<compile_context>
chip_gen: v6e
topology: v6e:2x2x1
jax: 0.10.0
libtpu: 0.0.40
codegen_flags: <defaults>
</compile_context>

<pallas_src>
import jax
import jax.numpy as jnp
from jax.experimental import pallas as pl
from jax.experimental.pallas import tpu as pltpu


SCALE = 2          # cfg.MODEL.SCALE_FACTOR
SEG_HIDDEN = 8     # hidden channels of the small segmentation net


# ----------------------------------------------------------------------------
# Fused Pallas kernel: full forward pass + loss partials for one batch element.
# ----------------------------------------------------------------------------
def _fused_kernel(theta_ref,            # SMEM: all weights/biases, flat f32 vector
                  x_ref,                # VMEM: (Cin, H, W) LR image
                  t_ref,                # VMEM: (S2, H, W) HR target in sub-pixel layout
                  lrp_ref,              # out:  (H, W) LR segmentation prediction
                  hrp_ref,              # out:  (S2, H, W) sub-pixel HR prediction channels
                  bce_ref,              # out:  (1, 1) per-image BCE sum (logits form)
                  l1_ref,               # out:  (1, 1) per-image L1 mean
                  xpad_ref,             # scratch: (Cin, H+2, W+2)
                  hpad_ref,             # scratch: (C1,  H+2, W+2)
                  ppad_ref):            # scratch: (1,   H+2, W+2)
    Cin, H, W = x_ref.shape
    C1 = hpad_ref.shape[0]
    S2 = hrp_ref.shape[0]
    Hp, Wp = H + 2, W + 2

    # Static offsets into the flat parameter vector (concatenation order in the wrapper).
    off_w1 = 0
    off_b1 = off_w1 + C1 * Cin * 9
    off_w2 = off_b1 + C1
    off_b2 = off_w2 + C1 * 9
    off_ws = off_b2 + 1
    off_bs = off_ws + S2 * 9

    def zero_border(ref):
        # 1-pixel zero frame for "same" padding; interior is fully rewritten each step.
        C, HH, WW = ref.shape
        zr = jnp.zeros((C, 1, WW), jnp.float32)
        zc = jnp.zeros((C, HH, 1), jnp.float32)
        ref[:, 0:1, :] = zr
        ref[:, HH - 1:HH, :] = zr
        ref[:, :, 0:1] = zc
        ref[:, :, WW - 1:WW] = zc

    zero_border(xpad_ref)
    zero_border(hpad_ref)
    zero_border(ppad_ref)

    # Stage the LR input into the zero-padded scratch (in-kernel "same" padding).
    xpad_ref[:, 1:1 + H, 1:1 + W] = x_ref[...]

    # ---- conv1: Cin -> C1, 3x3, ReLU.  VPU broadcast-FMA over 3x3 taps. ----
    for co in range(C1):
        acc = jnp.full((H, W), theta_ref[off_b1 + co], jnp.float32)
        base = off_w1 + co * Cin * 9
        for ci in range(Cin):
            for dh in range(3):
                for dw in range(3):
                    wv = theta_ref[base + ci * 9 + dh * 3 + dw]
                    acc = acc + wv * xpad_ref[ci, dh:dh + H, dw:dw + W]
        hpad_ref[co, 1:1 + H, 1:1 + W] = jnp.maximum(acc, 0.0)

    # ---- conv2: C1 -> 1, 3x3 -> segmentation logits z ----
    z = jnp.full((H, W), theta_ref[off_b2], jnp.float32)
    for ci in range(C1):
        for dh in range(3):
            for dw in range(3):
                wv = theta_ref[off_w2 + ci * 9 + dh * 3 + dw]
                z = z + wv * hpad_ref[ci, dh:dh + H, dw:dw + W]

    # LR target on the fly: 2x2 avg-pool of the HR target == mean over sub-pixel channels.
    lr_t = t_ref[0]
    for k in range(1, S2):
        lr_t = lr_t + t_ref[k]
    lr_t = lr_t * (1.0 / S2)

    # Fused BCE-with-logits (== BCELoss(sigmoid(z), lr_t)), per-image sum.
    bce_map = jnp.maximum(z, 0.0) - z * lr_t + jnp.log(1.0 + jnp.exp(-jnp.abs(z)))
    bce_ref[...] = jnp.sum(bce_map, keepdims=True)

    # Sigmoid -> LR segmentation prediction; also stage it padded for the SR conv.
    p = jax.nn.sigmoid(z)
    lrp_ref[...] = p
    ppad_ref[0, 1:1 + H, 1:1 + W] = p

    # ---- SR conv: 1 -> S2 sub-pixel channels, 3x3, with fused per-image L1 ----
    l1_acc = jnp.zeros((1, 1), jnp.float32)
    for k in range(S2):
        ck = jnp.full((H, W), theta_ref[off_bs + k], jnp.float32)
        for dh in range(3):
            for dw in range(3):
                wv = theta_ref[off_ws + k * 9 + dh * 3 + dw]
                ck = ck + wv * ppad_ref[0, dh:dh + H, dw:dw + W]
        hrp_ref[k] = ck
        l1_acc = l1_acc + jnp.sum(jnp.abs(ck - t_ref[k]), keepdims=True)
    l1_ref[...] = l1_acc * (1.0 / float(S2 * H * W))


def _fused_forward_pallas(theta, x, t_shuf, seg_hidden):
    B, Cin, H, W = x.shape
    S2 = t_shuf.shape[1]
    Hp, Wp = H + 2, W + 2

    smem_spec = pl.BlockSpec(memory_space=pltpu.MemorySpace.SMEM)

    out_shape = (
        jax.ShapeDtypeStruct((B, 1, H, W), jnp.float32),    # lr_segment_preds (NCHW)
        jax.ShapeDtypeStruct((B, S2, H, W), jnp.float32),   # sub-pixel HR prediction channels
        jax.ShapeDtypeStruct((B, 1, 1), jnp.float32),       # per-image BCE sums
        jax.ShapeDtypeStruct((B, 1, 1), jnp.float32),       # per-image L1 means
    )

    return pl.pallas_call(
        _fused_kernel,
        out_shape=out_shape,
        grid=(B,),
        in_specs=[
            smem_spec,                                                  # resident weights (SMEM)
            pl.BlockSpec((None, Cin, H, W), lambda b: (b, 0, 0, 0)),    # LR image
            pl.BlockSpec((None, S2, H, W), lambda b: (b, 0, 0, 0)),     # HR target, sub-pixel layout
        ],
        out_specs=(
            pl.BlockSpec((None, None, H, W), lambda b: (b, 0, 0, 0)),
            pl.BlockSpec((None, S2, H, W), lambda b: (b, 0, 0, 0)),
            pl.BlockSpec((None, 1, 1), lambda b: (b, 0, 0)),
            pl.BlockSpec((None, 1, 1), lambda b: (b, 0, 0)),
        ),
        scratch_shapes=[
            pltpu.VMEM((Cin, Hp, Wp), jnp.float32),          # zero-padded LR input
            pltpu.VMEM((seg_hidden, Hp, Wp), jnp.float32),   # zero-padded conv1 activations
            pltpu.VMEM((1, Hp, Wp), jnp.float32),            # zero-padded LR seg prediction
        ],
        compiler_params=pltpu.CompilerParams(
            dimension_semantics=("parallel",),               # batch axis -> megacore split
            vmem_limit_bytes=32 * 1024 * 1024,               # explicit, safe on v5e/v6e/v7x
        ),
    )(theta, x, t_shuf)


# ----------------------------------------------------------------------------
# Model glue (plain JAX, layout plumbing only)
# ----------------------------------------------------------------------------
def init_params(key):
    ks = jax.random.split(key, 6)
    scale = 0.1
    # Fixed small configuration: conv3x3(3->8)+ReLU, conv3x3(8->1)+sigmoid for the seg
    # net; sub-pixel conv3x3(1->s^2) + pixel shuffle for the SR_SEG_INV SR net.
    return {
        "w1": scale * jax.random.normal(ks[0], (SEG_HIDDEN, 3, 3, 3), jnp.float32),
        "b1": scale * jax.random.normal(ks[1], (SEG_HIDDEN,), jnp.float32),
        "w2": scale * jax.random.normal(ks[2], (1, SEG_HIDDEN, 3, 3), jnp.float32),
        "b2": scale * jax.random.normal(ks[3], (1,), jnp.float32),
        "w_sr": scale * jax.random.normal(ks[4], (SCALE * SCALE, 1, 3, 3), jnp.float32),
        "b_sr": scale * jax.random.normal(ks[5], (SCALE * SCALE,), jnp.float32),
    }


def forward(params, it, x, sr_targets=None, segment_targets=None, kernel_targets=None):
    del it, sr_targets  # unused on this path (non-KBPN)
    x = x.astype(jnp.float32)
    seg_t = segment_targets.astype(jnp.float32)
    B, _, H, W = x.shape
    s = SCALE

    # HR target re-expressed in sub-pixel ("pixel-unshuffled") layout (B, s*s, H, W) so the
    # kernel can (a) average over the channel axis to get the LR target (== 2x2 avg-pool
    # sr_transforms) and (b) compute the per-batch L1 without in-kernel lane interleaving.
    t_shuf = (seg_t.reshape(B, H, s, W, s)
                   .transpose(0, 2, 4, 1, 3)
                   .reshape(B, s * s, H, W))

    # All weights/biases flattened into one tiny SMEM-resident vector (~1.3 KB).
    theta = jnp.concatenate([
        params["w1"].reshape(-1), params["b1"].reshape(-1),
        params["w2"].reshape(-1), params["b2"].reshape(-1),
        params["w_sr"].reshape(-1), params["b_sr"].reshape(-1),
    ]).astype(jnp.float32)

    lr_segment_preds, c_shuf, bce_sums, l1_means = _fused_forward_pallas(
        theta, x, t_shuf, params["w1"].shape[0])

    # Pixel shuffle (pure layout) to produce the HR segmentation prediction, NCHW.
    segment_preds = (c_shuf.reshape(B, s, s, H, W)
                           .transpose(0, 3, 1, 4, 2)
                           .reshape(B, 1, H * s, W * s))

    # segment_loss = BCE(lr_segment_preds, lr_segment_targets)  (mean over all elements)
    segment_loss = jnp.sum(bce_sums) / (B * H * W)

    # sr_loss = (L1(segment_preds, segment_targets).mean(dim=(1,2,3)), kernel_preds)
    sr_loss_vec = l1_means.reshape(B)
    kernel_preds = jnp.zeros_like(kernel_targets)
    sr_loss = (sr_loss_vec, kernel_preds)

    return segment_loss, sr_loss, segment_preds, lr_segment_preds, kernel_preds


# ----------------------------------------------------------------------------
# Pure-JAX reference of the same forward pass (for a numerical self-check).
# ----------------------------------------------------------------------------
def _reference_forward(params, x, segment_targets):
    def conv3x3(v, w, b):
        y = jax.lax.conv_general_dilated(
            v, w, window_strides=(1, 1), padding="SAME",
            dimension_numbers=("NCHW", "OIHW", "NCHW"),
            precision=jax.lax.Precision.HIGHEST)
        return y + b.reshape(1, -1, 1, 1)

    B, _, H, W = x.shape
    s = SCALE
    h = jnp.maximum(conv3x3(x, params["w1"], params["b1"]), 0.0)
    z = conv3x3(h, params["w2"], params["b2"])
    lr_pred = jax.nn.sigmoid(z)
    c = conv3x3(lr_pred, params["w_sr"], params["b_sr"])
    hr = (c.reshape(B, s, s, H, W).transpose(0, 3, 1, 4, 2)
           .reshape(B, 1, H * s, W * s))
    lr_t = segment_targets.reshape(B, 1, H, s, W, s).mean(axis=(3, 5))
    bce = jnp.mean(jnp.maximum(z, 0.0) - z * lr_t + jnp.log1p(jnp.exp(-jnp.abs(z))))
    l1 = jnp.abs(hr - segment_targets).mean(axis=(1, 2, 3))
    return bce, l1, hr, lr_pred


# ----------------------------------------------------------------------------
if __name__ == "__main__":
    key = jax.random.PRNGKey(0)
    k_param, k_x, k_seg = jax.random.split(key, 3)

    B, Cin, H, W = 2, 3, 16, 16
    params = init_params(k_param)

    x = jax.random.uniform(k_x, (B, Cin, H, W), jnp.float32)                       # LR image, NCHW
    segment_targets = (jax.random.uniform(k_seg, (B, 1, H * SCALE, W * SCALE))
                       > 0.5).astype(jnp.float32)                                  # HR seg target
    kernel_targets = jnp.zeros((B, 1, 8, 8), jnp.float32)                          # blur-kernel target
    sr_targets = None                                                              # unused on this path

    outs = forward(params, 0, x, sr_targets, segment_targets, kernel_targets)
    outs = jax.block_until_ready(outs)
    segment_loss, (sr_loss_vec, _), segment_preds, lr_segment_preds, kernel_preds = outs

    # shape / sanity checks
    assert segment_preds.shape == (B, 1, H * SCALE, W * SCALE)
    assert lr_segment_preds.shape == (B, 1, H, W)
    assert sr_loss_vec.shape == (B,)
    assert kernel_preds.shape == kernel_targets.shape
    assert bool(jnp.isfinite(segment_loss)) and bool(jnp.all(jnp.isfinite(sr_loss_vec)))

    # numerical check against the pure-JAX/XLA reference of the same pipeline
    ref_bce, ref_l1, ref_hr, ref_lr = _reference_forward(params, x, segment_targets)
    assert bool(jnp.allclose(segment_loss, ref_bce, rtol=1e-3, atol=1e-3))
    assert bool(jnp.allclose(sr_loss_vec, ref_l1, rtol=1e-3, atol=1e-3))
    assert bool(jnp.allclose(lr_segment_preds, ref_lr, rtol=1e-3, atol=1e-3))
    assert bool(jnp.allclose(segment_preds, ref_hr, rtol=1e-3, atol=1e-3))

    print("KERNEL_OK")
</pallas_src>

<mosaic_0001>
module attributes {stable_mosaic.version = 11 : i64} {
  func.func @_fused_kernel(%arg0: i32, %arg1: memref<337xf32, #tpu.memory_space<smem>>, %arg2: memref<1x3x16x16xf32, #tpu.memory_space<vmem>>, %arg3: memref<1x4x16x16xf32, #tpu.memory_space<vmem>>, %arg4: memref<1x1x16x16xf32, #tpu.memory_space<vmem>>, %arg5: memref<1x4x16x16xf32, #tpu.memory_space<vmem>>, %arg6: memref<1x1x1xf32, #tpu.memory_space<vmem>>, %arg7: memref<1x1x1xf32, #tpu.memory_space<vmem>>, %arg8: memref<3x18x18xf32, #tpu.memory_space<vmem>>, %arg9: memref<8x18x18xf32, #tpu.memory_space<vmem>>, %arg10: memref<1x18x18xf32, #tpu.memory_space<vmem>>) attributes {dimension_semantics = [#tpu.dimension_semantics<parallel>], iteration_bounds = array<i64: 2>, scalar_prefetch = 0 : i64, scratch_operands = 3 : i64, tpu.core_type = #tpu.core_type<tc>, window_params = [{transform_indices = @transform_0, window_bounds = array<i64: 337>}, {transform_indices = @transform_1, window_bounds = array<i64: 1, 3, 16, 16>}, {transform_indices = @transform_2, window_bounds = array<i64: 1, 4, 16, 16>}, {transform_indices = @transform_3, window_bounds = array<i64: 1, 1, 16, 16>}, {transform_indices = @transform_4, window_bounds = array<i64: 1, 4, 16, 16>}, {transform_indices = @transform_5, window_bounds = array<i64: 1, 1, 1>}, {transform_indices = @transform_6, window_bounds = array<i64: 1, 1, 1>}]} {
    %cst = arith.constant 0.000000e+00 : f32
    %0 = vector.broadcast %cst : f32 to vector<3x1x18xf32>
    %cst_0 = arith.constant 0.000000e+00 : f32
    %1 = vector.broadcast %cst_0 : f32 to vector<3x18x1xf32>
    %c0 = arith.constant 0 : index
    %c0_1 = arith.constant 0 : index
    %c0_2 = arith.constant 0 : index
    %2 = vector.load %arg8[%c0, %c0_1, %c0_2] : memref<3x18x18xf32, #tpu.memory_space<vmem>>, vector<3x1x18xf32>
    tpu.vector_store %arg8[%c0, %c0_1, %c0_2], %0 {strides = array<i32>} : memref<3x18x18xf32, #tpu.memory_space<vmem>>, vector<3x1x18xf32>,
    %c0_3 = arith.constant 0 : index
    %c17 = arith.constant 17 : index
    %c0_4 = arith.constant 0 : index
    %3 = vector.load %arg8[%c0_3, %c17, %c0_4] : memref<3x18x18xf32, #tpu.memory_space<vmem>>, vector<3x1x18xf32>
    tpu.vector_store %arg8[%c0_3, %c17, %c0_4], %0 {strides = array<i32>} : memref<3x18x18xf32, #tpu.memory_space<vmem>>, vector<3x1x18xf32>,
    %c0_5 = arith.constant 0 : index
    %c0_6 = arith.constant 0 : index
    %c0_7 = arith.constant 0 : index
    %4 = vector.load %arg8[%c0_5, %c0_6, %c0_7] : memref<3x18x18xf32, #tpu.memory_space<vmem>>, vector<3x18x1xf32>
    tpu.vector_store %arg8[%c0_5, %c0_6, %c0_7], %1 {strides = array<i32>} : memref<3x18x18xf32, #tpu.memory_space<vmem>>, vector<3x18x1xf32>,
    %c0_8 = arith.constant 0 : index
    %c0_9 = arith.constant 0 : index
    %c17_10 = arith.constant 17 : index
    %5 = vector.load %arg8[%c0_8, %c0_9, %c17_10] : memref<3x18x18xf32, #tpu.memory_space<vmem>>, vector<3x18x1xf32>
    tpu.vector_store %arg8[%c0_8, %c0_9, %c17_10], %1 {strides = array<i32>} : memref<3x18x18xf32, #tpu.memory_space<vmem>>, vector<3x18x1xf32>,
    %cst_11 = arith.constant 0.000000e+00 : f32
    %6 = vector.broadcast %cst_11 : f32 to vector<8x1x18xf32>
    %cst_12 = arith.constant 0.000000e+00 : f32
    %7 = vector.broadcast %cst_12 : f32 to vector<8x18x1xf32>
    %c0_13 = arith.constant 0 : index
    %c0_14 = arith.constant 0 : index
    %c0_15 = arith.constant 0 : index
    %8 = vector.load %arg9[%c0_13, %c0_14, %c0_15] : memref<8x18x18xf32, #tpu.memory_space<vmem>>, vector<8x1x18xf32>
    tpu.vector_store %arg9[%c0_13, %c0_14, %c0_15], %6 {strides = array<i32>} : memref<8x18x18xf32, #tpu.memory_space<vmem>>, vector<8x1x18xf32>,
    %c0_16 = arith.constant 0 : index
    %c17_17 = arith.constant 17 : index
    %c0_18 = arith.constant 0 : index
    %9 = vector.load %arg9[%c0_16, %c17_17, %c0_18] : memref<8x18x18xf32, #tpu.memory_space<vmem>>, vector<8x1x18xf32>
    tpu.vector_store %arg9[%c0_16, %c17_17, %c0_18], %6 {strides = array<i32>} : memref<8x18x18xf32, #tpu.memory_space<vmem>>, vector<8x1x18xf32>,
    %c0_19 = arith.constant 0 : index
    %c0_20 = arith.constant 0 : index
    %c0_21 = arith.constant 0 : index
    %10 = vector.load %arg9[%c0_19, %c0_20, %c0_21] : memref<8x18x18xf32, #tpu.memory_space<vmem>>, vector<8x18x1xf32>
    tpu.vector_store %arg9[%c0_19, %c0_20, %c0_21], %7 {strides = array<i32>} : memref<8x18x18xf32, #tpu.memory_space<vmem>>, vector<8x18x1xf32>,
    %c0_22 = arith.constant 0 : index
    %c0_23 = arith.constant 0 : index
    %c17_24 = arith.constant 17 : index
    %11 = vector.load %arg9[%c0_22, %c0_23, %c17_24] : memref<8x18x18xf32, #tpu.memory_space<vmem>>, vector<8x18x1xf32>
    tpu.vector_store %arg9[%c0_22, %c0_23, %c17_24], %7 {strides = array<i32>} : memref<8x18x18xf32, #tpu.memory_space<vmem>>, vector<8x18x1xf32>,
    %cst_25 = arith.constant 0.000000e+00 : f32
    %12 = vector.broadcast %cst_25 : f32 to vector<1x1x18xf32>
    %cst_26 = arith.constant 0.000000e+00 : f32
    %13 = vector.broadcast %cst_26 : f32 to vector<1x18x1xf32>
    %c0_27 = arith.constant 0 : index
    %c0_28 = arith.constant 0 : index
    %c0_29 = arith.constant 0 : index
    %14 = vector.load %arg10[%c0_27, %c0_28, %c0_29] : memref<1x18x18xf32, #tpu.memory_space<vmem>>, vector<1x1x18xf32>
    tpu.vector_store %arg10[%c0_27, %c0_28, %c0_29], %12 {strides = array<i32>} : memref<1x18x18xf32, #tpu.memory_space<vmem>>, vector<1x1x18xf32>,
    %c0_30 = arith.constant 0 : index
    %c17_31 = arith.constant 17 : index
    %c0_32 = arith.constant 0 : index
    %15 = vector.load %arg10[%c0_30, %c17_31, %c0_32] : memref<1x18x18xf32, #tpu.memory_space<vmem>>, vector<1x1x18xf32>
    tpu.vector_store %arg10[%c0_30, %c17_31, %c0_32], %12 {strides = array<i32>} : memref<1x18x18xf32, #tpu.memory_space<vmem>>, vector<1x1x18xf32>,
    %c0_33 = arith.constant 0 : index
    %c0_34 = arith.constant 0 : index
    %c0_35 = arith.constant 0 : index
    %16 = vector.load %arg10[%c0_33, %c0_34, %c0_35] : memref<1x18x18xf32, #tpu.memory_space<vmem>>, vector<1x18x1xf32>
    tpu.vector_store %arg10[%c0_33, %c0_34, %c0_35], %13 {strides = array<i32>} : memref<1x18x18xf32, #tpu.memory_space<vmem>>, vector<1x18x1xf32>,
    %c0_36 = arith.constant 0 : index
    %c0_37 = arith.constant 0 : index
    %c17_38 = arith.constant 17 : index
    %17 = vector.load %arg10[%c0_36, %c0_37, %c17_38] : memref<1x18x18xf32, #tpu.memory_space<vmem>>, vector<1x18x1xf32>
    tpu.vector_store %arg10[%c0_36, %c0_37, %c17_38], %13 {strides = array<i32>} : memref<1x18x18xf32, #tpu.memory_space<vmem>>, vector<1x18x1xf32>,
    %c0_39 = arith.constant 0 : index
    %c0_40 = arith.constant 0 : index
    %c0_41 = arith.constant 0 : index
    %c0_42 = arith.constant 0 : index
    %18 = vector.load %arg2[%c0_39, %c0_40, %c0_41, %c0_42] : memref<1x3x16x16xf32, #tpu.memory_space<vmem>>, vector<1x3x16x16xf32>
    %19 = vector.shape_cast %18 : vector<1x3x16x16xf32> to vector<3x16x16xf32>
    %c0_43 = arith.constant 0 : index
    %c1 = arith.constant 1 : index
    %c1_44 = arith.constant 1 : index
    %20 = vector.load %arg8[%c0_43, %c1, %c1_44] : memref<3x18x18xf32, #tpu.memory_space<vmem>>, vector<3x16x16xf32>
    tpu.vector_store %arg8[%c0_43, %c1, %c1_44], %19 {strides = array<i32>} : memref<3x18x18xf32, #tpu.memory_space<vmem>>, vector<3x16x16xf32>,
    %c216 = arith.constant 216 : index
    %21 = memref.load %arg1[%c216] : memref<337xf32, #tpu.memory_space<smem>>
    %22 = vector.broadcast %21 : f32 to vector<16x16xf32>
    %c0_45 = arith.constant 0 : index
    %23 = memref.load %arg1[%c0_45] : memref<337xf32, #tpu.memory_space<smem>>
    %c0_46 = arith.constant 0 : index
    %c0_47 = arith.constant 0 : index
    %c0_48 = arith.constant 0 : index
    %24 = vector.load %arg8[%c0_46, %c0_47, %c0_48] : memref<3x18x18xf32, #tpu.memory_space<vmem>>, vector<1x16x16xf32>
    %25 = vector.shape_cast %24 : vector<1x16x16xf32> to vector<16x16xf32>
    %26 = vector.broadcast %23 : f32 to vector<16x16xf32>
    %27 = arith.mulf %26, %25 : vector<16x16xf32>
    %28 = arith.addf %22, %27 : vector<16x16xf32>
    %c1_49 = arith.constant 1 : index
    %29 = memref.load %arg1[%c1_49] : memref<337xf32, #tpu.memory_space<smem>>
    %c0_50 = arith.constant 0 : index
    %c0_51 = arith.constant 0 : index
    %c1_52 = arith.constant 1 : index
    %30 = vector.load %arg8[%c0_50, %c0_51, %c1_52] : memref<3x18x18xf32, #tpu.memory_space<vmem>>, vector<1x16x16xf32>
    %31 = vector.shape_cast %30 : vector<1x16x16xf32> to vector<16x16xf32>
    %32 = vector.broadcast %29 : f32 to vector<16x16xf32>
    %33 = arith.mulf %32, %31 : vector<16x16xf32>
    %34 = arith.addf %28, %33 : vector<16x16xf32>
    %c2 = arith.constant 2 : index
    %35 = memref.load %arg1[%c2] : memref<337xf32, #tpu.memory_space<smem>>
    %c0_53 = arith.constant 0 : index
    %c0_54 = arith.constant 0 : index
    %c2_55 = arith.constant 2 : index
    %36 = vector.load %arg8[%c0_53, %c0_54, %c2_55] : memref<3x18x18xf32, #tpu.memory_space<vmem>>, vector<1x16x16xf32>
    %37 = vector.shape_cast %36 : vector<1x16x16xf32> to vector<16x16xf32>
    %38 = vector.broadcast %35 : f32 to vector<16x16xf32>
    %39 = arith.mulf %38, %37 : vector<16x16xf32>
    %40 = arith.addf %34, %39 : vector<16x16xf32>
    %c3 = arith.constant 3 : index
    %41 = memref.load %arg1[%c3] : memref<337xf32, #tpu.memory_space<smem>>
    %c0_56 = arith.constant 0 : index
    %c1_57 = arith.constant 1 : index
    %c0_58 = arith.constant 0 : index
    %42 = vector.load %arg8[%c0_56, %c1_57, %c0_58] : memref<3x18x18xf32, #tpu.memory_space<vmem>>, vector<1x16x16xf32>
    %43 = vector.shape_cast %42 : vector<1x16x16xf32> to vector<16x16xf32>
    %44 = vector.broadcast %41 : f32 to vector<16x16xf32>
    %45 = arith.mulf %44, %43 : vector<16x16xf32>
    %46 = arith.addf %40, %45 : vector<16x16xf32>
    %c4 = arith.constant 4 : index
    %47 = memref.load %arg1[%c4] : memref<337xf32, #tpu.memory_space<smem>>
    %c0_59 = arith.constant 0 : index
    %c1_60 = arith.constant 1 : index
    %c1_61 = arith.constant 1 : index
    %48 = vector.load %arg8[%c0_59, %c1_60, %c1_61] : memref<3x18x18xf32, #tpu.memory_space<vmem>>, vector<1x16x16xf32>
    %49 = vector.shape_cast %48 : vector<1x16x16xf32> to vector<16x16xf32>
    %50 = vector.broadcast %47 : f32 to vector<16x16xf32>
    %51 = arith.mulf %50, %49 : vector<16x16xf32>
    %52 = arith.addf %46, %51 : vector<16x16xf32>
    %c5 = arith.constant 5 : index
    %53 = memref.load %arg1[%c5] : memref<337xf32, #tpu.memory_space<smem>>
    %c0_62 = arith.constant 0 : index
    %c1_63 = arith.constant 1 : index
    %c2_64 = arith.constant 2 : index
    %54 = vector.load %arg8[%c0_62, %c1_63, %c2_64] : memref<3x18x18xf32, #tpu.memory_space<vmem>>, vector<1x16x16xf32>
    %55 = vector.shape_cast %54 : vector<1x16x16xf32> to vector<16x16xf32>
    %56 = vector.broadcast %53 : f32 to vector<16x16xf32>
    %57 = arith.mulf %56, %55 : vector<16x16xf32>
    %58 = arith.addf %52, %57 : vector<16x16xf32>
    %c6 = arith.constant 6 : index
    %59 = memref.load %arg1[%c6] : memref<337xf32, #tpu.memory_space<smem>>
    %c0_65 = arith.constant 0 : index
    %c2_66 = arith.constant 2 : index
    %c0_67 = arith.constant 0 : index
    %60 = vector.load %arg8[%c0_65, %c2_66, %c0_67] : memref<3x18x18xf32, #tpu.memory_space<vmem>>, vector<1x16x16xf32>
    %61 = vector.shape_cast %60 : vector<1x16x16xf32> to vector<16x16xf32>
    %62 = vector.broadcast %59 : f32 to vector<16x16xf32>
    %63 = arith.mulf %62, %61 : vector<16x16xf32>
    %64 = arith.addf %58, %63 : vector<16x16xf32>
    %c7 = arith.constant 7 : index
    %65 = memref.load %arg1[%c7] : memref<337xf32, #tpu.memory_space<smem>>
    %c0_68 = arith.constant 0 : index
    %c2_69 = arith.constant 2 : index
    %c1_70 = arith.constant 1 : index
    %66 = vector.load %arg8[%c0_68, %c2_69, %c1_70] : memref<3x18x18xf32, #tpu.memory_space<vmem>>, vector<1x16x16xf32>
    %67 = vector.shape_cast %66 : vector<1x16x16xf32> to vector<16x16xf32>
    %68 = vector.broadcast %65 : f32 to vector<16x16xf32>
    %69 = arith.mulf %68, %67 : vector<16x16xf32>
    %70 = arith.addf %64, %69 : vector<16x16xf32>
    %c8 = arith.constant 8 : index
    %71 = memref.load %arg1[%c8] : memref<337xf32, #tpu.memory_space<smem>>
    %c0_71 = arith.constant 0 : index
    %c2_72 = arith.constant 2 : index
    %c2_73 = arith.constant 2 : index
    %72 = vector.load %arg8[%c0_71, %c2_72, %c2_73] : memref<3x18x18xf32, #tpu.memory_space<vmem>>, vector<1x16x16xf32>
    %73 = vector.shape_cast %72 : vector<1x16x16xf32> to vector<16x16xf32>
    %74 = vector.broadcast %71 : f32 to vector<16x16xf32>
    %75 = arith.mulf %74, %73 : vector<16x16xf32>
    %76 = arith.addf %70, %75 : vector<16x16xf32>
    %c9 = arith.constant 9 : index
    %77 = memref.load %arg1[%c9] : memref<337xf32, #tpu.memory_space<smem>>
    %c1_74 = arith.constant 1 : index
    %c0_75 = arith.constant 0 : index
    %c0_76 = arith.constant 0 : index
    %78 = vector.load %arg8[%c1_74, %c0_75, %c0_76] : memref<3x18x18xf32, #tpu.memory_space<vmem>>, vector<1x16x16xf32>
    %79 = vector.shape_cast %78 : vector<1x16x16xf32> to vector<16x16xf32>
    %80 = vector.broadcast %77 : f32 to vector<16x16xf32>
    %81 = arith.mulf %80, %79 : vector<16x16xf32>
    %82 = arith.addf %76, %81 : vector<16x16xf32>
    %c10 = arith.constant 10 : index
    %83 = memref.load %arg1[%c10] : memref<337xf32, #tpu.memory_space<smem>>
    %c1_77 = arith.constant 1 : index
    %c0_78 = arith.constant 0 : index
    %c1_79 = arith.constant 1 : index
    %84 = vector.load %arg8[%c1_77, %c0_78, %c1_79] : memref<3x18x18xf32, #tpu.memory_space<vmem>>, vector<1x16x16xf32>
    %85 = vector.shape_cast %84 : vector<1x16x16xf32> to vector<16x16xf32>
    %86 = vector.broadcast %83 : f32 to vector<16x16xf32>
    %87 = arith.mulf %86, %85 : vector<16x16xf32>
    %88 = arith.addf %82, %87 : vector<16x16xf32>
    %c11 = arith.constant 11 : index
    %89 = memref.load %arg1[%c11] : memref<337xf32, #tpu.memory_space<smem>>
    %c1_80 = arith.constant 1 : index
    %c0_81 = arith.constant 0 : index
    %c2_82 = arith.constant 2 : index
    %90 = vector.load %arg8[%c1_80, %c0_81, %c2_82] : memref<3x18x18xf32, #tpu.memory_space<vmem>>, vector<1x16x16xf32>
    %91 = vector.shape_cast %90 : vector<1x16x16xf32> to vector<16x16xf32>
    %92 = vector.broadcast %89 : f32 to vector<16x16xf32>
    %93 = arith.mulf %92, %91 : vector<16x16xf32>
    %94 = arith.addf %88, %93 : vector<16x16xf32>
    %c12 = arith.constant 12 : index
    %95 = memref.load %arg1[%c12] : memref<337xf32, #tpu.memory_space<smem>>
    %c1_83 = arith.constant 1 : index
    %c1_84 = arith.constant 1 : index
    %c0_85 = arith.constant 0 : index
    %96 = vector.load %arg8[%c1_83, %c1_84, %c0_85] : memref<3x18x18xf32, #tpu.memory_space<vmem>>, vector<1x16x16xf32>
    %97 = vector.shape_cast %96 : vector<1x16x16xf32> to vector<16x16xf32>
    %98 = vector.broadcast %95 : f32 to vector<16x16xf32>
    %99 = arith.mulf %98, %97 : vector<16x16xf32>
    %100 = arith.addf %94, %99 : vector<16x16xf32>
    %c13 = arith.constant 13 : index
    %101 = memref.load %arg1[%c13] : memref<337xf32, #tpu.memory_space<smem>>
    %c1_86 = arith.constant 1 : index
    %c1_87 = arith.constant 1 : index
    %c1_88 = arith.constant 1 : index
    %102 = vector.load %arg8[%c1_86, %c1_87, %c1_88] : memref<3x18x18xf32, #tpu.memory_space<vmem>>, vector<1x16x16xf32>
    %103 = vector.shape_cast %102 : vector<1x16x16xf32> to vector<16x16xf32>
    %104 = vector.broadcast %101 : f32 to vector<16x16xf32>
    %105 = arith.mulf %104, %103 : vector<16x16xf32>
    %106 = arith.addf %100, %105 : vector<16x16xf32>
    %c14 = arith.constant 14 : index
    %107 = memref.load %arg1[%c14] : memref<337xf32, #tpu.memory_space<smem>>
    %c1_89 = arith.constant 1 : index
    %c1_90 = arith.constant 1 : index
    %c2_91 = arith.constant 2 : index
    %108 = vector.load %arg8[%c1_89, %c1_90, %c2_91] : memref<3x18x18xf32, #tpu.memory_space<vmem>>, vector<1x16x16xf32>
    %109 = vector.shape_cast %108 : vector<1x16x16xf32> to vector<16x16xf32>
    %110 = vector.broadcast %107 : f32 to vector<16x16xf32>
    %111 = arith.mulf %110, %109 : vector<16x16xf32>
    %112 = arith.addf %106, %111 : vector<16x16xf32>
    %c15 = arith.constant 15 : index
    %113 = memref.load %arg1[%c15] : memref<337xf32, #tpu.memory_space<smem>>
    %c1_92 = arith.constant 1 : index
    %c2_93 = arith.constant 2 : index
    %c0_94 = arith.constant 0 : index
    %114 = vector.load %arg8[%c1_92, %c2_93, %c0_94] : memref<3x18x18xf32, #tpu.memory_space<vmem>>, vector<1x16x16xf32>
    %115 = vector.shape_cast %114 : vector<1x16x16xf32> to vector<16x16xf32>
    %116 = vector.broadcast %113 : f32 to vector<16x16xf32>
    %117 = arith.mulf %116, %115 : vector<16x16xf32>
    %118 = arith.addf %112, %117 : vector<16x16xf32>
    %c16 = arith.constant 16 : index
    %119 = memref.load %arg1[%c16] : memref<337xf32, #tpu.memory_space<smem>>
    %c1_95 = arith.constant 1 : index
    %c2_96 = arith.constant 2 : index
    %c1_97 = arith.constant 1 : index
    %120 = vector.load %arg8[%c1_95, %c2_96, %c1_97] : memref<3x18x18xf32, #tpu.memory_space<vmem>>, vector<1x16x16xf32>
    %121 = vector.shape_cast %120 : vector<1x16x16xf32> to vector<16x16xf32>
    %122 = vector.broadcast %119 : f32 to vector<16x16xf32>
    %123 = arith.mulf %122, %121 : vector<16x16xf32>
    %124 = arith.addf %118, %123 : vector<16x16xf32>
    %c17_98 = arith.constant 17 : index
    %125 = memref.load %arg1[%c17_98] : memref<337xf32, #tpu.memory_space<smem>>
    %c1_99 = arith.constant 1 : index
    %c2_100 = arith.constant 2 : index
    %c2_101 = arith.constant 2 : index
    %126 = vector.load %arg8[%c1_99, %c2_100, %c2_101] : memref<3x18x18xf32, #tpu.memory_space<vmem>>, vector<1x16x16xf32>
    %127 = vector.shape_cast %126 : vector<1x16x16xf32> to vector<16x16xf32>
    %128 = vector.broadcast %125 : f32 to vector<16x16xf32>
    %129 = arith.mulf %128, %127 : vector<16x16xf32>
    %130 = arith.addf %124, %129 : vector<16x16xf32>
    %c18 = arith.constant 18 : index
    %131 = memref.load %arg1[%c18] : memref<337xf32, #tpu.memory_space<smem>>
    %c2_102 = arith.constant 2 : index
    %c0_103 = arith.constant 0 : index
    %c0_104 = arith.constant 0 : index
    %132 = vector.load %arg8[%c2_102, %c0_103, %c0_104] : memref<3x18x18xf32, #tpu.memory_space<vmem>>, vector<1x16x16xf32>
    %133 = vector.shape_cast %132 : vector<1x16x16xf32> to vector<16x16xf32>
    %134 = vector.broadcast %131 : f32 to vector<16x16xf32>
    %135 = arith.mulf %134, %133 : vector<16x16xf32>
    %136 = arith.addf %130, %135 : vector<16x16xf32>
    %c19 = arith.constant 19 : index
    %137 = memref.load %arg1[%c19] : memref<337xf32, #tpu.memory_space<smem>>
    %c2_105 = arith.constant 2 : index
    %c0_106 = arith.constant 0 : index
    %c1_107 = arith.constant 1 : index
    %138 = vector.load %arg8[%c2_105, %c0_106, %c1_107] : memref<3x18x18xf32, #tpu.memory_space<vmem>>, vector<1x16x16xf32>
    %139 = vector.shape_cast %138 : vector<1x16x16xf32> to vector<16x16xf32>
    %140 = vector.broadcast %137 : f32 to vector<16x16xf32>
    %141 = arith.mulf %140, %139 : vector<16x16xf32>
    %142 = arith.addf %136, %141 : vector<16x16xf32>
    %c20 = arith.constant 20 : index
    %143 = memref.load %arg1[%c20] : memref<337xf32, #tpu.memory_space<smem>>
    %c2_108 = arith.constant 2 : index
    %c0_109 = arith.constant 0 : index
    %c2_110 = arith.constant 2 : index
    %144 = vector.load %arg8[%c2_108, %c0_109, %c2_110] : memref<3x18x18xf32, #tpu.memory_space<vmem>>, vector<1x16x16xf32>
    %145 = vector.shape_cast %144 : vector<1x16x16xf32> to vector<16x16xf32>
    %146 = vector.broadcast %143 : f32 to vector<16x16xf32>
    %147 = arith.mulf %146, %145 : vector<16x16xf32>
    %148 = arith.addf %142, %147 : vector<16x16xf32>
    %c21 = arith.constant 21 : index
    %149 = memref.load %arg1[%c21] : memref<337xf32, #tpu.memory_space<smem>>
    %c2_111 = arith.constant 2 : index
    %c1_112 = arith.constant 1 : index
    %c0_113 = arith.constant 0 : index
    %150 = vector.load %arg8[%c2_111, %c1_112, %c0_113] : memref<3x18x18xf32, #tpu.memory_space<vmem>>, vector<1x16x16xf32>
    %151 = vector.shape_cast %150 : vector<1x16x16xf32> to vector<16x16xf32>
    %152 = vector.broadcast %149 : f32 to vector<16x16xf32>
    %153 = arith.mulf %152, %151 : vector<16x16xf32>
    %154 = arith.addf %148, %153 : vector<16x16xf32>
    %c22 = arith.constant 22 : index
    %155 = memref.load %arg1[%c22] : memref<337xf32, #tpu.memory_space<smem>>
    %c2_114 = arith.constant 2 : index
    %c1_115 = arith.constant 1 : index
    %c1_116 = arith.constant 1 : index
    %156 = vector.load %arg8[%c2_114, %c1_115, %c1_116] : memref<3x18x18xf32, #tpu.memory_space<vmem>>, vector<1x16x16xf32>
    %157 = vector.shape_cast %156 : vector<1x16x16xf32> to vector<16x16xf32>
    %158 = vector.broadcast %155 : f32 to vector<16x16xf32>
    %159 = arith.mulf %158, %157 : vector<16x16xf32>
    %160 = arith.addf %154, %159 : vector<16x16xf32>
    %c23 = arith.constant 23 : index
    %161 = memref.load %arg1[%c23] : memref<337xf32, #tpu.memory_space<smem>>
    %c2_117 = arith.constant 2 : index
    %c1_118 = arith.constant 1 : index
    %c2_119 = arith.constant 2 : index
    %162 = vector.load %arg8[%c2_117, %c1_118, %c2_119] : memref<3x18x18xf32, #tpu.memory_space<vmem>>, vector<1x16x16xf32>
    %163 = vector.shape_cast %162 : vector<1x16x16xf32> to vector<16x16xf32>
    %164 = vector.broadcast %161 : f32 to vector<16x16xf32>
    %165 = arith.mulf %164, %163 : vector<16x16xf32>
    %166 = arith.addf %160, %165 : vector<16x16xf32>
    %c24 = arith.constant 24 : index
    %167 = memref.load %arg1[%c24] : memref<337xf32, #tpu.memory_space<smem>>
    %c2_120 = arith.constant 2 : index
    %c2_121 = arith.constant 2 : index
    %c0_122 = arith.constant 0 : index
    %168 = vector.load %arg8[%c2_120, %c2_121, %c0_122] : memref<3x18x18xf32, #tpu.memory_space<vmem>>, vector<1x16x16xf32>
    %169 = vector.shape_cast %168 : vector<1x16x16xf32> to vector<16x16xf32>
    %170 = vector.broadcast %167 : f32 to vector<16x16xf32>
    %171 = arith.mulf %170, %169 : vector<16x16xf32>
    %172 = arith.addf %166, %171 : vector<16x16xf32>
    %c25 = arith.constant 25 : index
    %173 = memref.load %arg1[%c25] : memref<337xf32, #tpu.memory_space<smem>>
    %c2_123 = arith.constant 2 : index
    %c2_124 = arith.constant 2 : index
    %c1_125 = arith.constant 1 : index
    %174 = vector.load %arg8[%c2_123, %c2_124, %c1_125] : memref<3x18x18xf32, #tpu.memory_space<vmem>>, vector<1x16x16xf32>
    %175 = vector.shape_cast %174 : vector<1x16x16xf32> to vector<16x16xf32>
    %176 = vector.broadcast %173 : f32 to vector<16x16xf32>
    %177 = arith.mulf %176, %175 : vector<16x16xf32>
    %178 = arith.addf %172, %177 : vector<16x16xf32>
    %c26 = arith.constant 26 : index
    %179 = memref.load %arg1[%c26] : memref<337xf32, #tpu.memory_space<smem>>
    %c2_126 = arith.constant 2 : index
    %c2_127 = arith.constant 2 : index
    %c2_128 = arith.constant 2 : index
    %180 = vector.load %arg8[%c2_126, %c2_127, %c2_128] : memref<3x18x18xf32, #tpu.memory_space<vmem>>, vector<1x16x16xf32>
    %181 = vector.shape_cast %180 : vector<1x16x16xf32> to vector<16x16xf32>
    %182 = vector.broadcast %179 : f32 to vector<16x16xf32>
    %183 = arith.mulf %182, %181 : vector<16x16xf32>
    %184 = arith.addf %178, %183 : vector<16x16xf32>
    %cst_129 = arith.constant 0.000000e+00 : f32
    %185 = vector.broadcast %cst_129 : f32 to vector<16x16xf32>
    %186 = arith.maximumf %184, %185 : vector<16x16xf32>
    %c0_130 = arith.constant 0 : index
    %c1_131 = arith.constant 1 : index
    %c1_132 = arith.constant 1 : index
    %187 = vector.load %arg9[%c0_130, %c1_131, %c1_132] : memref<8x18x18xf32, #tpu.memory_space<vmem>>, vector<1x16x16xf32>
    %188 = vector.shape_cast %187 : vector<1x16x16xf32> to vector<16x16xf32>
    %189 = vector.shape_cast %186 : vector<16x16xf32> to vector<1x16x16xf32>
    tpu.vector_store %arg9[%c0_130, %c1_131, %c1_132], %189 {strides = array<i32>} : memref<8x18x18xf32, #tpu.memory_space<vmem>>, vector<1x16x16xf32>,
    %c217 = arith.constant 217 : index
    %190 = memref.load %arg1[%c217] : memref<337xf32, #tpu.memory_space<smem>>
    %191 = vector.broadcast %190 : f32 to vector<16x16xf32>
    %c27 = arith.constant 27 : index
    %192 = memref.load %arg1[%c27] : memref<337xf32, #tpu.memory_space<smem>>
    %c0_133 = arith.constant 0 : index
    %c0_134 = arith.constant 0 : index
    %c0_135 = arith.constant 0 : index
    %193 = vector.load %arg8[%c0_133, %c0_134, %c0_135] : memref<3x18x18xf32, #tpu.memory_space<vmem>>, vector<1x16x16xf32>
    %194 = vector.shape_cast %193 : vector<1x16x16xf32> to vector<16x16xf32>
    %195 = vector.broadcast %192 : f32 to vector<16x16xf32>
    %196 = arith.mulf %195, %194 : vector<16x16xf32>
    %197 = arith.addf %191, %196 : vector<16x16xf32>
    %c28 = arith.constant 28 : index
    %198 = memref.load %arg1[%c28] : memref<337xf32, #tpu.memory_space<smem>>
    %c0_136 = arith.constant 0 : index
    %c0_137 = arith.constant 0 : index
    %c1_138 = arith.constant 1 : index
    %199 = vector.load %arg8[%c0_136, %c0_137, %c1_138] : memref<3x18x18xf32, #tpu.memory_space<vmem>>, vector<1x16x16xf32>
    %200 = vector.shape_cast %199 : vector<1x16x16xf32> to vector<16x16xf32>
    %201 = vector.broadcast %198 : f32 to vector<16x16xf32>
    %202 = arith.mulf %201, %200 : vector<16x16xf32>
    %203 = arith.addf %197, %202 : vector<16x16xf32>
    %c29 = arith.constant 29 : index
    %204 = memref.load %arg1[%c29] : memref<337xf32, #tpu.memory_space<smem>>
    %c0_139 = arith.constant 0 : index
    %c0_140 = arith.constant 0 : index
    %c2_141 = arith.constant 2 : index
    %205 = vector.load %arg8[%c0_139, %c0_140, %c2_141] : memref<3x18x18xf32, #tpu.memory_space<vmem>>, vector<1x16x16xf32>
    %206 = vector.shape_cast %205 : vector<1x16x16xf32> to vector<16x16xf32>
    %207 = vector.broadcast %204 : f32 to vector<16x16xf32>
    %208 = arith.mulf %207, %206 : vector<16x16xf32>
    %209 = arith.addf %203, %208 : vector<16x16xf32>
    %c30 = arith.constant 30 : index
    %210 = memref.load %arg1[%c30] : memref<337xf32, #tpu.memory_space<smem>>
    %c0_142 = arith.constant 0 : index
    %c1_143 = arith.constant 1 : index
    %c0_144 = arith.constant 0 : index
    %211 = vector.load %arg8[%c0_142, %c1_143, %c0_144] : memref<3x18x18xf32, #tpu.memory_space<vmem>>, vector<1x16x16xf32>
    %212 = vector.shape_cast %211 : vector<1x16x16xf32> to vector<16x16xf32>
    %213 = vector.broadcast %210 : f32 to vector<16x16xf32>
    %214 = arith.mulf %213, %212 : vector<16x16xf32>
    %215 = arith.addf %209, %214 : vector<16x16xf32>
    %c31 = arith.constant 31 : index
    %216 = memref.load %arg1[%c31] : memref<337xf32, #tpu.memory_space<smem>>
    %c0_145 = arith.constant 0 : index
    %c1_146 = arith.constant 1 : index
    %c1_147 = arith.constant 1 : index
    %217 = vector.load %arg8[%c0_145, %c1_146, %c1_147] : memref<3x18x18xf32, #tpu.memory_space<vmem>>, vector<1x16x16xf32>
    %218 = vector.shape_cast %217 : vector<1x16x16xf32> to vector<16x16xf32>
    %219 = vector.broadcast %216 : f32 to vector<16x16xf32>
    %220 = arith.mulf %219, %218 : vector<16x16xf32>
    %221 = arith.addf %215, %220 : vector<16x16xf32>
    %c32 = arith.constant 32 : index
    %222 = memref.load %arg1[%c32] : memref<337xf32, #tpu.memory_space<smem>>
    %c0_148 = arith.constant 0 : index
    %c1_149 = arith.constant 1 : index
    %c2_150 = arith.constant 2 : index
    %223 = vector.load %arg8[%c0_148, %c1_149, %c2_150] : memref<3x18x18xf32, #tpu.memory_space<vmem>>, vector<1x16x16xf32>
    %224 = vector.shape_cast %223 : vector<1x16x16xf32> to vector<16x16xf32>
    %225 = vector.broadcast %222 : f32 to vector<16x16xf32>
    %226 = arith.mulf %225, %224 : vector<16x16xf32>
    %227 = arith.addf %221, %226 : vector<16x16xf32>
    %c33 = arith.constant 33 : index
    %228 = memref.load %arg1[%c33] : memref<337xf32, #tpu.memory_space<smem>>
    %c0_151 = arith.constant 0 : index
    %c2_152 = arith.constant 2 : index
    %c0_153 = arith.constant 0 : index
    %229 = vector.load %arg8[%c0_151, %c2_152, %c0_153] : memref<3x18x18xf32, #tpu.memory_space<vmem>>, vector<1x16x16xf32>
    %230 = vector.shape_cast %229 : vector<1x16x16xf32> to vector<16x16xf32>
    %231 = vector.broadcast %228 : f32 to vector<16x16xf32>
    %232 = arith.mulf %231, %230 : vector<16x16xf32>
    %233 = arith.addf %227, %232 : vector<16x16xf32>
    %c34 = arith.constant 34 : index
    %234 = memref.load %arg1[%c34] : memref<337xf32, #tpu.memory_space<smem>>
    %c0_154 = arith.constant 0 : index
    %c2_155 = arith.constant 2 : index
    %c1_156 = arith.constant 1 : index
    %235 = vector.load %arg8[%c0_154, %c2_155, %c1_156] : memref<3x18x18xf32, #tpu.memory_space<vmem>>, vector<1x16x16xf32>
    %236 = vector.shape_cast %235 : vector<1x16x16xf32> to vector<16x16xf32>
    %237 = vector.broadcast %234 : f32 to vector<16x16xf32>
    %238 = arith.mulf %237, %236 : vector<16x16xf32>
    %239 = arith.addf %233, %238 : vector<16x16xf32>
    %c35 = arith.constant 35 : index
    %240 = memref.load %arg1[%c35] : memref<337xf32, #tpu.memory_space<smem>>
    %c0_157 = arith.constant 0 : index
    %c2_158 = arith.constant 2 : index
    %c2_159 = arith.constant 2 : index
    %241 = vector.load %arg8[%c0_157, %c2_158, %c2_159] : memref<3x18x18xf32, #tpu.memory_space<vmem>>, vector<1x16x16xf32>
    %242 = vector.shape_cast %241 : vector<1x16x16xf32> to vector<16x16xf32>
    %243 = vector.broadcast %240 : f32 to vector<16x16xf32>
    %244 = arith.mulf %243, %242 : vector<16x16xf32>
    %245 = arith.addf %239, %244 : vector<16x16xf32>
    %c36 = arith.constant 36 : index
    %246 = memref.load %arg1[%c36] : memref<337xf32, #tpu.memory_space<smem>>
    %c1_160 = arith.constant 1 : index
    %c0_161 = arith.constant 0 : index
    %c0_162 = arith.constant 0 : index
    %247 = vector.load %arg8[%c1_160, %c0_161, %c0_162] : memref<3x18x18xf32, #tpu.memory_space<vmem>>, vector<1x16x16xf32>
    %248 = vector.shape_cast %247 : vector<1x16x16xf32> to vector<16x16xf32>
    %249 = vector.broadcast %246 : f32 to vector<16x16xf32>
    %250 = arith.mulf %249, %248 : vector<16x16xf32>
    %251 = arith.addf %245, %250 : vector<16x16xf32>
    %c37 = arith.constant 37 : index
    %252 = memref.load %arg1[%c37] : memref<337xf32, #tpu.memory_space<smem>>
    %c1_163 = arith.constant 1 : index
    %c0_164 = arith.constant 0 : index
    %c1_165 = arith.constant 1 : index
    %253 = vector.load %arg8[%c1_163, %c0_164, %c1_165] : memref<3x18x18xf32, #tpu.memory_space<vmem>>, vector<1x16x16xf32>
    %254 = vector.shape_cast %253 : vector<1x16x16xf32> to vector<16x16xf32>
    %255 = vector.broadcast %252 : f32 to vector<16x16xf32>
    %256 = arith.mulf %255, %254 : vector<16x16xf32>
    %257 = arith.addf %251, %256 : vector<16x16xf32>
    %c38 = arith.constant 38 : index
    %258 = memref.load %arg1[%c38] : memref<337xf32, #tpu.memory_space<smem>>
    %c1_166 = arith.constant 1 : index
    %c0_167 = arith.constant 0 : index
    %c2_168 = arith.constant 2 : index
    %259 = vector.load %arg8[%c1_166, %c0_167, %c2_168] : memref<3x18x18xf32, #tpu.memory_space<vmem>>, vector<1x16x16xf32>
    %260 = vector.shape_cast %259 : vector<1x16x16xf32> to vector<16x16xf32>
    %261 = vector.broadcast %258 : f32 to vector<16x16xf32>
    %262 = arith.mulf %261, %260 : vector<16x16xf32>
    %263 = arith.addf %257, %262 : vector<16x16xf32>
    %c39 = arith.constant 39 : index
    %264 = memref.load %arg1[%c39] : memref<337xf32, #tpu.memory_space<smem>>
    %c1_169 = arith.constant 1 : index
    %c1_170 = arith.constant 1 : index
    %c0_171 = arith.constant 0 : index
    %265 = vector.load %arg8[%c1_169, %c1_170, %c0_171] : memref<3x18x18xf32, #tpu.memory_space<vmem>>, vector<1x16x16xf32>
    %266 = vector.shape_cast %265 : vector<1x16x16xf32> to vector<16x16xf32>
    %267 = vector.broadcast %264 : f32 to vector<16x16xf32>
    %268 = arith.mulf %267, %266 : vector<16x16xf32>
    %269 = arith.addf %263, %268 : vector<16x16xf32>
    %c40 = arith.constant 40 : index
    %270 = memref.load %arg1[%c40] : memref<337xf32, #tpu.memory_space<smem>>
    %c1_172 = arith.constant 1 : index
    %c1_173 = arith.constant 1 : index
    %c1_174 = arith.constant 1 : index
    %271 = vector.load %arg8[%c1_172, %c1_173, %c1_174] : memref<3x18x18xf32, #tpu.memory_space<vmem>>, vector<1x16x16xf32>
    %272 = vector.shape_cast %271 : vector<1x16x16xf32> to vector<16x16xf32>
    %273 = vector.broadcast %270 : f32 to vector<16x16xf32>
    %274 = arith.mulf %273, %272 : vector<16x16xf32>
    %275 = arith.addf %269, %274 : vector<16x16xf32>
    %c41 = arith.constant 41 : index
    %276 = memref.load %arg1[%c41] : memref<337xf32, #tpu.memory_space<smem>>
    %c1_175 = arith.constant 1 : index
    %c1_176 = arith.constant 1 : index
    %c2_177 = arith.constant 2 : index
    %277 = vector.load %arg8[%c1_175, %c1_176, %c2_177] : memref<3x18x18xf32, #tpu.memory_space<vmem>>, vector<1x16x16xf32>
    %278 = vector.shape_cast %277 : vector<1x16x16xf32> to vector<16x16xf32>
    %279 = vector.broadcast %276 : f32 to vector<16x16xf32>
    %280 = arith.mulf %279, %278 : vector<16x16xf32>
    %281 = arith.addf %275, %280 : vector<16x16xf32>
    %c42 = arith.constant 42 : index
    %282 = memref.load %arg1[%c42] : memref<337xf32, #tpu.memory_space<smem>>
    %c1_178 = arith.constant 1 : index
    %c2_179 = arith.constant 2 : index
    %c0_180 = arith.constant 0 : index
    %283 = vector.load %arg8[%c1_178, %c2_179, %c0_180] : memref<3x18x18xf32, #tpu.memory_space<vmem>>, vector<1x16x16xf32>
    %284 = vector.shape_cast %283 : vector<1x16x16xf32> to vector<16x16xf32>
    %285 = vector.broadcast %282 : f32 to vector<16x16xf32>
    %286 = arith.mulf %285, %284 : vector<16x16xf32>
    %287 = arith.addf %281, %286 : vector<16x16xf32>
    %c43 = arith.constant 43 : index
    %288 = memref.load %arg1[%c43] : memref<337xf32, #tpu.memory_space<smem>>
    %c1_181 = arith.constant 1 : index
    %c2_182 = arith.constant 2 : index
    %c1_183 = arith.constant 1 : index
    %289 = vector.load %arg8[%c1_181, %c2_182, %c1_183] : memref<3x18x18xf32, #tpu.memory_space<vmem>>, vector<1x16x16xf32>
    %290 = vector.shape_cast %289 : vector<1x16x16xf32> to vector<16x16xf32>
    %291 = vector.broadcast %288 : f32 to vector<16x16xf32>
    %292 = arith.mulf %291, %290 : vector<16x16xf32>
    %293 = arith.addf %287, %292 : vector<16x16xf32>
    %c44 = arith.constant 44 : index
    %294 = memref.load %arg1[%c44] : memref<337xf32, #tpu.memory_space<smem>>
    %c1_184 = arith.constant 1 : index
    %c2_185 = arith.constant 2 : index
    %c2_186 = arith.constant 2 : index
    %295 = vector.load %arg8[%c1_184, %c2_185, %c2_186] : memref<3x18x18xf32, #tpu.memory_space<vmem>>, vector<1x16x16xf32>
    %296 = vector.shape_cast %295 : vector<1x16x16xf32> to vector<16x16xf32>
    %297 = vector.broadcast %294 : f32 to vector<16x16xf32>
    %298 = arith.mulf %297, %296 : vector<16x16xf32>
    %299 = arith.addf %293, %298 : vector<16x16xf32>
    %c45 = arith.constant 45 : index
    %300 = memref.load %arg1[%c45] : memref<337xf32, #tpu.memory_space<smem>>
    %c2_187 = arith.constant 2 : index
    %c0_188 = arith.constant 0 : index
    %c0_189 = arith.constant 0 : index
    %301 = vector.load %arg8[%c2_187, %c0_188, %c0_189] : memref<3x18x18xf32, #tpu.memory_space<vmem>>, vector<1x16x16xf32>
    %302 = vector.shape_cast %301 : vector<1x16x16xf32> to vector<16x16xf32>
    %303 = vector.broadcast %300 : f32 to vector<16x16xf32>
    %304 = arith.mulf %303, %302 : vector<16x16xf32>
    %305 = arith.addf %299, %304 : vector<16x16xf32>
    %c46 = arith.constant 46 : index
    %306 = memref.load %arg1[%c46] : memref<337xf32, #tpu.memory_space<smem>>
    %c2_190 = arith.constant 2 : index
    %c0_191 = arith.constant 0 : index
    %c1_192 = arith.constant 1 : index
    %307 = vector.load %arg8[%c2_190, %c0_191, %c1_192] : memref<3x18x18xf32, #tpu.memory_space<vmem>>, vector<1x16x16xf32>
    %308 = vector.shape_cast %307 : vector<1x16x16xf32> to vector<16x16xf32>
    %309 = vector.broadcast %306 : f32 to vector<16x16xf32>
    %310 = arith.mulf %309, %308 : vector<16x16xf32>
    %311 = arith.addf %305, %310 : vector<16x16xf32>
    %c47 = arith.constant 47 : index
    %312 = memref.load %arg1[%c47] : memref<337xf32, #tpu.memory_space<smem>>
    %c2_193 = arith.constant 2 : index
    %c0_194 = arith.constant 0 : index
    %c2_195 = arith.constant 2 : index
    %313 = vector.load %arg8[%c2_193, %c0_194, %c2_195] : memref<3x18x18xf32, #tpu.memory_space<vmem>>, vector<1x16x16xf32>
    %314 = vector.shape_cast %313 : vector<1x16x16xf32> to vector<16x16xf32>
    %315 = vector.broadcast %312 : f32 to vector<16x16xf32>
    %316 = arith.mulf %315, %314 : vector<16x16xf32>
    %317 = arith.addf %311, %316 : vector<16x16xf32>
    %c48 = arith.constant 48 : index
    %318 = memref.load %arg1[%c48] : memref<337xf32, #tpu.memory_space<smem>>
    %c2_196 = arith.constant 2 : index
    %c1_197 = arith.constant 1 : index
    %c0_198 = arith.constant 0 : index
    %319 = vector.load %arg8[%c2_196, %c1_197, %c0_198] : memref<3x18x18xf32, #tpu.memory_space<vmem>>, vector<1x16x16xf32>
    %320 = vector.shape_cast %319 : vector<1x16x16xf32> to vector<16x16xf32>
    %321 = vector.broadcast %318 : f32 to vector<16x16xf32>
    %322 = arith.mulf %321, %320 : vector<16x16xf32>
    %323 = arith.addf %317, %322 : vector<16x16xf32>
    %c49 = arith.constant 49 : index
    %324 = memref.load %arg1[%c49] : memref<337xf32, #tpu.memory_space<smem>>
    %c2_199 = arith.constant 2 : index
    %c1_200 = arith.constant 1 : index
    %c1_201 = arith.constant 1 : index
    %325 = vector.load %arg8[%c2_199, %c1_200, %c1_201] : memref<3x18x18xf32, #tpu.memory_space<vmem>>, vector<1x16x16xf32>
    %326 = vector.shape_cast %325 : vector<1x16x16xf32> to vector<16x16xf32>
    %327 = vector.broadcast %324 : f32 to vector<16x16xf32>
    %328 = arith.mulf %327, %326 : vector<16x16xf32>
    %329 = arith.addf %323, %328 : vector<16x16xf32>
    %c50 = arith.constant 50 : index
    %330 = memref.load %arg1[%c50] : memref<337xf32, #tpu.memory_space<smem>>
    %c2_202 = arith.constant 2 : index
    %c1_203 = arith.constant 1 : index
    %c2_204 = arith.constant 2 : index
    %331 = vector.load %arg8[%c2_202, %c1_203, %c2_204] : memref<3x18x18xf32, #tpu.memory_space<vmem>>, vector<1x16x16xf32>
    %332 = vector.shape_cast %331 : vector<1x16x16xf32> to vector<16x16xf32>
    %333 = vector.broadcast %330 : f32 to vector<16x16xf32>
    %334 = arith.mulf %333, %332 : vector<16x16xf32>
    %335 = arith.addf %329, %334 : vector<16x16xf32>
    %c51 = arith.constant 51 : index
    %336 = memref.load %arg1[%c51] : memref<337xf32, #tpu.memory_space<smem>>
    %c2_205 = arith.constant 2 : index
    %c2_206 = arith.constant 2 : index
    %c0_207 = arith.constant 0 : index
    %337 = vector.load %arg8[%c2_205, %c2_206, %c0_207] : memref<3x18x18xf32, #tpu.memory_space<vmem>>, vector<1x16x16xf32>
    %338 = vector.shape_cast %337 : vector<1x16x16xf32> to vector<16x16xf32>
    %339 = vector.broadcast %336 : f32 to vector<16x16xf32>
    %340 = arith.mulf %339, %338 : vector<16x16xf32>
    %341 = arith.addf %335, %340 : vector<16x16xf32>
    %c52 = arith.constant 52 : index
    %342 = memref.load %arg1[%c52] : memref<337xf32, #tpu.memory_space<smem>>
    %c2_208 = arith.constant 2 : index
    %c2_209 = arith.constant 2 : index
    %c1_210 = arith.constant 1 : index
    %343 = vector.load %arg8[%c2_208, %c2_209, %c1_210] : memref<3x18x18xf32, #tpu.memory_space<vmem>>, vector<1x16x16xf32>
    %344 = vector.shape_cast %343 : vector<1x16x16xf32> to vector<16x16xf32>
    %345 = vector.broadcast %342 : f32 to vector<16x16xf32>
    %346 = arith.mulf %345, %344 : vector<16x16xf32>
    %347 = arith.addf %341, %346 : vector<16x16xf32>
    %c53 = arith.constant 53 : index
    %348 = memref.load %arg1[%c53] : memref<337xf32, #tpu.memory_space<smem>>
    %c2_211 = arith.constant 2 : index
    %c2_212 = arith.constant 2 : index
    %c2_213 = arith.constant 2 : index
    %349 = vector.load %arg8[%c2_211, %c2_212, %c2_213] : memref<3x18x18xf32, #tpu.memory_space<vmem>>, vector<1x16x16xf32>
    %350 = vector.shape_cast %349 : vector<1x16x16xf32> to vector<16x16xf32>
    %351 = vector.broadcast %348 : f32 to vector<16x16xf32>
    %352 = arith.mulf %351, %350 : vector<16x16xf32>
    %353 = arith.addf %347, %352 : vector<16x16xf32>
    %cst_214 = arith.constant 0.000000e+00 : f32
    %354 = vector.broadcast %cst_214 : f32 to vector<16x16xf32>
    %355 = arith.maximumf %353, %354 : vector<16x16xf32>
    %c1_215 = arith.constant 1 : index
    %c1_216 = arith.constant 1 : index
    %c1_217 = arith.constant 1 : index
    %356 = vector.load %arg9[%c1_215, %c1_216, %c1_217] : memref<8x18x18xf32, #tpu.memory_space<vmem>>, vector<1x16x16xf32>
    %357 = vector.shape_cast %356 : vector<1x16x16xf32> to vector<16x16xf32>
    %358 = vector.shape_cast %355 : vector<16x16xf32> to vector<1x16x16xf32>
    tpu.vector_store %arg9[%c1_215, %c1_216, %c1_217], %358 {strides = array<i32>} : memref<8x18x18xf32, #tpu.memory_space<vmem>>, vector<1x16x16xf32>,
    %c218 = arith.constant 218 : index
    %359 = memref.load %arg1[%c218] : memref<337xf32, #tpu.memory_space<smem>>
    %360 = vector.broadcast %359 : f32 to vector<16x16xf32>
    %c54 = arith.constant 54 : index
    %361 = memref.load %arg1[%c54] : memref<337xf32, #tpu.memory_space<smem>>
    %c0_218 = arith.constant 0 : index
    %c0_219 = arith.constant 0 : index
    %c0_220 = arith.constant 0 : index
    %362 = vector.load %arg8[%c0_218, %c0_219, %c0_220] : memref<3x18x18xf32, #tpu.memory_space<vmem>>, vector<1x16x16xf32>
    %363 = vector.shape_cast %362 : vector<1x16x16xf32> to vector<16x16xf32>
    %364 = vector.broadcast %361 : f32 to vector<16x16xf32>
    %365 = arith.mulf %364, %363 : vector<16x16xf32>
    %366 = arith.addf %360, %365 : vector<16x16xf32>
    %c55 = arith.constant 55 : index
    %367 = memref.load %arg1[%c55] : memref<337xf32, #tpu.memory_space<smem>>
    %c0_221 = arith.constant 0 : index
    %c0_222 = arith.constant 0 : index
    %c1_223 = arith.constant 1 : index
    %368 = vector.load %arg8[%c0_221, %c0_222, %c1_223] : memref<3x18x18xf32, #tpu.memory_space<vmem>>, vector<1x16x16xf32>
    %369 = vector.shape_cast %368 : vector<1x16x16xf32> to vector<16x16xf32>
    %370 = vector.broadcast %367 : f32 to vector<16x16xf32>
    %371 = arith.mulf %370, %369 : vector<16x16xf32>
    %372 = arith.addf %366, %371 : vector<16x16xf32>
    %c56 = arith.constant 56 : index
    %373 = memref.load %arg1[%c56] : memref<337xf32, #tpu.memory_space<smem>>
    %c0_224 = arith.constant 0 : index
    %c0_225 = arith.constant 0 : index
    %c2_226 = arith.constant 2 : index
    %374 = vector.load %arg8[%c0_224, %c0_225, %c2_226] : memref<3x18x18xf32, #tpu.memory_space<vmem>>, vector<1x16x16xf32>
    %375 = vector.shape_cast %374 : vector<1x16x16xf32> to vector<16x16xf32>
    %376 = vector.broadcast %373 : f32 to vector<16x16xf32>
    %377 = arith.mulf %376, %375 : vector<16x16xf32>
    %378 = arith.addf %372, %377 : vector<16x16xf32>
    %c57 = arith.constant 57 : index
    %379 = memref.load %arg1[%c57] : memref<337xf32, #tpu.memory_space<smem>>
    %c0_227 = arith.constant 0 : index
    %c1_228 = arith.constant 1 : index
    %c0_229 = arith.constant 0 : index
    %380 = vector.load %arg8[%c0_227, %c1_228, %c0_229] : memref<3x18x18xf32, #tpu.memory_space<vmem>>, vector<1x16x16xf32>
    %381 = vector.shape_cast %380 : vector<1x16x16xf32> to vector<16x16xf32>
    %382 = vector.broadcast %379 : f32 to vector<16x16xf32>
    %383 = arith.mulf %382, %381 : vector<16x16xf32>
    %384 = arith.addf %378, %383 : vector<16x16xf32>
    %c58 = arith.constant 58 : index
    %385 = memref.load %arg1[%c58] : memref<337xf32, #tpu.memory_space<smem>>
    %c0_230 = arith.constant 0 : index
    %c1_231 = arith.constant 1 : index
    %c1_232 = arith.constant 1 : index
    %386 = vector.load %arg8[%c0_230, %c1_231, %c1_232] : memref<3x18x18xf32, #tpu.memory_space<vmem>>, vector<1x16x16xf32>
    %387 = vector.shape_cast %386 : vector<1x16x16xf32> to vector<16x16xf32>
    %388 = vector.broadcast %385 : f32 to vector<16x16xf32>
    %389 = arith.mulf %388, %387 : vector<16x16xf32>
    %390 = arith.addf %384, %389 : vector<16x16xf32>
    %c59 = arith.constant 59 : index
    %391 = memref.load %arg1[%c59] : memref<337xf32, #tpu.memory_space<smem>>
    %c0_233 = arith.constant 0 : index
    %c1_234 = arith.constant 1 : index
    %c2_235 = arith.constant 2 : index
    %392 = vector.load %arg8[%c0_233, %c1_234, %c2_235] : memref<3x18x18xf32, #tpu.memory_space<vmem>>, vector<1x16x16xf32>
    %393 = vector.shape_cast %392 : vector<1x16x16xf32> to vector<16x16xf32>
    %394 = vector.broadcast %391 : f32 to vector<16x16xf32>
    %395 = arith.mulf %394, %393 : vector<16x16xf32>
    %396 = arith.addf %390, %395 : vector<16x16xf32>
    %c60 = arith.constant 60 : index
    %397 = memref.load %arg1[%c60] : memref<337xf32, #tpu.memory_space<smem>>
    %c0_236 = arith.constant 0 : index
    %c2_237 = arith.constant 2 : index
    %c0_238 = arith.constant 0 : index
    %398 = vector.load %arg8[%c0_236, %c2_237, %c0_238] : memref<3x18x18xf32, #tpu.memory_space<vmem>>, vector<1x16x16xf32>
    %399 = vector.shape_cast %398 : vector<1x16x16xf32> to vector<16x16xf32>
    %400 = vector.broadcast %397 : f32 to vector<16x16xf32>
    %401 = arith.mulf %400, %399 : vector<16x16xf32>
    %402 = arith.addf %396, %401 : vector<16x16xf32>
    %c61 = arith.constant 61 : index
    %403 = memref.load %arg1[%c61] : memref<337xf32, #tpu.memory_space<smem>>
    %c0_239 = arith.constant 0 : index
    %c2_240 = arith.constant 2 : index
    %c1_241 = arith.constant 1 : index
    %404 = vector.load %arg8[%c0_239, %c2_240, %c1_241] : memref<3x18x18xf32, #tpu.memory_space<vmem>>, vector<1x16x16xf32>
    %405 = vector.shape_cast %404 : vector<1x16x16xf32> to vector<16x16xf32>
    %406 = vector.broadcast %403 : f32 to vector<16x16xf32>
    %407 = arith.mulf %406, %405 : vector<16x16xf32>
    %408 = arith.addf %402, %407 : vector<16x16xf32>
    %c62 = arith.constant 62 : index
    %409 = memref.load %arg1[%c62] : memref<337xf32, #tpu.memory_space<smem>>
    %c0_242 = arith.constant 0 : index
    %c2_243 = arith.constant 2 : index
    %c2_244 = arith.constant 2 : index
    %410 = vector.load %arg8[%c0_242, %c2_243, %c2_244] : memref<3x18x18xf32, #tpu.memory_space<vmem>>, vector<1x16x16xf32>
    %411 = vector.shape_cast %410 : vector<1x16x16xf32> to vector<16x16xf32>
    %412 = vector.broadcast %409 : f32 to vector<16x16xf32>
    %413 = arith.mulf %412, %411 : vector<16x16xf32>
    %414 = arith.addf %408, %413 : vector<16x16xf32>
    %c63 = arith.constant 63 : index
    %415 = memref.load %arg1[%c63] : memref<337xf32, #tpu.memory_space<smem>>
    %c1_245 = arith.constant 1 : index
    %c0_246 = arith.constant 0 : index
    %c0_247 = arith.constant 0 : index
    %416 = vector.load %arg8[%c1_245, %c0_246, %c0_247] : memref<3x18x18xf32, #tpu.memory_space<vmem>>, vector<1x16x16xf32>
    %417 = vector.shape_cast %416 : vector<1x16x16xf32> to vector<16x16xf32>
    %418 = vector.broadcast %415 : f32 to vector<16x16xf32>
    %419 = arith.mulf %418, %417 : vector<16x16xf32>
    %420 = arith.addf %414, %419 : vector<16x16xf32>
    %c64 = arith.constant 64 : index
    %421 = memref.load %arg1[%c64] : memref<337xf32, #tpu.memory_space<smem>>
    %c1_248 = arith.constant 1 : index
    %c0_249 = arith.constant 0 : index
    %c1_250 = arith.constant 1 : index
    %422 = vector.load %arg8[%c1_248, %c0_249, %c1_250] : memref<3x18x18xf32, #tpu.memory_space<vmem>>, vector<1x16x16xf32>
    %423 = vector.shape_cast %422 : vector<1x16x16xf32> to vector<16x16xf32>
    %424 = vector.broadcast %421 : f32 to vector<16x16xf32>
    %425 = arith.mulf %424, %423 : vector<16x16xf32>
    %426 = arith.addf %420, %425 : vector<16x16xf32>
    %c65 = arith.constant 65 : index
    %427 = memref.load %arg1[%c65] : memref<337xf32, #tpu.memory_space<smem>>
    %c1_251 = arith.constant 1 : index
    %c0_252 = arith.constant 0 : index
    %c2_253 = arith.constant 2 : index
    %428 = vector.load %arg8[%c1_251, %c0_252, %c2_253] : memref<3x18x18xf32, #tpu.memory_space<vmem>>, vector<1x16x16xf32>
    %429 = vector.shape_cast %428 : vector<1x16x16xf32> to vector<16x16xf32>
    %430 = vector.broadcast %427 : f32 to vector<16x16xf32>
    %431 = arith.mulf %430, %429 : vector<16x16xf32>
    %432 = arith.addf %426, %431 : vector<16x16xf32>
    %c66 = arith.constant 66 : index
    %433 = memref.load %arg1[%c66] : memref<337xf32, #tpu.memory_space<smem>>
    %c1_254 = arith.constant 1 : index
    %c1_255 = arith.constant 1 : index
    %c0_256 = arith.constant 0 : index
    %434 = vector.load %arg8[%c1_254, %c1_255, %c0_256] : memref<3x18x18xf32, #tpu.memory_space<vmem>>, vector<1x16x16xf32>
    %435 = vector.shape_cast %434 : vector<1x16x16xf32> to vector<16x16xf32>
    %436 = vector.broadcast %433 : f32 to vector<16x16xf32>
    %437 = arith.mulf %436, %435 : vector<16x16xf32>
    %438 = arith.addf %432, %437 : vector<16x16xf32>
    %c67 = arith.constant 67 : index
    %439 = memref.load %arg1[%c67] : memref<337xf32, #tpu.memory_space<smem>>
    %c1_257 = arith.constant 1 : index
    %c1_258 = arith.constant 1 : index
    %c1_259 = arith.constant 1 : index
    %440 = vector.load %arg8[%c1_257, %c1_258, %c1_259] : memref<3x18x18xf32, #tpu.memory_space<vmem>>, vector<1x16x16xf32>
    %441 = vector.shape_cast %440 : vector<1x16x16xf32> to vector<16x16xf32>
    %442 = vector.broadcast %439 : f32 to vector<16x16xf32>
    %443 = arith.mulf %442, %441 : vector<16x16xf32>
    %444 = arith.addf %438, %443 : vector<16x16xf32>
    %c68 = arith.constant 68 : index
    %445 = memref.load %arg1[%c68] : memref<337xf32, #tpu.memory_space<smem>>
    %c1_260 = arith.constant 1 : index
    %c1_261 = arith.constant 1 : index
    %c2_262 = arith.constant 2 : index
    %446 = vector.load %arg8[%c1_260, %c1_261, %c2_262] : memref<3x18x18xf32, #tpu.memory_space<vmem>>, vector<1x16x16xf32>
    %447 = vector.shape_cast %446 : vector<1x16x16xf32> to vector<16x16xf32>
    %448 = vector.broadcast %445 : f32 to vector<16x16xf32>
    %449 = arith.mulf %448, %447 : vector<16x16xf32>
    %450 = arith.addf %444, %449 : vector<16x16xf32>
    %c69 = arith.constant 69 : index
    %451 = memref.load %arg1[%c69] : memref<337xf32, #tpu.memory_space<smem>>
    %c1_263 = arith.constant 1 : index
    %c2_264 = arith.constant 2 : index
    %c0_265 = arith.constant 0 : index
    %452 = vector.load %arg8[%c1_263, %c2_264, %c0_265] : memref<3x18x18xf32, #tpu.memory_space<vmem>>, vector<1x16x16xf32>
    %453 = vector.shape_cast %452 : vector<1x16x16xf32> to vector<16x16xf32>
    %454 = vector.broadcast %451 : f32 to vector<16x16xf32>
    %455 = arith.mulf %454, %453 : vector<16x16xf32>
    %456 = arith.addf %450, %455 : vector<16x16xf32>
    %c70 = arith.constant 70 : index
    %457 = memref.load %arg1[%c70] : memref<337xf32, #tpu.memory_space<smem>>
    %c1_266 = arith.constant 1 : index
    %c2_267 = arith.constant 2 : index
    %c1_268 = arith.constant 1 : index
    %458 = vector.load %arg8[%c1_266, %c2_267, %c1_268] : memref<3x18x18xf32, #tpu.memory_space<vmem>>, vector<1x16x16xf32>
    %459 = vector.shape_cast %458 : vector<1x16x16xf32> to vector<16x16xf32>
    %460 = vector.broadcast %457 : f32 to vector<16x16xf32>
    %461 = arith.mulf %460, %459 : vector<16x16xf32>
    %462 = arith.addf %456, %461 : vector<16x16xf32>
    %c71 = arith.constant 71 : index
    %463 = memref.load %arg1[%c71] : memref<337xf32, #tpu.memory_space<smem>>
    %c1_269 = arith.constant 1 : index
    %c2_270 = arith.constant 2 : index
    %c2_271 = arith.constant 2 : index
    %464 = vector.load %arg8[%c1_269, %c2_270, %c2_271] : memref<3x18x18xf32, #tpu.memory_space<vmem>>, vector<1x16x16xf32>
    %465 = vector.shape_cast %464 : vector<1x16x16xf32> to vector<16x16xf32>
    %466 = vector.broadcast %463 : f32 to vector<16x16xf32>
    %467 = arith.mulf %466, %465 : vector<16x16xf32>
    %468 = arith.addf %462, %467 : vector<16x16xf32>
    %c72 = arith.constant 72 : index
    %469 = memref.load %arg1[%c72] : memref<337xf32, #tpu.memory_space<smem>>
    %c2_272 = arith.constant 2 : index
    %c0_273 = arith.constant 0 : index
    %c0_274 = arith.constant 0 : index
    %470 = vector.load %arg8[%c2_272, %c0_273, %c0_274] : memref<3x18x18xf32, #tpu.memory_space<vmem>>, vector<1x16x16xf32>
    %471 = vector.shape_cast %470 : vector<1x16x16xf32> to vector<16x16xf32>
    %472 = vector.broadcast %469 : f32 to vector<16x16xf32>
    %473 = arith.mulf %472, %471 : vector<16x16xf32>
    %474 = arith.addf %468, %473 : vector<16x16xf32>
    %c73 = arith.constant 73 : index
    %475 = memref.load %arg1[%c73] : memref<337xf32, #tpu.memory_space<smem>>
    %c2_275 = arith.constant 2 : index
    %c0_276 = arith.constant 0 : index
    %c1_277 = arith.constant 1 : index
    %476 = vector.load %arg8[%c2_275, %c0_276, %c1_277] : memref<3x18x18xf32, #tpu.memory_space<vmem>>, vector<1x16x16xf32>
    %477 = vector.shape_cast %476 : vector<1x16x16xf32> to vector<16x16xf32>
    %478 = vector.broadcast %475 : f32 to vector<16x16xf32>
    %479 = arith.mulf %478, %477 : vector<16x16xf32>
    %480 = arith.addf %474, %479 : vector<16x16xf32>
    %c74 = arith.constant 74 : index
    %481 = memref.load %arg1[%c74] : memref<337xf32, #tpu.memory_space<smem>>
    %c2_278 = arith.constant 2 : index
    %c0_279 = arith.constant 0 : index
    %c2_280 = arith.constant 2 : index
    %482 = vector.load %arg8[%c2_278, %c0_279, %c2_280] : memref<3x18x18xf32, #tpu.memory_space<vmem>>, vector<1x16x16xf32>
    %483 = vector.shape_cast %482 : vector<1x16x16xf32> to vector<16x16xf32>
    %484 = vector.broadcast %481 : f32 to vector<16x16xf32>
    %485 = arith.mulf %484, %483 : vector<16x16xf32>
    %486 = arith.addf %480, %485 : vector<16x16xf32>
    %c75 = arith.constant 75 : index
    %487 = memref.load %arg1[%c75] : memref<337xf32, #tpu.memory_space<smem>>
    %c2_281 = arith.constant 2 : index
    %c1_282 = arith.constant 1 : index
    %c0_283 = arith.constant 0 : index
    %488 = vector.load %arg8[%c2_281, %c1_282, %c0_283] : memref<3x18x18xf32, #tpu.memory_space<vmem>>, vector<1x16x16xf32>
    %489 = vector.shape_cast %488 : vector<1x16x16xf32> to vector<16x16xf32>
    %490 = vector.broadcast %487 : f32 to vector<16x16xf32>
    %491 = arith.mulf %490, %489 : vector<16x16xf32>
    %492 = arith.addf %486, %491 : vector<16x16xf32>
    %c76 = arith.constant 76 : index
    %493 = memref.load %arg1[%c76] : memref<337xf32, #tpu.memory_space<smem>>
    %c2_284 = arith.constant 2 : index
    %c1_285 = arith.constant 1 : index
    %c1_286 = arith.constant 1 : index
    %494 = vector.load %arg8[%c2_284, %c1_285, %c1_286] : memref<3x18x18xf32, #tpu.memory_space<vmem>>, vector<1x16x16xf32>
    %495 = vector.shape_cast %494 : vector<1x16x16xf32> to vector<16x16xf32>
    %496 = vector.broadcast %493 : f32 to vector<16x16xf32>
    %497 = arith.mulf %496, %495 : vector<16x16xf32>
    %498 = arith.addf %492, %497 : vector<16x16xf32>
    %c77 = arith.constant 77 : index
    %499 = memref.load %arg1[%c77] : memref<337xf32, #tpu.memory_space<smem>>
    %c2_287 = arith.constant 2 : index
    %c1_288 = arith.constant 1 : index
    %c2_289 = arith.constant 2 : index
    %500 = vector.load %arg8[%c2_287, %c1_288, %c2_289] : memref<3x18x18xf32, #tpu.memory_space<vmem>>, vector<1x16x16xf32>
    %501 = vector.shape_cast %500 : vector<1x16x16xf32> to vector<16x16xf32>
    %502 = vector.broadcast %499 : f32 to vector<16x16xf32>
    %503 = arith.mulf %502, %501 : vector<16x16xf32>
    %504 = arith.addf %498, %503 : vector<16x16xf32>
    %c78 = arith.constant 78 : index
    %505 = memref.load %arg1[%c78] : memref<337xf32, #tpu.memory_space<smem>>
    %c2_290 = arith.constant 2 : index
    %c2_291 = arith.constant 2 : index
    %c0_292 = arith.constant 0 : index
    %506 = vector.load %arg8[%c2_290, %c2_291, %c0_292] : memref<3x18x18xf32, #tpu.memory_space<vmem>>, vector<1x16x16xf32>
    %507 = vector.shape_cast %506 : vector<1x16x16xf32> to vector<16x16xf32>
    %508 = vector.broadcast %505 : f32 to vector<16x16xf32>
    %509 = arith.mulf %508, %507 : vector<16x16xf32>
    %510 = arith.addf %504, %509 : vector<16x16xf32>
    %c79 = arith.constant 79 : index
    %511 = memref.load %arg1[%c79] : memref<337xf32, #tpu.memory_space<smem>>
    %c2_293 = arith.constant 2 : index
    %c2_294 = arith.constant 2 : index
    %c1_295 = arith.constant 1 : index
    %512 = vector.load %arg8[%c2_293, %c2_294, %c1_295] : memref<3x18x18xf32, #tpu.memory_space<vmem>>, vector<1x16x16xf32>
    %513 = vector.shape_cast %512 : vector<1x16x16xf32> to vector<16x16xf32>
    %514 = vector.broadcast %511 : f32 to vector<16x16xf32>
    %515 = arith.mulf %514, %513 : vector<16x16xf32>
    %516 = arith.addf %510, %515 : vector<16x16xf32>
    %c80 = arith.constant 80 : index
    %517 = memref.load %arg1[%c80] : memref<337xf32, #tpu.memory_space<smem>>
    %c2_296 = arith.constant 2 : index
    %c2_297 = arith.constant 2 : index
    %c2_298 = arith.constant 2 : index
    %518 = vector.load %arg8[%c2_296, %c2_297, %c2_298] : memref<3x18x18xf32, #tpu.memory_space<vmem>>, vector<1x16x16xf32>
    %519 = vector.shape_cast %518 : vector<1x16x16xf32> to vector<16x16xf32>
    %520 = vector.broadcast %517 : f32 to vector<16x16xf32>
    %521 = arith.mulf %520, %519 : vector<16x16xf32>
    %522 = arith.addf %516, %521 : vector<16x16xf32>
    %cst_299 = arith.constant 0.000000e+00 : f32
    %523 = vector.broadcast %cst_299 : f32 to vector<16x16xf32>
    %524 = arith.maximumf %522, %523 : vector<16x16xf32>
    %c2_300 = arith.constant 2 : index
    %c1_301 = arith.constant 1 : index
    %c1_302 = arith.constant 1 : index
    %525 = vector.load %arg9[%c2_300, %c1_301, %c1_302] : memref<8x18x18xf32, #tpu.memory_space<vmem>>, vector<1x16x16xf32>
    %526 = vector.shape_cast %525 : vector<1x16x16xf32> to vector<16x16xf32>
    %527 = vector.shape_cast %524 : vector<16x16xf32> to vector<1x16x16xf32>
    tpu.vector_store %arg9[%c2_300, %c1_301, %c1_302], %527 {strides = array<i32>} : memref<8x18x18xf32, #tpu.memory_space<vmem>>, vector<1x16x16xf32>,
    %c219 = arith.constant 219 : index
    %528 = memref.load %arg1[%c219] : memref<337xf32, #tpu.memory_space<smem>>
    %529 = vector.broadcast %528 : f32 to vector<16x16xf32>
    %c81 = arith.constant 81 : index
    %530 = memref.load %arg1[%c81] : memref<337xf32, #tpu.memory_space<smem>>
    %c0_303 = arith.constant 0 : index
    %c0_304 = arith.constant 0 : index
    %c0_305 = arith.constant 0 : index
    %531 = vector.load %arg8[%c0_303, %c0_304, %c0_305] : memref<3x18x18xf32, #tpu.memory_space<vmem>>, vector<1x16x16xf32>
    %532 = vector.shape_cast %531 : vector<1x16x16xf32> to vector<16x16xf32>
    %533 = vector.broadcast %530 : f32 to vector<16x16xf32>
    %534 = arith.mulf %533, %532 : vector<16x16xf32>
    %535 = arith.addf %529, %534 : vector<16x16xf32>
    %c82 = arith.constant 82 : index
    %536 = memref.load %arg1[%c82] : memref<337xf32, #tpu.memory_space<smem>>
    %c0_306 = arith.constant 0 : index
    %c0_307 = arith.constant 0 : index
    %c1_308 = arith.constant 1 : index
    %537 = vector.load %arg8[%c0_306, %c0_307, %c1_308] : memref<3x18x18xf32, #tpu.memory_space<vmem>>, vector<1x16x16xf32>
    %538 = vector.shape_cast %537 : vector<1x16x16xf32> to vector<16x16xf32>
    %539 = vector.broadcast %536 : f32 to vector<16x16xf32>
    %540 = arith.mulf %539, %538 : vector<16x16xf32>
    %541 = arith.addf %535, %540 : vector<16x16xf32>
    %c83 = arith.constant 83 : index
    %542 = memref.load %arg1[%c83] : memref<337xf32, #tpu.memory_space<smem>>
    %c0_309 = arith.constant 0 : index
    %c0_310 = arith.constant 0 : index
    %c2_311 = arith.constant 2 : index
    %543 = vector.load %arg8[%c0_309, %c0_310, %c2_311] : memref<3x18x18xf32, #tpu.memory_space<vmem>>, vector<1x16x16xf32>
    %544 = vector.shape_cast %543 : vector<1x16x16xf32> to vector<16x16xf32>
    %545 = vector.broadcast %542 : f32 to vector<16x16xf32>
    %546 = arith.mulf %545, %544 : vector<16x16xf32>
    %547 = arith.addf %541, %546 : vector<16x16xf32>
    %c84 = arith.constant 84 : index
    %548 = memref.load %arg1[%c84] : memref<337xf32, #tpu.memory_space<smem>>
    %c0_312 = arith.constant 0 : index
    %c1_313 = arith.constant 1 : index
    %c0_314 = arith.constant 0 : index
    %549 = vector.load %arg8[%c0_312, %c1_313, %c0_314] : memref<3x18x18xf32, #tpu.memory_space<vmem>>, vector<1x16x16xf32>
    %550 = vector.shape_cast %549 : vector<1x16x16xf32> to vector<16x16xf32>
    %551 = vector.broadcast %548 : f32 to vector<16x16xf32>
    %552 = arith.mulf %551, %550 : vector<16x16xf32>
    %553 = arith.addf %547, %552 : vector<16x16xf32>
    %c85 = arith.constant 85 : index
    %554 = memref.load %arg1[%c85] : memref<337xf32, #tpu.memory_space<smem>>
    %c0_315 = arith.constant 0 : index
    %c1_316 = arith.constant 1 : index
    %c1_317 = arith.constant 1 : index
    %555 = vector.load %arg8[%c0_315, %c1_316, %c1_317] : memref<3x18x18xf32, #tpu.memory_space<vmem>>, vector<1x16x16xf32>
    %556 = vector.shape_cast %555 : vector<1x16x16xf32> to vector<16x16xf32>
    %557 = vector.broadcast %554 : f32 to vector<16x16xf32>
    %558 = arith.mulf %557, %556 : vector<16x16xf32>
    %559 = arith.addf %553, %558 : vector<16x16xf32>
    %c86 = arith.constant 86 : index
    %560 = memref.load %arg1[%c86] : memref<337xf32, #tpu.memory_space<smem>>
    %c0_318 = arith.constant 0 : index
    %c1_319 = arith.constant 1 : index
    %c2_320 = arith.constant 2 : index
    %561 = vector.load %arg8[%c0_318, %c1_319, %c2_320] : memref<3x18x18xf32, #tpu.memory_space<vmem>>, vector<1x16x16xf32>
    %562 = vector.shape_cast %561 : vector<1x16x16xf32> to vector<16x16xf32>
    %563 = vector.broadcast %560 : f32 to vector<16x16xf32>
    %564 = arith.mulf %563, %562 : vector<16x16xf32>
    %565 = arith.addf %559, %564 : vector<16x16xf32>
    %c87 = arith.constant 87 : index
    %566 = memref.load %arg1[%c87] : memref<337xf32, #tpu.memory_space<smem>>
    %c0_321 = arith.constant 0 : index
    %c2_322 = arith.constant 2 : index
    %c0_323 = arith.constant 0 : index
    %567 = vector.load %arg8[%c0_321, %c2_322, %c0_323] : memref<3x18x18xf32, #tpu.memory_space<vmem>>, vector<1x16x16xf32>
    %568 = vector.shape_cast %567 : vector<1x16x16xf32> to vector<16x16xf32>
    %569 = vector.broadcast %566 : f32 to vector<16x16xf32>
    %570 = arith.mulf %569, %568 : vector<16x16xf32>
    %571 = arith.addf %565, %570 : vector<16x16xf32>
    %c88 = arith.constant 88 : index
    %572 = memref.load %arg1[%c88] : memref<337xf32, #tpu.memory_space<smem>>
    %c0_324 = arith.constant 0 : index
    %c2_325 = arith.constant 2 : index
    %c1_326 = arith.constant 1 : index
    %573 = vector.load %arg8[%c0_324, %c2_325, %c1_326] : memref<3x18x18xf32, #tpu.memory_space<vmem>>, vector<1x16x16xf32>
    %574 = vector.shape_cast %573 : vector<1x16x16xf32> to vector<16x16xf32>
    %575 = vector.broadcast %572 : f32 to vector<16x16xf32>
    %576 = arith.mulf %575, %574 : vector<16x16xf32>
    %577 = arith.addf %571, %576 : vector<16x16xf32>
    %c89 = arith.constant 89 : index
    %578 = memref.load %arg1[%c89] : memref<337xf32, #tpu.memory_space<smem>>
    %c0_327 = arith.constant 0 : index
    %c2_328 = arith.constant 2 : index
    %c2_329 = arith.constant 2 : index
    %579 = vector.load %arg8[%c0_327, %c2_328, %c2_329] : memref<3x18x18xf32, #tpu.memory_space<vmem>>, vector<1x16x16xf32>
    %580 = vector.shape_cast %579 : vector<1x16x16xf32> to vector<16x16xf32>
    %581 = vector.broadcast %578 : f32 to vector<16x16xf32>
    %582 = arith.mulf %581, %580 : vector<16x16xf32>
    %583 = arith.addf %577, %582 : vector<16x16xf32>
    %c90 = arith.constant 90 : index
    %584 = memref.load %arg1[%c90] : memref<337xf32, #tpu.memory_space<smem>>
    %c1_330 = arith.constant 1 : index
    %c0_331 = arith.constant 0 : index
    %c0_332 = arith.constant 0 : index
    %585 = vector.load %arg8[%c1_330, %c0_331, %c0_332] : memref<3x18x18xf32, #tpu.memory_space<vmem>>, vector<1x16x16xf32>
    %586 = vector.shape_cast %585 : vector<1x16x16xf32> to vector<16x16xf32>
    %587 = vector.broadcast %584 : f32 to vector<16x16xf32>
    %588 = arith.mulf %587, %586 : vector<16x16xf32>
    %589 = arith.addf %583, %588 : vector<16x16xf32>
    %c91 = arith.constant 91 : index
    %590 = memref.load %arg1[%c91] : memref<337xf32, #tpu.memory_space<smem>>
    %c1_333 = arith.constant 1 : index
    %c0_334 = arith.constant 0 : index
    %c1_335 = arith.constant 1 : index
    %591 = vector.load %arg8[%c1_333, %c0_334, %c1_335] : memref<3x18x18xf32, #tpu.memory_space<vmem>>, vector<1x16x16xf32>
    %592 = vector.shape_cast %591 : vector<1x16x16xf32> to vector<16x16xf32>
    %593 = vector.broadcast %590 : f32 to vector<16x16xf32>
    %594 = arith.mulf %593, %592 : vector<16x16xf32>
    %595 = arith.addf %589, %594 : vector<16x16xf32>
    %c92 = arith.constant 92 : index
    %596 = memref.load %arg1[%c92] : memref<337xf32, #tpu.memory_space<smem>>
    %c1_336 = arith.constant 1 : index
    %c0_337 = arith.constant 0 : index
    %c2_338 = arith.constant 2 : index
    %597 = vector.load %arg8[%c1_336, %c0_337, %c2_338] : memref<3x18x18xf32, #tpu.memory_space<vmem>>, vector<1x16x16xf32>
    %598 = vector.shape_cast %597 : vector<1x16x16xf32> to vector<16x16xf32>
    %599 = vector.broadcast %596 : f32 to vector<16x16xf32>
    %600 = arith.mulf %599, %598 : vector<16x16xf32>
    %601 = arith.addf %595, %600 : vector<16x16xf32>
    %c93 = arith.constant 93 : index
    %602 = memref.load %arg1[%c93] : memref<337xf32, #tpu.memory_space<smem>>
    %c1_339 = arith.constant 1 : index
    %c1_340 = arith.constant 1 : index
    %c0_341 = arith.constant 0 : index
    %603 = vector.load %arg8[%c1_339, %c1_340, %c0_341] : memref<3x18x18xf32, #tpu.memory_space<vmem>>, vector<1x16x16xf32>
    %604 = vector.shape_cast %603 : vector<1x16x16xf32> to vector<16x16xf32>
    %605 = vector.broadcast %602 : f32 to vector<16x16xf32>
    %606 = arith.mulf %605, %604 : vector<16x16xf32>
    %607 = arith.addf %601, %606 : vector<16x16xf32>
    %c94 = arith.constant 94 : index
    %608 = memref.load %arg1[%c94] : memref<337xf32, #tpu.memory_space<smem>>
    %c1_342 = arith.constant 1 : index
    %c1_343 = arith.constant 1 : index
    %c1_344 = arith.constant 1 : index
    %609 = vector.load %arg8[%c1_342, %c1_343, %c1_344] : memref<3x18x18xf32, #tpu.memory_space<vmem>>, vector<1x16x16xf32>
    %610 = vector.shape_cast %609 : vector<1x16x16xf32> to vector<16x16xf32>
    %611 = vector.broadcast %608 : f32 to vector<16x16xf32>
    %612 = arith.mulf %611, %610 : vector<16x16xf32>
    %613 = arith.addf %607, %612 : vector<16x16xf32>
    %c95 = arith.constant 95 : index
    %614 = memref.load %arg1[%c95] : memref<337xf32, #tpu.memory_space<smem>>
    %c1_345 = arith.constant 1 : index
    %c1_346 = arith.constant 1 : index
    %c2_347 = arith.constant 2 : index
    %615 = vector.load %arg8[%c1_345, %c1_346, %c2_347] : memref<3x18x18xf32, #tpu.memory_space<vmem>>, vector<1x16x16xf32>
    %616 = vector.shape_cast %615 : vector<1x16x16xf32> to vector<16x16xf32>
    %617 = vector.broadcast %614 : f32 to vector<16x16xf32>
    %618 = arith.mulf %617, %616 : vector<16x16xf32>
    %619 = arith.addf %613, %618 : vector<16x16xf32>
    %c96 = arith.constant 96 : index
    %620 = memref.load %arg1[%c96] : memref<337xf32, #tpu.memory_space<smem>>
    %c1_348 = arith.constant 1 : index
    %c2_349 = arith.constant 2 : index
    %c0_350 = arith.constant 0 : index
    %621 = vector.load %arg8[%c1_348, %c2_349, %c0_350] : memref<3x18x18xf32, #tpu.memory_space<vmem>>, vector<1x16x16xf32>
    %622 = vector.shape_cast %621 : vector<1x16x16xf32> to vector<16x16xf32>
    %623 = vector.broadcast %620 : f32 to vector<16x16xf32>
    %624 = arith.mulf %623, %622 : vector<16x16xf32>
    %625 = arith.addf %619, %624 : vector<16x16xf32>
    %c97 = arith.constant 97 : index
    %626 = memref.load %arg1[%c97] : memref<337xf32, #tpu.memory_space<smem>>
    %c1_351 = arith.constant 1 : index
    %c2_352 = arith.constant 2 : index
    %c1_353 = arith.constant 1 : index
    %627 = vector.load %arg8[%c1_351, %c2_352, %c1_353] : memref<3x18x18xf32, #tpu.memory_space<vmem>>, vector<1x16x16xf32>
    %628 = vector.shape_cast %627 : vector<1x16x16xf32> to vector<16x16xf32>
    %629 = vector.broadcast %626 : f32 to vector<16x16xf32>
    %630 = arith.mulf %629, %628 : vector<16x16xf32>
    %631 = arith.addf %625, %630 : vector<16x16xf32>
    %c98 = arith.constant 98 : index
    %632 = memref.load %arg1[%c98] : memref<337xf32, #tpu.memory_space<smem>>
    %c1_354 = arith.constant 1 : index
    %c2_355 = arith.constant 2 : index
    %c2_356 = arith.constant 2 : index
    %633 = vector.load %arg8[%c1_354, %c2_355, %c2_356] : memref<3x18x18xf32, #tpu.memory_space<vmem>>, vector<1x16x16xf32>
    %634 = vector.shape_cast %633 : vector<1x16x16xf32> to vector<16x16xf32>
    %635 = vector.broadcast %632 : f32 to vector<16x16xf32>
    %636 = arith.mulf %635, %634 : vector<16x16xf32>
    %637 = arith.addf %631, %636 : vector<16x16xf32>
    %c99 = arith.constant 99 : index
    %638 = memref.load %arg1[%c99] : memref<337xf32, #tpu.memory_space<smem>>
    %c2_357 = arith.constant 2 : index
    %c0_358 = arith.constant 0 : index
    %c0_359 = arith.constant 0 : index
    %639 = vector.load %arg8[%c2_357, %c0_358, %c0_359] : memref<3x18x18xf32, #tpu.memory_space<vmem>>, vector<1x16x16xf32>
    %640 = vector.shape_cast %639 : vector<1x16x16xf32> to vector<16x16xf32>
    %641 = vector.broadcast %638 : f32 to vector<16x16xf32>
    %642 = arith.mulf %641, %640 : vector<16x16xf32>
    %643 = arith.addf %637, %642 : vector<16x16xf32>
    %c100 = arith.constant 100 : index
    %644 = memref.load %arg1[%c100] : memref<337xf32, #tpu.memory_space<smem>>
    %c2_360 = arith.constant 2 : index
    %c0_361 = arith.constant 0 : index
    %c1_362 = arith.constant 1 : index
    %645 = vector.load %arg8[%c2_360, %c0_361, %c1_362] : memref<3x18x18xf32, #tpu.memory_space<vmem>>, vector<1x16x16xf32>
    %646 = vector.shape_cast %645 : vector<1x16x16xf32> to vector<16x16xf32>
    %647 = vector.broadcast %644 : f32 to vector<16x16xf32>
    %648 = arith.mulf %647, %646 : vector<16x16xf32>
    %649 = arith.addf %643, %648 : vector<16x16xf32>
    %c101 = arith.constant 101 : index
    %650 = memref.load %arg1[%c101] : memref<337xf32, #tpu.memory_space<smem>>
    %c2_363 = arith.constant 2 : index
    %c0_364 = arith.constant 0 : index
    %c2_365 = arith.constant 2 : index
    %651 = vector.load %arg8[%c2_363, %c0_364, %c2_365] : memref<3x18x18xf32, #tpu.memory_space<vmem>>, vector<1x16x16xf32>
    %652 = vector.shape_cast %651 : vector<1x16x16xf32> to vector<16x16xf32>
    %653 = vector.broadcast %650 : f32 to vector<16x16xf32>
    %654 = arith.mulf %653, %652 : vector<16x16xf32>
    %655 = arith.addf %649, %654 : vector<16x16xf32>
    %c102 = arith.constant 102 : index
    %656 = memref.load %arg1[%c102] : memref<337xf32, #tpu.memory_space<smem>>
    %c2_366 = arith.constant 2 : index
    %c1_367 = arith.constant 1 : index
    %c0_368 = arith.constant 0 : index
    %657 = vector.load %arg8[%c2_366, %c1_367, %c0_368] : memref<3x18x18xf32, #tpu.memory_space<vmem>>, vector<1x16x16xf32>
    %658 = vector.shape_cast %657 : vector<1x16x16xf32> to vector<16x16xf32>
    %659 = vector.broadcast %656 : f32 to vector<16x16xf32>
    %660 = arith.mulf %659, %658 : vector<16x16xf32>
    %661 = arith.addf %655, %660 : vector<16x16xf32>
    %c103 = arith.constant 103 : index
    %662 = memref.load %arg1[%c103] : memref<337xf32, #tpu.memory_space<smem>>
    %c2_369 = arith.constant 2 : index
    %c1_370 = arith.constant 1 : index
    %c1_371 = arith.constant 1 : index
    %663 = vector.load %arg8[%c2_369, %c1_370, %c1_371] : memref<3x18x18xf32, #tpu.memory_space<vmem>>, vector<1x16x16xf32>
    %664 = vector.shape_cast %663 : vector<1x16x16xf32> to vector<16x16xf32>
    %665 = vector.broadcast %662 : f32 to vector<16x16xf32>
    %666 = arith.mulf %665, %664 : vector<16x16xf32>
    %667 = arith.addf %661, %666 : vector<16x16xf32>
    %c104 = arith.constant 104 : index
    %668 = memref.load %arg1[%c104] : memref<337xf32, #tpu.memory_space<smem>>
    %c2_372 = arith.constant 2 : index
    %c1_373 = arith.constant 1 : index
    %c2_374 = arith.constant 2 : index
    %669 = vector.load %arg8[%c2_372, %c1_373, %c2_374] : memref<3x18x18xf32, #tpu.memory_space<vmem>>, vector<1x16x16xf32>
    %670 = vector.shape_cast %669 : vector<1x16x16xf32> to vector<16x16xf32>
    %671 = vector.broadcast %668 : f32 to vector<16x16xf32>
    %672 = arith.mulf %671, %670 : vector<16x16xf32>
    %673 = arith.addf %667, %672 : vector<16x16xf32>
    %c105 = arith.constant 105 : index
    %674 = memref.load %arg1[%c105] : memref<337xf32, #tpu.memory_space<smem>>
    %c2_375 = arith.constant 2 : index
    %c2_376 = arith.constant 2 : index
    %c0_377 = arith.constant 0 : index
    %675 = vector.load %arg8[%c2_375, %c2_376, %c0_377] : memref<3x18x18xf32, #tpu.memory_space<vmem>>, vector<1x16x16xf32>
    %676 = vector.shape_cast %675 : vector<1x16x16xf32> to vector<16x16xf32>
    %677 = vector.broadcast %674 : f32 to vector<16x16xf32>
    %678 = arith.mulf %677, %676 : vector<16x16xf32>
    %679 = arith.addf %673, %678 : vector<16x16xf32>
    %c106 = arith.constant 106 : index
    %680 = memref.load %arg1[%c106] : memref<337xf32, #tpu.memory_space<smem>>
    %c2_378 = arith.constant 2 : index
    %c2_379 = arith.constant 2 : index
    %c1_380 = arith.constant 1 : index
    %681 = vector.load %arg8[%c2_378, %c2_379, %c1_380] : memref<3x18x18xf32, #tpu.memory_space<vmem>>, vector<1x16x16xf32>
    %682 = vector.shape_cast %681 : vector<1x16x16xf32> to vector<16x16xf32>
    %683 = vector.broadcast %680 : f32 to vector<16x16xf32>
    %684 = arith.mulf %683, %682 : vector<16x16xf32>
    %685 = arith.addf %679, %684 : vector<16x16xf32>
    %c107 = arith.constant 107 : index
    %686 = memref.load %arg1[%c107] : memref<337xf32, #tpu.memory_space<smem>>
    %c2_381 = arith.constant 2 : index
    %c2_382 = arith.constant 2 : index
    %c2_383 = arith.constant 2 : index
    %687 = vector.load %arg8[%c2_381, %c2_382, %c2_383] : memref<3x18x18xf32, #tpu.memory_space<vmem>>, vector<1x16x16xf32>
    %688 = vector.shape_cast %687 : vector<1x16x16xf32> to vector<16x16xf32>
    %689 = vector.broadcast %686 : f32 to vector<16x16xf32>
    %690 = arith.mulf %689, %688 : vector<16x16xf32>
    %691 = arith.addf %685, %690 : vector<16x16xf32>
    %cst_384 = arith.constant 0.000000e+00 : f32
    %692 = vector.broadcast %cst_384 : f32 to vector<16x16xf32>
    %693 = arith.maximumf %691, %692 : vector<16x16xf32>
    %c3_385 = arith.constant 3 : index
    %c1_386 = arith.constant 1 : index
    %c1_387 = arith.constant 1 : index
    %694 = vector.load %arg9[%c3_385, %c1_386, %c1_387] : memref<8x18x18xf32, #tpu.memory_space<vmem>>, vector<1x16x16xf32>
    %695 = vector.shape_cast %694 : vector<1x16x16xf32> to vector<16x16xf32>
    %696 = vector.shape_cast %693 : vector<16x16xf32> to vector<1x16x16xf32>
    tpu.vector_store %arg9[%c3_385, %c1_386, %c1_387], %696 {strides = array<i32>} : memref<8x18x18xf32, #tpu.memory_space<vmem>>, vector<1x16x16xf32>,
    %c220 = arith.constant 220 : index
    %697 = memref.load %arg1[%c220] : memref<337xf32, #tpu.memory_space<smem>>
    %698 = vector.broadcast %697 : f32 to vector<16x16xf32>
    %c108 = arith.constant 108 : index
    %699 = memref.load %arg1[%c108] : memref<337xf32, #tpu.memory_space<smem>>
    %c0_388 = arith.constant 0 : index
    %c0_389 = arith.constant 0 : index
    %c0_390 = arith.constant 0 : index
    %700 = vector.load %arg8[%c0_388, %c0_389, %c0_390] : memref<3x18x18xf32, #tpu.memory_space<vmem>>, vector<1x16x16xf32>
    %701 = vector.shape_cast %700 : vector<1x16x16xf32> to vector<16x16xf32>
    %702 = vector.broadcast %699 : f32 to vector<16x16xf32>
    %703 = arith.mulf %702, %701 : vector<16x16xf32>
    %704 = arith.addf %698, %703 : vector<16x16xf32>
    %c109 = arith.constant 109 : index
    %705 = memref.load %arg1[%c109] : memref<337xf32, #tpu.memory_space<smem>>
    %c0_391 = arith.constant 0 : index
    %c0_392 = arith.constant 0 : index
    %c1_393 = arith.constant 1 : index
    %706 = vector.load %arg8[%c0_391, %c0_392, %c1_393] : memref<3x18x18xf32, #tpu.memory_space<vmem>>, vector<1x16x16xf32>
    %707 = vector.shape_cast %706 : vector<1x16x16xf32> to vector<16x16xf32>
    %708 = vector.broadcast %705 : f32 to vector<16x16xf32>
    %709 = arith.mulf %708, %707 : vector<16x16xf32>
    %710 = arith.addf %704, %709 : vector<16x16xf32>
    %c110 = arith.constant 110 : index
    %711 = memref.load %arg1[%c110] : memref<337xf32, #tpu.memory_space<smem>>
    %c0_394 = arith.constant 0 : index
    %c0_395 = arith.constant 0 : index
    %c2_396 = arith.constant 2 : index
    %712 = vector.load %arg8[%c0_394, %c0_395, %c2_396] : memref<3x18x18xf32, #tpu.memory_space<vmem>>, vector<1x16x16xf32>
    %713 = vector.shape_cast %712 : vector<1x16x16xf32> to vector<16x16xf32>
    %714 = vector.broadcast %711 : f32 to vector<16x16xf32>
    %715 = arith.mulf %714, %713 : vector<16x16xf32>
    %716 = arith.addf %710, %715 : vector<16x16xf32>
    %c111 = arith.constant 111 : index
    %717 = memref.load %arg1[%c111] : memref<337xf32, #tpu.memory_space<smem>>
    %c0_397 = arith.constant 0 : index
    %c1_398 = arith.constant 1 : index
    %c0_399 = arith.constant 0 : index
    %718 = vector.load %arg8[%c0_397, %c1_398, %c0_399] : memref<3x18x18xf32, #tpu.memory_space<vmem>>, vector<1x16x16xf32>
    %719 = vector.shape_cast %718 : vector<1x16x16xf32> to vector<16x16xf32>
    %720 = vector.broadcast %717 : f32 to vector<16x16xf32>
    %721 = arith.mulf %720, %719 : vector<16x16xf32>
    %722 = arith.addf %716, %721 : vector<16x16xf32>
    %c112 = arith.constant 112 : index
    %723 = memref.load %arg1[%c112] : memref<337xf32, #tpu.memory_space<smem>>
    %c0_400 = arith.constant 0 : index
    %c1_401 = arith.constant 1 : index
    %c1_402 = arith.constant 1 : index
    %724 = vector.load %arg8[%c0_400, %c1_401, %c1_402] : memref<3x18x18xf32, #tpu.memory_space<vmem>>, vector<1x16x16xf32>
    %725 = vector.shape_cast %724 : vector<1x16x16xf32> to vector<16x16xf32>
    %726 = vector.broadcast %723 : f32 to vector<16x16xf32>
    %727 = arith.mulf %726, %725 : vector<16x16xf32>
    %728 = arith.addf %722, %727 : vector<16x16xf32>
    %c113 = arith.constant 113 : index
    %729 = memref.load %arg1[%c113] : memref<337xf32, #tpu.memory_space<smem>>
    %c0_403 = arith.constant 0 : index
    %c1_404 = arith.constant 1 : index
    %c2_405 = arith.constant 2 : index
    %730 = vector.load %arg8[%c0_403, %c1_404, %c2_405] : memref<3x18x18xf32, #tpu.memory_space<vmem>>, vector<1x16x16xf32>
    %731 = vector.shape_cast %730 : vector<1x16x16xf32> to vector<16x16xf32>
    %732 = vector.broadcast %729 : f32 to vector<16x16xf32>
    %733 = arith.mulf %732, %731 : vector<16x16xf32>
    %734 = arith.addf %728, %733 : vector<16x16xf32>
    %c114 = arith.constant 114 : index
    %735 = memref.load %arg1[%c114] : memref<337xf32, #tpu.memory_space<smem>>
    %c0_406 = arith.constant 0 : index
    %c2_407 = arith.constant 2 : index
    %c0_408 = arith.constant 0 : index
    %736 = vector.load %arg8[%c0_406, %c2_407, %c0_408] : memref<3x18x18xf32, #tpu.memory_space<vmem>>, vector<1x16x16xf32>
    %737 = vector.shape_cast %736 : vector<1x16x16xf32> to vector<16x16xf32>
    %738 = vector.broadcast %735 : f32 to vector<16x16xf32>
    %739 = arith.mulf %738, %737 : vector<16x16xf32>
    %740 = arith.addf %734, %739 : vector<16x16xf32>
    %c115 = arith.constant 115 : index
    %741 = memref.load %arg1[%c115] : memref<337xf32, #tpu.memory_space<smem>>
    %c0_409 = arith.constant 0 : index
    %c2_410 = arith.constant 2 : index
    %c1_411 = arith.constant 1 : index
    %742 = vector.load %arg8[%c0_409, %c2_410, %c1_411] : memref<3x18x18xf32, #tpu.memory_space<vmem>>, vector<1x16x16xf32>
    %743 = vector.shape_cast %742 : vector<1x16x16xf32> to vector<16x16xf32>
    %744 = vector.broadcast %741 : f32 to vector<16x16xf32>
    %745 = arith.mulf %744, %743 : vector<16x16xf32>
    %746 = arith.addf %740, %745 : vector<16x16xf32>
    %c116 = arith.constant 116 : index
    %747 = memref.load %arg1[%c116] : memref<337xf32, #tpu.memory_space<smem>>
    %c0_412 = arith.constant 0 : index
    %c2_413 = arith.constant 2 : index
    %c2_414 = arith.constant 2 : index
    %748 = vector.load %arg8[%c0_412, %c2_413, %c2_414] : memref<3x18x18xf32, #tpu.memory_space<vmem>>, vector<1x16x16xf32>
    %749 = vector.shape_cast %748 : vector<1x16x16xf32> to vector<16x16xf32>
    %750 = vector.broadcast %747 : f32 to vector<16x16xf32>
    %751 = arith.mulf %750, %749 : vector<16x16xf32>
    %752 = arith.addf %746, %751 : vector<16x16xf32>
    %c117 = arith.constant 117 : index
    %753 = memref.load %arg1[%c117] : memref<337xf32, #tpu.memory_space<smem>>
    %c1_415 = arith.constant 1 : index
    %c0_416 = arith.constant 0 : index
    %c0_417 = arith.constant 0 : index
    %754 = vector.load %arg8[%c1_415, %c0_416, %c0_417] : memref<3x18x18xf32, #tpu.memory_space<vmem>>, vector<1x16x16xf32>
    %755 = vector.shape_cast %754 : vector<1x16x16xf32> to vector<16x16xf32>
    %756 = vector.broadcast %753 : f32 to vector<16x16xf32>
    %757 = arith.mulf %756, %755 : vector<16x16xf32>
    %758 = arith.addf %752, %757 : vector<16x16xf32>
    %c118 = arith.constant 118 : index
    %759 = memref.load %arg1[%c118] : memref<337xf32, #tpu.memory_space<smem>>
    %c1_418 = arith.constant 1 : index
    %c0_419 = arith.constant 0 : index
    %c1_420 = arith.constant 1 : index
    %760 = vector.load %arg8[%c1_418, %c0_419, %c1_420] : memref<3x18x18xf32, #tpu.memory_space<vmem>>, vector<1x16x16xf32>
    %761 = vector.shape_cast %760 : vector<1x16x16xf32> to vector<16x16xf32>
    %762 = vector.broadcast %759 : f32 to vector<16x16xf32>
    %763 = arith.mulf %762, %761 : vector<16x16xf32>
    %764 = arith.addf %758, %763 : vector<16x16xf32>
    %c119 = arith.constant 119 : index
    %765 = memref.load %arg1[%c119] : memref<337xf32, #tpu.memory_space<smem>>
    %c1_421 = arith.constant 1 : index
    %c0_422 = arith.constant 0 : index
    %c2_423 = arith.constant 2 : index
    %766 = vector.load %arg8[%c1_421, %c0_422, %c2_423] : memref<3x18x18xf32, #tpu.memory_space<vmem>>, vector<1x16x16xf32>
    %767 = vector.shape_cast %766 : vector<1x16x16xf32> to vector<16x16xf32>
    %768 = vector.broadcast %765 : f32 to vector<16x16xf32>
    %769 = arith.mulf %768, %767 : vector<16x16xf32>
    %770 = arith.addf %764, %769 : vector<16x16xf32>
    %c120 = arith.constant 120 : index
    %771 = memref.load %arg1[%c120] : memref<337xf32, #tpu.memory_space<smem>>
    %c1_424 = arith.constant 1 : index
    %c1_425 = arith.constant 1 : index
    %c0_426 = arith.constant 0 : index
    %772 = vector.load %arg8[%c1_424, %c1_425, %c0_426] : memref<3x18x18xf32, #tpu.memory_space<vmem>>, vector<1x16x16xf32>
    %773 = vector.shape_cast %772 : vector<1x16x16xf32> to vector<16x16xf32>
    %774 = vector.broadcast %771 : f32 to vector<16x16xf32>
    %775 = arith.mulf %774, %773 : vector<16x16xf32>
    %776 = arith.addf %770, %775 : vector<16x16xf32>
    %c121 = arith.constant 121 : index
    %777 = memref.load %arg1[%c121] : memref<337xf32, #tpu.memory_space<smem>>
    %c1_427 = arith.constant 1 : index
    %c1_428 = arith.constant 1 : index
    %c1_429 = arith.constant 1 : index
    %778 = vector.load %arg8[%c1_427, %c1_428, %c1_429] : memref<3x18x18xf32, #tpu.memory_space<vmem>>, vector<1x16x16xf32>
    %779 = vector.shape_cast %778 : vector<1x16x16xf32> to vector<16x16xf32>
    %780 = vector.broadcast %777 : f32 to vector<16x16xf32>
    %781 = arith.mulf %780, %779 : vector<16x16xf32>
    %782 = arith.addf %776, %781 : vector<16x16xf32>
    %c122 = arith.constant 122 : index
    %783 = memref.load %arg1[%c122] : memref<337xf32, #tpu.memory_space<smem>>
    %c1_430 = arith.constant 1 : index
    %c1_431 = arith.constant 1 : index
    %c2_432 = arith.constant 2 : index
    %784 = vector.load %arg8[%c1_430, %c1_431, %c2_432] : memref<3x18x18xf32, #tpu.memory_space<vmem>>, vector<1x16x16xf32>
    %785 = vector.shape_cast %784 : vector<1x16x16xf32> to vector<16x16xf32>
    %786 = vector.broadcast %783 : f32 to vector<16x16xf32>
    %787 = arith.mulf %786, %785 : vector<16x16xf32>
    %788 = arith.addf %782, %787 : vector<16x16xf32>
    %c123 = arith.constant 123 : index
    %789 = memref.load %arg1[%c123] : memref<337xf32, #tpu.memory_space<smem>>
    %c1_433 = arith.constant 1 : index
    %c2_434 = arith.constant 2 : index
    %c0_435 = arith.constant 0 : index
    %790 = vector.load %arg8[%c1_433, %c2_434, %c0_435] : memref<3x18x18xf32, #tpu.memory_space<vmem>>, vector<1x16x16xf32>
    %791 = vector.shape_cast %790 : vector<1x16x16xf32> to vector<16x16xf32>
    %792 = vector.broadcast %789 : f32 to vector<16x16xf32>
    %793 = arith.mulf %792, %791 : vector<16x16xf32>
    %794 = arith.addf %788, %793 : vector<16x16xf32>
    %c124 = arith.constant 124 : index
    %795 = memref.load %arg1[%c124] : memref<337xf32, #tpu.memory_space<smem>>
    %c1_436 = arith.constant 1 : index
    %c2_437 = arith.constant 2 : index
    %c1_438 = arith.constant 1 : index
    %796 = vector.load %arg8[%c1_436, %c2_437, %c1_438] : memref<3x18x18xf32, #tpu.memory_space<vmem>>, vector<1x16x16xf32>
    %797 = vector.shape_cast %796 : vector<1x16x16xf32> to vector<16x16xf32>
    %798 = vector.broadcast %795 : f32 to vector<16x16xf32>
    %799 = arith.mulf %798, %797 : vector<16x16xf32>
    %800 = arith.addf %794, %799 : vector<16x16xf32>
    %c125 = arith.constant 125 : index
    %801 = memref.load %arg1[%c125] : memref<337xf32, #tpu.memory_space<smem>>
    %c1_439 = arith.constant 1 : index
    %c2_440 = arith.constant 2 : index
    %c2_441 = arith.constant 2 : index
    %802 = vector.load %arg8[%c1_439, %c2_440, %c2_441] : memref<3x18x18xf32, #tpu.memory_space<vmem>>, vector<1x16x16xf32>
    %803 = vector.shape_cast %802 : vector<1x16x16xf32> to vector<16x16xf32>
    %804 = vector.broadcast %801 : f32 to vector<16x16xf32>
    %805 = arith.mulf %804, %803 : vector<16x16xf32>
    %806 = arith.addf %800, %805 : vector<16x16xf32>
    %c126 = arith.constant 126 : index
    %807 = memref.load %arg1[%c126] : memref<337xf32, #tpu.memory_space<smem>>
    %c2_442 = arith.constant 2 : index
    %c0_443 = arith.constant 0 : index
    %c0_444 = arith.constant 0 : index
    %808 = vector.load %arg8[%c2_442, %c0_443, %c0_444] : memref<3x18x18xf32, #tpu.memory_space<vmem>>, vector<1x16x16xf32>
    %809 = vector.shape_cast %808 : vector<1x16x16xf32> to vector<16x16xf32>
    %810 = vector.broadcast %807 : f32 to vector<16x16xf32>
    %811 = arith.mulf %810, %809 : vector<16x16xf32>
    %812 = arith.addf %806, %811 : vector<16x16xf32>
    %c127 = arith.constant 127 : index
    %813 = memref.load %arg1[%c127] : memref<337xf32, #tpu.memory_space<smem>>
    %c2_445 = arith.constant 2 : index
    %c0_446 = arith.constant 0 : index
    %c1_447 = arith.constant 1 : index
    %814 = vector.load %arg8[%c2_445, %c0_446, %c1_447] : memref<3x18x18xf32, #tpu.memory_space<vmem>>, vector<1x16x16xf32>
    %815 = vector.shape_cast %814 : vector<1x16x16xf32> to vector<16x16xf32>
    %816 = vector.broadcast %813 : f32 to vector<16x16xf32>
    %817 = arith.mulf %816, %815 : vector<16x16xf32>
    %818 = arith.addf %812, %817 : vector<16x16xf32>
    %c128 = arith.constant 128 : index
    %819 = memref.load %arg1[%c128] : memref<337xf32, #tpu.memory_space<smem>>
    %c2_448 = arith.constant 2 : index
    %c0_449 = arith.constant 0 : index
    %c2_450 = arith.constant 2 : index
    %820 = vector.load %arg8[%c2_448, %c0_449, %c2_450] : memref<3x18x18xf32, #tpu.memory_space<vmem>>, vector<1x16x16xf32>
    %821 = vector.shape_cast %820 : vector<1x16x16xf32> to vector<16x16xf32>
    %822 = vector.broadcast %819 : f32 to vector<16x16xf32>
    %823 = arith.mulf %822, %821 : vector<16x16xf32>
    %824 = arith.addf %818, %823 : vector<16x16xf32>
    %c129 = arith.constant 129 : index
    %825 = memref.load %arg1[%c129] : memref<337xf32, #tpu.memory_space<smem>>
    %c2_451 = arith.constant 2 : index
    %c1_452 = arith.constant 1 : index
    %c0_453 = arith.constant 0 : index
    %826 = vector.load %arg8[%c2_451, %c1_452, %c0_453] : memref<3x18x18xf32, #tpu.memory_space<vmem>>, vector<1x16x16xf32>
    %827 = vector.shape_cast %826 : vector<1x16x16xf32> to vector<16x16xf32>
    %828 = vector.broadcast %825 : f32 to vector<16x16xf32>
    %829 = arith.mulf %828, %827 : vector<16x16xf32>
    %830 = arith.addf %824, %829 : vector<16x16xf32>
    %c130 = arith.constant 130 : index
    %831 = memref.load %arg1[%c130] : memref<337xf32, #tpu.memory_space<smem>>
    %c2_454 = arith.constant 2 : index
    %c1_455 = arith.constant 1 : index
    %c1_456 = arith.constant 1 : index
    %832 = vector.load %arg8[%c2_454, %c1_455, %c1_456] : memref<3x18x18xf32, #tpu.memory_space<vmem>>, vector<1x16x16xf32>
    %833 = vector.shape_cast %832 : vector<1x16x16xf32> to vector<16x16xf32>
    %834 = vector.broadcast %831 : f32 to vector<16x16xf32>
    %835 = arith.mulf %834, %833 : vector<16x16xf32>
    %836 = arith.addf %830, %835 : vector<16x16xf32>
    %c131 = arith.constant 131 : index
    %837 = memref.load %arg1[%c131] : memref<337xf32, #tpu.memory_space<smem>>
    %c2_457 = arith.constant 2 : index
    %c1_458 = arith.constant 1 : index
    %c2_459 = arith.constant 2 : index
    %838 = vector.load %arg8[%c2_457, %c1_458, %c2_459] : memref<3x18x18xf32, #tpu.memory_space<vmem>>, vector<1x16x16xf32>
    %839 = vector.shape_cast %838 : vector<1x16x16xf32> to vector<16x16xf32>
    %840 = vector.broadcast %837 : f32 to vector<16x16xf32>
    %841 = arith.mulf %840, %839 : vector<16x16xf32>
    %842 = arith.addf %836, %841 : vector<16x16xf32>
    %c132 = arith.constant 132 : index
    %843 = memref.load %arg1[%c132] : memref<337xf32, #tpu.memory_space<smem>>
    %c2_460 = arith.constant 2 : index
    %c2_461 = arith.constant 2 : index
    %c0_462 = arith.constant 0 : index
    %844 = vector.load %arg8[%c2_460, %c2_461, %c0_462] : memref<3x18x18xf32, #tpu.memory_space<vmem>>, vector<1x16x16xf32>
    %845 = vector.shape_cast %844 : vector<1x16x16xf32> to vector<16x16xf32>
    %846 = vector.broadcast %843 : f32 to vector<16x16xf32>
    %847 = arith.mulf %846, %845 : vector<16x16xf32>
    %848 = arith.addf %842, %847 : vector<16x16xf32>
    %c133 = arith.constant 133 : index
    %849 = memref.load %arg1[%c133] : memref<337xf32, #tpu.memory_space<smem>>
    %c2_463 = arith.constant 2 : index
    %c2_464 = arith.constant 2 : index
    %c1_465 = arith.constant 1 : index
    %850 = vector.load %arg8[%c2_463, %c2_464, %c1_465] : memref<3x18x18xf32, #tpu.memory_space<vmem>>, vector<1x16x16xf32>
    %851 = vector.shape_cast %850 : vector<1x16x16xf32> to vector<16x16xf32>
    %852 = vector.broadcast %849 : f32 to vector<16x16xf32>
    %853 = arith.mulf %852, %851 : vector<16x16xf32>
    %854 = arith.addf %848, %853 : vector<16x16xf32>
    %c134 = arith.constant 134 : index
    %855 = memref.load %arg1[%c134] : memref<337xf32, #tpu.memory_space<smem>>
    %c2_466 = arith.constant 2 : index
    %c2_467 = arith.constant 2 : index
    %c2_468 = arith.constant 2 : index
    %856 = vector.load %arg8[%c2_466, %c2_467, %c2_468] : memref<3x18x18xf32, #tpu.memory_space<vmem>>, vector<1x16x16xf32>
    %857 = vector.shape_cast %856 : vector<1x16x16xf32> to vector<16x16xf32>
    %858 = vector.broadcast %855 : f32 to vector<16x16xf32>
    %859 = arith.mulf %858, %857 : vector<16x16xf32>
    %860 = arith.addf %854, %859 : vector<16x16xf32>
    %cst_469 = arith.constant 0.000000e+00 : f32
    %861 = vector.broadcast %cst_469 : f32 to vector<16x16xf32>
    %862 = arith.maximumf %860, %861 : vector<16x16xf32>
    %c4_470 = arith.constant 4 : index
    %c1_471 = arith.constant 1 : index
    %c1_472 = arith.constant 1 : index
    %863 = vector.load %arg9[%c4_470, %c1_471, %c1_472] : memref<8x18x18xf32, #tpu.memory_space<vmem>>, vector<1x16x16xf32>
    %864 = vector.shape_cast %863 : vector<1x16x16xf32> to vector<16x16xf32>
    %865 = vector.shape_cast %862 : vector<16x16xf32> to vector<1x16x16xf32>
    tpu.vector_store %arg9[%c4_470, %c1_471, %c1_472], %865 {strides = array<i32>} : memref<8x18x18xf32, #tpu.memory_space<vmem>>, vector<1x16x16xf32>,
    %c221 = arith.constant 221 : index
    %866 = memref.load %arg1[%c221] : memref<337xf32, #tpu.memory_space<smem>>
    %867 = vector.broadcast %866 : f32 to vector<16x16xf32>
    %c135 = arith.constant 135 : index
    %868 = memref.load %arg1[%c135] : memref<337xf32, #tpu.memory_space<smem>>
    %c0_473 = arith.constant 0 : index
    %c0_474 = arith.constant 0 : index
    %c0_475 = arith.constant 0 : index
    %869 = vector.load %arg8[%c0_473, %c0_474, %c0_475] : memref<3x18x18xf32, #tpu.memory_space<vmem>>, vector<1x16x16xf32>
    %870 = vector.shape_cast %869 : vector<1x16x16xf32> to vector<16x16xf32>
    %871 = vector.broadcast %868 : f32 to vector<16x16xf32>
    %872 = arith.mulf %871, %870 : vector<16x16xf32>
    %873 = arith.addf %867, %872 : vector<16x16xf32>
    %c136 = arith.constant 136 : index
    %874 = memref.load %arg1[%c136] : memref<337xf32, #tpu.memory_space<smem>>
    %c0_476 = arith.constant 0 : index
    %c0_477 = arith.constant 0 : index
    %c1_478 = arith.constant 1 : index
    %875 = vector.load %arg8[%c0_476, %c0_477, %c1_478] : memref<3x18x18xf32, #tpu.memory_space<vmem>>, vector<1x16x16xf32>
    %876 = vector.shape_cast %875 : vector<1x16x16xf32> to vector<16x16xf32>
    %877 = vector.broadcast %874 : f32 to vector<16x16xf32>
    %878 = arith.mulf %877, %876 : vector<16x16xf32>
    %879 = arith.addf %873, %878 : vector<16x16xf32>
    %c137 = arith.constant 137 : index
    %880 = memref.load %arg1[%c137] : memref<337xf32, #tpu.memory_space<smem>>
    %c0_479 = arith.constant 0 : index
    %c0_480 = arith.constant 0 : index
    %c2_481 = arith.constant 2 : index
    %881 = vector.load %arg8[%c0_479, %c0_480, %c2_481] : memref<3x18x18xf32, #tpu.memory_space<vmem>>, vector<1x16x16xf32>
    %882 = vector.shape_cast %881 : vector<1x16x16xf32> to vector<16x16xf32>
    %883 = vector.broadcast %880 : f32 to vector<16x16xf32>
    %884 = arith.mulf %883, %882 : vector<16x16xf32>
    %885 = arith.addf %879, %884 : vector<16x16xf32>
    %c138 = arith.constant 138 : index
    %886 = memref.load %arg1[%c138] : memref<337xf32, #tpu.memory_space<smem>>
    %c0_482 = arith.constant 0 : index
    %c1_483 = arith.constant 1 : index
    %c0_484 = arith.constant 0 : index
    %887 = vector.load %arg8[%c0_482, %c1_483, %c0_484] : memref<3x18x18xf32, #tpu.memory_space<vmem>>, vector<1x16x16xf32>
    %888 = vector.shape_cast %887 : vector<1x16x16xf32> to vector<16x16xf32>
    %889 = vector.broadcast %886 : f32 to vector<16x16xf32>
    %890 = arith.mulf %889, %888 : vector<16x16xf32>
    %891 = arith.addf %885, %890 : vector<16x16xf32>
    %c139 = arith.constant 139 : index
    %892 = memref.load %arg1[%c139] : memref<337xf32, #tpu.memory_space<smem>>
    %c0_485 = arith.constant 0 : index
    %c1_486 = arith.constant 1 : index
    %c1_487 = arith.constant 1 : index
    %893 = vector.load %arg8[%c0_485, %c1_486, %c1_487] : memref<3x18x18xf32, #tpu.memory_space<vmem>>, vector<1x16x16xf32>
    %894 = vector.shape_cast %893 : vector<1x16x16xf32> to vector<16x16xf32>
    %895 = vector.broadcast %892 : f32 to vector<16x16xf32>
    %896 = arith.mulf %895, %894 : vector<16x16xf32>
    %897 = arith.addf %891, %896 : vector<16x16xf32>
    %c140 = arith.constant 140 : index
    %898 = memref.load %arg1[%c140] : memref<337xf32, #tpu.memory_space<smem>>
    %c0_488 = arith.constant 0 : index
    %c1_489 = arith.constant 1 : index
    %c2_490 = arith.constant 2 : index
    %899 = vector.load %arg8[%c0_488, %c1_489, %c2_490] : memref<3x18x18xf32, #tpu.memory_space<vmem>>, vector<1x16x16xf32>
    %900 = vector.shape_cast %899 : vector<1x16x16xf32> to vector<16x16xf32>
    %901 = vector.broadcast %898 : f32 to vector<16x16xf32>
    %902 = arith.mulf %901, %900 : vector<16x16xf32>
    %903 = arith.addf %897, %902 : vector<16x16xf32>
    %c141 = arith.constant 141 : index
    %904 = memref.load %arg1[%c141] : memref<337xf32, #tpu.memory_space<smem>>
    %c0_491 = arith.constant 0 : index
    %c2_492 = arith.constant 2 : index
    %c0_493 = arith.constant 0 : index
    %905 = vector.load %arg8[%c0_491, %c2_492, %c0_493] : memref<3x18x18xf32, #tpu.memory_space<vmem>>, vector<1x16x16xf32>
    %906 = vector.shape_cast %905 : vector<1x16x16xf32> to vector<16x16xf32>
    %907 = vector.broadcast %904 : f32 to vector<16x16xf32>
    %908 = arith.mulf %907, %906 : vector<16x16xf32>
    %909 = arith.addf %903, %908 : vector<16x16xf32>
    %c142 = arith.constant 142 : index
    %910 = memref.load %arg1[%c142] : memref<337xf32, #tpu.memory_space<smem>>
    %c0_494 = arith.constant 0 : index
    %c2_495 = arith.constant 2 : index
    %c1_496 = arith.constant 1 : index
    %911 = vector.load %arg8[%c0_494, %c2_495, %c1_496] : memref<3x18x18xf32, #tpu.memory_space<vmem>>, vector<1x16x16xf32>
    %912 = vector.shape_cast %911 : vector<1x16x16xf32> to vector<16x16xf32>
    %913 = vector.broadcast %910 : f32 to vector<16x16xf32>
    %914 = arith.mulf %913, %912 : vector<16x16xf32>
    %915 = arith.addf %909, %914 : vector<16x16xf32>
    %c143 = arith.constant 143 : index
    %916 = memref.load %arg1[%c143] : memref<337xf32, #tpu.memory_space<smem>>
    %c0_497 = arith.constant 0 : index
    %c2_498 = arith.constant 2 : index
    %c2_499 = arith.constant 2 : index
    %917 = vector.load %arg8[%c0_497, %c2_498, %c2_499] : memref<3x18x18xf32, #tpu.memory_space<vmem>>, vector<1x16x16xf32>
    %918 = vector.shape_cast %917 : vector<1x16x16xf32> to vector<16x16xf32>
    %919 = vector.broadcast %916 : f32 to vector<16x16xf32>
    %920 = arith.mulf %919, %918 : vector<16x16xf32>
    %921 = arith.addf %915, %920 : vector<16x16xf32>
    %c144 = arith.constant 144 : index
    %922 = memref.load %arg1[%c144] : memref<337xf32, #tpu.memory_space<smem>>
    %c1_500 = arith.constant 1 : index
    %c0_501 = arith.constant 0 : index
    %c0_502 = arith.constant 0 : index
    %923 = vector.load %arg8[%c1_500, %c0_501, %c0_502] : memref<3x18x18xf32, #tpu.memory_space<vmem>>, vector<1x16x16xf32>
    %924 = vector.shape_cast %923 : vector<1x16x16xf32> to vector<16x16xf32>
    %925 = vector.broadcast %922 : f32 to vector<16x16xf32>
    %926 = arith.mulf %925, %924 : vector<16x16xf32>
    %927 = arith.addf %921, %926 : vector<16x16xf32>
    %c145 = arith.constant 145 : index
    %928 = memref.load %arg1[%c145] : memref<337xf32, #tpu.memory_space<smem>>
    %c1_503 = arith.constant 1 : index
    %c0_504 = arith.constant 0 : index
    %c1_505 = arith.constant 1 : index
    %929 = vector.load %arg8[%c1_503, %c0_504, %c1_505] : memref<3x18x18xf32, #tpu.memory_space<vmem>>, vector<1x16x16xf32>
    %930 = vector.shape_cast %929 : vector<1x16x16xf32> to vector<16x16xf32>
    %931 = vector.broadcast %928 : f32 to vector<16x16xf32>
    %932 = arith.mulf %931, %930 : vector<16x16xf32>
    %933 = arith.addf %927, %932 : vector<16x16xf32>
    %c146 = arith.constant 146 : index
    %934 = memref.load %arg1[%c146] : memref<337xf32, #tpu.memory_space<smem>>
    %c1_506 = arith.constant 1 : index
    %c0_507 = arith.constant 0 : index
    %c2_508 = arith.constant 2 : index
    %935 = vector.load %arg8[%c1_506, %c0_507, %c2_508] : memref<3x18x18xf32, #tpu.memory_space<vmem>>, vector<1x16x16xf32>
    %936 = vector.shape_cast %935 : vector<1x16x16xf32> to vector<16x16xf32>
    %937 = vector.broadcast %934 : f32 to vector<16x16xf32>
    %938 = arith.mulf %937, %936 : vector<16x16xf32>
    %939 = arith.addf %933, %938 : vector<16x16xf32>
    %c147 = arith.constant 147 : index
    %940 = memref.load %arg1[%c147] : memref<337xf32, #tpu.memory_space<smem>>
    %c1_509 = arith.constant 1 : index
    %c1_510 = arith.constant 1 : index
    %c0_511 = arith.constant 0 : index
    %941 = vector.load %arg8[%c1_509, %c1_510, %c0_511] : memref<3x18x18xf32, #tpu.memory_space<vmem>>, vector<1x16x16xf32>
    %942 = vector.shape_cast %941 : vector<1x16x16xf32> to vector<16x16xf32>
    %943 = vector.broadcast %940 : f32 to vector<16x16xf32>
    %944 = arith.mulf %943, %942 : vector<16x16xf32>
    %945 = arith.addf %939, %944 : vector<16x16xf32>
    %c148 = arith.constant 148 : index
    %946 = memref.load %arg1[%c148] : memref<337xf32, #tpu.memory_space<smem>>
    %c1_512 = arith.constant 1 : index
    %c1_513 = arith.constant 1 : index
    %c1_514 = arith.constant 1 : index
    %947 = vector.load %arg8[%c1_512, %c1_513, %c1_514] : memref<3x18x18xf32, #tpu.memory_space<vmem>>, vector<1x16x16xf32>
    %948 = vector.shape_cast %947 : vector<1x16x16xf32> to vector<16x16xf32>
    %949 = vector.broadcast %946 : f32 to vector<16x16xf32>
    %950 = arith.mulf %949, %948 : vector<16x16xf32>
    %951 = arith.addf %945, %950 : vector<16x16xf32>
    %c149 = arith.constant 149 : index
    %952 = memref.load %arg1[%c149] : memref<337xf32, #tpu.memory_space<smem>>
    %c1_515 = arith.constant 1 : index
    %c1_516 = arith.constant 1 : index
    %c2_517 = arith.constant 2 : index
    %953 = vector.load %arg8[%c1_515, %c1_516, %c2_517] : memref<3x18x18xf32, #tpu.memory_space<vmem>>, vector<1x16x16xf32>
    %954 = vector.shape_cast %953 : vector<1x16x16xf32> to vector<16x16xf32>
    %955 = vector.broadcast %952 : f32 to vector<16x16xf32>
    %956 = arith.mulf %955, %954 : vector<16x16xf32>
    %957 = arith.addf %951, %956 : vector<16x16xf32>
    %c150 = arith.constant 150 : index
    %958 = memref.load %arg1[%c150] : memref<337xf32, #tpu.memory_space<smem>>
    %c1_518 = arith.constant 1 : index
    %c2_519 = arith.constant 2 : index
    %c0_520 = arith.constant 0 : index
    %959 = vector.load %arg8[%c1_518, %c2_519, %c0_520] : memref<3x18x18xf32, #tpu.memory_space<vmem>>, vector<1x16x16xf32>
    %960 = vector.shape_cast %959 : vector<1x16x16xf32> to vector<16x16xf32>
    %961 = vector.broadcast %958 : f32 to vector<16x16xf32>
    %962 = arith.mulf %961, %960 : vector<16x16xf32>
    %963 = arith.addf %957, %962 : vector<16x16xf32>
    %c151 = arith.constant 151 : index
    %964 = memref.load %arg1[%c151] : memref<337xf32, #tpu.memory_space<smem>>
    %c1_521 = arith.constant 1 : index
    %c2_522 = arith.constant 2 : index
    %c1_523 = arith.constant 1 : index
    %965 = vector.load %arg8[%c1_521, %c2_522, %c1_523] : memref<3x18x18xf32, #tpu.memory_space<vmem>>, vector<1x16x16xf32>
    %966 = vector.shape_cast %965 : vector<1x16x16xf32> to vector<16x16xf32>
    %967 = vector.broadcast %964 : f32 to vector<16x16xf32>
    %968 = arith.mulf %967, %966 : vector<16x16xf32>
    %969 = arith.addf %963, %968 : vector<16x16xf32>
    %c152 = arith.constant 152 : index
    %970 = memref.load %arg1[%c152] : memref<337xf32, #tpu.memory_space<smem>>
    %c1_524 = arith.constant 1 : index
    %c2_525 = arith.constant 2 : index
    %c2_526 = arith.constant 2 : index
    %971 = vector.load %arg8[%c1_524, %c2_525, %c2_526] : memref<3x18x18xf32, #tpu.memory_space<vmem>>, vector<1x16x16xf32>
    %972 = vector.shape_cast %971 : vector<1x16x16xf32> to vector<16x16xf32>
    %973 = vector.broadcast %970 : f32 to vector<16x16xf32>
    %974 = arith.mulf %973, %972 : vector<16x16xf32>
    %975 = arith.addf %969, %974 : vector<16x16xf32>
    %c153 = arith.constant 153 : index
    %976 = memref.load %arg1[%c153] : memref<337xf32, #tpu.memory_space<smem>>
    %c2_527 = arith.constant 2 : index
    %c0_528 = arith.constant 0 : index
    %c0_529 = arith.constant 0 : index
    %977 = vector.load %arg8[%c2_527, %c0_528, %c0_529] : memref<3x18x18xf32, #tpu.memory_space<vmem>>, vector<1x16x16xf32>
    %978 = vector.shape_cast %977 : vector<1x16x16xf32> to vector<16x16xf32>
    %979 = vector.broadcast %976 : f32 to vector<16x16xf32>
    %980 = arith.mulf %979, %978 : vector<16x16xf32>
    %981 = arith.addf %975, %980 : vector<16x16xf32>
    %c154 = arith.constant 154 : index
    %982 = memref.load %arg1[%c154] : memref<337xf32, #tpu.memory_space<smem>>
    %c2_530 = arith.constant 2 : index
    %c0_531 = arith.constant 0 : index
    %c1_532 = arith.constant 1 : index
    %983 = vector.load %arg8[%c2_530, %c0_531, %c1_532] : memref<3x18x18xf32, #tpu.memory_space<vmem>>, vector<1x16x16xf32>
    %984 = vector.shape_cast %983 : vector<1x16x16xf32> to vector<16x16xf32>
    %985 = vector.broadcast %982 : f32 to vector<16x16xf32>
    %986 = arith.mulf %985, %984 : vector<16x16xf32>
    %987 = arith.addf %981, %986 : vector<16x16xf32>
    %c155 = arith.constant 155 : index
    %988 = memref.load %arg1[%c155] : memref<337xf32, #tpu.memory_space<smem>>
    %c2_533 = arith.constant 2 : index
    %c0_534 = arith.constant 0 : index
    %c2_535 = arith.constant 2 : index
    %989 = vector.load %arg8[%c2_533, %c0_534, %c2_535] : memref<3x18x18xf32, #tpu.memory_space<vmem>>, vector<1x16x16xf32>
    %990 = vector.shape_cast %989 : vector<1x16x16xf32> to vector<16x16xf32>
    %991 = vector.broadcast %988 : f32 to vector<16x16xf32>
    %992 = arith.mulf %991, %990 : vector<16x16xf32>
    %993 = arith.addf %987, %992 : vector<16x16xf32>
    %c156 = arith.constant 156 : index
    %994 = memref.load %arg1[%c156] : memref<337xf32, #tpu.memory_space<smem>>
    %c2_536 = arith.constant 2 : index
    %c1_537 = arith.constant 1 : index
    %c0_538 = arith.constant 0 : index
    %995 = vector.load %arg8[%c2_536, %c1_537, %c0_538] : memref<3x18x18xf32, #tpu.memory_space<vmem>>, vector<1x16x16xf32>
    %996 = vector.shape_cast %995 : vector<1x16x16xf32> to vector<16x16xf32>
    %997 = vector.broadcast %994 : f32 to vector<16x16xf32>
    %998 = arith.mulf %997, %996 : vector<16x16xf32>
    %999 = arith.addf %993, %998 : vector<16x16xf32>
    %c157 = arith.constant 157 : index
    %1000 = memref.load %arg1[%c157] : memref<337xf32, #tpu.memory_space<smem>>
    %c2_539 = arith.constant 2 : index
    %c1_540 = arith.constant 1 : index
    %c1_541 = arith.constant 1 : index
    %1001 = vector.load %arg8[%c2_539, %c1_540, %c1_541] : memref<3x18x18xf32, #tpu.memory_space<vmem>>, vector<1x16x16xf32>
    %1002 = vector.shape_cast %1001 : vector<1x16x16xf32> to vector<16x16xf32>
    %1003 = vector.broadcast %1000 : f32 to vector<16x16xf32>
    %1004 = arith.mulf %1003, %1002 : vector<16x16xf32>
    %1005 = arith.addf %999, %1004 : vector<16x16xf32>
    %c158 = arith.constant 158 : index
    %1006 = memref.load %arg1[%c158] : memref<337xf32, #tpu.memory_space<smem>>
    %c2_542 = arith.constant 2 : index
    %c1_543 = arith.constant 1 : index
    %c2_544 = arith.constant 2 : index
    %1007 = vector.load %arg8[%c2_542, %c1_543, %c2_544] : memref<3x18x18xf32, #tpu.memory_space<vmem>>, vector<1x16x16xf32>
    %1008 = vector.shape_cast %1007 : vector<1x16x16xf32> to vector<16x16xf32>
    %1009 = vector.broadcast %1006 : f32 to vector<16x16xf32>
    %1010 = arith.mulf %1009, %1008 : vector<16x16xf32>
    %1011 = arith.addf %1005, %1010 : vector<16x16xf32>
    %c159 = arith.constant 159 : index
    %1012 = memref.load %arg1[%c159] : memref<337xf32, #tpu.memory_space<smem>>
    %c2_545 = arith.constant 2 : index
    %c2_546 = arith.constant 2 : index
    %c0_547 = arith.constant 0 : index
    %1013 = vector.load %arg8[%c2_545, %c2_546, %c0_547] : memref<3x18x18xf32, #tpu.memory_space<vmem>>, vector<1x16x16xf32>
    %1014 = vector.shape_cast %1013 : vector<1x16x16xf32> to vector<16x16xf32>
    %1015 = vector.broadcast %1012 : f32 to vector<16x16xf32>
    %1016 = arith.mulf %1015, %1014 : vector<16x16xf32>
    %1017 = arith.addf %1011, %1016 : vector<16x16xf32>
    %c160 = arith.constant 160 : index
    %1018 = memref.load %arg1[%c160] : memref<337xf32, #tpu.memory_space<smem>>
    %c2_548 = arith.constant 2 : index
    %c2_549 = arith.constant 2 : index
    %c1_550 = arith.constant 1 : index
    %1019 = vector.load %arg8[%c2_548, %c2_549, %c1_550] : memref<3x18x18xf32, #tpu.memory_space<vmem>>, vector<1x16x16xf32>
    %1020 = vector.shape_cast %1019 : vector<1x16x16xf32> to vector<16x16xf32>
    %1021 = vector.broadcast %1018 : f32 to vector<16x16xf32>
    %1022 = arith.mulf %1021, %1020 : vector<16x16xf32>
    %1023 = arith.addf %1017, %1022 : vector<16x16xf32>
    %c161 = arith.constant 161 : index
    %1024 = memref.load %arg1[%c161] : memref<337xf32, #tpu.memory_space<smem>>
    %c2_551 = arith.constant 2 : index
    %c2_552 = arith.constant 2 : index
    %c2_553 = arith.constant 2 : index
    %1025 = vector.load %arg8[%c2_551, %c2_552, %c2_553] : memref<3x18x18xf32, #tpu.memory_space<vmem>>, vector<1x16x16xf32>
    %1026 = vector.shape_cast %1025 : vector<1x16x16xf32> to vector<16x16xf32>
    %1027 = vector.broadcast %1024 : f32 to vector<16x16xf32>
    %1028 = arith.mulf %1027, %1026 : vector<16x16xf32>
    %1029 = arith.addf %1023, %1028 : vector<16x16xf32>
    %cst_554 = arith.constant 0.000000e+00 : f32
    %1030 = vector.broadcast %cst_554 : f32 to vector<16x16xf32>
    %1031 = arith.maximumf %1029, %1030 : vector<16x16xf32>
    %c5_555 = arith.constant 5 : index
    %c1_556 = arith.constant 1 : index
    %c1_557 = arith.constant 1 : index
    %1032 = vector.load %arg9[%c5_555, %c1_556, %c1_557] : memref<8x18x18xf32, #tpu.memory_space<vmem>>, vector<1x16x16xf32>
    %1033 = vector.shape_cast %1032 : vector<1x16x16xf32> to vector<16x16xf32>
    %1034 = vector.shape_cast %1031 : vector<16x16xf32> to vector<1x16x16xf32>
    tpu.vector_store %arg9[%c5_555, %c1_556, %c1_557], %1034 {strides = array<i32>} : memref<8x18x18xf32, #tpu.memory_space<vmem>>, vector<1x16x16xf32>,
    %c222 = arith.constant 222 : index
    %1035 = memref.load %arg1[%c222] : memref<337xf32, #tpu.memory_space<smem>>
    %1036 = vector.broadcast %1035 : f32 to vector<16x16xf32>
    %c162 = arith.constant 162 : index
    %1037 = memref.load %arg1[%c162] : memref<337xf32, #tpu.memory_space<smem>>
    %c0_558 = arith.constant 0 : index
    %c0_559 = arith.constant 0 : index
    %c0_560 = arith.constant 0 : index
    %1038 = vector.load %arg8[%c0_558, %c0_559, %c0_560] : memref<3x18x18xf32, #tpu.memory_space<vmem>>, vector<1x16x16xf32>
    %1039 = vector.shape_cast %1038 : vector<1x16x16xf32> to vector<16x16xf32>
    %1040 = vector.broadcast %1037 : f32 to vector<16x16xf32>
    %1041 = arith.mulf %1040, %1039 : vector<16x16xf32>
    %1042 = arith.addf %1036, %1041 : vector<16x16xf32>
    %c163 = arith.constant 163 : index
    %1043 = memref.load %arg1[%c163] : memref<337xf32, #tpu.memory_space<smem>>
    %c0_561 = arith.constant 0 : index
    %c0_562 = arith.constant 0 : index
    %c1_563 = arith.constant 1 : index
    %1044 = vector.load %arg8[%c0_561, %c0_562, %c1_563] : memref<3x18x18xf32, #tpu.memory_space<vmem>>, vector<1x16x16xf32>
    %1045 = vector.shape_cast %1044 : vector<1x16x16xf32> to vector<16x16xf32>
    %1046 = vector.broadcast %1043 : f32 to vector<16x16xf32>
    %1047 = arith.mulf %1046, %1045 : vector<16x16xf32>
    %1048 = arith.addf %1042, %1047 : vector<16x16xf32>
    %c164 = arith.constant 164 : index
    %1049 = memref.load %arg1[%c164] : memref<337xf32, #tpu.memory_space<smem>>
    %c0_564 = arith.constant 0 : index
    %c0_565 = arith.constant 0 : index
    %c2_566 = arith.constant 2 : index
    %1050 = vector.load %arg8[%c0_564, %c0_565, %c2_566] : memref<3x18x18xf32, #tpu.memory_space<vmem>>, vector<1x16x16xf32>
    %1051 = vector.shape_cast %1050 : vector<1x16x16xf32> to vector<16x16xf32>
    %1052 = vector.broadcast %1049 : f32 to vector<16x16xf32>
    %1053 = arith.mulf %1052, %1051 : vector<16x16xf32>
    %1054 = arith.addf %1048, %1053 : vector<16x16xf32>
    %c165 = arith.constant 165 : index
    %1055 = memref.load %arg1[%c165] : memref<337xf32, #tpu.memory_space<smem>>
    %c0_567 = arith.constant 0 : index
    %c1_568 = arith.constant 1 : index
    %c0_569 = arith.constant 0 : index
    %1056 = vector.load %arg8[%c0_567, %c1_568, %c0_569] : memref<3x18x18xf32, #tpu.memory_space<vmem>>, vector<1x16x16xf32>
    %1057 = vector.shape_cast %1056 : vector<1x16x16xf32> to vector<16x16xf32>
    %1058 = vector.broadcast %1055 : f32 to vector<16x16xf32>
    %1059 = arith.mulf %1058, %1057 : vector<16x16xf32>
    %1060 = arith.addf %1054, %1059 : vector<16x16xf32>
    %c166 = arith.constant 166 : index
    %1061 = memref.load %arg1[%c166] : memref<337xf32, #tpu.memory_space<smem>>
    %c0_570 = arith.constant 0 : index
    %c1_571 = arith.constant 1 : index
    %c1_572 = arith.constant 1 : index
    %1062 = vector.load %arg8[%c0_570, %c1_571, %c1_572] : memref<3x18x18xf32, #tpu.memory_space<vmem>>, vector<1x16x16xf32>
    %1063 = vector.shape_cast %1062 : vector<1x16x16xf32> to vector<16x16xf32>
    %1064 = vector.broadcast %1061 : f32 to vector<16x16xf32>
    %1065 = arith.mulf %1064, %1063 : vector<16x16xf32>
    %1066 = arith.addf %1060, %1065 : vector<16x16xf32>
    %c167 = arith.constant 167 : index
    %1067 = memref.load %arg1[%c167] : memref<337xf32, #tpu.memory_space<smem>>
    %c0_573 = arith.constant 0 : index
    %c1_574 = arith.constant 1 : index
    %c2_575 = arith.constant 2 : index
    %1068 = vector.load %arg8[%c0_573, %c1_574, %c2_575] : memref<3x18x18xf32, #tpu.memory_space<vmem>>, vector<1x16x16xf32>
    %1069 = vector.shape_cast %1068 : vector<1x16x16xf32> to vector<16x16xf32>
    %1070 = vector.broadcast %1067 : f32 to vector<16x16xf32>
    %1071 = arith.mulf %1070, %1069 : vector<16x16xf32>
    %1072 = arith.addf %1066, %1071 : vector<16x16xf32>
    %c168 = arith.constant 168 : index
    %1073 = memref.load %arg1[%c168] : memref<337xf32, #tpu.memory_space<smem>>
    %c0_576 = arith.constant 0 : index
    %c2_577 = arith.constant 2 : index
    %c0_578 = arith.constant 0 : index
    %1074 = vector.load %arg8[%c0_576, %c2_577, %c0_578] : memref<3x18x18xf32, #tpu.memory_space<vmem>>, vector<1x16x16xf32>
    %1075 = vector.shape_cast %1074 : vector<1x16x16xf32> to vector<16x16xf32>
    %1076 = vector.broadcast %1073 : f32 to vector<16x16xf32>
    %1077 = arith.mulf %1076, %1075 : vector<16x16xf32>
    %1078 = arith.addf %1072, %1077 : vector<16x16xf32>
    %c169 = arith.constant 169 : index
    %1079 = memref.load %arg1[%c169] : memref<337xf32, #tpu.memory_space<smem>>
    %c0_579 = arith.constant 0 : index
    %c2_580 = arith.constant 2 : index
    %c1_581 = arith.constant 1 : index
    %1080 = vector.load %arg8[%c0_579, %c2_580, %c1_581] : memref<3x18x18xf32, #tpu.memory_space<vmem>>, vector<1x16x16xf32>
    %1081 = vector.shape_cast %1080 : vector<1x16x16xf32> to vector<16x16xf32>
    %1082 = vector.broadcast %1079 : f32 to vector<16x16xf32>
    %1083 = arith.mulf %1082, %1081 : vector<16x16xf32>
    %1084 = arith.addf %1078, %1083 : vector<16x16xf32>
    %c170 = arith.constant 170 : index
    %1085 = memref.load %arg1[%c170] : memref<337xf32, #tpu.memory_space<smem>>
    %c0_582 = arith.constant 0 : index
    %c2_583 = arith.constant 2 : index
    %c2_584 = arith.constant 2 : index
    %1086 = vector.load %arg8[%c0_582, %c2_583, %c2_584] : memref<3x18x18xf32, #tpu.memory_space<vmem>>, vector<1x16x16xf32>
    %1087 = vector.shape_cast %1086 : vector<1x16x16xf32> to vector<16x16xf32>
    %1088 = vector.broadcast %1085 : f32 to vector<16x16xf32>
    %1089 = arith.mulf %1088, %1087 : vector<16x16xf32>
    %1090 = arith.addf %1084, %1089 : vector<16x16xf32>
    %c171 = arith.constant 171 : index
    %1091 = memref.load %arg1[%c171] : memref<337xf32, #tpu.memory_space<smem>>
    %c1_585 = arith.constant 1 : index
    %c0_586 = arith.constant 0 : index
    %c0_587 = arith.constant 0 : index
    %1092 = vector.load %arg8[%c1_585, %c0_586, %c0_587] : memref<3x18x18xf32, #tpu.memory_space<vmem>>, vector<1x16x16xf32>
    %1093 = vector.shape_cast %1092 : vector<1x16x16xf32> to vector<16x16xf32>
    %1094 = vector.broadcast %1091 : f32 to vector<16x16xf32>
    %1095 = arith.mulf %1094, %1093 : vector<16x16xf32>
    %1096 = arith.addf %1090, %1095 : vector<16x16xf32>
    %c172 = arith.constant 172 : index
    %1097 = memref.load %arg1[%c172] : memref<337xf32, #tpu.memory_space<smem>>
    %c1_588 = arith.constant 1 : index
    %c0_589 = arith.constant 0 : index
    %c1_590 = arith.constant 1 : index
    %1098 = vector.load %arg8[%c1_588, %c0_589, %c1_590] : memref<3x18x18xf32, #tpu.memory_space<vmem>>, vector<1x16x16xf32>
    %1099 = vector.shape_cast %1098 : vector<1x16x16xf32> to vector<16x16xf32>
    %1100 = vector.broadcast %1097 : f32 to vector<16x16xf32>
    %1101 = arith.mulf %1100, %1099 : vector<16x16xf32>
    %1102 = arith.addf %1096, %1101 : vector<16x16xf32>
    %c173 = arith.constant 173 : index
    %1103 = memref.load %arg1[%c173] : memref<337xf32, #tpu.memory_space<smem>>
    %c1_591 = arith.constant 1 : index
    %c0_592 = arith.constant 0 : index
    %c2_593 = arith.constant 2 : index
    %1104 = vector.load %arg8[%c1_591, %c0_592, %c2_593] : memref<3x18x18xf32, #tpu.memory_space<vmem>>, vector<1x16x16xf32>
    %1105 = vector.shape_cast %1104 : vector<1x16x16xf32> to vector<16x16xf32>
    %1106 = vector.broadcast %1103 : f32 to vector<16x16xf32>
    %1107 = arith.mulf %1106, %1105 : vector<16x16xf32>
    %1108 = arith.addf %1102, %1107 : vector<16x16xf32>
    %c174 = arith.constant 174 : index
    %1109 = memref.load %arg1[%c174] : memref<337xf32, #tpu.memory_space<smem>>
    %c1_594 = arith.constant 1 : index
    %c1_595 = arith.constant 1 : index
    %c0_596 = arith.constant 0 : index
    %1110 = vector.load %arg8[%c1_594, %c1_595, %c0_596] : memref<3x18x18xf32, #tpu.memory_space<vmem>>, vector<1x16x16xf32>
    %1111 = vector.shape_cast %1110 : vector<1x16x16xf32> to vector<16x16xf32>
    %1112 = vector.broadcast %1109 : f32 to vector<16x16xf32>
    %1113 = arith.mulf %1112, %1111 : vector<16x16xf32>
    %1114 = arith.addf %1108, %1113 : vector<16x16xf32>
    %c175 = arith.constant 175 : index
    %1115 = memref.load %arg1[%c175] : memref<337xf32, #tpu.memory_space<smem>>
    %c1_597 = arith.constant 1 : index
    %c1_598 = arith.constant 1 : index
    %c1_599 = arith.constant 1 : index
    %1116 = vector.load %arg8[%c1_597, %c1_598, %c1_599] : memref<3x18x18xf32, #tpu.memory_space<vmem>>, vector<1x16x16xf32>
    %1117 = vector.shape_cast %1116 : vector<1x16x16xf32> to vector<16x16xf32>
    %1118 = vector.broadcast %1115 : f32 to vector<16x16xf32>
    %1119 = arith.mulf %1118, %1117 : vector<16x16xf32>
    %1120 = arith.addf %1114, %1119 : vector<16x16xf32>
    %c176 = arith.constant 176 : index
    %1121 = memref.load %arg1[%c176] : memref<337xf32, #tpu.memory_space<smem>>
    %c1_600 = arith.constant 1 : index
    %c1_601 = arith.constant 1 : index
    %c2_602 = arith.constant 2 : index
    %1122 = vector.load %arg8[%c1_600, %c1_601, %c2_602] : memref<3x18x18xf32, #tpu.memory_space<vmem>>, vector<1x16x16xf32>
    %1123 = vector.shape_cast %1122 : vector<1x16x16xf32> to vector<16x16xf32>
    %1124 = vector.broadcast %1121 : f32 to vector<16x16xf32>
    %1125 = arith.mulf %1124, %1123 : vector<16x16xf32>
    %1126 = arith.addf %1120, %1125 : vector<16x16xf32>
    %c177 = arith.constant 177 : index
    %1127 = memref.load %arg1[%c177] : memref<337xf32, #tpu.memory_space<smem>>
    %c1_603 = arith.constant 1 : index
    %c2_604 = arith.constant 2 : index
    %c0_605 = arith.constant 0 : index
    %1128 = vector.load %arg8[%c1_603, %c2_604, %c0_605] : memref<3x18x18xf32, #tpu.memory_space<vmem>>, vector<1x16x16xf32>
    %1129 = vector.shape_cast %1128 : vector<1x16x16xf32> to vector<16x16xf32>
    %1130 = vector.broadcast %1127 : f32 to vector<16x16xf32>
    %1131 = arith.mulf %1130, %1129 : vector<16x16xf32>
    %1132 = arith.addf %1126, %1131 : vector<16x16xf32>
    %c178 = arith.constant 178 : index
    %1133 = memref.load %arg1[%c178] : memref<337xf32, #tpu.memory_space<smem>>
    %c1_606 = arith.constant 1 : index
    %c2_607 = arith.constant 2 : index
    %c1_608 = arith.constant 1 : index
    %1134 = vector.load %arg8[%c1_606, %c2_607, %c1_608] : memref<3x18x18xf32, #tpu.memory_space<vmem>>, vector<1x16x16xf32>
    %1135 = vector.shape_cast %1134 : vector<1x16x16xf32> to vector<16x16xf32>
    %1136 = vector.broadcast %1133 : f32 to vector<16x16xf32>
    %1137 = arith.mulf %1136, %1135 : vector<16x16xf32>
    %1138 = arith.addf %1132, %1137 : vector<16x16xf32>
    %c179 = arith.constant 179 : index
    %1139 = memref.load %arg1[%c179] : memref<337xf32, #tpu.memory_space<smem>>
    %c1_609 = arith.constant 1 : index
    %c2_610 = arith.constant 2 : index
    %c2_611 = arith.constant 2 : index
    %1140 = vector.load %arg8[%c1_609, %c2_610, %c2_611] : memref<3x18x18xf32, #tpu.memory_space<vmem>>, vector<1x16x16xf32>
    %1141 = vector.shape_cast %1140 : vector<1x16x16xf32> to vector<16x16xf32>
    %1142 = vector.broadcast %1139 : f32 to vector<16x16xf32>
    %1143 = arith.mulf %1142, %1141 : vector<16x16xf32>
    %1144 = arith.addf %1138, %1143 : vector<16x16xf32>
    %c180 = arith.constant 180 : index
    %1145 = memref.load %arg1[%c180] : memref<337xf32, #tpu.memory_space<smem>>
    %c2_612 = arith.constant 2 : index
    %c0_613 = arith.constant 0 : index
    %c0_614 = arith.constant 0 : index
    %1146 = vector.load %arg8[%c2_612, %c0_613, %c0_614] : memref<3x18x18xf32, #tpu.memory_space<vmem>>, vector<1x16x16xf32>
    %1147 = vector.shape_cast %1146 : vector<1x16x16xf32> to vector<16x16xf32>
    %1148 = vector.broadcast %1145 : f32 to vector<16x16xf32>
    %1149 = arith.mulf %1148, %1147 : vector<16x16xf32>
    %1150 = arith.addf %1144, %1149 : vector<16x16xf32>
    %c181 = arith.constant 181 : index
    %1151 = memref.load %arg1[%c181] : memref<337xf32, #tpu.memory_space<smem>>
    %c2_615 = arith.constant 2 : index
    %c0_616 = arith.constant 0 : index
    %c1_617 = arith.constant 1 : index
    %1152 = vector.load %arg8[%c2_615, %c0_616, %c1_617] : memref<3x18x18xf32, #tpu.memory_space<vmem>>, vector<1x16x16xf32>
    %1153 = vector.shape_cast %1152 : vector<1x16x16xf32> to vector<16x16xf32>
    %1154 = vector.broadcast %1151 : f32 to vector<16x16xf32>
    %1155 = arith.mulf %1154, %1153 : vector<16x16xf32>
    %1156 = arith.addf %1150, %1155 : vector<16x16xf32>
    %c182 = arith.constant 182 : index
    %1157 = memref.load %arg1[%c182] : memref<337xf32, #tpu.memory_space<smem>>
    %c2_618 = arith.constant 2 : index
    %c0_619 = arith.constant 0 : index
    %c2_620 = arith.constant 2 : index
    %1158 = vector.load %arg8[%c2_618, %c0_619, %c2_620] : memref<3x18x18xf32, #tpu.memory_space<vmem>>, vector<1x16x16xf32>
    %1159 = vector.shape_cast %1158 : vector<1x16x16xf32> to vector<16x16xf32>
    %1160 = vector.broadcast %1157 : f32 to vector<16x16xf32>
    %1161 = arith.mulf %1160, %1159 : vector<16x16xf32>
    %1162 = arith.addf %1156, %1161 : vector<16x16xf32>
    %c183 = arith.constant 183 : index
    %1163 = memref.load %arg1[%c183] : memref<337xf32, #tpu.memory_space<smem>>
    %c2_621 = arith.constant 2 : index
    %c1_622 = arith.constant 1 : index
    %c0_623 = arith.constant 0 : index
    %1164 = vector.load %arg8[%c2_621, %c1_622, %c0_623] : memref<3x18x18xf32, #tpu.memory_space<vmem>>, vector<1x16x16xf32>
    %1165 = vector.shape_cast %1164 : vector<1x16x16xf32> to vector<16x16xf32>
    %1166 = vector.broadcast %1163 : f32 to vector<16x16xf32>
    %1167 = arith.mulf %1166, %1165 : vector<16x16xf32>
    %1168 = arith.addf %1162, %1167 : vector<16x16xf32>
    %c184 = arith.constant 184 : index
    %1169 = memref.load %arg1[%c184] : memref<337xf32, #tpu.memory_space<smem>>
    %c2_624 = arith.constant 2 : index
    %c1_625 = arith.constant 1 : index
    %c1_626 = arith.constant 1 : index
    %1170 = vector.load %arg8[%c2_624, %c1_625, %c1_626] : memref<3x18x18xf32, #tpu.memory_space<vmem>>, vector<1x16x16xf32>
    %1171 = vector.shape_cast %1170 : vector<1x16x16xf32> to vector<16x16xf32>
    %1172 = vector.broadcast %1169 : f32 to vector<16x16xf32>
    %1173 = arith.mulf %1172, %1171 : vector<16x16xf32>
    %1174 = arith.addf %1168, %1173 : vector<16x16xf32>
    %c185 = arith.constant 185 : index
    %1175 = memref.load %arg1[%c185] : memref<337xf32, #tpu.memory_space<smem>>
    %c2_627 = arith.constant 2 : index
    %c1_628 = arith.constant 1 : index
    %c2_629 = arith.constant 2 : index
    %1176 = vector.load %arg8[%c2_627, %c1_628, %c2_629] : memref<3x18x18xf32, #tpu.memory_space<vmem>>, vector<1x16x16xf32>
    %1177 = vector.shape_cast %1176 : vector<1x16x16xf32> to vector<16x16xf32>
    %1178 = vector.broadcast %1175 : f32 to vector<16x16xf32>
    %1179 = arith.mulf %1178, %1177 : vector<16x16xf32>
    %1180 = arith.addf %1174, %1179 : vector<16x16xf32>
    %c186 = arith.constant 186 : index
    %1181 = memref.load %arg1[%c186] : memref<337xf32, #tpu.memory_space<smem>>
    %c2_630 = arith.constant 2 : index
    %c2_631 = arith.constant 2 : index
    %c0_632 = arith.constant 0 : index
    %1182 = vector.load %arg8[%c2_630, %c2_631, %c0_632] : memref<3x18x18xf32, #tpu.memory_space<vmem>>, vector<1x16x16xf32>
    %1183 = vector.shape_cast %1182 : vector<1x16x16xf32> to vector<16x16xf32>
    %1184 = vector.broadcast %1181 : f32 to vector<16x16xf32>
    %1185 = arith.mulf %1184, %1183 : vector<16x16xf32>
    %1186 = arith.addf %1180, %1185 : vector<16x16xf32>
    %c187 = arith.constant 187 : index
    %1187 = memref.load %arg1[%c187] : memref<337xf32, #tpu.memory_space<smem>>
    %c2_633 = arith.constant 2 : index
    %c2_634 = arith.constant 2 : index
    %c1_635 = arith.constant 1 : index
    %1188 = vector.load %arg8[%c2_633, %c2_634, %c1_635] : memref<3x18x18xf32, #tpu.memory_space<vmem>>, vector<1x16x16xf32>
    %1189 = vector.shape_cast %1188 : vector<1x16x16xf32> to vector<16x16xf32>
    %1190 = vector.broadcast %1187 : f32 to vector<16x16xf32>
    %1191 = arith.mulf %1190, %1189 : vector<16x16xf32>
    %1192 = arith.addf %1186, %1191 : vector<16x16xf32>
    %c188 = arith.constant 188 : index
    %1193 = memref.load %arg1[%c188] : memref<337xf32, #tpu.memory_space<smem>>
    %c2_636 = arith.constant 2 : index
    %c2_637 = arith.constant 2 : index
    %c2_638 = arith.constant 2 : index
    %1194 = vector.load %arg8[%c2_636, %c2_637, %c2_638] : memref<3x18x18xf32, #tpu.memory_space<vmem>>, vector<1x16x16xf32>
    %1195 = vector.shape_cast %1194 : vector<1x16x16xf32> to vector<16x16xf32>
    %1196 = vector.broadcast %1193 : f32 to vector<16x16xf32>
    %1197 = arith.mulf %1196, %1195 : vector<16x16xf32>
    %1198 = arith.addf %1192, %1197 : vector<16x16xf32>
    %cst_639 = arith.constant 0.000000e+00 : f32
    %1199 = vector.broadcast %cst_639 : f32 to vector<16x16xf32>
    %1200 = arith.maximumf %1198, %1199 : vector<16x16xf32>
    %c6_640 = arith.constant 6 : index
    %c1_641 = arith.constant 1 : index
    %c1_642 = arith.constant 1 : index
    %1201 = vector.load %arg9[%c6_640, %c1_641, %c1_642] : memref<8x18x18xf32, #tpu.memory_space<vmem>>, vector<1x16x16xf32>
    %1202 = vector.shape_cast %1201 : vector<1x16x16xf32> to vector<16x16xf32>
    %1203 = vector.shape_cast %1200 : vector<16x16xf32> to vector<1x16x16xf32>
    tpu.vector_store %arg9[%c6_640, %c1_641, %c1_642], %1203 {strides = array<i32>} : memref<8x18x18xf32, #tpu.memory_space<vmem>>, vector<1x16x16xf32>,
    %c223 = arith.constant 223 : index
    %1204 = memref.load %arg1[%c223] : memref<337xf32, #tpu.memory_space<smem>>
    %1205 = vector.broadcast %1204 : f32 to vector<16x16xf32>
    %c189 = arith.constant 189 : index
    %1206 = memref.load %arg1[%c189] : memref<337xf32, #tpu.memory_space<smem>>
    %c0_643 = arith.constant 0 : index
    %c0_644 = arith.constant 0 : index
    %c0_645 = arith.constant 0 : index
    %1207 = vector.load %arg8[%c0_643, %c0_644, %c0_645] : memref<3x18x18xf32, #tpu.memory_space<vmem>>, vector<1x16x16xf32>
    %1208 = vector.shape_cast %1207 : vector<1x16x16xf32> to vector<16x16xf32>
    %1209 = vector.broadcast %1206 : f32 to vector<16x16xf32>
    %1210 = arith.mulf %1209, %1208 : vector<16x16xf32>
    %1211 = arith.addf %1205, %1210 : vector<16x16xf32>
    %c190 = arith.constant 190 : index
    %1212 = memref.load %arg1[%c190] : memref<337xf32, #tpu.memory_space<smem>>
    %c0_646 = arith.constant 0 : index
    %c0_647 = arith.constant 0 : index
    %c1_648 = arith.constant 1 : index
    %1213 = vector.load %arg8[%c0_646, %c0_647, %c1_648] : memref<3x18x18xf32, #tpu.memory_space<vmem>>, vector<1x16x16xf32>
    %1214 = vector.shape_cast %1213 : vector<1x16x16xf32> to vector<16x16xf32>
    %1215 = vector.broadcast %1212 : f32 to vector<16x16xf32>
    %1216 = arith.mulf %1215, %1214 : vector<16x16xf32>
    %1217 = arith.addf %1211, %1216 : vector<16x16xf32>
    %c191 = arith.constant 191 : index
    %1218 = memref.load %arg1[%c191] : memref<337xf32, #tpu.memory_space<smem>>
    %c0_649 = arith.constant 0 : index
    %c0_650 = arith.constant 0 : index
    %c2_651 = arith.constant 2 : index
    %1219 = vector.load %arg8[%c0_649, %c0_650, %c2_651] : memref<3x18x18xf32, #tpu.memory_space<vmem>>, vector<1x16x16xf32>
    %1220 = vector.shape_cast %1219 : vector<1x16x16xf32> to vector<16x16xf32>
    %1221 = vector.broadcast %1218 : f32 to vector<16x16xf32>
    %1222 = arith.mulf %1221, %1220 : vector<16x16xf32>
    %1223 = arith.addf %1217, %1222 : vector<16x16xf32>
    %c192 = arith.constant 192 : index
    %1224 = memref.load %arg1[%c192] : memref<337xf32, #tpu.memory_space<smem>>
    %c0_652 = arith.constant 0 : index
    %c1_653 = arith.constant 1 : index
    %c0_654 = arith.constant 0 : index
    %1225 = vector.load %arg8[%c0_652, %c1_653, %c0_654] : memref<3x18x18xf32, #tpu.memory_space<vmem>>, vector<1x16x16xf32>
    %1226 = vector.shape_cast %1225 : vector<1x16x16xf32> to vector<16x16xf32>
    %1227 = vector.broadcast %1224 : f32 to vector<16x16xf32>
    %1228 = arith.mulf %1227, %1226 : vector<16x16xf32>
    %1229 = arith.addf %1223, %1228 : vector<16x16xf32>
    %c193 = arith.constant 193 : index
    %1230 = memref.load %arg1[%c193] : memref<337xf32, #tpu.memory_space<smem>>
    %c0_655 = arith.constant 0 : index
    %c1_656 = arith.constant 1 : index
    %c1_657 = arith.constant 1 : index
    %1231 = vector.load %arg8[%c0_655, %c1_656, %c1_657] : memref<3x18x18xf32, #tpu.memory_space<vmem>>, vector<1x16x16xf32>
    %1232 = vector.shape_cast %1231 : vector<1x16x16xf32> to vector<16x16xf32>
    %1233 = vector.broadcast %1230 : f32 to vector<16x16xf32>
    %1234 = arith.mulf %1233, %1232 : vector<16x16xf32>
    %1235 = arith.addf %1229, %1234 : vector<16x16xf32>
    %c194 = arith.constant 194 : index
    %1236 = memref.load %arg1[%c194] : memref<337xf32, #tpu.memory_space<smem>>
    %c0_658 = arith.constant 0 : index
    %c1_659 = arith.constant 1 : index
    %c2_660 = arith.constant 2 : index
    %1237 = vector.load %arg8[%c0_658, %c1_659, %c2_660] : memref<3x18x18xf32, #tpu.memory_space<vmem>>, vector<1x16x16xf32>
    %1238 = vector.shape_cast %1237 : vector<1x16x16xf32> to vector<16x16xf32>
    %1239 = vector.broadcast %1236 : f32 to vector<16x16xf32>
    %1240 = arith.mulf %1239, %1238 : vector<16x16xf32>
    %1241 = arith.addf %1235, %1240 : vector<16x16xf32>
    %c195 = arith.constant 195 : index
    %1242 = memref.load %arg1[%c195] : memref<337xf32, #tpu.memory_space<smem>>
    %c0_661 = arith.constant 0 : index
    %c2_662 = arith.constant 2 : index
    %c0_663 = arith.constant 0 : index
    %1243 = vector.load %arg8[%c0_661, %c2_662, %c0_663] : memref<3x18x18xf32, #tpu.memory_space<vmem>>, vector<1x16x16xf32>
    %1244 = vector.shape_cast %1243 : vector<1x16x16xf32> to vector<16x16xf32>
    %1245 = vector.broadcast %1242 : f32 to vector<16x16xf32>
    %1246 = arith.mulf %1245, %1244 : vector<16x16xf32>
    %1247 = arith.addf %1241, %1246 : vector<16x16xf32>
    %c196 = arith.constant 196 : index
    %1248 = memref.load %arg1[%c196] : memref<337xf32, #tpu.memory_space<smem>>
    %c0_664 = arith.constant 0 : index
    %c2_665 = arith.constant 2 : index
    %c1_666 = arith.constant 1 : index
    %1249 = vector.load %arg8[%c0_664, %c2_665, %c1_666] : memref<3x18x18xf32, #tpu.memory_space<vmem>>, vector<1x16x16xf32>
    %1250 = vector.shape_cast %1249 : vector<1x16x16xf32> to vector<16x16xf32>
    %1251 = vector.broadcast %1248 : f32 to vector<16x16xf32>
    %1252 = arith.mulf %1251, %1250 : vector<16x16xf32>
    %1253 = arith.addf %1247, %1252 : vector<16x16xf32>
    %c197 = arith.constant 197 : index
    %1254 = memref.load %arg1[%c197] : memref<337xf32, #tpu.memory_space<smem>>
    %c0_667 = arith.constant 0 : index
    %c2_668 = arith.constant 2 : index
    %c2_669 = arith.constant 2 : index
    %1255 = vector.load %arg8[%c0_667, %c2_668, %c2_669] : memref<3x18x18xf32, #tpu.memory_space<vmem>>, vector<1x16x16xf32>
    %1256 = vector.shape_cast %1255 : vector<1x16x16xf32> to vector<16x16xf32>
    %1257 = vector.broadcast %1254 : f32 to vector<16x16xf32>
    %1258 = arith.mulf %1257, %1256 : vector<16x16xf32>
    %1259 = arith.addf %1253, %1258 : vector<16x16xf32>
    %c198 = arith.constant 198 : index
    %1260 = memref.load %arg1[%c198] : memref<337xf32, #tpu.memory_space<smem>>
    %c1_670 = arith.constant 1 : index
    %c0_671 = arith.constant 0 : index
    %c0_672 = arith.constant 0 : index
    %1261 = vector.load %arg8[%c1_670, %c0_671, %c0_672] : memref<3x18x18xf32, #tpu.memory_space<vmem>>, vector<1x16x16xf32>
    %1262 = vector.shape_cast %1261 : vector<1x16x16xf32> to vector<16x16xf32>
    %1263 = vector.broadcast %1260 : f32 to vector<16x16xf32>
    %1264 = arith.mulf %1263, %1262 : vector<16x16xf32>
    %1265 = arith.addf %1259, %1264 : vector<16x16xf32>
    %c199 = arith.constant 199 : index
    %1266 = memref.load %arg1[%c199] : memref<337xf32, #tpu.memory_space<smem>>
    %c1_673 = arith.constant 1 : index
    %c0_674 = arith.constant 0 : index
    %c1_675 = arith.constant 1 : index
    %1267 = vector.load %arg8[%c1_673, %c0_674, %c1_675] : memref<3x18x18xf32, #tpu.memory_space<vmem>>, vector<1x16x16xf32>
    %1268 = vector.shape_cast %1267 : vector<1x16x16xf32> to vector<16x16xf32>
    %1269 = vector.broadcast %1266 : f32 to vector<16x16xf32>
    %1270 = arith.mulf %1269, %1268 : vector<16x16xf32>
    %1271 = arith.addf %1265, %1270 : vector<16x16xf32>
    %c200 = arith.constant 200 : index
    %1272 = memref.load %arg1[%c200] : memref<337xf32, #tpu.memory_space<smem>>
    %c1_676 = arith.constant 1 : index
    %c0_677 = arith.constant 0 : index
    %c2_678 = arith.constant 2 : index
    %1273 = vector.load %arg8[%c1_676, %c0_677, %c2_678] : memref<3x18x18xf32, #tpu.memory_space<vmem>>, vector<1x16x16xf32>
    %1274 = vector.shape_cast %1273 : vector<1x16x16xf32> to vector<16x16xf32>
    %1275 = vector.broadcast %1272 : f32 to vector<16x16xf32>
    %1276 = arith.mulf %1275, %1274 : vector<16x16xf32>
    %1277 = arith.addf %1271, %1276 : vector<16x16xf32>
    %c201 = arith.constant 201 : index
    %1278 = memref.load %arg1[%c201] : memref<337xf32, #tpu.memory_space<smem>>
    %c1_679 = arith.constant 1 : index
    %c1_680 = arith.constant 1 : index
    %c0_681 = arith.constant 0 : index
    %1279 = vector.load %arg8[%c1_679, %c1_680, %c0_681] : memref<3x18x18xf32, #tpu.memory_space<vmem>>, vector<1x16x16xf32>
    %1280 = vector.shape_cast %1279 : vector<1x16x16xf32> to vector<16x16xf32>
    %1281 = vector.broadcast %1278 : f32 to vector<16x16xf32>
    %1282 = arith.mulf %1281, %1280 : vector<16x16xf32>
    %1283 = arith.addf %1277, %1282 : vector<16x16xf32>
    %c202 = arith.constant 202 : index
    %1284 = memref.load %arg1[%c202] : memref<337xf32, #tpu.memory_space<smem>>
    %c1_682 = arith.constant 1 : index
    %c1_683 = arith.constant 1 : index
    %c1_684 = arith.constant 1 : index
    %1285 = vector.load %arg8[%c1_682, %c1_683, %c1_684] : memref<3x18x18xf32, #tpu.memory_space<vmem>>, vector<1x16x16xf32>
    %1286 = vector.shape_cast %1285 : vector<1x16x16xf32> to vector<16x16xf32>
    %1287 = vector.broadcast %1284 : f32 to vector<16x16xf32>
    %1288 = arith.mulf %1287, %1286 : vector<16x16xf32>
    %1289 = arith.addf %1283, %1288 : vector<16x16xf32>
    %c203 = arith.constant 203 : index
    %1290 = memref.load %arg1[%c203] : memref<337xf32, #tpu.memory_space<smem>>
    %c1_685 = arith.constant 1 : index
    %c1_686 = arith.constant 1 : index
    %c2_687 = arith.constant 2 : index
    %1291 = vector.load %arg8[%c1_685, %c1_686, %c2_687] : memref<3x18x18xf32, #tpu.memory_space<vmem>>, vector<1x16x16xf32>
    %1292 = vector.shape_cast %1291 : vector<1x16x16xf32> to vector<16x16xf32>
    %1293 = vector.broadcast %1290 : f32 to vector<16x16xf32>
    %1294 = arith.mulf %1293, %1292 : vector<16x16xf32>
    %1295 = arith.addf %1289, %1294 : vector<16x16xf32>
    %c204 = arith.constant 204 : index
    %1296 = memref.load %arg1[%c204] : memref<337xf32, #tpu.memory_space<smem>>
    %c1_688 = arith.constant 1 : index
    %c2_689 = arith.constant 2 : index
    %c0_690 = arith.constant 0 : index
    %1297 = vector.load %arg8[%c1_688, %c2_689, %c0_690] : memref<3x18x18xf32, #tpu.memory_space<vmem>>, vector<1x16x16xf32>
    %1298 = vector.shape_cast %1297 : vector<1x16x16xf32> to vector<16x16xf32>
    %1299 = vector.broadcast %1296 : f32 to vector<16x16xf32>
    %1300 = arith.mulf %1299, %1298 : vector<16x16xf32>
    %1301 = arith.addf %1295, %1300 : vector<16x16xf32>
    %c205 = arith.constant 205 : index
    %1302 = memref.load %arg1[%c205] : memref<337xf32, #tpu.memory_space<smem>>
    %c1_691 = arith.constant 1 : index
    %c2_692 = arith.constant 2 : index
    %c1_693 = arith.constant 1 : index
    %1303 = vector.load %arg8[%c1_691, %c2_692, %c1_693] : memref<3x18x18xf32, #tpu.memory_space<vmem>>, vector<1x16x16xf32>
    %1304 = vector.shape_cast %1303 : vector<1x16x16xf32> to vector<16x16xf32>
    %1305 = vector.broadcast %1302 : f32 to vector<16x16xf32>
    %1306 = arith.mulf %1305, %1304 : vector<16x16xf32>
    %1307 = arith.addf %1301, %1306 : vector<16x16xf32>
    %c206 = arith.constant 206 : index
    %1308 = memref.load %arg1[%c206] : memref<337xf32, #tpu.memory_space<smem>>
    %c1_694 = arith.constant 1 : index
    %c2_695 = arith.constant 2 : index
    %c2_696 = arith.constant 2 : index
    %1309 = vector.load %arg8[%c1_694, %c2_695, %c2_696] : memref<3x18x18xf32, #tpu.memory_space<vmem>>, vector<1x16x16xf32>
    %1310 = vector.shape_cast %1309 : vector<1x16x16xf32> to vector<16x16xf32>
    %1311 = vector.broadcast %1308 : f32 to vector<16x16xf32>
    %1312 = arith.mulf %1311, %1310 : vector<16x16xf32>
    %1313 = arith.addf %1307, %1312 : vector<16x16xf32>
    %c207 = arith.constant 207 : index
    %1314 = memref.load %arg1[%c207] : memref<337xf32, #tpu.memory_space<smem>>
    %c2_697 = arith.constant 2 : index
    %c0_698 = arith.constant 0 : index
    %c0_699 = arith.constant 0 : index
    %1315 = vector.load %arg8[%c2_697, %c0_698, %c0_699] : memref<3x18x18xf32, #tpu.memory_space<vmem>>, vector<1x16x16xf32>
    %1316 = vector.shape_cast %1315 : vector<1x16x16xf32> to vector<16x16xf32>
    %1317 = vector.broadcast %1314 : f32 to vector<16x16xf32>
    %1318 = arith.mulf %1317, %1316 : vector<16x16xf32>
    %1319 = arith.addf %1313, %1318 : vector<16x16xf32>
    %c208 = arith.constant 208 : index
    %1320 = memref.load %arg1[%c208] : memref<337xf32, #tpu.memory_space<smem>>
    %c2_700 = arith.constant 2 : index
    %c0_701 = arith.constant 0 : index
    %c1_702 = arith.constant 1 : index
    %1321 = vector.load %arg8[%c2_700, %c0_701, %c1_702] : memref<3x18x18xf32, #tpu.memory_space<vmem>>, vector<1x16x16xf32>
    %1322 = vector.shape_cast %1321 : vector<1x16x16xf32> to vector<16x16xf32>
    %1323 = vector.broadcast %1320 : f32 to vector<16x16xf32>
    %1324 = arith.mulf %1323, %1322 : vector<16x16xf32>
    %1325 = arith.addf %1319, %1324 : vector<16x16xf32>
    %c209 = arith.constant 209 : index
    %1326 = memref.load %arg1[%c209] : memref<337xf32, #tpu.memory_space<smem>>
    %c2_703 = arith.constant 2 : index
    %c0_704 = arith.constant 0 : index
    %c2_705 = arith.constant 2 : index
    %1327 = vector.load %arg8[%c2_703, %c0_704, %c2_705] : memref<3x18x18xf32, #tpu.memory_space<vmem>>, vector<1x16x16xf32>
    %1328 = vector.shape_cast %1327 : vector<1x16x16xf32> to vector<16x16xf32>
    %1329 = vector.broadcast %1326 : f32 to vector<16x16xf32>
    %1330 = arith.mulf %1329, %1328 : vector<16x16xf32>
    %1331 = arith.addf %1325, %1330 : vector<16x16xf32>
    %c210 = arith.constant 210 : index
    %1332 = memref.load %arg1[%c210] : memref<337xf32, #tpu.memory_space<smem>>
    %c2_706 = arith.constant 2 : index
    %c1_707 = arith.constant 1 : index
    %c0_708 = arith.constant 0 : index
    %1333 = vector.load %arg8[%c2_706, %c1_707, %c0_708] : memref<3x18x18xf32, #tpu.memory_space<vmem>>, vector<1x16x16xf32>
    %1334 = vector.shape_cast %1333 : vector<1x16x16xf32> to vector<16x16xf32>
    %1335 = vector.broadcast %1332 : f32 to vector<16x16xf32>
    %1336 = arith.mulf %1335, %1334 : vector<16x16xf32>
    %1337 = arith.addf %1331, %1336 : vector<16x16xf32>
    %c211 = arith.constant 211 : index
    %1338 = memref.load %arg1[%c211] : memref<337xf32, #tpu.memory_space<smem>>
    %c2_709 = arith.constant 2 : index
    %c1_710 = arith.constant 1 : index
    %c1_711 = arith.constant 1 : index
    %1339 = vector.load %arg8[%c2_709, %c1_710, %c1_711] : memref<3x18x18xf32, #tpu.memory_space<vmem>>, vector<1x16x16xf32>
    %1340 = vector.shape_cast %1339 : vector<1x16x16xf32> to vector<16x16xf32>
    %1341 = vector.broadcast %1338 : f32 to vector<16x16xf32>
    %1342 = arith.mulf %1341, %1340 : vector<16x16xf32>
    %1343 = arith.addf %1337, %1342 : vector<16x16xf32>
    %c212 = arith.constant 212 : index
    %1344 = memref.load %arg1[%c212] : memref<337xf32, #tpu.memory_space<smem>>
    %c2_712 = arith.constant 2 : index
    %c1_713 = arith.constant 1 : index
    %c2_714 = arith.constant 2 : index
    %1345 = vector.load %arg8[%c2_712, %c1_713, %c2_714] : memref<3x18x18xf32, #tpu.memory_space<vmem>>, vector<1x16x16xf32>
    %1346 = vector.shape_cast %1345 : vector<1x16x16xf32> to vector<16x16xf32>
    %1347 = vector.broadcast %1344 : f32 to vector<16x16xf32>
    %1348 = arith.mulf %1347, %1346 : vector<16x16xf32>
    %1349 = arith.addf %1343, %1348 : vector<16x16xf32>
    %c213 = arith.constant 213 : index
    %1350 = memref.load %arg1[%c213] : memref<337xf32, #tpu.memory_space<smem>>
    %c2_715 = arith.constant 2 : index
    %c2_716 = arith.constant 2 : index
    %c0_717 = arith.constant 0 : index
    %1351 = vector.load %arg8[%c2_715, %c2_716, %c0_717] : memref<3x18x18xf32, #tpu.memory_space<vmem>>, vector<1x16x16xf32>
    %1352 = vector.shape_cast %1351 : vector<1x16x16xf32> to vector<16x16xf32>
    %1353 = vector.broadcast %1350 : f32 to vector<16x16xf32>
    %1354 = arith.mulf %1353, %1352 : vector<16x16xf32>
    %1355 = arith.addf %1349, %1354 : vector<16x16xf32>
    %c214 = arith.constant 214 : index
    %1356 = memref.load %arg1[%c214] : memref<337xf32, #tpu.memory_space<smem>>
    %c2_718 = arith.constant 2 : index
    %c2_719 = arith.constant 2 : index
    %c1_720 = arith.constant 1 : index
    %1357 = vector.load %arg8[%c2_718, %c2_719, %c1_720] : memref<3x18x18xf32, #tpu.memory_space<vmem>>, vector<1x16x16xf32>
    %1358 = vector.shape_cast %1357 : vector<1x16x16xf32> to vector<16x16xf32>
    %1359 = vector.broadcast %1356 : f32 to vector<16x16xf32>
    %1360 = arith.mulf %1359, %1358 : vector<16x16xf32>
    %1361 = arith.addf %1355, %1360 : vector<16x16xf32>
    %c215 = arith.constant 215 : index
    %1362 = memref.load %arg1[%c215] : memref<337xf32, #tpu.memory_space<smem>>
    %c2_721 = arith.constant 2 : index
    %c2_722 = arith.constant 2 : index
    %c2_723 = arith.constant 2 : index
    %1363 = vector.load %arg8[%c2_721, %c2_722, %c2_723] : memref<3x18x18xf32, #tpu.memory_space<vmem>>, vector<1x16x16xf32>
    %1364 = vector.shape_cast %1363 : vector<1x16x16xf32> to vector<16x16xf32>
    %1365 = vector.broadcast %1362 : f32 to vector<16x16xf32>
    %1366 = arith.mulf %1365, %1364 : vector<16x16xf32>
    %1367 = arith.addf %1361, %1366 : vector<16x16xf32>
    %cst_724 = arith.constant 0.000000e+00 : f32
    %1368 = vector.broadcast %cst_724 : f32 to vector<16x16xf32>
    %1369 = arith.maximumf %1367, %1368 : vector<16x16xf32>
    %c7_725 = arith.constant 7 : index
    %c1_726 = arith.constant 1 : index
    %c1_727 = arith.constant 1 : index
    %1370 = vector.load %arg9[%c7_725, %c1_726, %c1_727] : memref<8x18x18xf32, #tpu.memory_space<vmem>>, vector<1x16x16xf32>
    %1371 = vector.shape_cast %1370 : vector<1x16x16xf32> to vector<16x16xf32>
    %1372 = vector.shape_cast %1369 : vector<16x16xf32> to vector<1x16x16xf32>
    tpu.vector_store %arg9[%c7_725, %c1_726, %c1_727], %1372 {strides = array<i32>} : memref<8x18x18xf32, #tpu.memory_space<vmem>>, vector<1x16x16xf32>,
    %c296 = arith.constant 296 : index
    %1373 = memref.load %arg1[%c296] : memref<337xf32, #tpu.memory_space<smem>>
    %1374 = vector.broadcast %1373 : f32 to vector<16x16xf32>
    %c224 = arith.constant 224 : index
    %1375 = memref.load %arg1[%c224] : memref<337xf32, #tpu.memory_space<smem>>
    %c0_728 = arith.constant 0 : index
    %c0_729 = arith.constant 0 : index
    %c0_730 = arith.constant 0 : index
    %1376 = vector.load %arg9[%c0_728, %c0_729, %c0_730] : memref<8x18x18xf32, #tpu.memory_space<vmem>>, vector<1x16x16xf32>
    %1377 = vector.shape_cast %1376 : vector<1x16x16xf32> to vector<16x16xf32>
    %1378 = vector.broadcast %1375 : f32 to vector<16x16xf32>
    %1379 = arith.mulf %1378, %1377 : vector<16x16xf32>
    %1380 = arith.addf %1374, %1379 : vector<16x16xf32>
    %c225 = arith.constant 225 : index
    %1381 = memref.load %arg1[%c225] : memref<337xf32, #tpu.memory_space<smem>>
    %c0_731 = arith.constant 0 : index
    %c0_732 = arith.constant 0 : index
    %c1_733 = arith.constant 1 : index
    %1382 = vector.load %arg9[%c0_731, %c0_732, %c1_733] : memref<8x18x18xf32, #tpu.memory_space<vmem>>, vector<1x16x16xf32>
    %1383 = vector.shape_cast %1382 : vector<1x16x16xf32> to vector<16x16xf32>
    %1384 = vector.broadcast %1381 : f32 to vector<16x16xf32>
    %1385 = arith.mulf %1384, %1383 : vector<16x16xf32>
    %1386 = arith.addf %1380, %1385 : vector<16x16xf32>
    %c226 = arith.constant 226 : index
    %1387 = memref.load %arg1[%c226] : memref<337xf32, #tpu.memory_space<smem>>
    %c0_734 = arith.constant 0 : index
    %c0_735 = arith.constant 0 : index
    %c2_736 = arith.constant 2 : index
    %1388 = vector.load %arg9[%c0_734, %c0_735, %c2_736] : memref<8x18x18xf32, #tpu.memory_space<vmem>>, vector<1x16x16xf32>
    %1389 = vector.shape_cast %1388 : vector<1x16x16xf32> to vector<16x16xf32>
    %1390 = vector.broadcast %1387 : f32 to vector<16x16xf32>
    %1391 = arith.mulf %1390, %1389 : vector<16x16xf32>
    %1392 = arith.addf %1386, %1391 : vector<16x16xf32>
    %c227 = arith.constant 227 : index
    %1393 = memref.load %arg1[%c227] : memref<337xf32, #tpu.memory_space<smem>>
    %c0_737 = arith.constant 0 : index
    %c1_738 = arith.constant 1 : index
    %c0_739 = arith.constant 0 : index
    %1394 = vector.load %arg9[%c0_737, %c1_738, %c0_739] : memref<8x18x18xf32, #tpu.memory_space<vmem>>, vector<1x16x16xf32>
    %1395 = vector.shape_cast %1394 : vector<1x16x16xf32> to vector<16x16xf32>
    %1396 = vector.broadcast %1393 : f32 to vector<16x16xf32>
    %1397 = arith.mulf %1396, %1395 : vector<16x16xf32>
    %1398 = arith.addf %1392, %1397 : vector<16x16xf32>
    %c228 = arith.constant 228 : index
    %1399 = memref.load %arg1[%c228] : memref<337xf32, #tpu.memory_space<smem>>
    %c0_740 = arith.constant 0 : index
    %c1_741 = arith.constant 1 : index
    %c1_742 = arith.constant 1 : index
    %1400 = vector.load %arg9[%c0_740, %c1_741, %c1_742] : memref<8x18x18xf32, #tpu.memory_space<vmem>>, vector<1x16x16xf32>
    %1401 = vector.shape_cast %1400 : vector<1x16x16xf32> to vector<16x16xf32>
    %1402 = vector.broadcast %1399 : f32 to vector<16x16xf32>
    %1403 = arith.mulf %1402, %1401 : vector<16x16xf32>
    %1404 = arith.addf %1398, %1403 : vector<16x16xf32>
    %c229 = arith.constant 229 : index
    %1405 = memref.load %arg1[%c229] : memref<337xf32, #tpu.memory_space<smem>>
    %c0_743 = arith.constant 0 : index
    %c1_744 = arith.constant 1 : index
    %c2_745 = arith.constant 2 : index
    %1406 = vector.load %arg9[%c0_743, %c1_744, %c2_745] : memref<8x18x18xf32, #tpu.memory_space<vmem>>, vector<1x16x16xf32>
    %1407 = vector.shape_cast %1406 : vector<1x16x16xf32> to vector<16x16xf32>
    %1408 = vector.broadcast %1405 : f32 to vector<16x16xf32>
    %1409 = arith.mulf %1408, %1407 : vector<16x16xf32>
    %1410 = arith.addf %1404, %1409 : vector<16x16xf32>
    %c230 = arith.constant 230 : index
    %1411 = memref.load %arg1[%c230] : memref<337xf32, #tpu.memory_space<smem>>
    %c0_746 = arith.constant 0 : index
    %c2_747 = arith.constant 2 : index
    %c0_748 = arith.constant 0 : index
    %1412 = vector.load %arg9[%c0_746, %c2_747, %c0_748] : memref<8x18x18xf32, #tpu.memory_space<vmem>>, vector<1x16x16xf32>
    %1413 = vector.shape_cast %1412 : vector<1x16x16xf32> to vector<16x16xf32>
    %1414 = vector.broadcast %1411 : f32 to vector<16x16xf32>
    %1415 = arith.mulf %1414, %1413 : vector<16x16xf32>
    %1416 = arith.addf %1410, %1415 : vector<16x16xf32>
    %c231 = arith.constant 231 : index
    %1417 = memref.load %arg1[%c231] : memref<337xf32, #tpu.memory_space<smem>>
    %c0_749 = arith.constant 0 : index
    %c2_750 = arith.constant 2 : index
    %c1_751 = arith.constant 1 : index
    %1418 = vector.load %arg9[%c0_749, %c2_750, %c1_751] : memref<8x18x18xf32, #tpu.memory_space<vmem>>, vector<1x16x16xf32>
    %1419 = vector.shape_cast %1418 : vector<1x16x16xf32> to vector<16x16xf32>
    %1420 = vector.broadcast %1417 : f32 to vector<16x16xf32>
    %1421 = arith.mulf %1420, %1419 : vector<16x16xf32>
    %1422 = arith.addf %1416, %1421 : vector<16x16xf32>
    %c232 = arith.constant 232 : index
    %1423 = memref.load %arg1[%c232] : memref<337xf32, #tpu.memory_space<smem>>
    %c0_752 = arith.constant 0 : index
    %c2_753 = arith.constant 2 : index
    %c2_754 = arith.constant 2 : index
    %1424 = vector.load %arg9[%c0_752, %c2_753, %c2_754] : memref<8x18x18xf32, #tpu.memory_space<vmem>>, vector<1x16x16xf32>
    %1425 = vector.shape_cast %1424 : vector<1x16x16xf32> to vector<16x16xf32>
    %1426 = vector.broadcast %1423 : f32 to vector<16x16xf32>
    %1427 = arith.mulf %1426, %1425 : vector<16x16xf32>
    %1428 = arith.addf %1422, %1427 : vector<16x16xf32>
    %c233 = arith.constant 233 : index
    %1429 = memref.load %arg1[%c233] : memref<337xf32, #tpu.memory_space<smem>>
    %c1_755 = arith.constant 1 : index
    %c0_756 = arith.constant 0 : index
    %c0_757 = arith.constant 0 : index
    %1430 = vector.load %arg9[%c1_755, %c0_756, %c0_757] : memref<8x18x18xf32, #tpu.memory_space<vmem>>, vector<1x16x16xf32>
    %1431 = vector.shape_cast %1430 : vector<1x16x16xf32> to vector<16x16xf32>
    %1432 = vector.broadcast %1429 : f32 to vector<16x16xf32>
    %1433 = arith.mulf %1432, %1431 : vector<16x16xf32>
    %1434 = arith.addf %1428, %1433 : vector<16x16xf32>
    %c234 = arith.constant 234 : index
    %1435 = memref.load %arg1[%c234] : memref<337xf32, #tpu.memory_space<smem>>
    %c1_758 = arith.constant 1 : index
    %c0_759 = arith.constant 0 : index
    %c1_760 = arith.constant 1 : index
    %1436 = vector.load %arg9[%c1_758, %c0_759, %c1_760] : memref<8x18x18xf32, #tpu.memory_space<vmem>>, vector<1x16x16xf32>
    %1437 = vector.shape_cast %1436 : vector<1x16x16xf32> to vector<16x16xf32>
    %1438 = vector.broadcast %1435 : f32 to vector<16x16xf32>
    %1439 = arith.mulf %1438, %1437 : vector<16x16xf32>
    %1440 = arith.addf %1434, %1439 : vector<16x16xf32>
    %c235 = arith.constant 235 : index
    %1441 = memref.load %arg1[%c235] : memref<337xf32, #tpu.memory_space<smem>>
    %c1_761 = arith.constant 1 : index
    %c0_762 = arith.constant 0 : index
    %c2_763 = arith.constant 2 : index
    %1442 = vector.load %arg9[%c1_761, %c0_762, %c2_763] : memref<8x18x18xf32, #tpu.memory_space<vmem>>, vector<1x16x16xf32>
    %1443 = vector.shape_cast %1442 : vector<1x16x16xf32> to vector<16x16xf32>
    %1444 = vector.broadcast %1441 : f32 to vector<16x16xf32>
    %1445 = arith.mulf %1444, %1443 : vector<16x16xf32>
    %1446 = arith.addf %1440, %1445 : vector<16x16xf32>
    %c236 = arith.constant 236 : index
    %1447 = memref.load %arg1[%c236] : memref<337xf32, #tpu.memory_space<smem>>
    %c1_764 = arith.constant 1 : index
    %c1_765 = arith.constant 1 : index
    %c0_766 = arith.constant 0 : index
    %1448 = vector.load %arg9[%c1_764, %c1_765, %c0_766] : memref<8x18x18xf32, #tpu.memory_space<vmem>>, vector<1x16x16xf32>
    %1449 = vector.shape_cast %1448 : vector<1x16x16xf32> to vector<16x16xf32>
    %1450 = vector.broadcast %1447 : f32 to vector<16x16xf32>
    %1451 = arith.mulf %1450, %1449 : vector<16x16xf32>
    %1452 = arith.addf %1446, %1451 : vector<16x16xf32>
    %c237 = arith.constant 237 : index
    %1453 = memref.load %arg1[%c237] : memref<337xf32, #tpu.memory_space<smem>>
    %c1_767 = arith.constant 1 : index
    %c1_768 = arith.constant 1 : index
    %c1_769 = arith.constant 1 : index
    %1454 = vector.load %arg9[%c1_767, %c1_768, %c1_769] : memref<8x18x18xf32, #tpu.memory_space<vmem>>, vector<1x16x16xf32>
    %1455 = vector.shape_cast %1454 : vector<1x16x16xf32> to vector<16x16xf32>
    %1456 = vector.broadcast %1453 : f32 to vector<16x16xf32>
    %1457 = arith.mulf %1456, %1455 : vector<16x16xf32>
    %1458 = arith.addf %1452, %1457 : vector<16x16xf32>
    %c238 = arith.constant 238 : index
    %1459 = memref.load %arg1[%c238] : memref<337xf32, #tpu.memory_space<smem>>
    %c1_770 = arith.constant 1 : index
    %c1_771 = arith.constant 1 : index
    %c2_772 = arith.constant 2 : index
    %1460 = vector.load %arg9[%c1_770, %c1_771, %c2_772] : memref<8x18x18xf32, #tpu.memory_space<vmem>>, vector<1x16x16xf32>
    %1461 = vector.shape_cast %1460 : vector<1x16x16xf32> to vector<16x16xf32>
    %1462 = vector.broadcast %1459 : f32 to vector<16x16xf32>
    %1463 = arith.mulf %1462, %1461 : vector<16x16xf32>
    %1464 = arith.addf %1458, %1463 : vector<16x16xf32>
    %c239 = arith.constant 239 : index
    %1465 = memref.load %arg1[%c239] : memref<337xf32, #tpu.memory_space<smem>>
    %c1_773 = arith.constant 1 : index
    %c2_774 = arith.constant 2 : index
    %c0_775 = arith.constant 0 : index
    %1466 = vector.load %arg9[%c1_773, %c2_774, %c0_775] : memref<8x18x18xf32, #tpu.memory_space<vmem>>, vector<1x16x16xf32>
    %1467 = vector.shape_cast %1466 : vector<1x16x16xf32> to vector<16x16xf32>
    %1468 = vector.broadcast %1465 : f32 to vector<16x16xf32>
    %1469 = arith.mulf %1468, %1467 : vector<16x16xf32>
    %1470 = arith.addf %1464, %1469 : vector<16x16xf32>
    %c240 = arith.constant 240 : index
    %1471 = memref.load %arg1[%c240] : memref<337xf32, #tpu.memory_space<smem>>
    %c1_776 = arith.constant 1 : index
    %c2_777 = arith.constant 2 : index
    %c1_778 = arith.constant 1 : index
    %1472 = vector.load %arg9[%c1_776, %c2_777, %c1_778] : memref<8x18x18xf32, #tpu.memory_space<vmem>>, vector<1x16x16xf32>
    %1473 = vector.shape_cast %1472 : vector<1x16x16xf32> to vector<16x16xf32>
    %1474 = vector.broadcast %1471 : f32 to vector<16x16xf32>
    %1475 = arith.mulf %1474, %1473 : vector<16x16xf32>
    %1476 = arith.addf %1470, %1475 : vector<16x16xf32>
    %c241 = arith.constant 241 : index
    %1477 = memref.load %arg1[%c241] : memref<337xf32, #tpu.memory_space<smem>>
    %c1_779 = arith.constant 1 : index
    %c2_780 = arith.constant 2 : index
    %c2_781 = arith.constant 2 : index
    %1478 = vector.load %arg9[%c1_779, %c2_780, %c2_781] : memref<8x18x18xf32, #tpu.memory_space<vmem>>, vector<1x16x16xf32>
    %1479 = vector.shape_cast %1478 : vector<1x16x16xf32> to vector<16x16xf32>
    %1480 = vector.broadcast %1477 : f32 to vector<16x16xf32>
    %1481 = arith.mulf %1480, %1479 : vector<16x16xf32>
    %1482 = arith.addf %1476, %1481 : vector<16x16xf32>
    %c242 = arith.constant 242 : index
    %1483 = memref.load %arg1[%c242] : memref<337xf32, #tpu.memory_space<smem>>
    %c2_782 = arith.constant 2 : index
    %c0_783 = arith.constant 0 : index
    %c0_784 = arith.constant 0 : index
    %1484 = vector.load %arg9[%c2_782, %c0_783, %c0_784] : memref<8x18x18xf32, #tpu.memory_space<vmem>>, vector<1x16x16xf32>
    %1485 = vector.shape_cast %1484 : vector<1x16x16xf32> to vector<16x16xf32>
    %1486 = vector.broadcast %1483 : f32 to vector<16x16xf32>
    %1487 = arith.mulf %1486, %1485 : vector<16x16xf32>
    %1488 = arith.addf %1482, %1487 : vector<16x16xf32>
    %c243 = arith.constant 243 : index
    %1489 = memref.load %arg1[%c243] : memref<337xf32, #tpu.memory_space<smem>>
    %c2_785 = arith.constant 2 : index
    %c0_786 = arith.constant 0 : index
    %c1_787 = arith.constant 1 : index
    %1490 = vector.load %arg9[%c2_785, %c0_786, %c1_787] : memref<8x18x18xf32, #tpu.memory_space<vmem>>, vector<1x16x16xf32>
    %1491 = vector.shape_cast %1490 : vector<1x16x16xf32> to vector<16x16xf32>
    %1492 = vector.broadcast %1489 : f32 to vector<16x16xf32>
    %1493 = arith.mulf %1492, %1491 : vector<16x16xf32>
    %1494 = arith.addf %1488, %1493 : vector<16x16xf32>
    %c244 = arith.constant 244 : index
    %1495 = memref.load %arg1[%c244] : memref<337xf32, #tpu.memory_space<smem>>
    %c2_788 = arith.constant 2 : index
    %c0_789 = arith.constant 0 : index
    %c2_790 = arith.constant 2 : index
    %1496 = vector.load %arg9[%c2_788, %c0_789, %c2_790] : memref<8x18x18xf32, #tpu.memory_space<vmem>>, vector<1x16x16xf32>
    %1497 = vector.shape_cast %1496 : vector<1x16x16xf32> to vector<16x16xf32>
    %1498 = vector.broadcast %1495 : f32 to vector<16x16xf32>
    %1499 = arith.mulf %1498, %1497 : vector<16x16xf32>
    %1500 = arith.addf %1494, %1499 : vector<16x16xf32>
    %c245 = arith.constant 245 : index
    %1501 = memref.load %arg1[%c245] : memref<337xf32, #tpu.memory_space<smem>>
    %c2_791 = arith.constant 2 : index
    %c1_792 = arith.constant 1 : index
    %c0_793 = arith.constant 0 : index
    %1502 = vector.load %arg9[%c2_791, %c1_792, %c0_793] : memref<8x18x18xf32, #tpu.memory_space<vmem>>, vector<1x16x16xf32>
    %1503 = vector.shape_cast %1502 : vector<1x16x16xf32> to vector<16x16xf32>
    %1504 = vector.broadcast %1501 : f32 to vector<16x16xf32>
    %1505 = arith.mulf %1504, %1503 : vector<16x16xf32>
    %1506 = arith.addf %1500, %1505 : vector<16x16xf32>
    %c246 = arith.constant 246 : index
    %1507 = memref.load %arg1[%c246] : memref<337xf32, #tpu.memory_space<smem>>
    %c2_794 = arith.constant 2 : index
    %c1_795 = arith.constant 1 : index
    %c1_796 = arith.constant 1 : index
    %1508 = vector.load %arg9[%c2_794, %c1_795, %c1_796] : memref<8x18x18xf32, #tpu.memory_space<vmem>>, vector<1x16x16xf32>
    %1509 = vector.shape_cast %1508 : vector<1x16x16xf32> to vector<16x16xf32>
    %1510 = vector.broadcast %1507 : f32 to vector<16x16xf32>
    %1511 = arith.mulf %1510, %1509 : vector<16x16xf32>
    %1512 = arith.addf %1506, %1511 : vector<16x16xf32>
    %c247 = arith.constant 247 : index
    %1513 = memref.load %arg1[%c247] : memref<337xf32, #tpu.memory_space<smem>>
    %c2_797 = arith.constant 2 : index
    %c1_798 = arith.constant 1 : index
    %c2_799 = arith.constant 2 : index
    %1514 = vector.load %arg9[%c2_797, %c1_798, %c2_799] : memref<8x18x18xf32, #tpu.memory_space<vmem>>, vector<1x16x16xf32>
    %1515 = vector.shape_cast %1514 : vector<1x16x16xf32> to vector<16x16xf32>
    %1516 = vector.broadcast %1513 : f32 to vector<16x16xf32>
    %1517 = arith.mulf %1516, %1515 : vector<16x16xf32>
    %1518 = arith.addf %1512, %1517 : vector<16x16xf32>
    %c248 = arith.constant 248 : index
    %1519 = memref.load %arg1[%c248] : memref<337xf32, #tpu.memory_space<smem>>
    %c2_800 = arith.constant 2 : index
    %c2_801 = arith.constant 2 : index
    %c0_802 = arith.constant 0 : index
    %1520 = vector.load %arg9[%c2_800, %c2_801, %c0_802] : memref<8x18x18xf32, #tpu.memory_space<vmem>>, vector<1x16x16xf32>
    %1521 = vector.shape_cast %1520 : vector<1x16x16xf32> to vector<16x16xf32>
    %1522 = vector.broadcast %1519 : f32 to vector<16x16xf32>
    %1523 = arith.mulf %1522, %1521 : vector<16x16xf32>
    %1524 = arith.addf %1518, %1523 : vector<16x16xf32>
    %c249 = arith.constant 249 : index
    %1525 = memref.load %arg1[%c249] : memref<337xf32, #tpu.memory_space<smem>>
    %c2_803 = arith.constant 2 : index
    %c2_804 = arith.constant 2 : index
    %c1_805 = arith.constant 1 : index
    %1526 = vector.load %arg9[%c2_803, %c2_804, %c1_805] : memref<8x18x18xf32, #tpu.memory_space<vmem>>, vector<1x16x16xf32>
    %1527 = vector.shape_cast %1526 : vector<1x16x16xf32> to vector<16x16xf32>
    %1528 = vector.broadcast %1525 : f32 to vector<16x16xf32>
    %1529 = arith.mulf %1528, %1527 : vector<16x16xf32>
    %1530 = arith.addf %1524, %1529 : vector<16x16xf32>
    %c250 = arith.constant 250 : index
    %1531 = memref.load %arg1[%c250] : memref<337xf32, #tpu.memory_space<smem>>
    %c2_806 = arith.constant 2 : index
    %c2_807 = arith.constant 2 : index
    %c2_808 = arith.constant 2 : index
    %1532 = vector.load %arg9[%c2_806, %c2_807, %c2_808] : memref<8x18x18xf32, #tpu.memory_space<vmem>>, vector<1x16x16xf32>
    %1533 = vector.shape_cast %1532 : vector<1x16x16xf32> to vector<16x16xf32>
    %1534 = vector.broadcast %1531 : f32 to vector<16x16xf32>
    %1535 = arith.mulf %1534, %1533 : vector<16x16xf32>
    %1536 = arith.addf %1530, %1535 : vector<16x16xf32>
    %c251 = arith.constant 251 : index
    %1537 = memref.load %arg1[%c251] : memref<337xf32, #tpu.memory_space<smem>>
    %c3_809 = arith.constant 3 : index
    %c0_810 = arith.constant 0 : index
    %c0_811 = arith.constant 0 : index
    %1538 = vector.load %arg9[%c3_809, %c0_810, %c0_811] : memref<8x18x18xf32, #tpu.memory_space<vmem>>, vector<1x16x16xf32>
    %1539 = vector.shape_cast %1538 : vector<1x16x16xf32> to vector<16x16xf32>
    %1540 = vector.broadcast %1537 : f32 to vector<16x16xf32>
    %1541 = arith.mulf %1540, %1539 : vector<16x16xf32>
    %1542 = arith.addf %1536, %1541 : vector<16x16xf32>
    %c252 = arith.constant 252 : index
    %1543 = memref.load %arg1[%c252] : memref<337xf32, #tpu.memory_space<smem>>
    %c3_812 = arith.constant 3 : index
    %c0_813 = arith.constant 0 : index
    %c1_814 = arith.constant 1 : index
    %1544 = vector.load %arg9[%c3_812, %c0_813, %c1_814] : memref<8x18x18xf32, #tpu.memory_space<vmem>>, vector<1x16x16xf32>
    %1545 = vector.shape_cast %1544 : vector<1x16x16xf32> to vector<16x16xf32>
    %1546 = vector.broadcast %1543 : f32 to vector<16x16xf32>
    %1547 = arith.mulf %1546, %1545 : vector<16x16xf32>
    %1548 = arith.addf %1542, %1547 : vector<16x16xf32>
    %c253 = arith.constant 253 : index
    %1549 = memref.load %arg1[%c253] : memref<337xf32, #tpu.memory_space<smem>>
    %c3_815 = arith.constant 3 : index
    %c0_816 = arith.constant 0 : index
    %c2_817 = arith.constant 2 : index
    %1550 = vector.load %arg9[%c3_815, %c0_816, %c2_817] : memref<8x18x18xf32, #tpu.memory_space<vmem>>, vector<1x16x16xf32>
    %1551 = vector.shape_cast %1550 : vector<1x16x16xf32> to vector<16x16xf32>
    %1552 = vector.broadcast %1549 : f32 to vector<16x16xf32>
    %1553 = arith.mulf %1552, %1551 : vector<16x16xf32>
    %1554 = arith.addf %1548, %1553 : vector<16x16xf32>
    %c254 = arith.constant 254 : index
    %1555 = memref.load %arg1[%c254] : memref<337xf32, #tpu.memory_space<smem>>
    %c3_818 = arith.constant 3 : index
    %c1_819 = arith.constant 1 : index
    %c0_820 = arith.constant 0 : index
    %1556 = vector.load %arg9[%c3_818, %c1_819, %c0_820] : memref<8x18x18xf32, #tpu.memory_space<vmem>>, vector<1x16x16xf32>
    %1557 = vector.shape_cast %1556 : vector<1x16x16xf32> to vector<16x16xf32>
    %1558 = vector.broadcast %1555 : f32 to vector<16x16xf32>
    %1559 = arith.mulf %1558, %1557 : vector<16x16xf32>
    %1560 = arith.addf %1554, %1559 : vector<16x16xf32>
    %c255 = arith.constant 255 : index
    %1561 = memref.load %arg1[%c255] : memref<337xf32, #tpu.memory_space<smem>>
    %c3_821 = arith.constant 3 : index
    %c1_822 = arith.constant 1 : index
    %c1_823 = arith.constant 1 : index
    %1562 = vector.load %arg9[%c3_821, %c1_822, %c1_823] : memref<8x18x18xf32, #tpu.memory_space<vmem>>, vector<1x16x16xf32>
    %1563 = vector.shape_cast %1562 : vector<1x16x16xf32> to vector<16x16xf32>
    %1564 = vector.broadcast %1561 : f32 to vector<16x16xf32>
    %1565 = arith.mulf %1564, %1563 : vector<16x16xf32>
    %1566 = arith.addf %1560, %1565 : vector<16x16xf32>
    %c256 = arith.constant 256 : index
    %1567 = memref.load %arg1[%c256] : memref<337xf32, #tpu.memory_space<smem>>
    %c3_824 = arith.constant 3 : index
    %c1_825 = arith.constant 1 : index
    %c2_826 = arith.constant 2 : index
    %1568 = vector.load %arg9[%c3_824, %c1_825, %c2_826] : memref<8x18x18xf32, #tpu.memory_space<vmem>>, vector<1x16x16xf32>
    %1569 = vector.shape_cast %1568 : vector<1x16x16xf32> to vector<16x16xf32>
    %1570 = vector.broadcast %1567 : f32 to vector<16x16xf32>
    %1571 = arith.mulf %1570, %1569 : vector<16x16xf32>
    %1572 = arith.addf %1566, %1571 : vector<16x16xf32>
    %c257 = arith.constant 257 : index
    %1573 = memref.load %arg1[%c257] : memref<337xf32, #tpu.memory_space<smem>>
    %c3_827 = arith.constant 3 : index
    %c2_828 = arith.constant 2 : index
    %c0_829 = arith.constant 0 : index
    %1574 = vector.load %arg9[%c3_827, %c2_828, %c0_829] : memref<8x18x18xf32, #tpu.memory_space<vmem>>, vector<1x16x16xf32>
    %1575 = vector.shape_cast %1574 : vector<1x16x16xf32> to vector<16x16xf32>
    %1576 = vector.broadcast %1573 : f32 to vector<16x16xf32>
    %1577 = arith.mulf %1576, %1575 : vector<16x16xf32>
    %1578 = arith.addf %1572, %1577 : vector<16x16xf32>
    %c258 = arith.constant 258 : index
    %1579 = memref.load %arg1[%c258] : memref<337xf32, #tpu.memory_space<smem>>
    %c3_830 = arith.constant 3 : index
    %c2_831 = arith.constant 2 : index
    %c1_832 = arith.constant 1 : index
    %1580 = vector.load %arg9[%c3_830, %c2_831, %c1_832] : memref<8x18x18xf32, #tpu.memory_space<vmem>>, vector<1x16x16xf32>
    %1581 = vector.shape_cast %1580 : vector<1x16x16xf32> to vector<16x16xf32>
    %1582 = vector.broadcast %1579 : f32 to vector<16x16xf32>
    %1583 = arith.mulf %1582, %1581 : vector<16x16xf32>
    %1584 = arith.addf %1578, %1583 : vector<16x16xf32>
    %c259 = arith.constant 259 : index
    %1585 = memref.load %arg1[%c259] : memref<337xf32, #tpu.memory_space<smem>>
    %c3_833 = arith.constant 3 : index
    %c2_834 = arith.constant 2 : index
    %c2_835 = arith.constant 2 : index
    %1586 = vector.load %arg9[%c3_833, %c2_834, %c2_835] : memref<8x18x18xf32, #tpu.memory_space<vmem>>, vector<1x16x16xf32>
    %1587 = vector.shape_cast %1586 : vector<1x16x16xf32> to vector<16x16xf32>
    %1588 = vector.broadcast %1585 : f32 to vector<16x16xf32>
    %1589 = arith.mulf %1588, %1587 : vector<16x16xf32>
    %1590 = arith.addf %1584, %1589 : vector<16x16xf32>
    %c260 = arith.constant 260 : index
    %1591 = memref.load %arg1[%c260] : memref<337xf32, #tpu.memory_space<smem>>
    %c4_836 = arith.constant 4 : index
    %c0_837 = arith.constant 0 : index
    %c0_838 = arith.constant 0 : index
    %1592 = vector.load %arg9[%c4_836, %c0_837, %c0_838] : memref<8x18x18xf32, #tpu.memory_space<vmem>>, vector<1x16x16xf32>
    %1593 = vector.shape_cast %1592 : vector<1x16x16xf32> to vector<16x16xf32>
    %1594 = vector.broadcast %1591 : f32 to vector<16x16xf32>
    %1595 = arith.mulf %1594, %1593 : vector<16x16xf32>
    %1596 = arith.addf %1590, %1595 : vector<16x16xf32>
    %c261 = arith.constant 261 : index
    %1597 = memref.load %arg1[%c261] : memref<337xf32, #tpu.memory_space<smem>>
    %c4_839 = arith.constant 4 : index
    %c0_840 = arith.constant 0 : index
    %c1_841 = arith.constant 1 : index
    %1598 = vector.load %arg9[%c4_839, %c0_840, %c1_841] : memref<8x18x18xf32, #tpu.memory_space<vmem>>, vector<1x16x16xf32>
    %1599 = vector.shape_cast %1598 : vector<1x16x16xf32> to vector<16x16xf32>
    %1600 = vector.broadcast %1597 : f32 to vector<16x16xf32>
    %1601 = arith.mulf %1600, %1599 : vector<16x16xf32>
    %1602 = arith.addf %1596, %1601 : vector<16x16xf32>
    %c262 = arith.constant 262 : index
    %1603 = memref.load %arg1[%c262] : memref<337xf32, #tpu.memory_space<smem>>
    %c4_842 = arith.constant 4 : index
    %c0_843 = arith.constant 0 : index
    %c2_844 = arith.constant 2 : index
    %1604 = vector.load %arg9[%c4_842, %c0_843, %c2_844] : memref<8x18x18xf32, #tpu.memory_space<vmem>>, vector<1x16x16xf32>
    %1605 = vector.shape_cast %1604 : vector<1x16x16xf32> to vector<16x16xf32>
    %1606 = vector.broadcast %1603 : f32 to vector<16x16xf32>
    %1607 = arith.mulf %1606, %1605 : vector<16x16xf32>
    %1608 = arith.addf %1602, %1607 : vector<16x16xf32>
    %c263 = arith.constant 263 : index
    %1609 = memref.load %arg1[%c263] : memref<337xf32, #tpu.memory_space<smem>>
    %c4_845 = arith.constant 4 : index
    %c1_846 = arith.constant 1 : index
    %c0_847 = arith.constant 0 : index
    %1610 = vector.load %arg9[%c4_845, %c1_846, %c0_847] : memref<8x18x18xf32, #tpu.memory_space<vmem>>, vector<1x16x16xf32>
    %1611 = vector.shape_cast %1610 : vector<1x16x16xf32> to vector<16x16xf32>
    %1612 = vector.broadcast %1609 : f32 to vector<16x16xf32>
    %1613 = arith.mulf %1612, %1611 : vector<16x16xf32>
    %1614 = arith.addf %1608, %1613 : vector<16x16xf32>
    %c264 = arith.constant 264 : index
    %1615 = memref.load %arg1[%c264] : memref<337xf32, #tpu.memory_space<smem>>
    %c4_848 = arith.constant 4 : index
    %c1_849 = arith.constant 1 : index
    %c1_850 = arith.constant 1 : index
    %1616 = vector.load %arg9[%c4_848, %c1_849, %c1_850] : memref<8x18x18xf32, #tpu.memory_space<vmem>>, vector<1x16x16xf32>
    %1617 = vector.shape_cast %1616 : vector<1x16x16xf32> to vector<16x16xf32>
    %1618 = vector.broadcast %1615 : f32 to vector<16x16xf32>
    %1619 = arith.mulf %1618, %1617 : vector<16x16xf32>
    %1620 = arith.addf %1614, %1619 : vector<16x16xf32>
    %c265 = arith.constant 265 : index
    %1621 = memref.load %arg1[%c265] : memref<337xf32, #tpu.memory_space<smem>>
    %c4_851 = arith.constant 4 : index
    %c1_852 = arith.constant 1 : index
    %c2_853 = arith.constant 2 : index
    %1622 = vector.load %arg9[%c4_851, %c1_852, %c2_853] : memref<8x18x18xf32, #tpu.memory_space<vmem>>, vector<1x16x16xf32>
    %1623 = vector.shape_cast %1622 : vector<1x16x16xf32> to vector<16x16xf32>
    %1624 = vector.broadcast %1621 : f32 to vector<16x16xf32>
    %1625 = arith.mulf %1624, %1623 : vector<16x16xf32>
    %1626 = arith.addf %1620, %1625 : vector<16x16xf32>
    %c266 = arith.constant 266 : index
    %1627 = memref.load %arg1[%c266] : memref<337xf32, #tpu.memory_space<smem>>
    %c4_854 = arith.constant 4 : index
    %c2_855 = arith.constant 2 : index
    %c0_856 = arith.constant 0 : index
    %1628 = vector.load %arg9[%c4_854, %c2_855, %c0_856] : memref<8x18x18xf32, #tpu.memory_space<vmem>>, vector<1x16x16xf32>
    %1629 = vector.shape_cast %1628 : vector<1x16x16xf32> to vector<16x16xf32>
    %1630 = vector.broadcast %1627 : f32 to vector<16x16xf32>
    %1631 = arith.mulf %1630, %1629 : vector<16x16xf32>
    %1632 = arith.addf %1626, %1631 : vector<16x16xf32>
    %c267 = arith.constant 267 : index
    %1633 = memref.load %arg1[%c267] : memref<337xf32, #tpu.memory_space<smem>>
    %c4_857 = arith.constant 4 : index
    %c2_858 = arith.constant 2 : index
    %c1_859 = arith.constant 1 : index
    %1634 = vector.load %arg9[%c4_857, %c2_858, %c1_859] : memref<8x18x18xf32, #tpu.memory_space<vmem>>, vector<1x16x16xf32>
    %1635 = vector.shape_cast %1634 : vector<1x16x16xf32> to vector<16x16xf32>
    %1636 = vector.broadcast %1633 : f32 to vector<16x16xf32>
    %1637 = arith.mulf %1636, %1635 : vector<16x16xf32>
    %1638 = arith.addf %1632, %1637 : vector<16x16xf32>
    %c268 = arith.constant 268 : index
    %1639 = memref.load %arg1[%c268] : memref<337xf32, #tpu.memory_space<smem>>
    %c4_860 = arith.constant 4 : index
    %c2_861 = arith.constant 2 : index
    %c2_862 = arith.constant 2 : index
    %1640 = vector.load %arg9[%c4_860, %c2_861, %c2_862] : memref<8x18x18xf32, #tpu.memory_space<vmem>>, vector<1x16x16xf32>
    %1641 = vector.shape_cast %1640 : vector<1x16x16xf32> to vector<16x16xf32>
    %1642 = vector.broadcast %1639 : f32 to vector<16x16xf32>
    %1643 = arith.mulf %1642, %1641 : vector<16x16xf32>
    %1644 = arith.addf %1638, %1643 : vector<16x16xf32>
    %c269 = arith.constant 269 : index
    %1645 = memref.load %arg1[%c269] : memref<337xf32, #tpu.memory_space<smem>>
    %c5_863 = arith.constant 5 : index
    %c0_864 = arith.constant 0 : index
    %c0_865 = arith.constant 0 : index
    %1646 = vector.load %arg9[%c5_863, %c0_864, %c0_865] : memref<8x18x18xf32, #tpu.memory_space<vmem>>, vector<1x16x16xf32>
    %1647 = vector.shape_cast %1646 : vector<1x16x16xf32> to vector<16x16xf32>
    %1648 = vector.broadcast %1645 : f32 to vector<16x16xf32>
    %1649 = arith.mulf %1648, %1647 : vector<16x16xf32>
    %1650 = arith.addf %1644, %1649 : vector<16x16xf32>
    %c270 = arith.constant 270 : index
    %1651 = memref.load %arg1[%c270] : memref<337xf32, #tpu.memory_space<smem>>
    %c5_866 = arith.constant 5 : index
    %c0_867 = arith.constant 0 : index
    %c1_868 = arith.constant 1 : index
    %1652 = vector.load %arg9[%c5_866, %c0_867, %c1_868] : memref<8x18x18xf32, #tpu.memory_space<vmem>>, vector<1x16x16xf32>
    %1653 = vector.shape_cast %1652 : vector<1x16x16xf32> to vector<16x16xf32>
    %1654 = vector.broadcast %1651 : f32 to vector<16x16xf32>
    %1655 = arith.mulf %1654, %1653 : vector<16x16xf32>
    %1656 = arith.addf %1650, %1655 : vector<16x16xf32>
    %c271 = arith.constant 271 : index
    %1657 = memref.load %arg1[%c271] : memref<337xf32, #tpu.memory_space<smem>>
    %c5_869 = arith.constant 5 : index
    %c0_870 = arith.constant 0 : index
    %c2_871 = arith.constant 2 : index
    %1658 = vector.load %arg9[%c5_869, %c0_870, %c2_871] : memref<8x18x18xf32, #tpu.memory_space<vmem>>, vector<1x16x16xf32>
    %1659 = vector.shape_cast %1658 : vector<1x16x16xf32> to vector<16x16xf32>
    %1660 = vector.broadcast %1657 : f32 to vector<16x16xf32>
    %1661 = arith.mulf %1660, %1659 : vector<16x16xf32>
    %1662 = arith.addf %1656, %1661 : vector<16x16xf32>
    %c272 = arith.constant 272 : index
    %1663 = memref.load %arg1[%c272] : memref<337xf32, #tpu.memory_space<smem>>
    %c5_872 = arith.constant 5 : index
    %c1_873 = arith.constant 1 : index
    %c0_874 = arith.constant 0 : index
    %1664 = vector.load %arg9[%c5_872, %c1_873, %c0_874] : memref<8x18x18xf32, #tpu.memory_space<vmem>>, vector<1x16x16xf32>
    %1665 = vector.shape_cast %1664 : vector<1x16x16xf32> to vector<16x16xf32>
    %1666 = vector.broadcast %1663 : f32 to vector<16x16xf32>
    %1667 = arith.mulf %1666, %1665 : vector<16x16xf32>
    %1668 = arith.addf %1662, %1667 : vector<16x16xf32>
    %c273 = arith.constant 273 : index
    %1669 = memref.load %arg1[%c273] : memref<337xf32, #tpu.memory_space<smem>>
    %c5_875 = arith.constant 5 : index
    %c1_876 = arith.constant 1 : index
    %c1_877 = arith.constant 1 : index
    %1670 = vector.load %arg9[%c5_875, %c1_876, %c1_877] : memref<8x18x18xf32, #tpu.memory_space<vmem>>, vector<1x16x16xf32>
    %1671 = vector.shape_cast %1670 : vector<1x16x16xf32> to vector<16x16xf32>
    %1672 = vector.broadcast %1669 : f32 to vector<16x16xf32>
    %1673 = arith.mulf %1672, %1671 : vector<16x16xf32>
    %1674 = arith.addf %1668, %1673 : vector<16x16xf32>
    %c274 = arith.constant 274 : index
    %1675 = memref.load %arg1[%c274] : memref<337xf32, #tpu.memory_space<smem>>
    %c5_878 = arith.constant 5 : index
    %c1_879 = arith.constant 1 : index
    %c2_880 = arith.constant 2 : index
    %1676 = vector.load %arg9[%c5_878, %c1_879, %c2_880] : memref<8x18x18xf32, #tpu.memory_space<vmem>>, vector<1x16x16xf32>
    %1677 = vector.shape_cast %1676 : vector<1x16x16xf32> to vector<16x16xf32>
    %1678 = vector.broadcast %1675 : f32 to vector<16x16xf32>
    %1679 = arith.mulf %1678, %1677 : vector<16x16xf32>
    %1680 = arith.addf %1674, %1679 : vector<16x16xf32>
    %c275 = arith.constant 275 : index
    %1681 = memref.load %arg1[%c275] : memref<337xf32, #tpu.memory_space<smem>>
    %c5_881 = arith.constant 5 : index
    %c2_882 = arith.constant 2 : index
    %c0_883 = arith.constant 0 : index
    %1682 = vector.load %arg9[%c5_881, %c2_882, %c0_883] : memref<8x18x18xf32, #tpu.memory_space<vmem>>, vector<1x16x16xf32>
    %1683 = vector.shape_cast %1682 : vector<1x16x16xf32> to vector<16x16xf32>
    %1684 = vector.broadcast %1681 : f32 to vector<16x16xf32>
    %1685 = arith.mulf %1684, %1683 : vector<16x16xf32>
    %1686 = arith.addf %1680, %1685 : vector<16x16xf32>
    %c276 = arith.constant 276 : index
    %1687 = memref.load %arg1[%c276] : memref<337xf32, #tpu.memory_space<smem>>
    %c5_884 = arith.constant 5 : index
    %c2_885 = arith.constant 2 : index
    %c1_886 = arith.constant 1 : index
    %1688 = vector.load %arg9[%c5_884, %c2_885, %c1_886] : memref<8x18x18xf32, #tpu.memory_space<vmem>>, vector<1x16x16xf32>
    %1689 = vector.shape_cast %1688 : vector<1x16x16xf32> to vector<16x16xf32>
    %1690 = vector.broadcast %1687 : f32 to vector<16x16xf32>
    %1691 = arith.mulf %1690, %1689 : vector<16x16xf32>
    %1692 = arith.addf %1686, %1691 : vector<16x16xf32>
    %c277 = arith.constant 277 : index
    %1693 = memref.load %arg1[%c277] : memref<337xf32, #tpu.memory_space<smem>>
    %c5_887 = arith.constant 5 : index
    %c2_888 = arith.constant 2 : index
    %c2_889 = arith.constant 2 : index
    %1694 = vector.load %arg9[%c5_887, %c2_888, %c2_889] : memref<8x18x18xf32, #tpu.memory_space<vmem>>, vector<1x16x16xf32>
    %1695 = vector.shape_cast %1694 : vector<1x16x16xf32> to vector<16x16xf32>
    %1696 = vector.broadcast %1693 : f32 to vector<16x16xf32>
    %1697 = arith.mulf %1696, %1695 : vector<16x16xf32>
    %1698 = arith.addf %1692, %1697 : vector<16x16xf32>
    %c278 = arith.constant 278 : index
    %1699 = memref.load %arg1[%c278] : memref<337xf32, #tpu.memory_space<smem>>
    %c6_890 = arith.constant 6 : index
    %c0_891 = arith.constant 0 : index
    %c0_892 = arith.constant 0 : index
    %1700 = vector.load %arg9[%c6_890, %c0_891, %c0_892] : memref<8x18x18xf32, #tpu.memory_space<vmem>>, vector<1x16x16xf32>
    %1701 = vector.shape_cast %1700 : vector<1x16x16xf32> to vector<16x16xf32>
    %1702 = vector.broadcast %1699 : f32 to vector<16x16xf32>
    %1703 = arith.mulf %1702, %1701 : vector<16x16xf32>
    %1704 = arith.addf %1698, %1703 : vector<16x16xf32>
    %c279 = arith.constant 279 : index
    %1705 = memref.load %arg1[%c279] : memref<337xf32, #tpu.memory_space<smem>>
    %c6_893 = arith.constant 6 : index
    %c0_894 = arith.constant 0 : index
    %c1_895 = arith.constant 1 : index
    %1706 = vector.load %arg9[%c6_893, %c0_894, %c1_895] : memref<8x18x18xf32, #tpu.memory_space<vmem>>, vector<1x16x16xf32>
    %1707 = vector.shape_cast %1706 : vector<1x16x16xf32> to vector<16x16xf32>
    %1708 = vector.broadcast %1705 : f32 to vector<16x16xf32>
    %1709 = arith.mulf %1708, %1707 : vector<16x16xf32>
    %1710 = arith.addf %1704, %1709 : vector<16x16xf32>
    %c280 = arith.constant 280 : index
    %1711 = memref.load %arg1[%c280] : memref<337xf32, #tpu.memory_space<smem>>
    %c6_896 = arith.constant 6 : index
    %c0_897 = arith.constant 0 : index
    %c2_898 = arith.constant 2 : index
    %1712 = vector.load %arg9[%c6_896, %c0_897, %c2_898] : memref<8x18x18xf32, #tpu.memory_space<vmem>>, vector<1x16x16xf32>
    %1713 = vector.shape_cast %1712 : vector<1x16x16xf32> to vector<16x16xf32>
    %1714 = vector.broadcast %1711 : f32 to vector<16x16xf32>
    %1715 = arith.mulf %1714, %1713 : vector<16x16xf32>
    %1716 = arith.addf %1710, %1715 : vector<16x16xf32>
    %c281 = arith.constant 281 : index
    %1717 = memref.load %arg1[%c281] : memref<337xf32, #tpu.memory_space<smem>>
    %c6_899 = arith.constant 6 : index
    %c1_900 = arith.constant 1 : index
    %c0_901 = arith.constant 0 : index
    %1718 = vector.load %arg9[%c6_899, %c1_900, %c0_901] : memref<8x18x18xf32, #tpu.memory_space<vmem>>, vector<1x16x16xf32>
    %1719 = vector.shape_cast %1718 : vector<1x16x16xf32> to vector<16x16xf32>
    %1720 = vector.broadcast %1717 : f32 to vector<16x16xf32>
    %1721 = arith.mulf %1720, %1719 : vector<16x16xf32>
    %1722 = arith.addf %1716, %1721 : vector<16x16xf32>
    %c282 = arith.constant 282 : index
    %1723 = memref.load %arg1[%c282] : memref<337xf32, #tpu.memory_space<smem>>
    %c6_902 = arith.constant 6 : index
    %c1_903 = arith.constant 1 : index
    %c1_904 = arith.constant 1 : index
    %1724 = vector.load %arg9[%c6_902, %c1_903, %c1_904] : memref<8x18x18xf32, #tpu.memory_space<vmem>>, vector<1x16x16xf32>
    %1725 = vector.shape_cast %1724 : vector<1x16x16xf32> to vector<16x16xf32>
    %1726 = vector.broadcast %1723 : f32 to vector<16x16xf32>
    %1727 = arith.mulf %1726, %1725 : vector<16x16xf32>
    %1728 = arith.addf %1722, %1727 : vector<16x16xf32>
    %c283 = arith.constant 283 : index
    %1729 = memref.load %arg1[%c283] : memref<337xf32, #tpu.memory_space<smem>>
    %c6_905 = arith.constant 6 : index
    %c1_906 = arith.constant 1 : index
    %c2_907 = arith.constant 2 : index
    %1730 = vector.load %arg9[%c6_905, %c1_906, %c2_907] : memref<8x18x18xf32, #tpu.memory_space<vmem>>, vector<1x16x16xf32>
    %1731 = vector.shape_cast %1730 : vector<1x16x16xf32> to vector<16x16xf32>
    %1732 = vector.broadcast %1729 : f32 to vector<16x16xf32>
    %1733 = arith.mulf %1732, %1731 : vector<16x16xf32>
    %1734 = arith.addf %1728, %1733 : vector<16x16xf32>
    %c284 = arith.constant 284 : index
    %1735 = memref.load %arg1[%c284] : memref<337xf32, #tpu.memory_space<smem>>
    %c6_908 = arith.constant 6 : index
    %c2_909 = arith.constant 2 : index
    %c0_910 = arith.constant 0 : index
    %1736 = vector.load %arg9[%c6_908, %c2_909, %c0_910] : memref<8x18x18xf32, #tpu.memory_space<vmem>>, vector<1x16x16xf32>
    %1737 = vector.shape_cast %1736 : vector<1x16x16xf32> to vector<16x16xf32>
    %1738 = vector.broadcast %1735 : f32 to vector<16x16xf32>
    %1739 = arith.mulf %1738, %1737 : vector<16x16xf32>
    %1740 = arith.addf %1734, %1739 : vector<16x16xf32>
    %c285 = arith.constant 285 : index
    %1741 = memref.load %arg1[%c285] : memref<337xf32, #tpu.memory_space<smem>>
    %c6_911 = arith.constant 6 : index
    %c2_912 = arith.constant 2 : index
    %c1_913 = arith.constant 1 : index
    %1742 = vector.load %arg9[%c6_911, %c2_912, %c1_913] : memref<8x18x18xf32, #tpu.memory_space<vmem>>, vector<1x16x16xf32>
    %1743 = vector.shape_cast %1742 : vector<1x16x16xf32> to vector<16x16xf32>
    %1744 = vector.broadcast %1741 : f32 to vector<16x16xf32>
    %1745 = arith.mulf %1744, %1743 : vector<16x16xf32>
    %1746 = arith.addf %1740, %1745 : vector<16x16xf32>
    %c286 = arith.constant 286 : index
    %1747 = memref.load %arg1[%c286] : memref<337xf32, #tpu.memory_space<smem>>
    %c6_914 = arith.constant 6 : index
    %c2_915 = arith.constant 2 : index
    %c2_916 = arith.constant 2 : index
    %1748 = vector.load %arg9[%c6_914, %c2_915, %c2_916] : memref<8x18x18xf32, #tpu.memory_space<vmem>>, vector<1x16x16xf32>
    %1749 = vector.shape_cast %1748 : vector<1x16x16xf32> to vector<16x16xf32>
    %1750 = vector.broadcast %1747 : f32 to vector<16x16xf32>
    %1751 = arith.mulf %1750, %1749 : vector<16x16xf32>
    %1752 = arith.addf %1746, %1751 : vector<16x16xf32>
    %c287 = arith.constant 287 : index
    %1753 = memref.load %arg1[%c287] : memref<337xf32, #tpu.memory_space<smem>>
    %c7_917 = arith.constant 7 : index
    %c0_918 = arith.constant 0 : index
    %c0_919 = arith.constant 0 : index
    %1754 = vector.load %arg9[%c7_917, %c0_918, %c0_919] : memref<8x18x18xf32, #tpu.memory_space<vmem>>, vector<1x16x16xf32>
    %1755 = vector.shape_cast %1754 : vector<1x16x16xf32> to vector<16x16xf32>
    %1756 = vector.broadcast %1753 : f32 to vector<16x16xf32>
    %1757 = arith.mulf %1756, %1755 : vector<16x16xf32>
    %1758 = arith.addf %1752, %1757 : vector<16x16xf32>
    %c288 = arith.constant 288 : index
    %1759 = memref.load %arg1[%c288] : memref<337xf32, #tpu.memory_space<smem>>
    %c7_920 = arith.constant 7 : index
    %c0_921 = arith.constant 0 : index
    %c1_922 = arith.constant 1 : index
    %1760 = vector.load %arg9[%c7_920, %c0_921, %c1_922] : memref<8x18x18xf32, #tpu.memory_space<vmem>>, vector<1x16x16xf32>
    %1761 = vector.shape_cast %1760 : vector<1x16x16xf32> to vector<16x16xf32>
    %1762 = vector.broadcast %1759 : f32 to vector<16x16xf32>
    %1763 = arith.mulf %1762, %1761 : vector<16x16xf32>
    %1764 = arith.addf %1758, %1763 : vector<16x16xf32>
    %c289 = arith.constant 289 : index
    %1765 = memref.load %arg1[%c289] : memref<337xf32, #tpu.memory_space<smem>>
    %c7_923 = arith.constant 7 : index
    %c0_924 = arith.constant 0 : index
    %c2_925 = arith.constant 2 : index
    %1766 = vector.load %arg9[%c7_923, %c0_924, %c2_925] : memref<8x18x18xf32, #tpu.memory_space<vmem>>, vector<1x16x16xf32>
    %1767 = vector.shape_cast %1766 : vector<1x16x16xf32> to vector<16x16xf32>
    %1768 = vector.broadcast %1765 : f32 to vector<16x16xf32>
    %1769 = arith.mulf %1768, %1767 : vector<16x16xf32>
    %1770 = arith.addf %1764, %1769 : vector<16x16xf32>
    %c290 = arith.constant 290 : index
    %1771 = memref.load %arg1[%c290] : memref<337xf32, #tpu.memory_space<smem>>
    %c7_926 = arith.constant 7 : index
    %c1_927 = arith.constant 1 : index
    %c0_928 = arith.constant 0 : index
    %1772 = vector.load %arg9[%c7_926, %c1_927, %c0_928] : memref<8x18x18xf32, #tpu.memory_space<vmem>>, vector<1x16x16xf32>
    %1773 = vector.shape_cast %1772 : vector<1x16x16xf32> to vector<16x16xf32>
    %1774 = vector.broadcast %1771 : f32 to vector<16x16xf32>
    %1775 = arith.mulf %1774, %1773 : vector<16x16xf32>
    %1776 = arith.addf %1770, %1775 : vector<16x16xf32>
    %c291 = arith.constant 291 : index
    %1777 = memref.load %arg1[%c291] : memref<337xf32, #tpu.memory_space<smem>>
    %c7_929 = arith.constant 7 : index
    %c1_930 = arith.constant 1 : index
    %c1_931 = arith.constant 1 : index
    %1778 = vector.load %arg9[%c7_929, %c1_930, %c1_931] : memref<8x18x18xf32, #tpu.memory_space<vmem>>, vector<1x16x16xf32>
    %1779 = vector.shape_cast %1778 : vector<1x16x16xf32> to vector<16x16xf32>
    %1780 = vector.broadcast %1777 : f32 to vector<16x16xf32>
    %1781 = arith.mulf %1780, %1779 : vector<16x16xf32>
    %1782 = arith.addf %1776, %1781 : vector<16x16xf32>
    %c292 = arith.constant 292 : index
    %1783 = memref.load %arg1[%c292] : memref<337xf32, #tpu.memory_space<smem>>
    %c7_932 = arith.constant 7 : index
    %c1_933 = arith.constant 1 : index
    %c2_934 = arith.constant 2 : index
    %1784 = vector.load %arg9[%c7_932, %c1_933, %c2_934] : memref<8x18x18xf32, #tpu.memory_space<vmem>>, vector<1x16x16xf32>
    %1785 = vector.shape_cast %1784 : vector<1x16x16xf32> to vector<16x16xf32>
    %1786 = vector.broadcast %1783 : f32 to vector<16x16xf32>
    %1787 = arith.mulf %1786, %1785 : vector<16x16xf32>
    %1788 = arith.addf %1782, %1787 : vector<16x16xf32>
    %c293 = arith.constant 293 : index
    %1789 = memref.load %arg1[%c293] : memref<337xf32, #tpu.memory_space<smem>>
    %c7_935 = arith.constant 7 : index
    %c2_936 = arith.constant 2 : index
    %c0_937 = arith.constant 0 : index
    %1790 = vector.load %arg9[%c7_935, %c2_936, %c0_937] : memref<8x18x18xf32, #tpu.memory_space<vmem>>, vector<1x16x16xf32>
    %1791 = vector.shape_cast %1790 : vector<1x16x16xf32> to vector<16x16xf32>
    %1792 = vector.broadcast %1789 : f32 to vector<16x16xf32>
    %1793 = arith.mulf %1792, %1791 : vector<16x16xf32>
    %1794 = arith.addf %1788, %1793 : vector<16x16xf32>
    %c294 = arith.constant 294 : index
    %1795 = memref.load %arg1[%c294] : memref<337xf32, #tpu.memory_space<smem>>
    %c7_938 = arith.constant 7 : index
    %c2_939 = arith.constant 2 : index
    %c1_940 = arith.constant 1 : index
    %1796 = vector.load %arg9[%c7_938, %c2_939, %c1_940] : memref<8x18x18xf32, #tpu.memory_space<vmem>>, vector<1x16x16xf32>
    %1797 = vector.shape_cast %1796 : vector<1x16x16xf32> to vector<16x16xf32>
    %1798 = vector.broadcast %1795 : f32 to vector<16x16xf32>
    %1799 = arith.mulf %1798, %1797 : vector<16x16xf32>
    %1800 = arith.addf %1794, %1799 : vector<16x16xf32>
    %c295 = arith.constant 295 : index
    %1801 = memref.load %arg1[%c295] : memref<337xf32, #tpu.memory_space<smem>>
    %c7_941 = arith.constant 7 : index
    %c2_942 = arith.constant 2 : index
    %c2_943 = arith.constant 2 : index
    %1802 = vector.load %arg9[%c7_941, %c2_942, %c2_943] : memref<8x18x18xf32, #tpu.memory_space<vmem>>, vector<1x16x16xf32>
    %1803 = vector.shape_cast %1802 : vector<1x16x16xf32> to vector<16x16xf32>
    %1804 = vector.broadcast %1801 : f32 to vector<16x16xf32>
    %1805 = arith.mulf %1804, %1803 : vector<16x16xf32>
    %1806 = arith.addf %1800, %1805 : vector<16x16xf32>
    %c0_944 = arith.constant 0 : index
    %c0_945 = arith.constant 0 : index
    %c0_946 = arith.constant 0 : index
    %c0_947 = arith.constant 0 : index
    %1807 = vector.load %arg3[%c0_944, %c0_945, %c0_946, %c0_947] : memref<1x4x16x16xf32, #tpu.memory_space<vmem>>, vector<1x1x16x16xf32>
    %1808 = vector.shape_cast %1807 : vector<1x1x16x16xf32> to vector<16x16xf32>
    %c0_948 = arith.constant 0 : index
    %c1_949 = arith.constant 1 : index
    %c0_950 = arith.constant 0 : index
    %c0_951 = arith.constant 0 : index
    %1809 = vector.load %arg3[%c0_948, %c1_949, %c0_950, %c0_951] : memref<1x4x16x16xf32, #tpu.memory_space<vmem>>, vector<1x1x16x16xf32>
    %1810 = vector.shape_cast %1809 : vector<1x1x16x16xf32> to vector<16x16xf32>
    %1811 = arith.addf %1808, %1810 : vector<16x16xf32>
    %c0_952 = arith.constant 0 : index
    %c2_953 = arith.constant 2 : index
    %c0_954 = arith.constant 0 : index
    %c0_955 = arith.constant 0 : index
    %1812 = vector.load %arg3[%c0_952, %c2_953, %c0_954, %c0_955] : memref<1x4x16x16xf32, #tpu.memory_space<vmem>>, vector<1x1x16x16xf32>
    %1813 = vector.shape_cast %1812 : vector<1x1x16x16xf32> to vector<16x16xf32>
    %1814 = arith.addf %1811, %1813 : vector<16x16xf32>
    %c0_956 = arith.constant 0 : index
    %c3_957 = arith.constant 3 : index
    %c0_958 = arith.constant 0 : index
    %c0_959 = arith.constant 0 : index
    %1815 = vector.load %arg3[%c0_956, %c3_957, %c0_958, %c0_959] : memref<1x4x16x16xf32, #tpu.memory_space<vmem>>, vector<1x1x16x16xf32>
    %1816 = vector.shape_cast %1815 : vector<1x1x16x16xf32> to vector<16x16xf32>
    %1817 = arith.addf %1814, %1816 : vector<16x16xf32>
    %cst_960 = arith.constant 2.500000e-01 : f32
    %1818 = vector.broadcast %cst_960 : f32 to vector<16x16xf32>
    %1819 = arith.mulf %1817, %1818 : vector<16x16xf32>
    %cst_961 = arith.constant 0.000000e+00 : f32
    %1820 = vector.broadcast %cst_961 : f32 to vector<16x16xf32>
    %1821 = arith.maximumf %1806, %1820 : vector<16x16xf32>
    %1822 = arith.mulf %1806, %1819 : vector<16x16xf32>
    %1823 = arith.subf %1821, %1822 : vector<16x16xf32>
    %1824 = math.absf %1806 : vector<16x16xf32>
    %cst_962 = arith.constant 0.000000e+00 : f32
    %1825 = vector.broadcast %cst_962 : f32 to vector<16x16xf32>
    %1826 = arith.subf %1825, %1824 : vector<16x16xf32>
    %1827 = math.exp %1826 : vector<16x16xf32>
    %cst_963 = arith.constant 1.000000e+00 : f32
    %1828 = vector.broadcast %cst_963 : f32 to vector<16x16xf32>
    %1829 = arith.addf %1828, %1827 : vector<16x16xf32>
    %1830 = math.log %1829 : vector<16x16xf32>
    %1831 = arith.addf %1823, %1830 : vector<16x16xf32>
    %1832 = vector.shape_cast %1831 : vector<16x16xf32> to vector<1x16x16xf32>
    %cst_964 = arith.constant dense<0.000000e+00> : vector<1xf32>
    %1833 = vector.multi_reduction <add>, %1832, %cst_964 [1, 2] : vector<1x16x16xf32> to vector<1xf32>
    %1834 = vector.shape_cast %1833 : vector<1xf32> to vector<1x1x1xf32>
    %1835 = vector.extract %1834[0, 0, 0] : f32 from vector<1x1x1xf32>
    %1836 = vector.broadcast %1835 : f32 to vector<1x1xf32>
    %c0_965 = arith.constant 0 : index
    %c0_966 = arith.constant 0 : index
    %c0_967 = arith.constant 0 : index
    %1837 = vector.load %arg6[%c0_965, %c0_966, %c0_967] : memref<1x1x1xf32, #tpu.memory_space<vmem>>, vector<1x1x1xf32>
    %1838 = vector.shape_cast %1837 : vector<1x1x1xf32> to vector<1x1xf32>
    %1839 = vector.shape_cast %1836 : vector<1x1xf32> to vector<1x1x1xf32>
    tpu.vector_store %arg6[%c0_965, %c0_966, %c0_967], %1839 {strides = array<i32>} : memref<1x1x1xf32, #tpu.memory_space<vmem>>, vector<1x1x1xf32>,
    %1840 = arith.negf %1806 : vector<16x16xf32>
    %1841 = math.exp %1840 : vector<16x16xf32>
    %cst_968 = arith.constant 1.000000e+00 : f32
    %1842 = vector.broadcast %cst_968 : f32 to vector<16x16xf32>
    %1843 = arith.addf %1842, %1841 : vector<16x16xf32>
    %1844 = arith.divf %1842, %1843 : vector<16x16xf32>
    %c0_969 = arith.constant 0 : index
    %c0_970 = arith.constant 0 : index
    %c0_971 = arith.constant 0 : index
    %c0_972 = arith.constant 0 : index
    %1845 = vector.load %arg4[%c0_969, %c0_970, %c0_971, %c0_972] : memref<1x1x16x16xf32, #tpu.memory_space<vmem>>, vector<1x1x16x16xf32>
    %1846 = vector.shape_cast %1845 : vector<1x1x16x16xf32> to vector<16x16xf32>
    %1847 = vector.shape_cast %1844 : vector<16x16xf32> to vector<1x1x16x16xf32>
    tpu.vector_store %arg4[%c0_969, %c0_970, %c0_971, %c0_972], %1847 {strides = array<i32>} : memref<1x1x16x16xf32, #tpu.memory_space<vmem>>, vector<1x1x16x16xf32>,
    %c0_973 = arith.constant 0 : index
    %c1_974 = arith.constant 1 : index
    %c1_975 = arith.constant 1 : index
    %1848 = vector.load %arg10[%c0_973, %c1_974, %c1_975] : memref<1x18x18xf32, #tpu.memory_space<vmem>>, vector<1x16x16xf32>
    %1849 = vector.shape_cast %1848 : vector<1x16x16xf32> to vector<16x16xf32>
    %1850 = vector.shape_cast %1844 : vector<16x16xf32> to vector<1x16x16xf32>
    tpu.vector_store %arg10[%c0_973, %c1_974, %c1_975], %1850 {strides = array<i32>} : memref<1x18x18xf32, #tpu.memory_space<vmem>>, vector<1x16x16xf32>,
    %cst_976 = arith.constant 0.000000e+00 : f32
    %1851 = vector.broadcast %cst_976 : f32 to vector<1x1xf32>
    %c333 = arith.constant 333 : index
    %1852 = memref.load %arg1[%c333] : memref<337xf32, #tpu.memory_space<smem>>
    %1853 = vector.broadcast %1852 : f32 to vector<16x16xf32>
    %c297 = arith.constant 297 : index
    %1854 = memref.load %arg1[%c297] : memref<337xf32, #tpu.memory_space<smem>>
    %c0_977 = arith.constant 0 : index
    %c0_978 = arith.constant 0 : index
    %c0_979 = arith.constant 0 : index
    %1855 = vector.load %arg10[%c0_977, %c0_978, %c0_979] : memref<1x18x18xf32, #tpu.memory_space<vmem>>, vector<1x16x16xf32>
    %1856 = vector.shape_cast %1855 : vector<1x16x16xf32> to vector<16x16xf32>
    %1857 = vector.broadcast %1854 : f32 to vector<16x16xf32>
    %1858 = arith.mulf %1857, %1856 : vector<16x16xf32>
    %1859 = arith.addf %1853, %1858 : vector<16x16xf32>
    %c298 = arith.constant 298 : index
    %1860 = memref.load %arg1[%c298] : memref<337xf32, #tpu.memory_space<smem>>
    %c0_980 = arith.constant 0 : index
    %c0_981 = arith.constant 0 : index
    %c1_982 = arith.constant 1 : index
    %1861 = vector.load %arg10[%c0_980, %c0_981, %c1_982] : memref<1x18x18xf32, #tpu.memory_space<vmem>>, vector<1x16x16xf32>
    %1862 = vector.shape_cast %1861 : vector<1x16x16xf32> to vector<16x16xf32>
    %1863 = vector.broadcast %1860 : f32 to vector<16x16xf32>
    %1864 = arith.mulf %1863, %1862 : vector<16x16xf32>
    %1865 = arith.addf %1859, %1864 : vector<16x16xf32>
    %c299 = arith.constant 299 : index
    %1866 = memref.load %arg1[%c299] : memref<337xf32, #tpu.memory_space<smem>>
    %c0_983 = arith.constant 0 : index
    %c0_984 = arith.constant 0 : index
    %c2_985 = arith.constant 2 : index
    %1867 = vector.load %arg10[%c0_983, %c0_984, %c2_985] : memref<1x18x18xf32, #tpu.memory_space<vmem>>, vector<1x16x16xf32>
    %1868 = vector.shape_cast %1867 : vector<1x16x16xf32> to vector<16x16xf32>
    %1869 = vector.broadcast %1866 : f32 to vector<16x16xf32>
    %1870 = arith.mulf %1869, %1868 : vector<16x16xf32>
    %1871 = arith.addf %1865, %1870 : vector<16x16xf32>
    %c300 = arith.constant 300 : index
    %1872 = memref.load %arg1[%c300] : memref<337xf32, #tpu.memory_space<smem>>
    %c0_986 = arith.constant 0 : index
    %c1_987 = arith.constant 1 : index
    %c0_988 = arith.constant 0 : index
    %1873 = vector.load %arg10[%c0_986, %c1_987, %c0_988] : memref<1x18x18xf32, #tpu.memory_space<vmem>>, vector<1x16x16xf32>
    %1874 = vector.shape_cast %1873 : vector<1x16x16xf32> to vector<16x16xf32>
    %1875 = vector.broadcast %1872 : f32 to vector<16x16xf32>
    %1876 = arith.mulf %1875, %1874 : vector<16x16xf32>
    %1877 = arith.addf %1871, %1876 : vector<16x16xf32>
    %c301 = arith.constant 301 : index
    %1878 = memref.load %arg1[%c301] : memref<337xf32, #tpu.memory_space<smem>>
    %c0_989 = arith.constant 0 : index
    %c1_990 = arith.constant 1 : index
    %c1_991 = arith.constant 1 : index
    %1879 = vector.load %arg10[%c0_989, %c1_990, %c1_991] : memref<1x18x18xf32, #tpu.memory_space<vmem>>, vector<1x16x16xf32>
    %1880 = vector.shape_cast %1879 : vector<1x16x16xf32> to vector<16x16xf32>
    %1881 = vector.broadcast %1878 : f32 to vector<16x16xf32>
    %1882 = arith.mulf %1881, %1880 : vector<16x16xf32>
    %1883 = arith.addf %1877, %1882 : vector<16x16xf32>
    %c302 = arith.constant 302 : index
    %1884 = memref.load %arg1[%c302] : memref<337xf32, #tpu.memory_space<smem>>
    %c0_992 = arith.constant 0 : index
    %c1_993 = arith.constant 1 : index
    %c2_994 = arith.constant 2 : index
    %1885 = vector.load %arg10[%c0_992, %c1_993, %c2_994] : memref<1x18x18xf32, #tpu.memory_space<vmem>>, vector<1x16x16xf32>
    %1886 = vector.shape_cast %1885 : vector<1x16x16xf32> to vector<16x16xf32>
    %1887 = vector.broadcast %1884 : f32 to vector<16x16xf32>
    %1888 = arith.mulf %1887, %1886 : vector<16x16xf32>
    %1889 = arith.addf %1883, %1888 : vector<16x16xf32>
    %c303 = arith.constant 303 : index
    %1890 = memref.load %arg1[%c303] : memref<337xf32, #tpu.memory_space<smem>>
    %c0_995 = arith.constant 0 : index
    %c2_996 = arith.constant 2 : index
    %c0_997 = arith.constant 0 : index
    %1891 = vector.load %arg10[%c0_995, %c2_996, %c0_997] : memref<1x18x18xf32, #tpu.memory_space<vmem>>, vector<1x16x16xf32>
    %1892 = vector.shape_cast %1891 : vector<1x16x16xf32> to vector<16x16xf32>
    %1893 = vector.broadcast %1890 : f32 to vector<16x16xf32>
    %1894 = arith.mulf %1893, %1892 : vector<16x16xf32>
    %1895 = arith.addf %1889, %1894 : vector<16x16xf32>
    %c304 = arith.constant 304 : index
    %1896 = memref.load %arg1[%c304] : memref<337xf32, #tpu.memory_space<smem>>
    %c0_998 = arith.constant 0 : index
    %c2_999 = arith.constant 2 : index
    %c1_1000 = arith.constant 1 : index
    %1897 = vector.load %arg10[%c0_998, %c2_999, %c1_1000] : memref<1x18x18xf32, #tpu.memory_space<vmem>>, vector<1x16x16xf32>
    %1898 = vector.shape_cast %1897 : vector<1x16x16xf32> to vector<16x16xf32>
    %1899 = vector.broadcast %1896 : f32 to vector<16x16xf32>
    %1900 = arith.mulf %1899, %1898 : vector<16x16xf32>
    %1901 = arith.addf %1895, %1900 : vector<16x16xf32>
    %c305 = arith.constant 305 : index
    %1902 = memref.load %arg1[%c305] : memref<337xf32, #tpu.memory_space<smem>>
    %c0_1001 = arith.constant 0 : index
    %c2_1002 = arith.constant 2 : index
    %c2_1003 = arith.constant 2 : index
    %1903 = vector.load %arg10[%c0_1001, %c2_1002, %c2_1003] : memref<1x18x18xf32, #tpu.memory_space<vmem>>, vector<1x16x16xf32>
    %1904 = vector.shape_cast %1903 : vector<1x16x16xf32> to vector<16x16xf32>
    %1905 = vector.broadcast %1902 : f32 to vector<16x16xf32>
    %1906 = arith.mulf %1905, %1904 : vector<16x16xf32>
    %1907 = arith.addf %1901, %1906 : vector<16x16xf32>
    %c0_1004 = arith.constant 0 : index
    %c0_1005 = arith.constant 0 : index
    %c0_1006 = arith.constant 0 : index
    %c0_1007 = arith.constant 0 : index
    %1908 = vector.load %arg5[%c0_1004, %c0_1005, %c0_1006, %c0_1007] : memref<1x4x16x16xf32, #tpu.memory_space<vmem>>, vector<1x1x16x16xf32>
    %1909 = vector.shape_cast %1908 : vector<1x1x16x16xf32> to vector<16x16xf32>
    %1910 = vector.shape_cast %1907 : vector<16x16xf32> to vector<1x1x16x16xf32>
    tpu.vector_store %arg5[%c0_1004, %c0_1005, %c0_1006, %c0_1007], %1910 {strides = array<i32>} : memref<1x4x16x16xf32, #tpu.memory_space<vmem>>, vector<1x1x16x16xf32>,
    %c0_1008 = arith.constant 0 : index
    %c0_1009 = arith.constant 0 : index
    %c0_1010 = arith.constant 0 : index
    %c0_1011 = arith.constant 0 : index
    %1911 = vector.load %arg3[%c0_1008, %c0_1009, %c0_1010, %c0_1011] : memref<1x4x16x16xf32, #tpu.memory_space<vmem>>, vector<1x1x16x16xf32>
    %1912 = vector.shape_cast %1911 : vector<1x1x16x16xf32> to vector<16x16xf32>
    %1913 = arith.subf %1907, %1912 : vector<16x16xf32>
    %1914 = math.absf %1913 : vector<16x16xf32>
    %1915 = vector.shape_cast %1914 : vector<16x16xf32> to vector<1x16x16xf32>
    %cst_1012 = arith.constant dense<0.000000e+00> : vector<1xf32>
    %1916 = vector.multi_reduction <add>, %1915, %cst_1012 [1, 2] : vector<1x16x16xf32> to vector<1xf32>
    %1917 = vector.shape_cast %1916 : vector<1xf32> to vector<1x1x1xf32>
    %1918 = vector.extract %1917[0, 0, 0] : f32 from vector<1x1x1xf32>
    %1919 = vector.broadcast %1918 : f32 to vector<1x1xf32>
    %1920 = arith.addf %1851, %1919 : vector<1x1xf32>
    %c334 = arith.constant 334 : index
    %1921 = memref.load %arg1[%c334] : memref<337xf32, #tpu.memory_space<smem>>
    %1922 = vector.broadcast %1921 : f32 to vector<16x16xf32>
    %c306 = arith.constant 306 : index
    %1923 = memref.load %arg1[%c306] : memref<337xf32, #tpu.memory_space<smem>>
    %c0_1013 = arith.constant 0 : index
    %c0_1014 = arith.constant 0 : index
    %c0_1015 = arith.constant 0 : index
    %1924 = vector.load %arg10[%c0_1013, %c0_1014, %c0_1015] : memref<1x18x18xf32, #tpu.memory_space<vmem>>, vector<1x16x16xf32>
    %1925 = vector.shape_cast %1924 : vector<1x16x16xf32> to vector<16x16xf32>
    %1926 = vector.broadcast %1923 : f32 to vector<16x16xf32>
    %1927 = arith.mulf %1926, %1925 : vector<16x16xf32>
    %1928 = arith.addf %1922, %1927 : vector<16x16xf32>
    %c307 = arith.constant 307 : index
    %1929 = memref.load %arg1[%c307] : memref<337xf32, #tpu.memory_space<smem>>
    %c0_1016 = arith.constant 0 : index
    %c0_1017 = arith.constant 0 : index
    %c1_1018 = arith.constant 1 : index
    %1930 = vector.load %arg10[%c0_1016, %c0_1017, %c1_1018] : memref<1x18x18xf32, #tpu.memory_space<vmem>>, vector<1x16x16xf32>
    %1931 = vector.shape_cast %1930 : vector<1x16x16xf32> to vector<16x16xf32>
    %1932 = vector.broadcast %1929 : f32 to vector<16x16xf32>
    %1933 = arith.mulf %1932, %1931 : vector<16x16xf32>
    %1934 = arith.addf %1928, %1933 : vector<16x16xf32>
    %c308 = arith.constant 308 : index
    %1935 = memref.load %arg1[%c308] : memref<337xf32, #tpu.memory_space<smem>>
    %c0_1019 = arith.constant 0 : index
    %c0_1020 = arith.constant 0 : index
    %c2_1021 = arith.constant 2 : index
    %1936 = vector.load %arg10[%c0_1019, %c0_1020, %c2_1021] : memref<1x18x18xf32, #tpu.memory_space<vmem>>, vector<1x16x16xf32>
    %1937 = vector.shape_cast %1936 : vector<1x16x16xf32> to vector<16x16xf32>
    %1938 = vector.broadcast %1935 : f32 to vector<16x16xf32>
    %1939 = arith.mulf %1938, %1937 : vector<16x16xf32>
    %1940 = arith.addf %1934, %1939 : vector<16x16xf32>
    %c309 = arith.constant 309 : index
    %1941 = memref.load %arg1[%c309] : memref<337xf32, #tpu.memory_space<smem>>
    %c0_1022 = arith.constant 0 : index
    %c1_1023 = arith.constant 1 : index
    %c0_1024 = arith.constant 0 : index
    %1942 = vector.load %arg10[%c0_1022, %c1_1023, %c0_1024] : memref<1x18x18xf32, #tpu.memory_space<vmem>>, vector<1x16x16xf32>
    %1943 = vector.shape_cast %1942 : vector<1x16x16xf32> to vector<16x16xf32>
    %1944 = vector.broadcast %1941 : f32 to vector<16x16xf32>
    %1945 = arith.mulf %1944, %1943 : vector<16x16xf32>
    %1946 = arith.addf %1940, %1945 : vector<16x16xf32>
    %c310 = arith.constant 310 : index
    %1947 = memref.load %arg1[%c310] : memref<337xf32, #tpu.memory_space<smem>>
    %c0_1025 = arith.constant 0 : index
    %c1_1026 = arith.constant 1 : index
    %c1_1027 = arith.constant 1 : index
    %1948 = vector.load %arg10[%c0_1025, %c1_1026, %c1_1027] : memref<1x18x18xf32, #tpu.memory_space<vmem>>, vector<1x16x16xf32>
    %1949 = vector.shape_cast %1948 : vector<1x16x16xf32> to vector<16x16xf32>
    %1950 = vector.broadcast %1947 : f32 to vector<16x16xf32>
    %1951 = arith.mulf %1950, %1949 : vector<16x16xf32>
    %1952 = arith.addf %1946, %1951 : vector<16x16xf32>
    %c311 = arith.constant 311 : index
    %1953 = memref.load %arg1[%c311] : memref<337xf32, #tpu.memory_space<smem>>
    %c0_1028 = arith.constant 0 : index
    %c1_1029 = arith.constant 1 : index
    %c2_1030 = arith.constant 2 : index
    %1954 = vector.load %arg10[%c0_1028, %c1_1029, %c2_1030] : memref<1x18x18xf32, #tpu.memory_space<vmem>>, vector<1x16x16xf32>
    %1955 = vector.shape_cast %1954 : vector<1x16x16xf32> to vector<16x16xf32>
    %1956 = vector.broadcast %1953 : f32 to vector<16x16xf32>
    %1957 = arith.mulf %1956, %1955 : vector<16x16xf32>
    %1958 = arith.addf %1952, %1957 : vector<16x16xf32>
    %c312 = arith.constant 312 : index
    %1959 = memref.load %arg1[%c312] : memref<337xf32, #tpu.memory_space<smem>>
    %c0_1031 = arith.constant 0 : index
    %c2_1032 = arith.constant 2 : index
    %c0_1033 = arith.constant 0 : index
    %1960 = vector.load %arg10[%c0_1031, %c2_1032, %c0_1033] : memref<1x18x18xf32, #tpu.memory_space<vmem>>, vector<1x16x16xf32>
    %1961 = vector.shape_cast %1960 : vector<1x16x16xf32> to vector<16x16xf32>
    %1962 = vector.broadcast %1959 : f32 to vector<16x16xf32>
    %1963 = arith.mulf %1962, %1961 : vector<16x16xf32>
    %1964 = arith.addf %1958, %1963 : vector<16x16xf32>
    %c313 = arith.constant 313 : index
    %1965 = memref.load %arg1[%c313] : memref<337xf32, #tpu.memory_space<smem>>
    %c0_1034 = arith.constant 0 : index
    %c2_1035 = arith.constant 2 : index
    %c1_1036 = arith.constant 1 : index
    %1966 = vector.load %arg10[%c0_1034, %c2_1035, %c1_1036] : memref<1x18x18xf32, #tpu.memory_space<vmem>>, vector<1x16x16xf32>
    %1967 = vector.shape_cast %1966 : vector<1x16x16xf32> to vector<16x16xf32>
    %1968 = vector.broadcast %1965 : f32 to vector<16x16xf32>
    %1969 = arith.mulf %1968, %1967 : vector<16x16xf32>
    %1970 = arith.addf %1964, %1969 : vector<16x16xf32>
    %c314 = arith.constant 314 : index
    %1971 = memref.load %arg1[%c314] : memref<337xf32, #tpu.memory_space<smem>>
    %c0_1037 = arith.constant 0 : index
    %c2_1038 = arith.constant 2 : index
    %c2_1039 = arith.constant 2 : index
    %1972 = vector.load %arg10[%c0_1037, %c2_1038, %c2_1039] : memref<1x18x18xf32, #tpu.memory_space<vmem>>, vector<1x16x16xf32>
    %1973 = vector.shape_cast %1972 : vector<1x16x16xf32> to vector<16x16xf32>
    %1974 = vector.broadcast %1971 : f32 to vector<16x16xf32>
    %1975 = arith.mulf %1974, %1973 : vector<16x16xf32>
    %1976 = arith.addf %1970, %1975 : vector<16x16xf32>
    %c0_1040 = arith.constant 0 : index
    %c1_1041 = arith.constant 1 : index
    %c0_1042 = arith.constant 0 : index
    %c0_1043 = arith.constant 0 : index
    %1977 = vector.load %arg5[%c0_1040, %c1_1041, %c0_1042, %c0_1043] : memref<1x4x16x16xf32, #tpu.memory_space<vmem>>, vector<1x1x16x16xf32>
    %1978 = vector.shape_cast %1977 : vector<1x1x16x16xf32> to vector<16x16xf32>
    %1979 = vector.shape_cast %1976 : vector<16x16xf32> to vector<1x1x16x16xf32>
    tpu.vector_store %arg5[%c0_1040, %c1_1041, %c0_1042, %c0_1043], %1979 {strides = array<i32>} : memref<1x4x16x16xf32, #tpu.memory_space<vmem>>, vector<1x1x16x16xf32>,
    %c0_1044 = arith.constant 0 : index
    %c1_1045 = arith.constant 1 : index
    %c0_1046 = arith.constant 0 : index
    %c0_1047 = arith.constant 0 : index
    %1980 = vector.load %arg3[%c0_1044, %c1_1045, %c0_1046, %c0_1047] : memref<1x4x16x16xf32, #tpu.memory_space<vmem>>, vector<1x1x16x16xf32>
    %1981 = vector.shape_cast %1980 : vector<1x1x16x16xf32> to vector<16x16xf32>
    %1982 = arith.subf %1976, %1981 : vector<16x16xf32>
    %1983 = math.absf %1982 : vector<16x16xf32>
    %1984 = vector.shape_cast %1983 : vector<16x16xf32> to vector<1x16x16xf32>
    %cst_1048 = arith.constant dense<0.000000e+00> : vector<1xf32>
    %1985 = vector.multi_reduction <add>, %1984, %cst_1048 [1, 2] : vector<1x16x16xf32> to vector<1xf32>
    %1986 = vector.shape_cast %1985 : vector<1xf32> to vector<1x1x1xf32>
    %1987 = vector.extract %1986[0, 0, 0] : f32 from vector<1x1x1xf32>
    %1988 = vector.broadcast %1987 : f32 to vector<1x1xf32>
    %1989 = arith.addf %1920, %1988 : vector<1x1xf32>
    %c335 = arith.constant 335 : index
    %1990 = memref.load %arg1[%c335] : memref<337xf32, #tpu.memory_space<smem>>
    %1991 = vector.broadcast %1990 : f32 to vector<16x16xf32>
    %c315 = arith.constant 315 : index
    %1992 = memref.load %arg1[%c315] : memref<337xf32, #tpu.memory_space<smem>>
    %c0_1049 = arith.constant 0 : index
    %c0_1050 = arith.constant 0 : index
    %c0_1051 = arith.constant 0 : index
    %1993 = vector.load %arg10[%c0_1049, %c0_1050, %c0_1051] : memref<1x18x18xf32, #tpu.memory_space<vmem>>, vector<1x16x16xf32>
    %1994 = vector.shape_cast %1993 : vector<1x16x16xf32> to vector<16x16xf32>
    %1995 = vector.broadcast %1992 : f32 to vector<16x16xf32>
    %1996 = arith.mulf %1995, %1994 : vector<16x16xf32>
    %1997 = arith.addf %1991, %1996 : vector<16x16xf32>
    %c316 = arith.constant 316 : index
    %1998 = memref.load %arg1[%c316] : memref<337xf32, #tpu.memory_space<smem>>
    %c0_1052 = arith.constant 0 : index
    %c0_1053 = arith.constant 0 : index
    %c1_1054 = arith.constant 1 : index
    %1999 = vector.load %arg10[%c0_1052, %c0_1053, %c1_1054] : memref<1x18x18xf32, #tpu.memory_space<vmem>>, vector<1x16x16xf32>
    %2000 = vector.shape_cast %1999 : vector<1x16x16xf32> to vector<16x16xf32>
    %2001 = vector.broadcast %1998 : f32 to vector<16x16xf32>
    %2002 = arith.mulf %2001, %2000 : vector<16x16xf32>
    %2003 = arith.addf %1997, %2002 : vector<16x16xf32>
    %c317 = arith.constant 317 : index
    %2004 = memref.load %arg1[%c317] : memref<337xf32, #tpu.memory_space<smem>>
    %c0_1055 = arith.constant 0 : index
    %c0_1056 = arith.constant 0 : index
    %c2_1057 = arith.constant 2 : index
    %2005 = vector.load %arg10[%c0_1055, %c0_1056, %c2_1057] : memref<1x18x18xf32, #tpu.memory_space<vmem>>, vector<1x16x16xf32>
    %2006 = vector.shape_cast %2005 : vector<1x16x16xf32> to vector<16x16xf32>
    %2007 = vector.broadcast %2004 : f32 to vector<16x16xf32>
    %2008 = arith.mulf %2007, %2006 : vector<16x16xf32>
    %2009 = arith.addf %2003, %2008 : vector<16x16xf32>
    %c318 = arith.constant 318 : index
    %2010 = memref.load %arg1[%c318] : memref<337xf32, #tpu.memory_space<smem>>
    %c0_1058 = arith.constant 0 : index
    %c1_1059 = arith.constant 1 : index
    %c0_1060 = arith.constant 0 : index
    %2011 = vector.load %arg10[%c0_1058, %c1_1059, %c0_1060] : memref<1x18x18xf32, #tpu.memory_space<vmem>>, vector<1x16x16xf32>
    %2012 = vector.shape_cast %2011 : vector<1x16x16xf32> to vector<16x16xf32>
    %2013 = vector.broadcast %2010 : f32 to vector<16x16xf32>
    %2014 = arith.mulf %2013, %2012 : vector<16x16xf32>
    %2015 = arith.addf %2009, %2014 : vector<16x16xf32>
    %c319 = arith.constant 319 : index
    %2016 = memref.load %arg1[%c319] : memref<337xf32, #tpu.memory_space<smem>>
    %c0_1061 = arith.constant 0 : index
    %c1_1062 = arith.constant 1 : index
    %c1_1063 = arith.constant 1 : index
    %2017 = vector.load %arg10[%c0_1061, %c1_1062, %c1_1063] : memref<1x18x18xf32, #tpu.memory_space<vmem>>, vector<1x16x16xf32>
    %2018 = vector.shape_cast %2017 : vector<1x16x16xf32> to vector<16x16xf32>
    %2019 = vector.broadcast %2016 : f32 to vector<16x16xf32>
    %2020 = arith.mulf %2019, %2018 : vector<16x16xf32>
    %2021 = arith.addf %2015, %2020 : vector<16x16xf32>
    %c320 = arith.constant 320 : index
    %2022 = memref.load %arg1[%c320] : memref<337xf32, #tpu.memory_space<smem>>
    %c0_1064 = arith.constant 0 : index
    %c1_1065 = arith.constant 1 : index
    %c2_1066 = arith.constant 2 : index
    %2023 = vector.load %arg10[%c0_1064, %c1_1065, %c2_1066] : memref<1x18x18xf32, #tpu.memory_space<vmem>>, vector<1x16x16xf32>
    %2024 = vector.shape_cast %2023 : vector<1x16x16xf32> to vector<16x16xf32>
    %2025 = vector.broadcast %2022 : f32 to vector<16x16xf32>
    %2026 = arith.mulf %2025, %2024 : vector<16x16xf32>
    %2027 = arith.addf %2021, %2026 : vector<16x16xf32>
    %c321 = arith.constant 321 : index
    %2028 = memref.load %arg1[%c321] : memref<337xf32, #tpu.memory_space<smem>>
    %c0_1067 = arith.constant 0 : index
    %c2_1068 = arith.constant 2 : index
    %c0_1069 = arith.constant 0 : index
    %2029 = vector.load %arg10[%c0_1067, %c2_1068, %c0_1069] : memref<1x18x18xf32, #tpu.memory_space<vmem>>, vector<1x16x16xf32>
    %2030 = vector.shape_cast %2029 : vector<1x16x16xf32> to vector<16x16xf32>
    %2031 = vector.broadcast %2028 : f32 to vector<16x16xf32>
    %2032 = arith.mulf %2031, %2030 : vector<16x16xf32>
    %2033 = arith.addf %2027, %2032 : vector<16x16xf32>
    %c322 = arith.constant 322 : index
    %2034 = memref.load %arg1[%c322] : memref<337xf32, #tpu.memory_space<smem>>
    %c0_1070 = arith.constant 0 : index
    %c2_1071 = arith.constant 2 : index
    %c1_1072 = arith.constant 1 : index
    %2035 = vector.load %arg10[%c0_1070, %c2_1071, %c1_1072] : memref<1x18x18xf32, #tpu.memory_space<vmem>>, vector<1x16x16xf32>
    %2036 = vector.shape_cast %2035 : vector<1x16x16xf32> to vector<16x16xf32>
    %2037 = vector.broadcast %2034 : f32 to vector<16x16xf32>
    %2038 = arith.mulf %2037, %2036 : vector<16x16xf32>
    %2039 = arith.addf %2033, %2038 : vector<16x16xf32>
    %c323 = arith.constant 323 : index
    %2040 = memref.load %arg1[%c323] : memref<337xf32, #tpu.memory_space<smem>>
    %c0_1073 = arith.constant 0 : index
    %c2_1074 = arith.constant 2 : index
    %c2_1075 = arith.constant 2 : index
    %2041 = vector.load %arg10[%c0_1073, %c2_1074, %c2_1075] : memref<1x18x18xf32, #tpu.memory_space<vmem>>, vector<1x16x16xf32>
    %2042 = vector.shape_cast %2041 : vector<1x16x16xf32> to vector<16x16xf32>
    %2043 = vector.broadcast %2040 : f32 to vector<16x16xf32>
    %2044 = arith.mulf %2043, %2042 : vector<16x16xf32>
    %2045 = arith.addf %2039, %2044 : vector<16x16xf32>
    %c0_1076 = arith.constant 0 : index
    %c2_1077 = arith.constant 2 : index
    %c0_1078 = arith.constant 0 : index
    %c0_1079 = arith.constant 0 : index
    %2046 = vector.load %arg5[%c0_1076, %c2_1077, %c0_1078, %c0_1079] : memref<1x4x16x16xf32, #tpu.memory_space<vmem>>, vector<1x1x16x16xf32>
    %2047 = vector.shape_cast %2046 : vector<1x1x16x16xf32> to vector<16x16xf32>
    %2048 = vector.shape_cast %2045 : vector<16x16xf32> to vector<1x1x16x16xf32>
    tpu.vector_store %arg5[%c0_1076, %c2_1077, %c0_1078, %c0_1079], %2048 {strides = array<i32>} : memref<1x4x16x16xf32, #tpu.memory_space<vmem>>, vector<1x1x16x16xf32>,
    %c0_1080 = arith.constant 0 : index
    %c2_1081 = arith.constant 2 : index
    %c0_1082 = arith.constant 0 : index
    %c0_1083 = arith.constant 0 : index
    %2049 = vector.load %arg3[%c0_1080, %c2_1081, %c0_1082, %c0_1083] : memref<1x4x16x16xf32, #tpu.memory_space<vmem>>, vector<1x1x16x16xf32>
    %2050 = vector.shape_cast %2049 : vector<1x1x16x16xf32> to vector<16x16xf32>
    %2051 = arith.subf %2045, %2050 : vector<16x16xf32>
    %2052 = math.absf %2051 : vector<16x16xf32>
    %2053 = vector.shape_cast %2052 : vector<16x16xf32> to vector<1x16x16xf32>
    %cst_1084 = arith.constant dense<0.000000e+00> : vector<1xf32>
    %2054 = vector.multi_reduction <add>, %2053, %cst_1084 [1, 2] : vector<1x16x16xf32> to vector<1xf32>
    %2055 = vector.shape_cast %2054 : vector<1xf32> to vector<1x1x1xf32>
    %2056 = vector.extract %2055[0, 0, 0] : f32 from vector<1x1x1xf32>
    %2057 = vector.broadcast %2056 : f32 to vector<1x1xf32>
    %2058 = arith.addf %1989, %2057 : vector<1x1xf32>
    %c336 = arith.constant 336 : index
    %2059 = memref.load %arg1[%c336] : memref<337xf32, #tpu.memory_space<smem>>
    %2060 = vector.broadcast %2059 : f32 to vector<16x16xf32>
    %c324 = arith.constant 324 : index
    %2061 = memref.load %arg1[%c324] : memref<337xf32, #tpu.memory_space<smem>>
    %c0_1085 = arith.constant 0 : index
    %c0_1086 = arith.constant 0 : index
    %c0_1087 = arith.constant 0 : index
    %2062 = vector.load %arg10[%c0_1085, %c0_1086, %c0_1087] : memref<1x18x18xf32, #tpu.memory_space<vmem>>, vector<1x16x16xf32>
    %2063 = vector.shape_cast %2062 : vector<1x16x16xf32> to vector<16x16xf32>
    %2064 = vector.broadcast %2061 : f32 to vector<16x16xf32>
    %2065 = arith.mulf %2064, %2063 : vector<16x16xf32>
    %2066 = arith.addf %2060, %2065 : vector<16x16xf32>
    %c325 = arith.constant 325 : index
    %2067 = memref.load %arg1[%c325] : memref<337xf32, #tpu.memory_space<smem>>
    %c0_1088 = arith.constant 0 : index
    %c0_1089 = arith.constant 0 : index
    %c1_1090 = arith.constant 1 : index
    %2068 = vector.load %arg10[%c0_1088, %c0_1089, %c1_1090] : memref<1x18x18xf32, #tpu.memory_space<vmem>>, vector<1x16x16xf32>
    %2069 = vector.shape_cast %2068 : vector<1x16x16xf32> to vector<16x16xf32>
    %2070 = vector.broadcast %2067 : f32 to vector<16x16xf32>
    %2071 = arith.mulf %2070, %2069 : vector<16x16xf32>
    %2072 = arith.addf %2066, %2071 : vector<16x16xf32>
    %c326 = arith.constant 326 : index
    %2073 = memref.load %arg1[%c326] : memref<337xf32, #tpu.memory_space<smem>>
    %c0_1091 = arith.constant 0 : index
    %c0_1092 = arith.constant 0 : index
    %c2_1093 = arith.constant 2 : index
    %2074 = vector.load %arg10[%c0_1091, %c0_1092, %c2_1093] : memref<1x18x18xf32, #tpu.memory_space<vmem>>, vector<1x16x16xf32>
    %2075 = vector.shape_cast %2074 : vector<1x16x16xf32> to vector<16x16xf32>
    %2076 = vector.broadcast %2073 : f32 to vector<16x16xf32>
    %2077 = arith.mulf %2076, %2075 : vector<16x16xf32>
    %2078 = arith.addf %2072, %2077 : vector<16x16xf32>
    %c327 = arith.constant 327 : index
    %2079 = memref.load %arg1[%c327] : memref<337xf32, #tpu.memory_space<smem>>
    %c0_1094 = arith.constant 0 : index
    %c1_1095 = arith.constant 1 : index
    %c0_1096 = arith.constant 0 : index
    %2080 = vector.load %arg10[%c0_1094, %c1_1095, %c0_1096] : memref<1x18x18xf32, #tpu.memory_space<vmem>>, vector<1x16x16xf32>
    %2081 = vector.shape_cast %2080 : vector<1x16x16xf32> to vector<16x16xf32>
    %2082 = vector.broadcast %2079 : f32 to vector<16x16xf32>
    %2083 = arith.mulf %2082, %2081 : vector<16x16xf32>
    %2084 = arith.addf %2078, %2083 : vector<16x16xf32>
    %c328 = arith.constant 328 : index
    %2085 = memref.load %arg1[%c328] : memref<337xf32, #tpu.memory_space<smem>>
    %c0_1097 = arith.constant 0 : index
    %c1_1098 = arith.constant 1 : index
    %c1_1099 = arith.constant 1 : index
    %2086 = vector.load %arg10[%c0_1097, %c1_1098, %c1_1099] : memref<1x18x18xf32, #tpu.memory_space<vmem>>, vector<1x16x16xf32>
    %2087 = vector.shape_cast %2086 : vector<1x16x16xf32> to vector<16x16xf32>
    %2088 = vector.broadcast %2085 : f32 to vector<16x16xf32>
    %2089 = arith.mulf %2088, %2087 : vector<16x16xf32>
    %2090 = arith.addf %2084, %2089 : vector<16x16xf32>
    %c329 = arith.constant 329 : index
    %2091 = memref.load %arg1[%c329] : memref<337xf32, #tpu.memory_space<smem>>
    %c0_1100 = arith.constant 0 : index
    %c1_1101 = arith.constant 1 : index
    %c2_1102 = arith.constant 2 : index
    %2092 = vector.load %arg10[%c0_1100, %c1_1101, %c2_1102] : memref<1x18x18xf32, #tpu.memory_space<vmem>>, vector<1x16x16xf32>
    %2093 = vector.shape_cast %2092 : vector<1x16x16xf32> to vector<16x16xf32>
    %2094 = vector.broadcast %2091 : f32 to vector<16x16xf32>
    %2095 = arith.mulf %2094, %2093 : vector<16x16xf32>
    %2096 = arith.addf %2090, %2095 : vector<16x16xf32>
    %c330 = arith.constant 330 : index
    %2097 = memref.load %arg1[%c330] : memref<337xf32, #tpu.memory_space<smem>>
    %c0_1103 = arith.constant 0 : index
    %c2_1104 = arith.constant 2 : index
    %c0_1105 = arith.constant 0 : index
    %2098 = vector.load %arg10[%c0_1103, %c2_1104, %c0_1105] : memref<1x18x18xf32, #tpu.memory_space<vmem>>, vector<1x16x16xf32>
    %2099 = vector.shape_cast %2098 : vector<1x16x16xf32> to vector<16x16xf32>
    %2100 = vector.broadcast %2097 : f32 to vector<16x16xf32>
    %2101 = arith.mulf %2100, %2099 : vector<16x16xf32>
    %2102 = arith.addf %2096, %2101 : vector<16x16xf32>
    %c331 = arith.constant 331 : index
    %2103 = memref.load %arg1[%c331] : memref<337xf32, #tpu.memory_space<smem>>
    %c0_1106 = arith.constant 0 : index
    %c2_1107 = arith.constant 2 : index
    %c1_1108 = arith.constant 1 : index
    %2104 = vector.load %arg10[%c0_1106, %c2_1107, %c1_1108] : memref<1x18x18xf32, #tpu.memory_space<vmem>>, vector<1x16x16xf32>
    %2105 = vector.shape_cast %2104 : vector<1x16x16xf32> to vector<16x16xf32>
    %2106 = vector.broadcast %2103 : f32 to vector<16x16xf32>
    %2107 = arith.mulf %2106, %2105 : vector<16x16xf32>
    %2108 = arith.addf %2102, %2107 : vector<16x16xf32>
    %c332 = arith.constant 332 : index
    %2109 = memref.load %arg1[%c332] : memref<337xf32, #tpu.memory_space<smem>>
    %c0_1109 = arith.constant 0 : index
    %c2_1110 = arith.constant 2 : index
    %c2_1111 = arith.constant 2 : index
    %2110 = vector.load %arg10[%c0_1109, %c2_1110, %c2_1111] : memref<1x18x18xf32, #tpu.memory_space<vmem>>, vector<1x16x16xf32>
    %2111 = vector.shape_cast %2110 : vector<1x16x16xf32> to vector<16x16xf32>
    %2112 = vector.broadcast %2109 : f32 to vector<16x16xf32>
    %2113 = arith.mulf %2112, %2111 : vector<16x16xf32>
    %2114 = arith.addf %2108, %2113 : vector<16x16xf32>
    %c0_1112 = arith.constant 0 : index
    %c3_1113 = arith.constant 3 : index
    %c0_1114 = arith.constant 0 : index
    %c0_1115 = arith.constant 0 : index
    %2115 = vector.load %arg5[%c0_1112, %c3_1113, %c0_1114, %c0_1115] : memref<1x4x16x16xf32, #tpu.memory_space<vmem>>, vector<1x1x16x16xf32>
    %2116 = vector.shape_cast %2115 : vector<1x1x16x16xf32> to vector<16x16xf32>
    %2117 = vector.shape_cast %2114 : vector<16x16xf32> to vector<1x1x16x16xf32>
    tpu.vector_store %arg5[%c0_1112, %c3_1113, %c0_1114, %c0_1115], %2117 {strides = array<i32>} : memref<1x4x16x16xf32, #tpu.memory_space<vmem>>, vector<1x1x16x16xf32>,
    %c0_1116 = arith.constant 0 : index
    %c3_1117 = arith.constant 3 : index
    %c0_1118 = arith.constant 0 : index
    %c0_1119 = arith.constant 0 : index
    %2118 = vector.load %arg3[%c0_1116, %c3_1117, %c0_1118, %c0_1119] : memref<1x4x16x16xf32, #tpu.memory_space<vmem>>, vector<1x1x16x16xf32>
    %2119 = vector.shape_cast %2118 : vector<1x1x16x16xf32> to vector<16x16xf32>
    %2120 = arith.subf %2114, %2119 : vector<16x16xf32>
    %2121 = math.absf %2120 : vector<16x16xf32>
    %2122 = vector.shape_cast %2121 : vector<16x16xf32> to vector<1x16x16xf32>
    %cst_1120 = arith.constant dense<0.000000e+00> : vector<1xf32>
    %2123 = vector.multi_reduction <add>, %2122, %cst_1120 [1, 2] : vector<1x16x16xf32> to vector<1xf32>
    %2124 = vector.shape_cast %2123 : vector<1xf32> to vector<1x1x1xf32>
    %2125 = vector.extract %2124[0, 0, 0] : f32 from vector<1x1x1xf32>
    %2126 = vector.broadcast %2125 : f32 to vector<1x1xf32>
    %2127 = arith.addf %2058, %2126 : vector<1x1xf32>
    %cst_1121 = arith.constant 9.765625E-4 : f32
    %2128 = vector.broadcast %cst_1121 : f32 to vector<1x1xf32>
    %2129 = arith.mulf %2127, %2128 : vector<1x1xf32>
    %c0_1122 = arith.constant 0 : index
    %c0_1123 = arith.constant 0 : index
    %c0_1124 = arith.constant 0 : index
    %2130 = vector.load %arg7[%c0_1122, %c0_1123, %c0_1124] : memref<1x1x1xf32, #tpu.memory_space<vmem>>, vector<1x1x1xf32>
    %2131 = vector.shape_cast %2130 : vector<1x1x1xf32> to vector<1x1xf32>
    %2132 = vector.shape_cast %2129 : vector<1x1xf32> to vector<1x1x1xf32>
    tpu.vector_store %arg7[%c0_1122, %c0_1123, %c0_1124], %2132 {strides = array<i32>} : memref<1x1x1xf32, #tpu.memory_space<vmem>>, vector<1x1x1xf32>,
    return
  }
  func.func @transform_0(%arg0: i32) -> i32 {
    %c0_i32 = arith.constant 0 : i32
    %c0_i32_0 = arith.constant 0 : i32
    return %c0_i32 : i32
  }
  func.func @transform_1(%arg0: i32) -> (i32, i32, i32, i32) {
    %c0_i32 = arith.constant 0 : i32
    %c0_i32_0 = arith.constant 0 : i32
    %c0_i32_1 = arith.constant 0 : i32
    %c0_i32_2 = arith.constant 0 : i32
    return %arg0, %c0_i32, %c0_i32_0, %c0_i32_1 : i32, i32, i32, i32
  }
  func.func @transform_2(%arg0: i32) -> (i32, i32, i32, i32) {
    %c0_i32 = arith.constant 0 : i32
    %c0_i32_0 = arith.constant 0 : i32
    %c0_i32_1 = arith.constant 0 : i32
    %c0_i32_2 = arith.constant 0 : i32
    return %arg0, %c0_i32, %c0_i32_0, %c0_i32_1 : i32, i32, i32, i32
  }
  func.func @transform_3(%arg0: i32) -> (i32, i32, i32, i32) {
    %c0_i32 = arith.constant 0 : i32
    %c0_i32_0 = arith.constant 0 : i32
    %c0_i32_1 = arith.constant 0 : i32
    %c0_i32_2 = arith.constant 0 : i32
    return %arg0, %c0_i32, %c0_i32_0, %c0_i32_1 : i32, i32, i32, i32
  }
  func.func @transform_4(%arg0: i32) -> (i32, i32, i32, i32) {
    %c0_i32 = arith.constant 0 : i32
    %c0_i32_0 = arith.constant 0 : i32
    %c0_i32_1 = arith.constant 0 : i32
    %c0_i32_2 = arith.constant 0 : i32
    return %arg0, %c0_i32, %c0_i32_0, %c0_i32_1 : i32, i32, i32, i32
  }
  func.func @transform_5(%arg0: i32) -> (i32, i32, i32) {
    %c0_i32 = arith.constant 0 : i32
    %c0_i32_0 = arith.constant 0 : i32
    %c0_i32_1 = arith.constant 0 : i32
    return %arg0, %c0_i32, %c0_i32_0 : i32, i32, i32
  }
  func.func @transform_6(%arg0: i32) -> (i32, i32, i32) {
    %c0_i32 = arith.constant 0 : i32
    %c0_i32_0 = arith.constant 0 : i32
    %c0_i32_1 = arith.constant 0 : i32
    return %arg0, %c0_i32, %c0_i32_0 : i32, i32, i32
  }
}

</mosaic_0001>

<llo_original>
// kernel: tpu_custom_call.1
$region0: #{tpu_custom_call.1}
  #allocation0 [shape = 'u32[]', space=smem, size = 0x4, offset = 0x4, fixed_abs, tag = 'smem constant byte address 0x4 - core index']
  #allocation1 [shape = 'u32[144,128]{1,0:T(1,128)}', space=vmem, size = 0x12000, scoped, tag = 'internal scratch']
  #allocation2 [shape = 'f32[3,18,18]{2,1,0:T(8,128)}', space=vmem, size = 0x9000, scoped, tag = 'scratch operand']
  #allocation3 [shape = 'f32[8,18,18]{2,1,0:T(8,128)}', space=vmem, size = 0x18000, scoped, tag = 'scratch operand']
  #allocation4 [shape = 'f32[1,18,18]{2,1,0:T(8,128)}', space=vmem, size = 0x3000, scoped, tag = 'scratch operand']
  %s0 = inlined_call_operand.hbm [shape: f32[337], index: 0, kind: input, shape index: {}]
  %s1 = inlined_call_operand.hbm [shape: f32[2,3,16,16], index: 1, kind: input, shape index: {}]
  %s2 = inlined_call_operand.hbm [shape: f32[2,4,16,16], index: 2, kind: input, shape index: {}]
  %s3 = inlined_call_operand.hbm [shape: f32[2,1,16,16], index: 3, kind: output, shape index: {0}]
  %s4 = inlined_call_operand.hbm [shape: f32[2,4,16,16], index: 4, kind: output, shape index: {1}]
  %s5 = inlined_call_operand.vmem [shape: f32[2,1,1], index: 5, kind: output, shape index: {2}]
  %s6 = inlined_call_operand.vmem [shape: f32[2,1,1], index: 6, kind: output, shape index: {3}]
  %7 = xla_tuple %s3, %s4, %s5, %s6
  %s8 = sld [smem:[#allocation0]]
  $region81: #{tpu_custom_call.1} parent=0
    _
  %s10 = ssub.s32 1, %s8
  %s11 = scalar_select 0, %s10, %s8
  $region1: #{tpu_custom_call.1} parent=0
    #allocation5 [shape = 'u8[1536]{0}', space=smem, size = 0x600, scoped, tag = 'input window, operand 0, single buffered']
    #allocation6 [shape = 's32[2]{0}', space=sflag, size = 0x8, scoped, tag = 'scoped memory for tpu_custom_call.1']
    #allocation7 [shape = 's32[2]{0}', space=sflag, size = 0x8, scoped, tag = 'scoped memory for tpu_custom_call.1']
    #allocation8 [shape = 's32[2]{0}', space=sflag, size = 0x8, scoped, tag = 'scoped memory for tpu_custom_call.1']
    #allocation9 [shape = 'u8[49152]{0}', space=vmem, size = 0xc000, scoped, tag = 'input window, operand 1']
    #allocation10 [shape = 'u8[65536]{0}', space=vmem, size = 0x10000, scoped, tag = 'input window, operand 2']
    #allocation11 [shape = 's32[2]{0}', space=sflag, size = 0x8, scoped, tag = 'scoped memory for tpu_custom_call.1']
    #allocation12 [shape = 'u8[16384]{0}', space=vmem, size = 0x4000, scoped, tag = 'output window, operand 0']
    #allocation13 [shape = 'u8[65536]{0}', space=vmem, size = 0x10000, scoped, tag = 'output window, operand 1']
    #allocation14 [shape = 's32[2]{0}', space=sflag, size = 0x8, scoped, tag = 'scoped memory for tpu_custom_call.1']
    %12 = vsyncpa [#allocation8], 0
    %13 = vsyncpa [#allocation6], 0
    %s14 = scalar_lea.sflag [#allocation6], 1
    %15 = vsyncpa %s14, 0
    %16 = vsyncpa [#allocation11], 0
    %s17 = scalar_lea.sflag [#allocation11], 1
    %18 = vsyncpa %s17, 0
    %19 = vsyncpa [#allocation7], 0
    %s20 = scalar_lea.sflag [#allocation7], 1
    %21 = vsyncpa %s20, 0
    %22 = vsyncpa [#allocation14], 0
    %s23 = scalar_lea.sflag [#allocation14], 1
    %24 = vsyncpa %s23, 0
    loop: start=0, step=1, limit=4
    $region2: #{tpu_custom_call.1} parent=1 // loop_pre_header
      _
    $region3: #{tpu_custom_call.1} parent=1 // loop_header
      %s26 = sphi 0, %s30
      %p27 = scmp.ge.s32.totalorder %s26, 4
      %s34 = sphi 0, %s34
      %s36 = sphi 0, %s34
      %s37 = sphi 0, %s36
      %s51 = sphi 0, %s37
      %s57 = sphi 0, %s59
      %s60 = sphi 0, %s57
      %s61 = sphi 0, %s60
      %s77 = sphi 0, %s61
      %s83 = sphi 0, %s85
      %s86 = sphi 0, %s83
      %s87 = sphi 0, %s86
      %s103 = sphi 0, %s87
      %s109 = sphi 0, %s111
      %s112 = sphi 0, %s109
      %s113 = sphi 0, %s112
      %s129 = sphi 0, %s113
      %s135 = sphi 0, %s137
      %s138 = sphi 0, %s135
      %s139 = sphi 0, %s138
      %s155 = sphi 0, %s139
      %s161 = sphi 0, %s163
      %s164 = sphi 0, %s161
      %s165 = sphi 0, %s164
      %s181 = sphi 0, %s165
      %s187 = sphi 0, %s189
      %s190 = sphi 0, %s187
      %s191 = sphi 0, %s190
      %s207 = sphi 0, %s191
    $region4: #{tpu_custom_call.1} parent=1 // loop_header_branch
      %29 = sbr.rel (%p27) target = $region8
    $region5: #{tpu_custom_call.1} parent=1 // loop_body
      %s31 = ssub.s32 %s26, 1
      %s32 = ssub.s32 %s26, 2
      %s33 = sadd.s32 %s26, 1
      %s35 = sadd.s32 %s34, 1
      %p38 = scmp.eq.s32.totalorder %s26, 1
      %p39 = scmp.ne.s32.totalorder %s34, %s36
      %p40 = scmp.eq.s32.totalorder %s26, 0
      %p41 = por %p39, %p40
      %p42 = scmp.ne.s32.totalorder %s34, %s36
      %p43 = scmp.eq.s32.totalorder %s31, 1
      %p44 = por %p42, %p43
      %p45 = scmp.ne.s32.totalorder %s36, %s37
      %p46 = scmp.eq.s32.totalorder %s31, 0
      %p47 = por %p45, %p46
      %p48 = scmp.ne.s32.totalorder %s36, %s37
      %p49 = scmp.eq.s32.totalorder %s32, 1
      %p50 = por %p48, %p49
      %p52 = scmp.ne.s32.totalorder %s37, %s51
      %p53 = scmp.eq.s32.totalorder %s32, 0
      %p54 = por %p52, %p53
      %s55 = ssub.s32 %s26, %s33
      %p56 = scmp.eq.s32.totalorder %s55, 0
      %s58 = sadd.s32 %s57, 1
      %s59 = scalar_select %p56, %s57, %s58
      %p62 = pneg %p56
      %p63 = scmp.eq.s32.totalorder %s26, 1
      %p64 = por %p62, %p63
      %p65 = scmp.ne.s32.totalorder %s57, %s60
      %p66 = scmp.eq.s32.totalorder %s26, 0
      %p67 = por %p65, %p66
      %p68 = scmp.ne.s32.totalorder %s57, %s60
      %p69 = scmp.eq.s32.totalorder %s31, 1
      %p70 = por %p68, %p69
      %p71 = scmp.ne.s32.totalorder %s60, %s61
      %p72 = scmp.eq.s32.totalorder %s31, 0
      %p73 = por %p71, %p72
      %p74 = scmp.ne.s32.totalorder %s60, %s61
      %p75 = scmp.eq.s32.totalorder %s32, 1
      %p76 = por %p74, %p75
      %p78 = scmp.ne.s32.totalorder %s61, %s77
      %p79 = scmp.eq.s32.totalorder %s32, 0
      %p80 = por %p78, %p79
      %s81 = ssub.s32 %s26, %s33
      %p82 = scmp.eq.s32.totalorder %s81, 0
      %s84 = sadd.s32 %s83, 1
      %s85 = scalar_select %p82, %s83, %s84
      %p88 = pneg %p82
      %p89 = scmp.eq.s32.totalorder %s26, 1
      %p90 = por %p88, %p89
      %p91 = scmp.ne.s32.totalorder %s83, %s86
      %p92 = scmp.eq.s32.totalorder %s26, 0
      %p93 = por %p91, %p92
      %p94 = scmp.ne.s32.totalorder %s83, %s86
      %p95 = scmp.eq.s32.totalorder %s31, 1
      %p96 = por %p94, %p95
      %p97 = scmp.ne.s32.totalorder %s86, %s87
      %p98 = scmp.eq.s32.totalorder %s31, 0
      %p99 = por %p97, %p98
      %p100 = scmp.ne.s32.totalorder %s86, %s87
      %p101 = scmp.eq.s32.totalorder %s32, 1
      %p102 = por %p100, %p101
      %p104 = scmp.ne.s32.totalorder %s87, %s103
      %p105 = scmp.eq.s32.totalorder %s32, 0
      %p106 = por %p104, %p105
      %s107 = ssub.s32 %s26, %s33
      %p108 = scmp.eq.s32.totalorder %s107, 0
      %s110 = sadd.s32 %s109, 1
      %s111 = scalar_select %p108, %s109, %s110
      %p114 = pneg %p108
      %p115 = scmp.eq.s32.totalorder %s26, 1
      %p116 = por %p114, %p115
      %p117 = scmp.ne.s32.totalorder %s109, %s112
      %p118 = scmp.eq.s32.totalorder %s26, 0
      %p119 = por %p117, %p118
      %p120 = scmp.ne.s32.totalorder %s109, %s112
      %p121 = scmp.eq.s32.totalorder %s31, 1
      %p122 = por %p120, %p121
      %p123 = scmp.ne.s32.totalorder %s112, %s113
      %p124 = scmp.eq.s32.totalorder %s31, 0
      %p125 = por %p123, %p124
      %p126 = scmp.ne.s32.totalorder %s112, %s113
      %p127 = scmp.eq.s32.totalorder %s32, 1
      %p128 = por %p126, %p127
      %p130 = scmp.ne.s32.totalorder %s113, %s129
      %p131 = scmp.eq.s32.totalorder %s32, 0
      %p132 = por %p130, %p131
      %s133 = ssub.s32 %s26, %s33
      %p134 = scmp.eq.s32.totalorder %s133, 0
      %s136 = sadd.s32 %s135, 1
      %s137 = scalar_select %p134, %s135, %s136
      %p140 = pneg %p134
      %p141 = scmp.eq.s32.totalorder %s26, 1
      %p142 = por %p140, %p141
      %p143 = scmp.ne.s32.totalorder %s135, %s138
      %p144 = scmp.eq.s32.totalorder %s26, 0
      %p145 = por %p143, %p144
      %p146 = scmp.ne.s32.totalorder %s135, %s138
      %p147 = scmp.eq.s32.totalorder %s31, 1
      %p148 = por %p146, %p147
      %p149 = scmp.ne.s32.totalorder %s138, %s139
      %p150 = scmp.eq.s32.totalorder %s31, 0
      %p151 = por %p149, %p150
      %p152 = scmp.ne.s32.totalorder %s138, %s139
      %p153 = scmp.eq.s32.totalorder %s32, 1
      %p154 = por %p152, %p153
      %p156 = scmp.ne.s32.totalorder %s139, %s155
      %p157 = scmp.eq.s32.totalorder %s32, 0
      %p158 = por %p156, %p157
      %s159 = ssub.s32 %s26, %s33
      %p160 = scmp.eq.s32.totalorder %s159, 0
      %s162 = sadd.s32 %s161, 1
      %s163 = scalar_select %p160, %s161, %s162
      %p166 = pneg %p160
      %p167 = scmp.eq.s32.totalorder %s26, 1
      %p168 = por %p166, %p167
      %p169 = scmp.ne.s32.totalorder %s161, %s164
      %p170 = scmp.eq.s32.totalorder %s26, 0
      %p171 = por %p169, %p170
      %p172 = scmp.ne.s32.totalorder %s161, %s164
      %p173 = scmp.eq.s32.totalorder %s31, 1
      %p174 = por %p172, %p173
      %p175 = scmp.ne.s32.totalorder %s164, %s165
      %p176 = scmp.eq.s32.totalorder %s31, 0
      %p177 = por %p175, %p176
      %p178 = scmp.ne.s32.totalorder %s164, %s165
      %p179 = scmp.eq.s32.totalorder %s32, 1
      %p180 = por %p178, %p179
      %p182 = scmp.ne.s32.totalorder %s165, %s181
      %p183 = scmp.eq.s32.totalorder %s32, 0
      %p184 = por %p182, %p183
      %s185 = ssub.s32 %s26, %s33
      %p186 = scmp.eq.s32.totalorder %s185, 0
      %s188 = sadd.s32 %s187, 1
      %s189 = scalar_select %p186, %s187, %s188
      %p192 = pneg %p186
      %p193 = scmp.eq.s32.totalorder %s26, 1
      %p194 = por %p192, %p193
      %p195 = scmp.ne.s32.totalorder %s187, %s190
      %p196 = scmp.eq.s32.totalorder %s26, 0
      %p197 = por %p195, %p196
      %p198 = scmp.ne.s32.totalorder %s187, %s190
      %p199 = scmp.eq.s32.totalorder %s31, 1
      %p200 = por %p198, %p199
      %p201 = scmp.ne.s32.totalorder %s190, %s191
      %p202 = scmp.eq.s32.totalorder %s31, 0
      %p203 = por %p201, %p202
      %p204 = scmp.ne.s32.totalorder %s190, %s191
      %p205 = scmp.eq.s32.totalorder %s32, 1
      %p206 = por %p204, %p205
      %p208 = scmp.ne.s32.totalorder %s191, %s207
      %p209 = scmp.eq.s32.totalorder %s32, 0
      %p210 = por %p208, %p209
      %p211 = scmp.le.s32.totalorder 1, %s26
      %p212 = scmp.lt.s32.totalorder %s26, 3
      %p213 = pnand %p211, %p212
      %p214 = pneg %p213
      // Predicated region
      $region9: #{tpu_custom_call.1} parent=5 // pred_check
        _
      $region10: #{tpu_custom_call.1} parent=5 // pred_check_branch
        %216 = sbr.rel (%p213) target = $region12
      $region11: #{tpu_custom_call.1} parent=5 // pred_region
        %s217 = ssub.s32 %s26, 1
        // Predicated region
        $region13: #{tpu_custom_call.1} parent=11 // pred_check
          %p218 = pneg %p47
        $region14: #{tpu_custom_call.1} parent=11 // pred_check_branch
          %220 = sbr.rel (%p218) target = $region16
        $region15: #{tpu_custom_call.1} parent=11 // pred_region
          %s222 = ssub.s32 48, 48
          %223 = vsyncadd [#allocation8], %s222
          %226 = dma.hbm_to_smem %s0, 48, [#allocation5], [#allocation8]
        $region16: #{tpu_custom_call.1} parent=11 // pred_fallthru
          _
      $region12: #{tpu_custom_call.1} parent=5 // pred_fallthru
        _
      %p227 = scmp.lt.s32.totalorder %s26, 2
      // Predicated region
      $region17: #{tpu_custom_call.1} parent=5 // pred_check
        %p228 = pneg %p227
      $region18: #{tpu_custom_call.1} parent=5 // pred_check_branch
        %230 = sbr.rel (%p228) target = $region20
      $region19: #{tpu_custom_call.1} parent=5 // pred_region
        // Predicated region
        $region21: #{tpu_custom_call.1} parent=19 // pred_check
          %p231 = pneg %p67
        $region22: #{tpu_custom_call.1} parent=19 // pred_check_branch
          %233 = sbr.rel (%p231) target = $region24
        $region23: #{tpu_custom_call.1} parent=19 // pred_region
          %s234 = sand.u32 %s57, 1
          %s235 = scalar_lea.sflag [#allocation6], %s234
          %s236 = sand.u32 %s57, 1
          %s237 = smul.addr %s236, 48
          %s238 = scalar_lea.vmem [#allocation9], %s237
          %s240 = ssub.s32 768, 768
          %241 = vsyncadd %s235, %s240
          %s242 = smul.addr %s26, 6
          %s243 = smul.addr %s242, 128
          %s244 = scalar_lea.hbm %s1, %s243
          %s245 = sshll.u32 %s238, 4
          %s246 = int_to_ptr.vmem [resolvable:$true] %s245
          %251 = dma.hbm_to_vmem [thread:$0]  %s244, 768, %s246, %s235, 128, 128, 8
        $region24: #{tpu_custom_call.1} parent=19 // pred_fallthru
          _
        // Predicated region
        $region25: #{tpu_custom_call.1} parent=19 // pred_check
          %p252 = pneg %p93
        $region26: #{tpu_custom_call.1} parent=19 // pred_check_branch
          %254 = sbr.rel (%p252) target = $region28
        $region27: #{tpu_custom_call.1} parent=19 // pred_region
          %s255 = sand.u32 %s83, 1
          %s256 = scalar_lea.sflag [#allocation11], %s255
          %s257 = sand.u32 %s83, 1
          %s258 = smul.addr %s257, 64
          %s259 = scalar_lea.vmem [#allocation10], %s258
          %s261 = ssub.s32 1024, 1024
          %262 = vsyncadd %s256, %s261
          %s263 = smul.addr %s26, 8
          %s264 = smul.addr %s263, 128
          %s265 = scalar_lea.hbm %s2, %s264
          %s266 = sshll.u32 %s259, 4
          %s267 = int_to_ptr.vmem [resolvable:$true] %s266
          %272 = dma.hbm_to_vmem [thread:$0]  %s265, 1024, %s267, %s256, 128, 128, 8
        $region28: #{tpu_custom_call.1} parent=19 // pred_fallthru
          _
      $region20: #{tpu_custom_call.1} parent=5 // pred_fallthru
        _
      %p273 = scmp.le.s32.totalorder 1, %s26
      %p274 = scmp.lt.s32.totalorder %s26, 3
      %p275 = pnand %p273, %p274
      %p276 = pneg %p275
      // Predicated region
      $region29: #{tpu_custom_call.1} parent=5 // pred_check
        _
      $region30: #{tpu_custom_call.1} parent=5 // pred_check_branch
        %278 = sbr.rel (%p275) target = $region32
      $region31: #{tpu_custom_call.1} parent=5 // pred_region
        %s279 = ssub.s32 %s26, 1
        // Predicated region
        $region33: #{tpu_custom_call.1} parent=31 // pred_check
          %p280 = pneg %p47
        $region34: #{tpu_custom_call.1} parent=31 // pred_check_branch
          %282 = sbr.rel (%p280) target = $region36
        $region35: #{tpu_custom_call.1} parent=31 // pred_region
          %283 = dma.done [#allocation8], 48
        $region36: #{tpu_custom_call.1} parent=31 // pred_fallthru
          _
        %s284 = sand.u32 %s60, 1
        %s285 = scalar_lea.sflag [#allocation6], %s284
        %s286 = sand.u32 %s60, 1
        %s287 = smul.addr %s286, 48
        %s288 = scalar_lea.vmem [#allocation9], %s287
        // Predicated region
        $region37: #{tpu_custom_call.1} parent=31 // pred_check
          %p289 = pneg %p73
        $region38: #{tpu_custom_call.1} parent=31 // pred_check_branch
          %291 = sbr.rel (%p289) target = $region40
        $region39: #{tpu_custom_call.1} parent=31 // pred_region
          %292 = dma.done %s285, 768
        $region40: #{tpu_custom_call.1} parent=31 // pred_fallthru
          _
        %s293 = sand.u32 %s86, 1
        %s294 = scalar_lea.sflag [#allocation11], %s293
        %s295 = sand.u32 %s86, 1
        %s296 = smul.addr %s295, 64
        %s297 = scalar_lea.vmem [#allocation10], %s296
        // Predicated region
        $region41: #{tpu_custom_call.1} parent=31 // pred_check
          %p298 = pneg %p99
        $region42: #{tpu_custom_call.1} parent=31 // pred_check_branch
          %300 = sbr.rel (%p298) target = $region44
        $region43: #{tpu_custom_call.1} parent=31 // pred_region
          %301 = dma.done %s294, 1024
        $region44: #{tpu_custom_call.1} parent=31 // pred_fallthru
          _
        %302 = sfence
        %p303 = pneg %p47
        %p304 = pneg %p44
        %s305 = sand.u32 %s60, 1
        %s306 = scalar_lea.sflag [#allocation6], %s305
        %s307 = sand.u32 %s60, 1
        %s308 = smul.addr %s307, 48
        %s309 = scalar_lea.vmem [#allocation9], %s308
        %p310 = pneg %p73
        %p311 = pneg %p70
        %s312 = sand.u32 %s86, 1
        %s313 = scalar_lea.sflag [#allocation11], %s312
        %s314 = sand.u32 %s86, 1
        %s315 = smul.addr %s314, 64
        %s316 = scalar_lea.vmem [#allocation10], %s315
        %p317 = pneg %p99
        %p318 = pneg %p96
        %p319 = pneg %p125
        %p320 = pneg %p122
        %s321 = sand.u32 %s112, 1
        %s322 = scalar_lea.sflag [#allocation7], %s321
        %s323 = sand.u32 %s112, 1
        %s324 = smul.addr %s323, 16
        %s325 = scalar_lea.vmem [#allocation12], %s324
        %p326 = pneg %p151
        %p327 = pneg %p148
        %s328 = sand.u32 %s138, 1
        %s329 = scalar_lea.sflag [#allocation14], %s328
        %s330 = sand.u32 %s138, 1
        %s331 = smul.addr %s330, 64
        %s332 = scalar_lea.vmem [#allocation13], %s331
        %p333 = pneg %p177
        %p334 = pneg %p174
        %p335 = scmp.lt.s32.totalorder %s31, 1
        %s336 = scalar_select %p335, %s31, 1
        %s337 = scalar_lea.vmem %s5, %s336
        %p338 = pneg %p203
        %p339 = pneg %p200
        %p340 = scmp.lt.s32.totalorder %s31, 1
        %s341 = scalar_select %p340, %s31, 1
        %s342 = scalar_lea.vmem %s6, %s341
        %p343 = scmp.lt.s32.totalorder %s31, 1
        %s344 = scalar_select %p343, %s31, 1
        %s345 = scalar_lea.vmem %s5, %s344
        %p346 = scmp.lt.s32.totalorder %s31, 1
        %s347 = scalar_select %p346, %s31, 1
        %s348 = scalar_lea.vmem %s6, %s347
        %vm349 = vcmask 139264
        %350 = vst.msk [vmem:[#allocation2] sm:$0x1] %vm349, 0.0
        %351 = vst.msk [vmem:[#allocation2 + $0x18] sm:$0x1] %vm349, 0.0
        %352 = vst.msk [vmem:[#allocation2 + $0x30] sm:$0x1] %vm349, 0.0
        %353 = vst.msk [vmem:[#allocation2 + $0x11] sm:$0x1] %vm349, 0.0
        %354 = vst.msk [vmem:[#allocation2 + $0x29] sm:$0x1] %vm349, 0.0
        %355 = vst.msk [vmem:[#allocation2 + $0x41] sm:$0x1] %vm349, 0.0
        %vm356 = vcmask 7168
        %357 = vst.msk [vmem:[#allocation2] sm:$0xff] %vm356, 0.0
        %358 = vst.msk [vmem:[#allocation2 + $0x8] sm:$0xff] %vm356, 0.0
        %vm359 = vcmask 1024
        %360 = vst.msk [vmem:[#allocation2 + $0x10] sm:$0x3] %vm359, 0.0
        %361 = vst.msk [vmem:[#allocation2 + $0x18] sm:$0xff] %vm356, 0.0
        %362 = vst.msk [vmem:[#allocation2 + $0x20] sm:$0xff] %vm356, 0.0
        %363 = vst.msk [vmem:[#allocation2 + $0x28] sm:$0x3] %vm359, 0.0
        %364 = vst.msk [vmem:[#allocation2 + $0x30] sm:$0xff] %vm356, 0.0
        %365 = vst.msk [vmem:[#allocation2 + $0x38] sm:$0xff] %vm356, 0.0
        %366 = vst.msk [vmem:[#allocation2 + $0x40] sm:$0x3] %vm359, 0.0
        %vm367 = vcmask 146568
        %368 = vst.msk [vmem:[#allocation2] sm:$0xff] %vm367, 0.0
        %369 = vst.msk [vmem:[#allocation2 + $0x8] sm:$0xff] %vm367, 0.0
        %vm370 = vcmask 140424
        %371 = vst.msk [vmem:[#allocation2 + $0x10] sm:$0x3] %vm370, 0.0
        %372 = vst.msk [vmem:[#allocation2 + $0x18] sm:$0xff] %vm367, 0.0
        %373 = vst.msk [vmem:[#allocation2 + $0x20] sm:$0xff] %vm367, 0.0
        %374 = vst.msk [vmem:[#allocation2 + $0x28] sm:$0x3] %vm370, 0.0
        %375 = vst.msk [vmem:[#allocation2 + $0x30] sm:$0xff] %vm367, 0.0
        %376 = vst.msk [vmem:[#allocation2 + $0x38] sm:$0xff] %vm367, 0.0
        %377 = vst.msk [vmem:[#allocation2 + $0x40] sm:$0x3] %vm370, 0.0
        %378 = vst.msk [vmem:[#allocation3] sm:$0x1] %vm349, 0.0
        %379 = vst.msk [vmem:[#allocation3 + $0x18] sm:$0x1] %vm349, 0.0
        %380 = vst.msk [vmem:[#allocation3 + $0x30] sm:$0x1] %vm349, 0.0
        %381 = vst.msk [vmem:[#allocation3 + $0x48] sm:$0x1] %vm349, 0.0
        %382 = vst.msk [vmem:[#allocation3 + $0x60] sm:$0x1] %vm349, 0.0
        %383 = vst.msk [vmem:[#allocation3 + $0x78] sm:$0x1] %vm349, 0.0
        %384 = vst.msk [vmem:[#allocation3 + $0x90] sm:$0x1] %vm349, 0.0
        %385 = vst.msk [vmem:[#allocation3 + $0xa8] sm:$0x1] %vm349, 0.0
        %386 = vst.msk [vmem:[#allocation3 + $0x11] sm:$0x1] %vm349, 0.0
        %387 = vst.msk [vmem:[#allocation3 + $0x29] sm:$0x1] %vm349, 0.0
        %388 = vst.msk [vmem:[#allocation3 + $0x41] sm:$0x1] %vm349, 0.0
        %389 = vst.msk [vmem:[#allocation3 + $0x59] sm:$0x1] %vm349, 0.0
        %390 = vst.msk [vmem:[#allocation3 + $0x71] sm:$0x1] %vm349, 0.0
        %391 = vst.msk [vmem:[#allocation3 + $0x89] sm:$0x1] %vm349, 0.0
        %392 = vst.msk [vmem:[#allocation3 + $0xa1] sm:$0x1] %vm349, 0.0
        %393 = vst.msk [vmem:[#allocation3 + $0xb9] sm:$0x1] %vm349, 0.0
        %394 = vst.msk [vmem:[#allocation3] sm:$0xff] %vm356, 0.0
        %395 = vst.msk [vmem:[#allocation3 + $0x8] sm:$0xff] %vm356, 0.0
        %396 = vst.msk [vmem:[#allocation3 + $0x10] sm:$0x3] %vm359, 0.0
        %397 = vst.msk [vmem:[#allocation3 + $0x18] sm:$0xff] %vm356, 0.0
        %398 = vst.msk [vmem:[#allocation3 + $0x20] sm:$0xff] %vm356, 0.0
        %399 = vst.msk [vmem:[#allocation3 + $0x28] sm:$0x3] %vm359, 0.0
        %400 = vst.msk [vmem:[#allocation3 + $0x30] sm:$0xff] %vm356, 0.0
        %401 = vst.msk [vmem:[#allocation3 + $0x38] sm:$0xff] %vm356, 0.0
        %402 = vst.msk [vmem:[#allocation3 + $0x40] sm:$0x3] %vm359, 0.0
        %403 = vst.msk [vmem:[#allocation3 + $0x48] sm:$0xff] %vm356, 0.0
        %404 = vst.msk [vmem:[#allocation3 + $0x50] sm:$0xff] %vm356, 0.0
        %405 = vst.msk [vmem:[#allocation3 + $0x58] sm:$0x3] %vm359, 0.0
        %406 = vst.msk [vmem:[#allocation3 + $0x60] sm:$0xff] %vm356, 0.0
        %407 = vst.msk [vmem:[#allocation3 + $0x68] sm:$0xff] %vm356, 0.0
        %408 = vst.msk [vmem:[#allocation3 + $0x70] sm:$0x3] %vm359, 0.0
        %409 = vst.msk [vmem:[#allocation3 + $0x78] sm:$0xff] %vm356, 0.0
        %410 = vst.msk [vmem:[#allocation3 + $0x80] sm:$0xff] %vm356, 0.0
        %411 = vst.msk [vmem:[#allocation3 + $0x88] sm:$0x3] %vm359, 0.0
        %412 = vst.msk [vmem:[#allocation3 + $0x90] sm:$0xff] %vm356, 0.0
        %413 = vst.msk [vmem:[#allocation3 + $0x98] sm:$0xff] %vm356, 0.0
        %414 = vst.msk [vmem:[#allocation3 + $0xa0] sm:$0x3] %vm359, 0.0
        %415 = vst.msk [vmem:[#allocation3 + $0xa8] sm:$0xff] %vm356, 0.0
        %416 = vst.msk [vmem:[#allocation3 + $0xb0] sm:$0xff] %vm356, 0.0
        %417 = vst.msk [vmem:[#allocation3 + $0xb8] sm:$0x3] %vm359, 0.0
        %418 = vst.msk [vmem:[#allocation3] sm:$0xff] %vm367, 0.0
        %419 = vst.msk [vmem:[#allocation3 + $0x8] sm:$0xff] %vm367, 0.0
        %420 = vst.msk [vmem:[#allocation3 + $0x10] sm:$0x3] %vm370, 0.0
        %421 = vst.msk [vmem:[#allocation3 + $0x18] sm:$0xff] %vm367, 0.0
        %422 = vst.msk [vmem:[#allocation3 + $0x20] sm:$0xff] %vm367, 0.0
        %423 = vst.msk [vmem:[#allocation3 + $0x28] sm:$0x3] %vm370, 0.0
        %424 = vst.msk [vmem:[#allocation3 + $0x30] sm:$0xff] %vm367, 0.0
        %425 = vst.msk [vmem:[#allocation3 + $0x38] sm:$0xff] %vm367, 0.0
        %426 = vst.msk [vmem:[#allocation3 + $0x40] sm:$0x3] %vm370, 0.0
        %427 = vst.msk [vmem:[#allocation3 + $0x48] sm:$0xff] %vm367, 0.0
        %428 = vst.msk [vmem:[#allocation3 + $0x50] sm:$0xff] %vm367, 0.0
        %429 = vst.msk [vmem:[#allocation3 + $0x58] sm:$0x3] %vm370, 0.0
        %430 = vst.msk [vmem:[#allocation3 + $0x60] sm:$0xff] %vm367, 0.0
        %431 = vst.msk [vmem:[#allocation3 + $0x68] sm:$0xff] %vm367, 0.0
        %432 = vst.msk [vmem:[#allocation3 + $0x70] sm:$0x3] %vm370, 0.0
        %433 = vst.msk [vmem:[#allocation3 + $0x78] sm:$0xff] %vm367, 0.0
        %434 = vst.msk [vmem:[#allocation3 + $0x80] sm:$0xff] %vm367, 0.0
        %435 = vst.msk [vmem:[#allocation3 + $0x88] sm:$0x3] %vm370, 0.0
        %436 = vst.msk [vmem:[#allocation3 + $0x90] sm:$0xff] %vm367, 0.0
        %437 = vst.msk [vmem:[#allocation3 + $0x98] sm:$0xff] %vm367, 0.0
        %438 = vst.msk [vmem:[#allocation3 + $0xa0] sm:$0x3] %vm370, 0.0
        %439 = vst.msk [vmem:[#allocation3 + $0xa8] sm:$0xff] %vm367, 0.0
        %440 = vst.msk [vmem:[#allocation3 + $0xb0] sm:$0xff] %vm367, 0.0
        %441 = vst.msk [vmem:[#allocation3 + $0xb8] sm:$0x3] %vm370, 0.0
        %442 = vst.msk [vmem:[#allocation4] sm:$0x1] %vm349, 0.0
        %443 = vst.msk [vmem:[#allocation4 + $0x11] sm:$0x1] %vm349, 0.0
        %444 = vst.msk [vmem:[#allocation4] sm:$0xff] %vm356, 0.0
        %445 = vst.msk [vmem:[#allocation4 + $0x8] sm:$0xff] %vm356, 0.0
        %446 = vst.msk [vmem:[#allocation4 + $0x10] sm:$0x3] %vm359, 0.0
        %447 = vst.msk [vmem:[#allocation4] sm:$0xff] %vm367, 0.0
        %448 = vst.msk [vmem:[#allocation4 + $0x8] sm:$0xff] %vm367, 0.0
        %449 = vst.msk [vmem:[#allocation4 + $0x10] sm:$0x3] %vm370, 0.0
        %v450 = vld [vmem:[%s288] sm:$0xff]
        %v451 = vld [vmem:[%s288 + $0x8] sm:$0xff]
        %v452 = vld [vmem:[%s288 + $0x10] sm:$0xff]
        %v453 = vld [vmem:[%s288 + $0x18] sm:$0xff]
        %v454 = vld [vmem:[%s288 + $0x20] sm:$0xff]
        %v455 = vld [vmem:[%s288 + $0x28] sm:$0xff]
        %462 = vrot.lane.b32.xlu0 %v450, 1
        %v463 = vpop.permute.xlu0 %462
        %464 = vrot.lane.b32.xlu0 %v451, 1
        %v465 = vpop.permute.xlu0 %464
        %466 = vrot.lane.b32.xlu0 %v452, 1
        %v467 = vpop.permute.xlu0 %466
        %468 = vrot.lane.b32.xlu0 %v453, 1
        %v469 = vpop.permute.xlu0 %468
        %470 = vrot.lane.b32.xlu0 %v454, 1
        %v471 = vpop.permute.xlu0 %470
        %472 = vrot.lane.b32.xlu0 %v455, 1
        %v473 = vpop.permute.xlu0 %472
        %vm480 = vcmask 138248
        %481 = vst.msk [vmem:[#allocation2 + $0x1] sm:$0xff] %vm480, %v463
        %482 = vst.msk [vmem:[#allocation2 + $0x9] sm:$0xff] %vm480, %v465
        %483 = vst.msk [vmem:[#allocation2 + $0x19] sm:$0xff] %vm480, %v467
        %484 = vst.msk [vmem:[#allocation2 + $0x21] sm:$0xff] %vm480, %v469
        %485 = vst.msk [vmem:[#allocation2 + $0x31] sm:$0xff] %vm480, %v471
        %486 = vst.msk [vmem:[#allocation2 + $0x39] sm:$0xff] %vm480, %v473
        %s487 = sld [smem:[#allocation5 + $0xd8]]
        %v488 = vstv %s487
        %s489 = sld [smem:[#allocation5]]
        %v490 = vld [vmem:[#allocation2] sm:$0xff]
        %v491 = vld [vmem:[#allocation2 + $0x8] sm:$0xff]
        %v492 = vstv %s489
        %v493 = vmul.f32 %v492, %v490
        %v494 = vmul.f32 %v492, %v491
        %v495 = vadd.f32 %v488, %v493
        %v496 = vadd.f32 %v488, %v494
        %s497 = sld [smem:[#allocation5 + $0x1]]
        %v498 = vstv %s497
        %v499 = vmul.f32 %v498, %v490
        %v500 = vmul.f32 %v498, %v491
        %503 = vrot.lane.b32.xlu0 %v499, 127
        %v504 = vpop.permute.xlu0 %503
        %505 = vrot.lane.b32.xlu0 %v500, 127
        %v506 = vpop.permute.xlu0 %505
        %v509 = vadd.f32 %v495, %v504
        %v510 = vadd.f32 %v496, %v506
        %s511 = sld [smem:[#allocation5 + $0x2]]
        %v512 = vstv %s511
        %v513 = vmul.f32 %v512, %v490
        %v514 = vmul.f32 %v512, %v491
        %517 = vrot.lane.b32.xlu0 %v513, 126
        %v518 = vpop.permute.xlu0 %517
        %519 = vrot.lane.b32.xlu0 %v514, 126
        %v520 = vpop.permute.xlu0 %519
        %v523 = vadd.f32 %v509, %v518
        %v524 = vadd.f32 %v510, %v520
        %s525 = sld [smem:[#allocation5 + $0x3]]
        %v526 = vld [vmem:[#allocation2 + $0x1] sm:$0xff]
        %v527 = vld [vmem:[#allocation2 + $0x9] sm:$0xff]
        %v528 = vstv %s525
        %v529 = vmul.f32 %v528, %v526
        %v530 = vmul.f32 %v528, %v527
        %v531 = vadd.f32 %v523, %v529
        %v532 = vadd.f32 %v524, %v530
        %s533 = sld [smem:[#allocation5 + $0x4]]
        %v534 = vstv %s533
        %v535 = vmul.f32 %v534, %v526
        %v536 = vmul.f32 %v534, %v527
        %539 = vrot.lane.b32.xlu0 %v535, 127
        %v540 = vpop.permute.xlu0 %539
        %541 = vrot.lane.b32.xlu0 %v536, 127
        %v542 = vpop.permute.xlu0 %541
        %v545 = vadd.f32 %v531, %v540
        %v546 = vadd.f32 %v532, %v542
        %s547 = sld [smem:[#allocation5 + $0x5]]
        %v548 = vstv %s547
        %v549 = vmul.f32 %v548, %v526
        %v550 = vmul.f32 %v548, %v527
        %553 = vrot.lane.b32.xlu0 %v549, 126
        %v554 = vpop.permute.xlu0 %553
        %555 = vrot.lane.b32.xlu0 %v550, 126
        %v556 = vpop.permute.xlu0 %555
        %v559 = vadd.f32 %v545, %v554
        %v560 = vadd.f32 %v546, %v556
        %s561 = sld [smem:[#allocation5 + $0x6]]
        %v562 = vld [vmem:[#allocation2 + $0x2] sm:$0xff]
        %v563 = vld [vmem:[#allocation2 + $0xa] sm:$0xff]
        %v564 = vstv %s561
        %v565 = vmul.f32 %v564, %v562
        %v566 = vmul.f32 %v564, %v563
        %v567 = vadd.f32 %v559, %v565
        %v568 = vadd.f32 %v560, %v566
        %s569 = sld [smem:[#allocation5 + $0x7]]
        %v570 = vstv %s569
        %v571 = vmul.f32 %v570, %v562
        %v572 = vmul.f32 %v570, %v563
        %575 = vrot.lane.b32.xlu0 %v571, 127
        %v576 = vpop.permute.xlu0 %575
        %577 = vrot.lane.b32.xlu0 %v572, 127
        %v578 = vpop.permute.xlu0 %577
        %v581 = vadd.f32 %v567, %v576
        %v582 = vadd.f32 %v568, %v578
        %s583 = sld [smem:[#allocation5 + $0x8]]
        %v584 = vstv %s583
        %v585 = vmul.f32 %v584, %v562
        %v586 = vmul.f32 %v584, %v563
        %589 = vrot.lane.b32.xlu0 %v585, 126
        %v590 = vpop.permute.xlu0 %589
        %591 = vrot.lane.b32.xlu0 %v586, 126
        %v592 = vpop.permute.xlu0 %591
        %v595 = vadd.f32 %v581, %v590
        %v596 = vadd.f32 %v582, %v592
        %s597 = sld [smem:[#allocation5 + $0x9]]
        %s598 = scalar_lea.vmem [#allocation2], 24
        %v599 = vld [vmem:[%s598] sm:$0xff]
        %v600 = vld [vmem:[%s598 + $0x8] sm:$0xff]
        %v601 = vstv %s597
        %v602 = vmul.f32 %v601, %v599
        %v603 = vmul.f32 %v601, %v600
        %v604 = vadd.f32 %v595, %v602
        %v605 = vadd.f32 %v596, %v603
        %s606 = sld [smem:[#allocation5 + $0xa]]
        %v607 = vstv %s606
        %v608 = vmul.f32 %v607, %v599
        %v609 = vmul.f32 %v607, %v600
        %612 = vrot.lane.b32.xlu0 %v608, 127
        %v613 = vpop.permute.xlu0 %612
        %614 = vrot.lane.b32.xlu0 %v609, 127
        %v615 = vpop.permute.xlu0 %614
        %v618 = vadd.f32 %v604, %v613
        %v619 = vadd.f32 %v605, %v615
        %s620 = sld [smem:[#allocation5 + $0xb]]
        %v621 = vstv %s620
        %v622 = vmul.f32 %v621, %v599
        %v623 = vmul.f32 %v621, %v600
        %626 = vrot.lane.b32.xlu0 %v622, 126
        %v627 = vpop.permute.xlu0 %626
        %628 = vrot.lane.b32.xlu0 %v623, 126
        %v629 = vpop.permute.xlu0 %628
        %v632 = vadd.f32 %v618, %v627
        %v633 = vadd.f32 %v619, %v629
        %s634 = sld [smem:[#allocation5 + $0xc]]
        %v635 = vld [vmem:[%s598 + $0x1] sm:$0xff]
        %v636 = vld [vmem:[%s598 + $0x9] sm:$0xff]
        %v637 = vstv %s634
        %v638 = vmul.f32 %v637, %v635
        %v639 = vmul.f32 %v637, %v636
        %v640 = vadd.f32 %v632, %v638
        %v641 = vadd.f32 %v633, %v639
        %s642 = sld [smem:[#allocation5 + $0xd]]
        %v643 = vstv %s642
        %v644 = vmul.f32 %v643, %v635
        %v645 = vmul.f32 %v643, %v636
        %648 = vrot.lane.b32.xlu0 %v644, 127
        %v649 = vpop.permute.xlu0 %648
        %650 = vrot.lane.b32.xlu0 %v645, 127
        %v651 = vpop.permute.xlu0 %650
        %v654 = vadd.f32 %v640, %v649
        %v655 = vadd.f32 %v641, %v651
        %s656 = sld [smem:[#allocation5 + $0xe]]
        %v657 = vstv %s656
        %v658 = vmul.f32 %v657, %v635
        %v659 = vmul.f32 %v657, %v636
        %662 = vrot.lane.b32.xlu0 %v658, 126
        %v663 = vpop.permute.xlu0 %662
        %664 = vrot.lane.b32.xlu0 %v659, 126
        %v665 = vpop.permute.xlu0 %664
        %v668 = vadd.f32 %v654, %v663
        %v669 = vadd.f32 %v655, %v665
        %s670 = sld [smem:[#allocation5 + $0xf]]
        %v671 = vld [vmem:[%s598 + $0x2] sm:$0xff]
        %v672 = vld [vmem:[%s598 + $0xa] sm:$0xff]
        %v673 = vstv %s670
        %v674 = vmul.f32 %v673, %v671
        %v675 = vmul.f32 %v673, %v672
        %v676 = vadd.f32 %v668, %v674
        %v677 = vadd.f32 %v669, %v675
        %s678 = sld [smem:[#allocation5 + $0x10]]
        %v679 = vstv %s678
        %v680 = vmul.f32 %v679, %v671
        %v681 = vmul.f32 %v679, %v672
        %684 = vrot.lane.b32.xlu0 %v680, 127
        %v685 = vpop.permute.xlu0 %684
        %686 = vrot.lane.b32.xlu0 %v681, 127
        %v687 = vpop.permute.xlu0 %686
        %v690 = vadd.f32 %v676, %v685
        %v691 = vadd.f32 %v677, %v687
        %s692 = sld [smem:[#allocation5 + $0x11]]
        %v693 = vstv %s692
        %v694 = vmul.f32 %v693, %v671
        %v695 = vmul.f32 %v693, %v672
        %698 = vrot.lane.b32.xlu0 %v694, 126
        %v699 = vpop.permute.xlu0 %698
        %700 = vrot.lane.b32.xlu0 %v695, 126
        %v701 = vpop.permute.xlu0 %700
        %v704 = vadd.f32 %v690, %v699
        %v705 = vadd.f32 %v691, %v701
        %s706 = sld [smem:[#allocation5 + $0x12]]
        %s707 = scalar_lea.vmem [#allocation2], 48
        %v708 = vld [vmem:[%s707] sm:$0xff]
        %v709 = vld [vmem:[%s707 + $0x8] sm:$0xff]
        %v710 = vstv %s706
        %v711 = vmul.f32 %v710, %v708
        %v712 = vmul.f32 %v710, %v709
        %v713 = vadd.f32 %v704, %v711
        %v714 = vadd.f32 %v705, %v712
        %s715 = sld [smem:[#allocation5 + $0x13]]
        %v716 = vstv %s715
        %v717 = vmul.f32 %v716, %v708
        %v718 = vmul.f32 %v716, %v709
        %721 = vrot.lane.b32.xlu0 %v717, 127
        %v722 = vpop.permute.xlu0 %721
        %723 = vrot.lane.b32.xlu0 %v718, 127
        %v724 = vpop.permute.xlu0 %723
        %v727 = vadd.f32 %v713, %v722
        %v728 = vadd.f32 %v714, %v724
        %s729 = sld [smem:[#allocation5 + $0x14]]
        %v730 = vstv %s729
        %v731 = vmul.f32 %v730, %v708
        %v732 = vmul.f32 %v730, %v709
        %735 = vrot.lane.b32.xlu0 %v731, 126
        %v736 = vpop.permute.xlu0 %735
        %737 = vrot.lane.b32.xlu0 %v732, 126
        %v738 = vpop.permute.xlu0 %737
        %v741 = vadd.f32 %v727, %v736
        %v742 = vadd.f32 %v728, %v738
        %s743 = sld [smem:[#allocation5 + $0x15]]
        %v744 = vld [vmem:[%s707 + $0x1] sm:$0xff]
        %v745 = vld [vmem:[%s707 + $0x9] sm:$0xff]
        %v746 = vstv %s743
        %v747 = vmul.f32 %v746, %v744
        %v748 = vmul.f32 %v746, %v745
        %v749 = vadd.f32 %v741, %v747
        %v750 = vadd.f32 %v742, %v748
        %s751 = sld [smem:[#allocation5 + $0x16]]
        %v752 = vstv %s751
        %v753 = vmul.f32 %v752, %v744
        %v754 = vmul.f32 %v752, %v745
        %757 = vrot.lane.b32.xlu0 %v753, 127
        %v758 = vpop.permute.xlu0 %757
        %759 = vrot.lane.b32.xlu0 %v754, 127
        %v760 = vpop.permute.xlu0 %759
        %v763 = vadd.f32 %v749, %v758
        %v764 = vadd.f32 %v750, %v760
        %s765 = sld [smem:[#allocation5 + $0x17]]
        %v766 = vstv %s765
        %v767 = vmul.f32 %v766, %v744
        %v768 = vmul.f32 %v766, %v745
        %771 = vrot.lane.b32.xlu0 %v767, 126
        %v772 = vpop.permute.xlu0 %771
        %773 = vrot.lane.b32.xlu0 %v768, 126
        %v774 = vpop.permute.xlu0 %773
        %v777 = vadd.f32 %v763, %v772
        %v778 = vadd.f32 %v764, %v774
        %s779 = sld [smem:[#allocation5 + $0x18]]
        %v780 = vld [vmem:[%s707 + $0x2] sm:$0xff]
        %v781 = vld [vmem:[%s707 + $0xa] sm:$0xff]
        %v782 = vstv %s779
        %v783 = vmul.f32 %v782, %v780
        %v784 = vmul.f32 %v782, %v781
        %v785 = vadd.f32 %v777, %v783
        %v786 = vadd.f32 %v778, %v784
        %s787 = sld [smem:[#allocation5 + $0x19]]
        %v788 = vstv %s787
        %v789 = vmul.f32 %v788, %v780
        %v790 = vmul.f32 %v788, %v781
        %793 = vrot.lane.b32.xlu0 %v789, 127
        %v794 = vpop.permute.xlu0 %793
        %795 = vrot.lane.b32.xlu0 %v790, 127
        %v796 = vpop.permute.xlu0 %795
        %v799 = vadd.f32 %v785, %v794
        %v800 = vadd.f32 %v786, %v796
        %s801 = sld [smem:[#allocation5 + $0x1a]]
        %v802 = vstv %s801
        %v803 = vmul.f32 %v802, %v780
        %v804 = vmul.f32 %v802, %v781
        %807 = vrot.lane.b32.xlu0 %v803, 126
        %v808 = vpop.permute.xlu0 %807
        %809 = vrot.lane.b32.xlu0 %v804, 126
        %v810 = vpop.permute.xlu0 %809
        %v813 = vadd.f32 %v799, %v808
        %v814 = vadd.f32 %v800, %v810
        %v815 = vmax.f32 %v813, 0.0
        %v816 = vmax.f32 %v814, 0.0
        %819 = vrot.lane.b32.xlu0 %v815, 1
        %v820 = vpop.permute.xlu0 %819
        %821 = vrot.lane.b32.xlu0 %v816, 1
        %v822 = vpop.permute.xlu0 %821
        %825 = vst.msk [vmem:[#allocation3 + $0x1] sm:$0xff] %vm480, %v820
        %826 = vst.msk [vmem:[#allocation3 + $0x9] sm:$0xff] %vm480, %v822
        %s827 = sld [smem:[#allocation5 + $0xd9]]
        %v828 = vstv %s827
        %s829 = sld [smem:[#allocation5 + $0x1b]]
        %v830 = vld [vmem:[#allocation2] sm:$0xff]
        %v831 = vld [vmem:[#allocation2 + $0x8] sm:$0xff]
        %v832 = vstv %s829
        %v833 = vmul.f32 %v832, %v830
        %v834 = vmul.f32 %v832, %v831
        %v835 = vadd.f32 %v828, %v833
        %v836 = vadd.f32 %v828, %v834
        %s837 = sld [smem:[#allocation5 + $0x1c]]
        %v838 = vstv %s837
        %v839 = vmul.f32 %v838, %v830
        %v840 = vmul.f32 %v838, %v831
        %843 = vrot.lane.b32.xlu0 %v839, 127
        %v844 = vpop.permute.xlu0 %843
        %845 = vrot.lane.b32.xlu0 %v840, 127
        %v846 = vpop.permute.xlu0 %845
        %v849 = vadd.f32 %v835, %v844
        %v850 = vadd.f32 %v836, %v846
        %s851 = sld [smem:[#allocation5 + $0x1d]]
        %v852 = vstv %s851
        %v853 = vmul.f32 %v852, %v830
        %v854 = vmul.f32 %v852, %v831
        %857 = vrot.lane.b32.xlu0 %v853, 126
        %v858 = vpop.permute.xlu0 %857
        %859 = vrot.lane.b32.xlu0 %v854, 126
        %v860 = vpop.permute.xlu0 %859
        %v863 = vadd.f32 %v849, %v858
        %v864 = vadd.f32 %v850, %v860
        %s865 = sld [smem:[#allocation5 + $0x1e]]
        %v866 = vld [vmem:[#allocation2 + $0x1] sm:$0xff]
        %v867 = vld [vmem:[#allocation2 + $0x9] sm:$0xff]
        %v868 = vstv %s865
        %v869 = vmul.f32 %v868, %v866
        %v870 = vmul.f32 %v868, %v867
        %v871 = vadd.f32 %v863, %v869
        %v872 = vadd.f32 %v864, %v870
        %s873 = sld [smem:[#allocation5 + $0x1f]]
        %v874 = vstv %s873
        %v875 = vmul.f32 %v874, %v866
        %v876 = vmul.f32 %v874, %v867
        %879 = vrot.lane.b32.xlu0 %v875, 127
        %v880 = vpop.permute.xlu0 %879
        %881 = vrot.lane.b32.xlu0 %v876, 127
        %v882 = vpop.permute.xlu0 %881
        %v885 = vadd.f32 %v871, %v880
        %v886 = vadd.f32 %v872, %v882
        %s887 = sld [smem:[#allocation5 + $0x20]]
        %v888 = vstv %s887
        %v889 = vmul.f32 %v888, %v866
        %v890 = vmul.f32 %v888, %v867
        %893 = vrot.lane.b32.xlu0 %v889, 126
        %v894 = vpop.permute.xlu0 %893
        %895 = vrot.lane.b32.xlu0 %v890, 126
        %v896 = vpop.permute.xlu0 %895
        %v899 = vadd.f32 %v885, %v894
        %v900 = vadd.f32 %v886, %v896
        %s901 = sld [smem:[#allocation5 + $0x21]]
        %v902 = vld [vmem:[#allocation2 + $0x2] sm:$0xff]
        %v903 = vld [vmem:[#allocation2 + $0xa] sm:$0xff]
        %v904 = vstv %s901
        %v905 = vmul.f32 %v904, %v902
        %v906 = vmul.f32 %v904, %v903
        %v907 = vadd.f32 %v899, %v905
        %v908 = vadd.f32 %v900, %v906
        %s909 = sld [smem:[#allocation5 + $0x22]]
        %v910 = vstv %s909
        %v911 = vmul.f32 %v910, %v902
        %v912 = vmul.f32 %v910, %v903
        %915 = vrot.lane.b32.xlu0 %v911, 127
        %v916 = vpop.permute.xlu0 %915
        %917 = vrot.lane.b32.xlu0 %v912, 127
        %v918 = vpop.permute.xlu0 %917
        %v921 = vadd.f32 %v907, %v916
        %v922 = vadd.f32 %v908, %v918
        %s923 = sld [smem:[#allocation5 + $0x23]]
        %v924 = vstv %s923
        %v925 = vmul.f32 %v924, %v902
        %v926 = vmul.f32 %v924, %v903
        %929 = vrot.lane.b32.xlu0 %v925, 126
        %v930 = vpop.permute.xlu0 %929
        %931 = vrot.lane.b32.xlu0 %v926, 126
        %v932 = vpop.permute.xlu0 %931
        %v935 = vadd.f32 %v921, %v930
        %v936 = vadd.f32 %v922, %v932
        %s937 = sld [smem:[#allocation5 + $0x24]]
        %v938 = vld [vmem:[%s598] sm:$0xff]
        %v939 = vld [vmem:[%s598 + $0x8] sm:$0xff]
        %v940 = vstv %s937
        %v941 = vmul.f32 %v940, %v938
        %v942 = vmul.f32 %v940, %v939
        %v943 = vadd.f32 %v935, %v941
        %v944 = vadd.f32 %v936, %v942
        %s945 = sld [smem:[#allocation5 + $0x25]]
        %v946 = vstv %s945
        %v947 = vmul.f32 %v946, %v938
        %v948 = vmul.f32 %v946, %v939
        %951 = vrot.lane.b32.xlu0 %v947, 127
        %v952 = vpop.permute.xlu0 %951
        %953 = vrot.lane.b32.xlu0 %v948, 127
        %v954 = vpop.permute.xlu0 %953
        %v957 = vadd.f32 %v943, %v952
        %v958 = vadd.f32 %v944, %v954
        %s959 = sld [smem:[#allocation5 + $0x26]]
        %v960 = vstv %s959
        %v961 = vmul.f32 %v960, %v938
        %v962 = vmul.f32 %v960, %v939
        %965 = vrot.lane.b32.xlu0 %v961, 126
        %v966 = vpop.permute.xlu0 %965
        %967 = vrot.lane.b32.xlu0 %v962, 126
        %v968 = vpop.permute.xlu0 %967
        %v971 = vadd.f32 %v957, %v966
        %v972 = vadd.f32 %v958, %v968
        %s973 = sld [smem:[#allocation5 + $0x27]]
        %v974 = vld [vmem:[%s598 + $0x1] sm:$0xff]
        %v975 = vld [vmem:[%s598 + $0x9] sm:$0xff]
        %v976 = vstv %s973
        %v977 = vmul.f32 %v976, %v974
        %v978 = vmul.f32 %v976, %v975
        %v979 = vadd.f32 %v971, %v977
        %v980 = vadd.f32 %v972, %v978
        %s981 = sld [smem:[#allocation5 + $0x28]]
        %v982 = vstv %s981
        %v983 = vmul.f32 %v982, %v974
        %v984 = vmul.f32 %v982, %v975
        %987 = vrot.lane.b32.xlu0 %v983, 127
        %v988 = vpop.permute.xlu0 %987
        %989 = vrot.lane.b32.xlu0 %v984, 127
        %v990 = vpop.permute.xlu0 %989
        %v993 = vadd.f32 %v979, %v988
        %v994 = vadd.f32 %v980, %v990
        %s995 = sld [smem:[#allocation5 + $0x29]]
        %v996 = vstv %s995
        %v997 = vmul.f32 %v996, %v974
        %v998 = vmul.f32 %v996, %v975
        %1001 = vrot.lane.b32.xlu0 %v997, 126
        %v1002 = vpop.permute.xlu0 %1001
        %1003 = vrot.lane.b32.xlu0 %v998, 126
        %v1004 = vpop.permute.xlu0 %1003
        %v1007 = vadd.f32 %v993, %v1002
        %v1008 = vadd.f32 %v994, %v1004
        %s1009 = sld [smem:[#allocation5 + $0x2a]]
        %v1010 = vld [vmem:[%s598 + $0x2] sm:$0xff]
        %v1011 = vld [vmem:[%s598 + $0xa] sm:$0xff]
        %v1012 = vstv %s1009
        %v1013 = vmul.f32 %v1012, %v1010
        %v1014 = vmul.f32 %v1012, %v1011
        %v1015 = vadd.f32 %v1007, %v1013
        %v1016 = vadd.f32 %v1008, %v1014
        %s1017 = sld [smem:[#allocation5 + $0x2b]]
        %v1018 = vstv %s1017
        %v1019 = vmul.f32 %v1018, %v1010
        %v1020 = vmul.f32 %v1018, %v1011
        %1023 = vrot.lane.b32.xlu0 %v1019, 127
        %v1024 = vpop.permute.xlu0 %1023
        %1025 = vrot.lane.b32.xlu0 %v1020, 127
        %v1026 = vpop.permute.xlu0 %1025
        %v1029 = vadd.f32 %v1015, %v1024
        %v1030 = vadd.f32 %v1016, %v1026
        %s1031 = sld [smem:[#allocation5 + $0x2c]]
        %v1032 = vstv %s1031
        %v1033 = vmul.f32 %v1032, %v1010
        %v1034 = vmul.f32 %v1032, %v1011
        %1037 = vrot.lane.b32.xlu0 %v1033, 126
        %v1038 = vpop.permute.xlu0 %1037
        %1039 = vrot.lane.b32.xlu0 %v1034, 126
        %v1040 = vpop.permute.xlu0 %1039
        %v1043 = vadd.f32 %v1029, %v1038
        %v1044 = vadd.f32 %v1030, %v1040
        %s1045 = sld [smem:[#allocation5 + $0x2d]]
        %v1046 = vld [vmem:[%s707] sm:$0xff]
        %v1047 = vld [vmem:[%s707 + $0x8] sm:$0xff]
        %v1048 = vstv %s1045
        %v1049 = vmul.f32 %v1048, %v1046
        %v1050 = vmul.f32 %v1048, %v1047
        %v1051 = vadd.f32 %v1043, %v1049
        %v1052 = vadd.f32 %v1044, %v1050
        %s1053 = sld [smem:[#allocation5 + $0x2e]]
        %v1054 = vstv %s1053
        %v1055 = vmul.f32 %v1054, %v1046
        %v1056 = vmul.f32 %v1054, %v1047
        %1059 = vrot.lane.b32.xlu0 %v1055, 127
        %v1060 = vpop.permute.xlu0 %1059
        %1061 = vrot.lane.b32.xlu0 %v1056, 127
        %v1062 = vpop.permute.xlu0 %1061
        %v1065 = vadd.f32 %v1051, %v1060
        %v1066 = vadd.f32 %v1052, %v1062
        %s1067 = sld [smem:[#allocation5 + $0x2f]]
        %v1068 = vstv %s1067
        %v1069 = vmul.f32 %v1068, %v1046
        %v1070 = vmul.f32 %v1068, %v1047
        %1073 = vrot.lane.b32.xlu0 %v1069, 126
        %v1074 = vpop.permute.xlu0 %1073
        %1075 = vrot.lane.b32.xlu0 %v1070, 126
        %v1076 = vpop.permute.xlu0 %1075
        %v1079 = vadd.f32 %v1065, %v1074
        %v1080 = vadd.f32 %v1066, %v1076
        %s1081 = sld [smem:[#allocation5 + $0x30]]
        %v1082 = vld [vmem:[%s707 + $0x1] sm:$0xff]
        %v1083 = vld [vmem:[%s707 + $0x9] sm:$0xff]
        %v1084 = vstv %s1081
        %v1085 = vmul.f32 %v1084, %v1082
        %v1086 = vmul.f32 %v1084, %v1083
        %v1087 = vadd.f32 %v1079, %v1085
        %v1088 = vadd.f32 %v1080, %v1086
        %s1089 = sld [smem:[#allocation5 + $0x31]]
        %v1090 = vstv %s1089
        %v1091 = vmul.f32 %v1090, %v1082
        %v1092 = vmul.f32 %v1090, %v1083
        %1095 = vrot.lane.b32.xlu0 %v1091, 127
        %v1096 = vpop.permute.xlu0 %1095
        %1097 = vrot.lane.b32.xlu0 %v1092, 127
        %v1098 = vpop.permute.xlu0 %1097
        %v1101 = vadd.f32 %v1087, %v1096
        %v1102 = vadd.f32 %v1088, %v1098
        %s1103 = sld [smem:[#allocation5 + $0x32]]
        %v1104 = vstv %s1103
        %v1105 = vmul.f32 %v1104, %v1082
        %v1106 = vmul.f32 %v1104, %v1083
        %1109 = vrot.lane.b32.xlu0 %v1105, 126
        %v1110 = vpop.permute.xlu0 %1109
        %1111 = vrot.lane.b32.xlu0 %v1106, 126
        %v1112 = vpop.permute.xlu0 %1111
        %v1115 = vadd.f32 %v1101, %v1110
        %v1116 = vadd.f32 %v1102, %v1112
        %s1117 = sld [smem:[#allocation5 + $0x33]]
        %v1118 = vld [vmem:[%s707 + $0x2] sm:$0xff]
        %v1119 = vld [vmem:[%s707 + $0xa] sm:$0xff]
        %v1120 = vstv %s1117
        %v1121 = vmul.f32 %v1120, %v1118
        %v1122 = vmul.f32 %v1120, %v1119
        %v1123 = vadd.f32 %v1115, %v1121
        %v1124 = vadd.f32 %v1116, %v1122
        %s1125 = sld [smem:[#allocation5 + $0x34]]
        %v1126 = vstv %s1125
        %v1127 = vmul.f32 %v1126, %v1118
        %v1128 = vmul.f32 %v1126, %v1119
        %1131 = vrot.lane.b32.xlu0 %v1127, 127
        %v1132 = vpop.permute.xlu0 %1131
        %1133 = vrot.lane.b32.xlu0 %v1128, 127
        %v1134 = vpop.permute.xlu0 %1133
        %v1137 = vadd.f32 %v1123, %v1132
        %v1138 = vadd.f32 %v1124, %v1134
        %s1139 = sld [smem:[#allocation5 + $0x35]]
        %v1140 = vstv %s1139
        %v1141 = vmul.f32 %v1140, %v1118
        %v1142 = vmul.f32 %v1140, %v1119
        %1145 = vrot.lane.b32.xlu0 %v1141, 126
        %v1146 = vpop.permute.xlu0 %1145
        %1147 = vrot.lane.b32.xlu0 %v1142, 126
        %v1148 = vpop.permute.xlu0 %1147
        %v1151 = vadd.f32 %v1137, %v1146
        %v1152 = vadd.f32 %v1138, %v1148
        %v1153 = vmax.f32 %v1151, 0.0
        %v1154 = vmax.f32 %v1152, 0.0
        %1157 = vrot.lane.b32.xlu0 %v1153, 1
        %v1158 = vpop.permute.xlu0 %1157
        %1159 = vrot.lane.b32.xlu0 %v1154, 1
        %v1160 = vpop.permute.xlu0 %1159
        %s1163 = scalar_lea.vmem [#allocation3], 24
        %1164 = vst.msk [vmem:[%s1163 + $0x1] sm:$0xff] %vm480, %v1158
        %1165 = vst.msk [vmem:[%s1163 + $0x9] sm:$0xff] %vm480, %v1160
        %s1166 = sld [smem:[#allocation5 + $0xda]]
        %v1167 = vstv %s1166
        %s1168 = sld [smem:[#allocation5 + $0x36]]
        %v1169 = vld [vmem:[#allocation2] sm:$0xff]
        %v1170 = vld [vmem:[#allocation2 + $0x8] sm:$0xff]
        %v1171 = vstv %s1168
        %v1172 = vmul.f32 %v1171, %v1169
        %v1173 = vmul.f32 %v1171, %v1170
        %v1174 = vadd.f32 %v1167, %v1172
        %v1175 = vadd.f32 %v1167, %v1173
        %s1176 = sld [smem:[#allocation5 + $0x37]]
        %v1177 = vstv %s1176
        %v1178 = vmul.f32 %v1177, %v1169
        %v1179 = vmul.f32 %v1177, %v1170
        %1182 = vrot.lane.b32.xlu0 %v1178, 127
        %v1183 = vpop.permute.xlu0 %1182
        %1184 = vrot.lane.b32.xlu0 %v1179, 127
        %v1185 = vpop.permute.xlu0 %1184
        %v1188 = vadd.f32 %v1174, %v1183
        %v1189 = vadd.f32 %v1175, %v1185
        %s1190 = sld [smem:[#allocation5 + $0x38]]
        %v1191 = vstv %s1190
        %v1192 = vmul.f32 %v1191, %v1169
        %v1193 = vmul.f32 %v1191, %v1170
        %1196 = vrot.lane.b32.xlu0 %v1192, 126
        %v1197 = vpop.permute.xlu0 %1196
        %1198 = vrot.lane.b32.xlu0 %v1193, 126
        %v1199 = vpop.permute.xlu0 %1198
        %v1202 = vadd.f32 %v1188, %v1197
        %v1203 = vadd.f32 %v1189, %v1199
        %s1204 = sld [smem:[#allocation5 + $0x39]]
        %v1205 = vld [vmem:[#allocation2 + $0x1] sm:$0xff]
        %v1206 = vld [vmem:[#allocation2 + $0x9] sm:$0xff]
        %v1207 = vstv %s1204
        %v1208 = vmul.f32 %v1207, %v1205
        %v1209 = vmul.f32 %v1207, %v1206
        %v1210 = vadd.f32 %v1202, %v1208
        %v1211 = vadd.f32 %v1203, %v1209
        %s1212 = sld [smem:[#allocation5 + $0x3a]]
        %v1213 = vstv %s1212
        %v1214 = vmul.f32 %v1213, %v1205
        %v1215 = vmul.f32 %v1213, %v1206
        %1218 = vrot.lane.b32.xlu0 %v1214, 127
        %v1219 = vpop.permute.xlu0 %1218
        %1220 = vrot.lane.b32.xlu0 %v1215, 127
        %v1221 = vpop.permute.xlu0 %1220
        %v1224 = vadd.f32 %v1210, %v1219
        %v1225 = vadd.f32 %v1211, %v1221
        %s1226 = sld [smem:[#allocation5 + $0x3b]]
        %v1227 = vstv %s1226
        %v1228 = vmul.f32 %v1227, %v1205
        %v1229 = vmul.f32 %v1227, %v1206
        %1232 = vrot.lane.b32.xlu0 %v1228, 126
        %v1233 = vpop.permute.xlu0 %1232
        %1234 = vrot.lane.b32.xlu0 %v1229, 126
        %v1235 = vpop.permute.xlu0 %1234
        %v1238 = vadd.f32 %v1224, %v1233
        %v1239 = vadd.f32 %v1225, %v1235
        %s1240 = sld [smem:[#allocation5 + $0x3c]]
        %v1241 = vld [vmem:[#allocation2 + $0x2] sm:$0xff]
        %v1242 = vld [vmem:[#allocation2 + $0xa] sm:$0xff]
        %v1243 = vstv %s1240
        %v1244 = vmul.f32 %v1243, %v1241
        %v1245 = vmul.f32 %v1243, %v1242
        %v1246 = vadd.f32 %v1238, %v1244
        %v1247 = vadd.f32 %v1239, %v1245
        %s1248 = sld [smem:[#allocation5 + $0x3d]]
        %v1249 = vstv %s1248
        %v1250 = vmul.f32 %v1249, %v1241
        %v1251 = vmul.f32 %v1249, %v1242
        %1254 = vrot.lane.b32.xlu0 %v1250, 127
        %v1255 = vpop.permute.xlu0 %1254
        %1256 = vrot.lane.b32.xlu0 %v1251, 127
        %v1257 = vpop.permute.xlu0 %1256
        %v1260 = vadd.f32 %v1246, %v1255
        %v1261 = vadd.f32 %v1247, %v1257
        %s1262 = sld [smem:[#allocation5 + $0x3e]]
        %v1263 = vstv %s1262
        %v1264 = vmul.f32 %v1263, %v1241
        %v1265 = vmul.f32 %v1263, %v1242
        %1268 = vrot.lane.b32.xlu0 %v1264, 126
        %v1269 = vpop.permute.xlu0 %1268
        %1270 = vrot.lane.b32.xlu0 %v1265, 126
        %v1271 = vpop.permute.xlu0 %1270
        %v1274 = vadd.f32 %v1260, %v1269
        %v1275 = vadd.f32 %v1261, %v1271
        %s1276 = sld [smem:[#allocation5 + $0x3f]]
        %v1277 = vld [vmem:[%s598] sm:$0xff]
        %v1278 = vld [vmem:[%s598 + $0x8] sm:$0xff]
        %v1279 = vstv %s1276
        %v1280 = vmul.f32 %v1279, %v1277
        %v1281 = vmul.f32 %v1279, %v1278
        %v1282 = vadd.f32 %v1274, %v1280
        %v1283 = vadd.f32 %v1275, %v1281
        %s1284 = sld [smem:[#allocation5 + $0x40]]
        %v1285 = vstv %s1284
        %v1286 = vmul.f32 %v1285, %v1277
        %v1287 = vmul.f32 %v1285, %v1278
        %1290 = vrot.lane.b32.xlu0 %v1286, 127
        %v1291 = vpop.permute.xlu0 %1290
        %1292 = vrot.lane.b32.xlu0 %v1287, 127
        %v1293 = vpop.permute.xlu0 %1292
        %v1296 = vadd.f32 %v1282, %v1291
        %v1297 = vadd.f32 %v1283, %v1293
        %s1298 = sld [smem:[#allocation5 + $0x41]]
        %v1299 = vstv %s1298
        %v1300 = vmul.f32 %v1299, %v1277
        %v1301 = vmul.f32 %v1299, %v1278
        %1304 = vrot.lane.b32.xlu0 %v1300, 126
        %v1305 = vpop.permute.xlu0 %1304
        %1306 = vrot.lane.b32.xlu0 %v1301, 126
        %v1307 = vpop.permute.xlu0 %1306
        %v1310 = vadd.f32 %v1296, %v1305
        %v1311 = vadd.f32 %v1297, %v1307
        %s1312 = sld [smem:[#allocation5 + $0x42]]
        %v1313 = vld [vmem:[%s598 + $0x1] sm:$0xff]
        %v1314 = vld [vmem:[%s598 + $0x9] sm:$0xff]
        %v1315 = vstv %s1312
        %v1316 = vmul.f32 %v1315, %v1313
        %v1317 = vmul.f32 %v1315, %v1314
        %v1318 = vadd.f32 %v1310, %v1316
        %v1319 = vadd.f32 %v1311, %v1317
        %s1320 = sld [smem:[#allocation5 + $0x43]]
        %v1321 = vstv %s1320
        %v1322 = vmul.f32 %v1321, %v1313
        %v1323 = vmul.f32 %v1321, %v1314
        %1326 = vrot.lane.b32.xlu0 %v1322, 127
        %v1327 = vpop.permute.xlu0 %1326
        %1328 = vrot.lane.b32.xlu0 %v1323, 127
        %v1329 = vpop.permute.xlu0 %1328
        %v1332 = vadd.f32 %v1318, %v1327
        %v1333 = vadd.f32 %v1319, %v1329
        %s1334 = sld [smem:[#allocation5 + $0x44]]
        %v1335 = vstv %s1334
        %v1336 = vmul.f32 %v1335, %v1313
        %v1337 = vmul.f32 %v1335, %v1314
        %1340 = vrot.lane.b32.xlu0 %v1336, 126
        %v1341 = vpop.permute.xlu0 %1340
        %1342 = vrot.lane.b32.xlu0 %v1337, 126
        %v1343 = vpop.permute.xlu0 %1342
        %v1346 = vadd.f32 %v1332, %v1341
        %v1347 = vadd.f32 %v1333, %v1343
        %s1348 = sld [smem:[#allocation5 + $0x45]]
        %v1349 = vld [vmem:[%s598 + $0x2] sm:$0xff]
        %v1350 = vld [vmem:[%s598 + $0xa] sm:$0xff]
        %v1351 = vstv %s1348
        %v1352 = vmul.f32 %v1351, %v1349
        %v1353 = vmul.f32 %v1351, %v1350
        %v1354 = vadd.f32 %v1346, %v1352
        %v1355 = vadd.f32 %v1347, %v1353
        %s1356 = sld [smem:[#allocation5 + $0x46]]
        %v1357 = vstv %s1356
        %v1358 = vmul.f32 %v1357, %v1349
        %v1359 = vmul.f32 %v1357, %v1350
        %1362 = vrot.lane.b32.xlu0 %v1358, 127
        %v1363 = vpop.permute.xlu0 %1362
        %1364 = vrot.lane.b32.xlu0 %v1359, 127
        %v1365 = vpop.permute.xlu0 %1364
        %v1368 = vadd.f32 %v1354, %v1363
        %v1369 = vadd.f32 %v1355, %v1365
        %s1370 = sld [smem:[#allocation5 + $0x47]]
        %v1371 = vstv %s1370
        %v1372 = vmul.f32 %v1371, %v1349
        %v1373 = vmul.f32 %v1371, %v1350
        %1376 = vrot.lane.b32.xlu0 %v1372, 126
        %v1377 = vpop.permute.xlu0 %1376
        %1378 = vrot.lane.b32.xlu0 %v1373, 126
        %v1379 = vpop.permute.xlu0 %1378
        %v1382 = vadd.f32 %v1368, %v1377
        %v1383 = vadd.f32 %v1369, %v1379
        %s1384 = sld [smem:[#allocation5 + $0x48]]
        %v1385 = vld [vmem:[%s707] sm:$0xff]
        %v1386 = vld [vmem:[%s707 + $0x8] sm:$0xff]
        %v1387 = vstv %s1384
        %v1388 = vmul.f32 %v1387, %v1385
        %v1389 = vmul.f32 %v1387, %v1386
        %v1390 = vadd.f32 %v1382, %v1388
        %v1391 = vadd.f32 %v1383, %v1389
        %s1392 = sld [smem:[#allocation5 + $0x49]]
        %v1393 = vstv %s1392
        %v1394 = vmul.f32 %v1393, %v1385
        %v1395 = vmul.f32 %v1393, %v1386
        %1398 = vrot.lane.b32.xlu0 %v1394, 127
        %v1399 = vpop.permute.xlu0 %1398
        %1400 = vrot.lane.b32.xlu0 %v1395, 127
        %v1401 = vpop.permute.xlu0 %1400
        %v1404 = vadd.f32 %v1390, %v1399
        %v1405 = vadd.f32 %v1391, %v1401
        %s1406 = sld [smem:[#allocation5 + $0x4a]]
        %v1407 = vstv %s1406
        %v1408 = vmul.f32 %v1407, %v1385
        %v1409 = vmul.f32 %v1407, %v1386
        %1412 = vrot.lane.b32.xlu0 %v1408, 126
        %v1413 = vpop.permute.xlu0 %1412
        %1414 = vrot.lane.b32.xlu0 %v1409, 126
        %v1415 = vpop.permute.xlu0 %1414
        %v1418 = vadd.f32 %v1404, %v1413
        %v1419 = vadd.f32 %v1405, %v1415
        %s1420 = sld [smem:[#allocation5 + $0x4b]]
        %v1421 = vld [vmem:[%s707 + $0x1] sm:$0xff]
        %v1422 = vld [vmem:[%s707 + $0x9] sm:$0xff]
        %v1423 = vstv %s1420
        %v1424 = vmul.f32 %v1423, %v1421
        %v1425 = vmul.f32 %v1423, %v1422
        %v1426 = vadd.f32 %v1418, %v1424
        %v1427 = vadd.f32 %v1419, %v1425
        %s1428 = sld [smem:[#allocation5 + $0x4c]]
        %v1429 = vstv %s1428
        %v1430 = vmul.f32 %v1429, %v1421
        %v1431 = vmul.f32 %v1429, %v1422
        %1434 = vrot.lane.b32.xlu0 %v1430, 127
        %v1435 = vpop.permute.xlu0 %1434
        %1436 = vrot.lane.b32.xlu0 %v1431, 127
        %v1437 = vpop.permute.xlu0 %1436
        %v1440 = vadd.f32 %v1426, %v1435
        %v1441 = vadd.f32 %v1427, %v1437
        %s1442 = sld [smem:[#allocation5 + $0x4d]]
        %v1443 = vstv %s1442
        %v1444 = vmul.f32 %v1443, %v1421
        %v1445 = vmul.f32 %v1443, %v1422
        %1448 = vrot.lane.b32.xlu0 %v1444, 126
        %v1449 = vpop.permute.xlu0 %1448
        %1450 = vrot.lane.b32.xlu0 %v1445, 126
        %v1451 = vpop.permute.xlu0 %1450
        %v1454 = vadd.f32 %v1440, %v1449
        %v1455 = vadd.f32 %v1441, %v1451
        %s1456 = sld [smem:[#allocation5 + $0x4e]]
        %v1457 = vld [vmem:[%s707 + $0x2] sm:$0xff]
        %v1458 = vld [vmem:[%s707 + $0xa] sm:$0xff]
        %v1459 = vstv %s1456
        %v1460 = vmul.f32 %v1459, %v1457
        %v1461 = vmul.f32 %v1459, %v1458
        %v1462 = vadd.f32 %v1454, %v1460
        %v1463 = vadd.f32 %v1455, %v1461
        %s1464 = sld [smem:[#allocation5 + $0x4f]]
        %v1465 = vstv %s1464
        %v1466 = vmul.f32 %v1465, %v1457
        %v1467 = vmul.f32 %v1465, %v1458
        %1470 = vrot.lane.b32.xlu0 %v1466, 127
        %v1471 = vpop.permute.xlu0 %1470
        %1472 = vrot.lane.b32.xlu0 %v1467, 127
        %v1473 = vpop.permute.xlu0 %1472
        %v1476 = vadd.f32 %v1462, %v1471
        %v1477 = vadd.f32 %v1463, %v1473
        %s1478 = sld [smem:[#allocation5 + $0x50]]
        %v1479 = vstv %s1478
        %v1480 = vmul.f32 %v1479, %v1457
        %v1481 = vmul.f32 %v1479, %v1458
        %1484 = vrot.lane.b32.xlu0 %v1480, 126
        %v1485 = vpop.permute.xlu0 %1484
        %1486 = vrot.lane.b32.xlu0 %v1481, 126
        %v1487 = vpop.permute.xlu0 %1486
        %v1490 = vadd.f32 %v1476, %v1485
        %v1491 = vadd.f32 %v1477, %v1487
        %v1492 = vmax.f32 %v1490, 0.0
        %v1493 = vmax.f32 %v1491, 0.0
        %1496 = vrot.lane.b32.xlu0 %v1492, 1
        %v1497 = vpop.permute.xlu0 %1496
        %1498 = vrot.lane.b32.xlu0 %v1493, 1
        %v1499 = vpop.permute.xlu0 %1498
        %s1502 = scalar_lea.vmem [#allocation3], 48
        %1503 = vst.msk [vmem:[%s1502 + $0x1] sm:$0xff] %vm480, %v1497
        %1504 = vst.msk [vmem:[%s1502 + $0x9] sm:$0xff] %vm480, %v1499
        %s1505 = sld [smem:[#allocation5 + $0xdb]]
        %v1506 = vstv %s1505
        %s1507 = sld [smem:[#allocation5 + $0x51]]
        %v1508 = vld [vmem:[#allocation2] sm:$0xff]
        %v1509 = vld [vmem:[#allocation2 + $0x8] sm:$0xff]
        %v1510 = vstv %s1507
        %v1511 = vmul.f32 %v1510, %v1508
        %v1512 = vmul.f32 %v1510, %v1509
        %v1513 = vadd.f32 %v1506, %v1511
        %v1514 = vadd.f32 %v1506, %v1512
        %s1515 = sld [smem:[#allocation5 + $0x52]]
        %v1516 = vstv %s1515
        %v1517 = vmul.f32 %v1516, %v1508
        %v1518 = vmul.f32 %v1516, %v1509
        %1521 = vrot.lane.b32.xlu0 %v1517, 127
        %v1522 = vpop.permute.xlu0 %1521
        %1523 = vrot.lane.b32.xlu0 %v1518, 127
        %v1524 = vpop.permute.xlu0 %1523
        %v1527 = vadd.f32 %v1513, %v1522
        %v1528 = vadd.f32 %v1514, %v1524
        %s1529 = sld [smem:[#allocation5 + $0x53]]
        %v1530 = vstv %s1529
        %v1531 = vmul.f32 %v1530, %v1508
        %v1532 = vmul.f32 %v1530, %v1509
        %1535 = vrot.lane.b32.xlu0 %v1531, 126
        %v1536 = vpop.permute.xlu0 %1535
        %1537 = vrot.lane.b32.xlu0 %v1532, 126
        %v1538 = vpop.permute.xlu0 %1537
        %v1541 = vadd.f32 %v1527, %v1536
        %v1542 = vadd.f32 %v1528, %v1538
        %s1543 = sld [smem:[#allocation5 + $0x54]]
        %v1544 = vld [vmem:[#allocation2 + $0x1] sm:$0xff]
        %v1545 = vld [vmem:[#allocation2 + $0x9] sm:$0xff]
        %v1546 = vstv %s1543
        %v1547 = vmul.f32 %v1546, %v1544
        %v1548 = vmul.f32 %v1546, %v1545
        %v1549 = vadd.f32 %v1541, %v1547
        %v1550 = vadd.f32 %v1542, %v1548
        %s1551 = sld [smem:[#allocation5 + $0x55]]
        %v1552 = vstv %s1551
        %v1553 = vmul.f32 %v1552, %v1544
        %v1554 = vmul.f32 %v1552, %v1545
        %1557 = vrot.lane.b32.xlu0 %v1553, 127
        %v1558 = vpop.permute.xlu0 %1557
        %1559 = vrot.lane.b32.xlu0 %v1554, 127
        %v1560 = vpop.permute.xlu0 %1559
        %v1563 = vadd.f32 %v1549, %v1558
        %v1564 = vadd.f32 %v1550, %v1560
        %s1565 = sld [smem:[#allocation5 + $0x56]]
        %v1566 = vstv %s1565
        %v1567 = vmul.f32 %v1566, %v1544
        %v1568 = vmul.f32 %v1566, %v1545
        %1571 = vrot.lane.b32.xlu0 %v1567, 126
        %v1572 = vpop.permute.xlu0 %1571
        %1573 = vrot.lane.b32.xlu0 %v1568, 126
        %v1574 = vpop.permute.xlu0 %1573
        %v1577 = vadd.f32 %v1563, %v1572
        %v1578 = vadd.f32 %v1564, %v1574
        %s1579 = sld [smem:[#allocation5 + $0x57]]
        %v1580 = vld [vmem:[#allocation2 + $0x2] sm:$0xff]
        %v1581 = vld [vmem:[#allocation2 + $0xa] sm:$0xff]
        %v1582 = vstv %s1579
        %v1583 = vmul.f32 %v1582, %v1580
        %v1584 = vmul.f32 %v1582, %v1581
        %v1585 = vadd.f32 %v1577, %v1583
        %v1586 = vadd.f32 %v1578, %v1584
        %s1587 = sld [smem:[#allocation5 + $0x58]]
        %v1588 = vstv %s1587
        %v1589 = vmul.f32 %v1588, %v1580
        %v1590 = vmul.f32 %v1588, %v1581
        %1593 = vrot.lane.b32.xlu0 %v1589, 127
        %v1594 = vpop.permute.xlu0 %1593
        %1595 = vrot.lane.b32.xlu0 %v1590, 127
        %v1596 = vpop.permute.xlu0 %1595
        %v1599 = vadd.f32 %v1585, %v1594
        %v1600 = vadd.f32 %v1586, %v1596
        %s1601 = sld [smem:[#allocation5 + $0x59]]
        %v1602 = vstv %s1601
        %v1603 = vmul.f32 %v1602, %v1580
        %v1604 = vmul.f32 %v1602, %v1581
        %1607 = vrot.lane.b32.xlu0 %v1603, 126
        %v1608 = vpop.permute.xlu0 %1607
        %1609 = vrot.lane.b32.xlu0 %v1604, 126
        %v1610 = vpop.permute.xlu0 %1609
        %v1613 = vadd.f32 %v1599, %v1608
        %v1614 = vadd.f32 %v1600, %v1610
        %s1615 = sld [smem:[#allocation5 + $0x5a]]
        %v1616 = vld [vmem:[%s598] sm:$0xff]
        %v1617 = vld [vmem:[%s598 + $0x8] sm:$0xff]
        %v1618 = vstv %s1615
        %v1619 = vmul.f32 %v1618, %v1616
        %v1620 = vmul.f32 %v1618, %v1617
        %v1621 = vadd.f32 %v1613, %v1619
        %v1622 = vadd.f32 %v1614, %v1620
        %s1623 = sld [smem:[#allocation5 + $0x5b]]
        %v1624 = vstv %s1623
        %v1625 = vmul.f32 %v1624, %v1616
        %v1626 = vmul.f32 %v1624, %v1617
        %1629 = vrot.lane.b32.xlu0 %v1625, 127
        %v1630 = vpop.permute.xlu0 %1629
        %1631 = vrot.lane.b32.xlu0 %v1626, 127
        %v1632 = vpop.permute.xlu0 %1631
        %v1635 = vadd.f32 %v1621, %v1630
        %v1636 = vadd.f32 %v1622, %v1632
        %s1637 = sld [smem:[#allocation5 + $0x5c]]
        %v1638 = vstv %s1637
        %v1639 = vmul.f32 %v1638, %v1616
        %v1640 = vmul.f32 %v1638, %v1617
        %1643 = vrot.lane.b32.xlu0 %v1639, 126
        %v1644 = vpop.permute.xlu0 %1643
        %1645 = vrot.lane.b32.xlu0 %v1640, 126
        %v1646 = vpop.permute.xlu0 %1645
        %v1649 = vadd.f32 %v1635, %v1644
        %v1650 = vadd.f32 %v1636, %v1646
        %s1651 = sld [smem:[#allocation5 + $0x5d]]
        %v1652 = vld [vmem:[%s598 + $0x1] sm:$0xff]
        %v1653 = vld [vmem:[%s598 + $0x9] sm:$0xff]
        %v1654 = vstv %s1651
        %v1655 = vmul.f32 %v1654, %v1652
        %v1656 = vmul.f32 %v1654, %v1653
        %v1657 = vadd.f32 %v1649, %v1655
        %v1658 = vadd.f32 %v1650, %v1656
        %s1659 = sld [smem:[#allocation5 + $0x5e]]
        %v1660 = vstv %s1659
        %v1661 = vmul.f32 %v1660, %v1652
        %v1662 = vmul.f32 %v1660, %v1653
        %1665 = vrot.lane.b32.xlu0 %v1661, 127
        %v1666 = vpop.permute.xlu0 %1665
        %1667 = vrot.lane.b32.xlu0 %v1662, 127
        %v1668 = vpop.permute.xlu0 %1667
        %v1671 = vadd.f32 %v1657, %v1666
        %v1672 = vadd.f32 %v1658, %v1668
        %s1673 = sld [smem:[#allocation5 + $0x5f]]
        %v1674 = vstv %s1673
        %v1675 = vmul.f32 %v1674, %v1652
        %v1676 = vmul.f32 %v1674, %v1653
        %1679 = vrot.lane.b32.xlu0 %v1675, 126
        %v1680 = vpop.permute.xlu0 %1679
        %1681 = vrot.lane.b32.xlu0 %v1676, 126
        %v1682 = vpop.permute.xlu0 %1681
        %v1685 = vadd.f32 %v1671, %v1680
        %v1686 = vadd.f32 %v1672, %v1682
        %s1687 = sld [smem:[#allocation5 + $0x60]]
        %v1688 = vld [vmem:[%s598 + $0x2] sm:$0xff]
        %v1689 = vld [vmem:[%s598 + $0xa] sm:$0xff]
        %v1690 = vstv %s1687
        %v1691 = vmul.f32 %v1690, %v1688
        %v1692 = vmul.f32 %v1690, %v1689
        %v1693 = vadd.f32 %v1685, %v1691
        %v1694 = vadd.f32 %v1686, %v1692
        %s1695 = sld [smem:[#allocation5 + $0x61]]
        %v1696 = vstv %s1695
        %v1697 = vmul.f32 %v1696, %v1688
        %v1698 = vmul.f32 %v1696, %v1689
        %1701 = vrot.lane.b32.xlu0 %v1697, 127
        %v1702 = vpop.permute.xlu0 %1701
        %1703 = vrot.lane.b32.xlu0 %v1698, 127
        %v1704 = vpop.permute.xlu0 %1703
        %v1707 = vadd.f32 %v1693, %v1702
        %v1708 = vadd.f32 %v1694, %v1704
        %s1709 = sld [smem:[#allocation5 + $0x62]]
        %v1710 = vstv %s1709
        %v1711 = vmul.f32 %v1710, %v1688
        %v1712 = vmul.f32 %v1710, %v1689
        %1715 = vrot.lane.b32.xlu0 %v1711, 126
        %v1716 = vpop.permute.xlu0 %1715
        %1717 = vrot.lane.b32.xlu0 %v1712, 126
        %v1718 = vpop.permute.xlu0 %1717
        %v1721 = vadd.f32 %v1707, %v1716
        %v1722 = vadd.f32 %v1708, %v1718
        %s1723 = sld [smem:[#allocation5 + $0x63]]
        %v1724 = vld [vmem:[%s707] sm:$0xff]
        %v1725 = vld [vmem:[%s707 + $0x8] sm:$0xff]
        %v1726 = vstv %s1723
        %v1727 = vmul.f32 %v1726, %v1724
        %v1728 = vmul.f32 %v1726, %v1725
        %v1729 = vadd.f32 %v1721, %v1727
        %v1730 = vadd.f32 %v1722, %v1728
        %s1731 = sld [smem:[#allocation5 + $0x64]]
        %v1732 = vstv %s1731
        %v1733 = vmul.f32 %v1732, %v1724
        %v1734 = vmul.f32 %v1732, %v1725
        %1737 = vrot.lane.b32.xlu0 %v1733, 127
        %v1738 = vpop.permute.xlu0 %1737
        %1739 = vrot.lane.b32.xlu0 %v1734, 127
        %v1740 = vpop.permute.xlu0 %1739
        %v1743 = vadd.f32 %v1729, %v1738
        %v1744 = vadd.f32 %v1730, %v1740
        %s1745 = sld [smem:[#allocation5 + $0x65]]
        %v1746 = vstv %s1745
        %v1747 = vmul.f32 %v1746, %v1724
        %v1748 = vmul.f32 %v1746, %v1725
        %1751 = vrot.lane.b32.xlu0 %v1747, 126
        %v1752 = vpop.permute.xlu0 %1751
        %1753 = vrot.lane.b32.xlu0 %v1748, 126
        %v1754 = vpop.permute.xlu0 %1753
        %v1757 = vadd.f32 %v1743, %v1752
        %v1758 = vadd.f32 %v1744, %v1754
        %s1759 = sld [smem:[#allocation5 + $0x66]]
        %v1760 = vld [vmem:[%s707 + $0x1] sm:$0xff]
        %v1761 = vld [vmem:[%s707 + $0x9] sm:$0xff]
        %v1762 = vstv %s1759
        %v1763 = vmul.f32 %v1762, %v1760
        %v1764 = vmul.f32 %v1762, %v1761
        %v1765 = vadd.f32 %v1757, %v1763
        %v1766 = vadd.f32 %v1758, %v1764
        %s1767 = sld [smem:[#allocation5 + $0x67]]
        %v1768 = vstv %s1767
        %v1769 = vmul.f32 %v1768, %v1760
        %v1770 = vmul.f32 %v1768, %v1761
        %1773 = vrot.lane.b32.xlu0 %v1769, 127
        %v1774 = vpop.permute.xlu0 %1773
        %1775 = vrot.lane.b32.xlu0 %v1770, 127
        %v1776 = vpop.permute.xlu0 %1775
        %v1779 = vadd.f32 %v1765, %v1774
        %v1780 = vadd.f32 %v1766, %v1776
        %s1781 = sld [smem:[#allocation5 + $0x68]]
        %v1782 = vstv %s1781
        %v1783 = vmul.f32 %v1782, %v1760
        %v1784 = vmul.f32 %v1782, %v1761
        %1787 = vrot.lane.b32.xlu0 %v1783, 126
        %v1788 = vpop.permute.xlu0 %1787
        %1789 = vrot.lane.b32.xlu0 %v1784, 126
        %v1790 = vpop.permute.xlu0 %1789
        %v1793 = vadd.f32 %v1779, %v1788
        %v1794 = vadd.f32 %v1780, %v1790
        %s1795 = sld [smem:[#allocation5 + $0x69]]
        %v1796 = vld [vmem:[%s707 + $0x2] sm:$0xff]
        %v1797 = vld [vmem:[%s707 + $0xa] sm:$0xff]
        %v1798 = vstv %s1795
        %v1799 = vmul.f32 %v1798, %v1796
        %v1800 = vmul.f32 %v1798, %v1797
        %v1801 = vadd.f32 %v1793, %v1799
        %v1802 = vadd.f32 %v1794, %v1800
        %s1803 = sld [smem:[#allocation5 + $0x6a]]
        %v1804 = vstv %s1803
        %v1805 = vmul.f32 %v1804, %v1796
        %v1806 = vmul.f32 %v1804, %v1797
        %1809 = vrot.lane.b32.xlu0 %v1805, 127
        %v1810 = vpop.permute.xlu0 %1809
        %1811 = vrot.lane.b32.xlu0 %v1806, 127
        %v1812 = vpop.permute.xlu0 %1811
        %v1815 = vadd.f32 %v1801, %v1810
        %v1816 = vadd.f32 %v1802, %v1812
        %s1817 = sld [smem:[#allocation5 + $0x6b]]
        %v1818 = vstv %s1817
        %v1819 = vmul.f32 %v1818, %v1796
        %v1820 = vmul.f32 %v1818, %v1797
        %1823 = vrot.lane.b32.xlu0 %v1819, 126
        %v1824 = vpop.permute.xlu0 %1823
        %1825 = vrot.lane.b32.xlu0 %v1820, 126
        %v1826 = vpop.permute.xlu0 %1825
        %v1829 = vadd.f32 %v1815, %v1824
        %v1830 = vadd.f32 %v1816, %v1826
        %v1831 = vmax.f32 %v1829, 0.0
        %v1832 = vmax.f32 %v1830, 0.0
        %1835 = vrot.lane.b32.xlu0 %v1831, 1
        %v1836 = vpop.permute.xlu0 %1835
        %1837 = vrot.lane.b32.xlu0 %v1832, 1
        %v1838 = vpop.permute.xlu0 %1837
        %s1841 = scalar_lea.vmem [#allocation3], 72
        %1842 = vst.msk [vmem:[%s1841 + $0x1] sm:$0xff] %vm480, %v1836
        %1843 = vst.msk [vmem:[%s1841 + $0x9] sm:$0xff] %vm480, %v1838
        %s1844 = sld [smem:[#allocation5 + $0xdc]]
        %v1845 = vstv %s1844
        %s1846 = sld [smem:[#allocation5 + $0x6c]]
        %v1847 = vld [vmem:[#allocation2] sm:$0xff]
        %v1848 = vld [vmem:[#allocation2 + $0x8] sm:$0xff]
        %v1849 = vstv %s1846
        %v1850 = vmul.f32 %v1849, %v1847
        %v1851 = vmul.f32 %v1849, %v1848
        %v1852 = vadd.f32 %v1845, %v1850
        %v1853 = vadd.f32 %v1845, %v1851
        %s1854 = sld [smem:[#allocation5 + $0x6d]]
        %v1855 = vstv %s1854
        %v1856 = vmul.f32 %v1855, %v1847
        %v1857 = vmul.f32 %v1855, %v1848
        %1860 = vrot.lane.b32.xlu0 %v1856, 127
        %v1861 = vpop.permute.xlu0 %1860
        %1862 = vrot.lane.b32.xlu0 %v1857, 127
        %v1863 = vpop.permute.xlu0 %1862
        %v1866 = vadd.f32 %v1852, %v1861
        %v1867 = vadd.f32 %v1853, %v1863
        %s1868 = sld [smem:[#allocation5 + $0x6e]]
        %v1869 = vstv %s1868
        %v1870 = vmul.f32 %v1869, %v1847
        %v1871 = vmul.f32 %v1869, %v1848
        %1874 = vrot.lane.b32.xlu0 %v1870, 126
        %v1875 = vpop.permute.xlu0 %1874
        %1876 = vrot.lane.b32.xlu0 %v1871, 126
        %v1877 = vpop.permute.xlu0 %1876
        %v1880 = vadd.f32 %v1866, %v1875
        %v1881 = vadd.f32 %v1867, %v1877
        %s1882 = sld [smem:[#allocation5 + $0x6f]]
        %v1883 = vld [vmem:[#allocation2 + $0x1] sm:$0xff]
        %v1884 = vld [vmem:[#allocation2 + $0x9] sm:$0xff]
        %v1885 = vstv %s1882
        %v1886 = vmul.f32 %v1885, %v1883
        %v1887 = vmul.f32 %v1885, %v1884
        %v1888 = vadd.f32 %v1880, %v1886
        %v1889 = vadd.f32 %v1881, %v1887
        %s1890 = sld [smem:[#allocation5 + $0x70]]
        %v1891 = vstv %s1890
        %v1892 = vmul.f32 %v1891, %v1883
        %v1893 = vmul.f32 %v1891, %v1884
        %1896 = vrot.lane.b32.xlu0 %v1892, 127
        %v1897 = vpop.permute.xlu0 %1896
        %1898 = vrot.lane.b32.xlu0 %v1893, 127
        %v1899 = vpop.permute.xlu0 %1898
        %v1902 = vadd.f32 %v1888, %v1897
        %v1903 = vadd.f32 %v1889, %v1899
        %s1904 = sld [smem:[#allocation5 + $0x71]]
        %v1905 = vstv %s1904
        %v1906 = vmul.f32 %v1905, %v1883
        %v1907 = vmul.f32 %v1905, %v1884
        %1910 = vrot.lane.b32.xlu0 %v1906, 126
        %v1911 = vpop.permute.xlu0 %1910
        %1912 = vrot.lane.b32.xlu0 %v1907, 126
        %v1913 = vpop.permute.xlu0 %1912
        %v1916 = vadd.f32 %v1902, %v1911
        %v1917 = vadd.f32 %v1903, %v1913
        %s1918 = sld [smem:[#allocation5 + $0x72]]
        %v1919 = vld [vmem:[#allocation2 + $0x2] sm:$0xff]
        %v1920 = vld [vmem:[#allocation2 + $0xa] sm:$0xff]
        %v1921 = vstv %s1918
        %v1922 = vmul.f32 %v1921, %v1919
        %v1923 = vmul.f32 %v1921, %v1920
        %v1924 = vadd.f32 %v1916, %v1922
        %v1925 = vadd.f32 %v1917, %v1923
        %s1926 = sld [smem:[#allocation5 + $0x73]]
        %v1927 = vstv %s1926
        %v1928 = vmul.f32 %v1927, %v1919
        %v1929 = vmul.f32 %v1927, %v1920
        %1932 = vrot.lane.b32.xlu0 %v1928, 127
        %v1933 = vpop.permute.xlu0 %1932
        %1934 = vrot.lane.b32.xlu0 %v1929, 127
        %v1935 = vpop.permute.xlu0 %1934
        %v1938 = vadd.f32 %v1924, %v1933
        %v1939 = vadd.f32 %v1925, %v1935
        %s1940 = sld [smem:[#allocation5 + $0x74]]
        %v1941 = vstv %s1940
        %v1942 = vmul.f32 %v1941, %v1919
        %v1943 = vmul.f32 %v1941, %v1920
        %1946 = vrot.lane.b32.xlu0 %v1942, 126
        %v1947 = vpop.permute.xlu0 %1946
        %1948 = vrot.lane.b32.xlu0 %v1943, 126
        %v1949 = vpop.permute.xlu0 %1948
        %v1952 = vadd.f32 %v1938, %v1947
        %v1953 = vadd.f32 %v1939, %v1949
        %s1954 = sld [smem:[#allocation5 + $0x75]]
        %v1955 = vld [vmem:[%s598] sm:$0xff]
        %v1956 = vld [vmem:[%s598 + $0x8] sm:$0xff]
        %v1957 = vstv %s1954
        %v1958 = vmul.f32 %v1957, %v1955
        %v1959 = vmul.f32 %v1957, %v1956
        %v1960 = vadd.f32 %v1952, %v1958
        %v1961 = vadd.f32 %v1953, %v1959
        %s1962 = sld [smem:[#allocation5 + $0x76]]
        %v1963 = vstv %s1962
        %v1964 = vmul.f32 %v1963, %v1955
        %v1965 = vmul.f32 %v1963, %v1956
        %1968 = vrot.lane.b32.xlu0 %v1964, 127
        %v1969 = vpop.permute.xlu0 %1968
        %1970 = vrot.lane.b32.xlu0 %v1965, 127
        %v1971 = vpop.permute.xlu0 %1970
        %v1974 = vadd.f32 %v1960, %v1969
        %v1975 = vadd.f32 %v1961, %v1971
        %s1976 = sld [smem:[#allocation5 + $0x77]]
        %v1977 = vstv %s1976
        %v1978 = vmul.f32 %v1977, %v1955
        %v1979 = vmul.f32 %v1977, %v1956
        %1982 = vrot.lane.b32.xlu0 %v1978, 126
        %v1983 = vpop.permute.xlu0 %1982
        %1984 = vrot.lane.b32.xlu0 %v1979, 126
        %v1985 = vpop.permute.xlu0 %1984
        %v1988 = vadd.f32 %v1974, %v1983
        %v1989 = vadd.f32 %v1975, %v1985
        %s1990 = sld [smem:[#allocation5 + $0x78]]
        %v1991 = vld [vmem:[%s598 + $0x1] sm:$0xff]
        %v1992 = vld [vmem:[%s598 + $0x9] sm:$0xff]
        %v1993 = vstv %s1990
        %v1994 = vmul.f32 %v1993, %v1991
        %v1995 = vmul.f32 %v1993, %v1992
        %v1996 = vadd.f32 %v1988, %v1994
        %v1997 = vadd.f32 %v1989, %v1995
        %s1998 = sld [smem:[#allocation5 + $0x79]]
        %v1999 = vstv %s1998
        %v2000 = vmul.f32 %v1999, %v1991
        %v2001 = vmul.f32 %v1999, %v1992
        %2004 = vrot.lane.b32.xlu0 %v2000, 127
        %v2005 = vpop.permute.xlu0 %2004
        %2006 = vrot.lane.b32.xlu0 %v2001, 127
        %v2007 = vpop.permute.xlu0 %2006
        %v2010 = vadd.f32 %v1996, %v2005
        %v2011 = vadd.f32 %v1997, %v2007
        %s2012 = sld [smem:[#allocation5 + $0x7a]]
        %v2013 = vstv %s2012
        %v2014 = vmul.f32 %v2013, %v1991
        %v2015 = vmul.f32 %v2013, %v1992
        %2018 = vrot.lane.b32.xlu0 %v2014, 126
        %v2019 = vpop.permute.xlu0 %2018
        %2020 = vrot.lane.b32.xlu0 %v2015, 126
        %v2021 = vpop.permute.xlu0 %2020
        %v2024 = vadd.f32 %v2010, %v2019
        %v2025 = vadd.f32 %v2011, %v2021
        %s2026 = sld [smem:[#allocation5 + $0x7b]]
        %v2027 = vld [vmem:[%s598 + $0x2] sm:$0xff]
        %v2028 = vld [vmem:[%s598 + $0xa] sm:$0xff]
        %v2029 = vstv %s2026
        %v2030 = vmul.f32 %v2029, %v2027
        %v2031 = vmul.f32 %v2029, %v2028
        %v2032 = vadd.f32 %v2024, %v2030
        %v2033 = vadd.f32 %v2025, %v2031
        %s2034 = sld [smem:[#allocation5 + $0x7c]]
        %v2035 = vstv %s2034
        %v2036 = vmul.f32 %v2035, %v2027
        %v2037 = vmul.f32 %v2035, %v2028
        %2040 = vrot.lane.b32.xlu0 %v2036, 127
        %v2041 = vpop.permute.xlu0 %2040
        %2042 = vrot.lane.b32.xlu0 %v2037, 127
        %v2043 = vpop.permute.xlu0 %2042
        %v2046 = vadd.f32 %v2032, %v2041
        %v2047 = vadd.f32 %v2033, %v2043
        %s2048 = sld [smem:[#allocation5 + $0x7d]]
        %v2049 = vstv %s2048
        %v2050 = vmul.f32 %v2049, %v2027
        %v2051 = vmul.f32 %v2049, %v2028
        %2054 = vrot.lane.b32.xlu0 %v2050, 126
        %v2055 = vpop.permute.xlu0 %2054
        %2056 = vrot.lane.b32.xlu0 %v2051, 126
        %v2057 = vpop.permute.xlu0 %2056
        %v2060 = vadd.f32 %v2046, %v2055
        %v2061 = vadd.f32 %v2047, %v2057
        %s2062 = sld [smem:[#allocation5 + $0x7e]]
        %v2063 = vld [vmem:[%s707] sm:$0xff]
        %v2064 = vld [vmem:[%s707 + $0x8] sm:$0xff]
        %v2065 = vstv %s2062
        %v2066 = vmul.f32 %v2065, %v2063
        %v2067 = vmul.f32 %v2065, %v2064
        %v2068 = vadd.f32 %v2060, %v2066
        %v2069 = vadd.f32 %v2061, %v2067
        %s2070 = sld [smem:[#allocation5 + $0x7f]]
        %v2071 = vstv %s2070
        %v2072 = vmul.f32 %v2071, %v2063
        %v2073 = vmul.f32 %v2071, %v2064
        %2076 = vrot.lane.b32.xlu0 %v2072, 127
        %v2077 = vpop.permute.xlu0 %2076
        %2078 = vrot.lane.b32.xlu0 %v2073, 127
        %v2079 = vpop.permute.xlu0 %2078
        %v2082 = vadd.f32 %v2068, %v2077
        %v2083 = vadd.f32 %v2069, %v2079
        %s2084 = sld [smem:[#allocation5 + $0x80]]
        %v2085 = vstv %s2084
        %v2086 = vmul.f32 %v2085, %v2063
        %v2087 = vmul.f32 %v2085, %v2064
        %2090 = vrot.lane.b32.xlu0 %v2086, 126
        %v2091 = vpop.permute.xlu0 %2090
        %2092 = vrot.lane.b32.xlu0 %v2087, 126
        %v2093 = vpop.permute.xlu0 %2092
        %v2096 = vadd.f32 %v2082, %v2091
        %v2097 = vadd.f32 %v2083, %v2093
        %s2098 = sld [smem:[#allocation5 + $0x81]]
        %v2099 = vld [vmem:[%s707 + $0x1] sm:$0xff]
        %v2100 = vld [vmem:[%s707 + $0x9] sm:$0xff]
        %v2101 = vstv %s2098
        %v2102 = vmul.f32 %v2101, %v2099
        %v2103 = vmul.f32 %v2101, %v2100
        %v2104 = vadd.f32 %v2096, %v2102
        %v2105 = vadd.f32 %v2097, %v2103
        %s2106 = sld [smem:[#allocation5 + $0x82]]
        %v2107 = vstv %s2106
        %v2108 = vmul.f32 %v2107, %v2099
        %v2109 = vmul.f32 %v2107, %v2100
        %2112 = vrot.lane.b32.xlu0 %v2108, 127
        %v2113 = vpop.permute.xlu0 %2112
        %2114 = vrot.lane.b32.xlu0 %v2109, 127
        %v2115 = vpop.permute.xlu0 %2114
        %v2118 = vadd.f32 %v2104, %v2113
        %v2119 = vadd.f32 %v2105, %v2115
        %s2120 = sld [smem:[#allocation5 + $0x83]]
        %v2121 = vstv %s2120
        %v2122 = vmul.f32 %v2121, %v2099
        %v2123 = vmul.f32 %v2121, %v2100
        %2126 = vrot.lane.b32.xlu0 %v2122, 126
        %v2127 = vpop.permute.xlu0 %2126
        %2128 = vrot.lane.b32.xlu0 %v2123, 126
        %v2129 = vpop.permute.xlu0 %2128
        %v2132 = vadd.f32 %v2118, %v2127
        %v2133 = vadd.f32 %v2119, %v2129
        %s2134 = sld [smem:[#allocation5 + $0x84]]
        %v2135 = vld [vmem:[%s707 + $0x2] sm:$0xff]
        %v2136 = vld [vmem:[%s707 + $0xa] sm:$0xff]
        %v2137 = vstv %s2134
        %v2138 = vmul.f32 %v2137, %v2135
        %v2139 = vmul.f32 %v2137, %v2136
        %v2140 = vadd.f32 %v2132, %v2138
        %v2141 = vadd.f32 %v2133, %v2139
        %s2142 = sld [smem:[#allocation5 + $0x85]]
        %v2143 = vstv %s2142
        %v2144 = vmul.f32 %v2143, %v2135
        %v2145 = vmul.f32 %v2143, %v2136
        %2148 = vrot.lane.b32.xlu0 %v2144, 127
        %v2149 = vpop.permute.xlu0 %2148
        %2150 = vrot.lane.b32.xlu0 %v2145, 127
        %v2151 = vpop.permute.xlu0 %2150
        %v2154 = vadd.f32 %v2140, %v2149
        %v2155 = vadd.f32 %v2141, %v2151
        %s2156 = sld [smem:[#allocation5 + $0x86]]
        %v2157 = vstv %s2156
        %v2158 = vmul.f32 %v2157, %v2135
        %v2159 = vmul.f32 %v2157, %v2136
        %2162 = vrot.lane.b32.xlu0 %v2158, 126
        %v2163 = vpop.permute.xlu0 %2162
        %2164 = vrot.lane.b32.xlu0 %v2159, 126
        %v2165 = vpop.permute.xlu0 %2164
        %v2168 = vadd.f32 %v2154, %v2163
        %v2169 = vadd.f32 %v2155, %v2165
        %v2170 = vmax.f32 %v2168, 0.0
        %v2171 = vmax.f32 %v2169, 0.0
        %2174 = vrot.lane.b32.xlu0 %v2170, 1
        %v2175 = vpop.permute.xlu0 %2174
        %2176 = vrot.lane.b32.xlu0 %v2171, 1
        %v2177 = vpop.permute.xlu0 %2176
        %s2180 = scalar_lea.vmem [#allocation3], 96
        %2181 = vst.msk [vmem:[%s2180 + $0x1] sm:$0xff] %vm480, %v2175
        %2182 = vst.msk [vmem:[%s2180 + $0x9] sm:$0xff] %vm480, %v2177
        %s2183 = sld [smem:[#allocation5 + $0xdd]]
        %v2184 = vstv %s2183
        %s2185 = sld [smem:[#allocation5 + $0x87]]
        %v2186 = vld [vmem:[#allocation2] sm:$0xff]
        %v2187 = vld [vmem:[#allocation2 + $0x8] sm:$0xff]
        %v2188 = vstv %s2185
        %v2189 = vmul.f32 %v2188, %v2186
        %v2190 = vmul.f32 %v2188, %v2187
        %v2191 = vadd.f32 %v2184, %v2189
        %v2192 = vadd.f32 %v2184, %v2190
        %s2193 = sld [smem:[#allocation5 + $0x88]]
        %v2194 = vstv %s2193
        %v2195 = vmul.f32 %v2194, %v2186
        %v2196 = vmul.f32 %v2194, %v2187
        %2199 = vrot.lane.b32.xlu0 %v2195, 127
        %v2200 = vpop.permute.xlu0 %2199
        %2201 = vrot.lane.b32.xlu0 %v2196, 127
        %v2202 = vpop.permute.xlu0 %2201
        %v2205 = vadd.f32 %v2191, %v2200
        %v2206 = vadd.f32 %v2192, %v2202
        %s2207 = sld [smem:[#allocation5 + $0x89]]
        %v2208 = vstv %s2207
        %v2209 = vmul.f32 %v2208, %v2186
        %v2210 = vmul.f32 %v2208, %v2187
        %2213 = vrot.lane.b32.xlu0 %v2209, 126
        %v2214 = vpop.permute.xlu0 %2213
        %2215 = vrot.lane.b32.xlu0 %v2210, 126
        %v2216 = vpop.permute.xlu0 %2215
        %v2219 = vadd.f32 %v2205, %v2214
        %v2220 = vadd.f32 %v2206, %v2216
        %s2221 = sld [smem:[#allocation5 + $0x8a]]
        %v2222 = vld [vmem:[#allocation2 + $0x1] sm:$0xff]
        %v2223 = vld [vmem:[#allocation2 + $0x9] sm:$0xff]
        %v2224 = vstv %s2221
        %v2225 = vmul.f32 %v2224, %v2222
        %v2226 = vmul.f32 %v2224, %v2223
        %v2227 = vadd.f32 %v2219, %v2225
        %v2228 = vadd.f32 %v2220, %v2226
        %s2229 = sld [smem:[#allocation5 + $0x8b]]
        %v2230 = vstv %s2229
        %v2231 = vmul.f32 %v2230, %v2222
        %v2232 = vmul.f32 %v2230, %v2223
        %2235 = vrot.lane.b32.xlu0 %v2231, 127
        %v2236 = vpop.permute.xlu0 %2235
        %2237 = vrot.lane.b32.xlu0 %v2232, 127
        %v2238 = vpop.permute.xlu0 %2237
        %v2241 = vadd.f32 %v2227, %v2236
        %v2242 = vadd.f32 %v2228, %v2238
        %s2243 = sld [smem:[#allocation5 + $0x8c]]
        %v2244 = vstv %s2243
        %v2245 = vmul.f32 %v2244, %v2222
        %v2246 = vmul.f32 %v2244, %v2223
        %2249 = vrot.lane.b32.xlu0 %v2245, 126
        %v2250 = vpop.permute.xlu0 %2249
        %2251 = vrot.lane.b32.xlu0 %v2246, 126
        %v2252 = vpop.permute.xlu0 %2251
        %v2255 = vadd.f32 %v2241, %v2250
        %v2256 = vadd.f32 %v2242, %v2252
        %s2257 = sld [smem:[#allocation5 + $0x8d]]
        %v2258 = vld [vmem:[#allocation2 + $0x2] sm:$0xff]
        %v2259 = vld [vmem:[#allocation2 + $0xa] sm:$0xff]
        %v2260 = vstv %s2257
        %v2261 = vmul.f32 %v2260, %v2258
        %v2262 = vmul.f32 %v2260, %v2259
        %v2263 = vadd.f32 %v2255, %v2261
        %v2264 = vadd.f32 %v2256, %v2262
        %s2265 = sld [smem:[#allocation5 + $0x8e]]
        %v2266 = vstv %s2265
        %v2267 = vmul.f32 %v2266, %v2258
        %v2268 = vmul.f32 %v2266, %v2259
        %2271 = vrot.lane.b32.xlu0 %v2267, 127
        %v2272 = vpop.permute.xlu0 %2271
        %2273 = vrot.lane.b32.xlu0 %v2268, 127
        %v2274 = vpop.permute.xlu0 %2273
        %v2277 = vadd.f32 %v2263, %v2272
        %v2278 = vadd.f32 %v2264, %v2274
        %s2279 = sld [smem:[#allocation5 + $0x8f]]
        %v2280 = vstv %s2279
        %v2281 = vmul.f32 %v2280, %v2258
        %v2282 = vmul.f32 %v2280, %v2259
        %2285 = vrot.lane.b32.xlu0 %v2281, 126
        %v2286 = vpop.permute.xlu0 %2285
        %2287 = vrot.lane.b32.xlu0 %v2282, 126
        %v2288 = vpop.permute.xlu0 %2287
        %v2291 = vadd.f32 %v2277, %v2286
        %v2292 = vadd.f32 %v2278, %v2288
        %s2293 = sld [smem:[#allocation5 + $0x90]]
        %v2294 = vld [vmem:[%s598] sm:$0xff]
        %v2295 = vld [vmem:[%s598 + $0x8] sm:$0xff]
        %v2296 = vstv %s2293
        %v2297 = vmul.f32 %v2296, %v2294
        %v2298 = vmul.f32 %v2296, %v2295
        %v2299 = vadd.f32 %v2291, %v2297
        %v2300 = vadd.f32 %v2292, %v2298
        %s2301 = sld [smem:[#allocation5 + $0x91]]
        %v2302 = vstv %s2301
        %v2303 = vmul.f32 %v2302, %v2294
        %v2304 = vmul.f32 %v2302, %v2295
        %2307 = vrot.lane.b32.xlu0 %v2303, 127
        %v2308 = vpop.permute.xlu0 %2307
        %2309 = vrot.lane.b32.xlu0 %v2304, 127
        %v2310 = vpop.permute.xlu0 %2309
        %v2313 = vadd.f32 %v2299, %v2308
        %v2314 = vadd.f32 %v2300, %v2310
        %s2315 = sld [smem:[#allocation5 + $0x92]]
        %v2316 = vstv %s2315
        %v2317 = vmul.f32 %v2316, %v2294
        %v2318 = vmul.f32 %v2316, %v2295
        %2321 = vrot.lane.b32.xlu0 %v2317, 126
        %v2322 = vpop.permute.xlu0 %2321
        %2323 = vrot.lane.b32.xlu0 %v2318, 126
        %v2324 = vpop.permute.xlu0 %2323
        %v2327 = vadd.f32 %v2313, %v2322
        %v2328 = vadd.f32 %v2314, %v2324
        %s2329 = sld [smem:[#allocation5 + $0x93]]
        %v2330 = vld [vmem:[%s598 + $0x1] sm:$0xff]
        %v2331 = vld [vmem:[%s598 + $0x9] sm:$0xff]
        %v2332 = vstv %s2329
        %v2333 = vmul.f32 %v2332, %v2330
        %v2334 = vmul.f32 %v2332, %v2331
        %v2335 = vadd.f32 %v2327, %v2333
        %v2336 = vadd.f32 %v2328, %v2334
        %s2337 = sld [smem:[#allocation5 + $0x94]]
        %v2338 = vstv %s2337
        %v2339 = vmul.f32 %v2338, %v2330
        %v2340 = vmul.f32 %v2338, %v2331
        %2343 = vrot.lane.b32.xlu0 %v2339, 127
        %v2344 = vpop.permute.xlu0 %2343
        %2345 = vrot.lane.b32.xlu0 %v2340, 127
        %v2346 = vpop.permute.xlu0 %2345
        %v2349 = vadd.f32 %v2335, %v2344
        %v2350 = vadd.f32 %v2336, %v2346
        %s2351 = sld [smem:[#allocation5 + $0x95]]
        %v2352 = vstv %s2351
        %v2353 = vmul.f32 %v2352, %v2330
        %v2354 = vmul.f32 %v2352, %v2331
        %2357 = vrot.lane.b32.xlu0 %v2353, 126
        %v2358 = vpop.permute.xlu0 %2357
        %2359 = vrot.lane.b32.xlu0 %v2354, 126
        %v2360 = vpop.permute.xlu0 %2359
        %v2363 = vadd.f32 %v2349, %v2358
        %v2364 = vadd.f32 %v2350, %v2360
        %s2365 = sld [smem:[#allocation5 + $0x96]]
        %v2366 = vld [vmem:[%s598 + $0x2] sm:$0xff]
        %v2367 = vld [vmem:[%s598 + $0xa] sm:$0xff]
        %v2368 = vstv %s2365
        %v2369 = vmul.f32 %v2368, %v2366
        %v2370 = vmul.f32 %v2368, %v2367
        %v2371 = vadd.f32 %v2363, %v2369
        %v2372 = vadd.f32 %v2364, %v2370
        %s2373 = sld [smem:[#allocation5 + $0x97]]
        %v2374 = vstv %s2373
        %v2375 = vmul.f32 %v2374, %v2366
        %v2376 = vmul.f32 %v2374, %v2367
        %2379 = vrot.lane.b32.xlu0 %v2375, 127
        %v2380 = vpop.permute.xlu0 %2379
        %2381 = vrot.lane.b32.xlu0 %v2376, 127
        %v2382 = vpop.permute.xlu0 %2381
        %v2385 = vadd.f32 %v2371, %v2380
        %v2386 = vadd.f32 %v2372, %v2382
        %s2387 = sld [smem:[#allocation5 + $0x98]]
        %v2388 = vstv %s2387
        %v2389 = vmul.f32 %v2388, %v2366
        %v2390 = vmul.f32 %v2388, %v2367
        %2393 = vrot.lane.b32.xlu0 %v2389, 126
        %v2394 = vpop.permute.xlu0 %2393
        %2395 = vrot.lane.b32.xlu0 %v2390, 126
        %v2396 = vpop.permute.xlu0 %2395
        %v2399 = vadd.f32 %v2385, %v2394
        %v2400 = vadd.f32 %v2386, %v2396
        %s2401 = sld [smem:[#allocation5 + $0x99]]
        %v2402 = vld [vmem:[%s707] sm:$0xff]
        %v2403 = vld [vmem:[%s707 + $0x8] sm:$0xff]
        %v2404 = vstv %s2401
        %v2405 = vmul.f32 %v2404, %v2402
        %v2406 = vmul.f32 %v2404, %v2403
        %v2407 = vadd.f32 %v2399, %v2405
        %v2408 = vadd.f32 %v2400, %v2406
        %s2409 = sld [smem:[#allocation5 + $0x9a]]
        %v2410 = vstv %s2409
        %v2411 = vmul.f32 %v2410, %v2402
        %v2412 = vmul.f32 %v2410, %v2403
        %2415 = vrot.lane.b32.xlu0 %v2411, 127
        %v2416 = vpop.permute.xlu0 %2415
        %2417 = vrot.lane.b32.xlu0 %v2412, 127
        %v2418 = vpop.permute.xlu0 %2417
        %v2421 = vadd.f32 %v2407, %v2416
        %v2422 = vadd.f32 %v2408, %v2418
        %s2423 = sld [smem:[#allocation5 + $0x9b]]
        %v2424 = vstv %s2423
        %v2425 = vmul.f32 %v2424, %v2402
        %v2426 = vmul.f32 %v2424, %v2403
        %2429 = vrot.lane.b32.xlu0 %v2425, 126
        %v2430 = vpop.permute.xlu0 %2429
        %2431 = vrot.lane.b32.xlu0 %v2426, 126
        %v2432 = vpop.permute.xlu0 %2431
        %v2435 = vadd.f32 %v2421, %v2430
        %v2436 = vadd.f32 %v2422, %v2432
        %s2437 = sld [smem:[#allocation5 + $0x9c]]
        %v2438 = vld [vmem:[%s707 + $0x1] sm:$0xff]
        %v2439 = vld [vmem:[%s707 + $0x9] sm:$0xff]
        %v2440 = vstv %s2437
        %v2441 = vmul.f32 %v2440, %v2438
        %v2442 = vmul.f32 %v2440, %v2439
        %v2443 = vadd.f32 %v2435, %v2441
        %v2444 = vadd.f32 %v2436, %v2442
        %s2445 = sld [smem:[#allocation5 + $0x9d]]
        %v2446 = vstv %s2445
        %v2447 = vmul.f32 %v2446, %v2438
        %v2448 = vmul.f32 %v2446, %v2439
        %2451 = vrot.lane.b32.xlu0 %v2447, 127
        %v2452 = vpop.permute.xlu0 %2451
        %2453 = vrot.lane.b32.xlu0 %v2448, 127
        %v2454 = vpop.permute.xlu0 %2453
        %v2457 = vadd.f32 %v2443, %v2452
        %v2458 = vadd.f32 %v2444, %v2454
        %s2459 = sld [smem:[#allocation5 + $0x9e]]
        %v2460 = vstv %s2459
        %v2461 = vmul.f32 %v2460, %v2438
        %v2462 = vmul.f32 %v2460, %v2439
        %2465 = vrot.lane.b32.xlu0 %v2461, 126
        %v2466 = vpop.permute.xlu0 %2465
        %2467 = vrot.lane.b32.xlu0 %v2462, 126
        %v2468 = vpop.permute.xlu0 %2467
        %v2471 = vadd.f32 %v2457, %v2466
        %v2472 = vadd.f32 %v2458, %v2468
        %s2473 = sld [smem:[#allocation5 + $0x9f]]
        %v2474 = vld [vmem:[%s707 + $0x2] sm:$0xff]
        %v2475 = vld [vmem:[%s707 + $0xa] sm:$0xff]
        %v2476 = vstv %s2473
        %v2477 = vmul.f32 %v2476, %v2474
        %v2478 = vmul.f32 %v2476, %v2475
        %v2479 = vadd.f32 %v2471, %v2477
        %v2480 = vadd.f32 %v2472, %v2478
        %s2481 = sld [smem:[#allocation5 + $0xa0]]
        %v2482 = vstv %s2481
        %v2483 = vmul.f32 %v2482, %v2474
        %v2484 = vmul.f32 %v2482, %v2475
        %2487 = vrot.lane.b32.xlu0 %v2483, 127
        %v2488 = vpop.permute.xlu0 %2487
        %2489 = vrot.lane.b32.xlu0 %v2484, 127
        %v2490 = vpop.permute.xlu0 %2489
        %v2493 = vadd.f32 %v2479, %v2488
        %v2494 = vadd.f32 %v2480, %v2490
        %s2495 = sld [smem:[#allocation5 + $0xa1]]
        %v2496 = vstv %s2495
        %v2497 = vmul.f32 %v2496, %v2474
        %v2498 = vmul.f32 %v2496, %v2475
        %2501 = vrot.lane.b32.xlu0 %v2497, 126
        %v2502 = vpop.permute.xlu0 %2501
        %2503 = vrot.lane.b32.xlu0 %v2498, 126
        %v2504 = vpop.permute.xlu0 %2503
        %v2507 = vadd.f32 %v2493, %v2502
        %v2508 = vadd.f32 %v2494, %v2504
        %v2509 = vmax.f32 %v2507, 0.0
        %v2510 = vmax.f32 %v2508, 0.0
        %2513 = vrot.lane.b32.xlu0 %v2509, 1
        %v2514 = vpop.permute.xlu0 %2513
        %2515 = vrot.lane.b32.xlu0 %v2510, 1
        %v2516 = vpop.permute.xlu0 %2515
        %s2519 = scalar_lea.vmem [#allocation3], 120
        %2520 = vst.msk [vmem:[%s2519 + $0x1] sm:$0xff] %vm480, %v2514
        %2521 = vst.msk [vmem:[%s2519 + $0x9] sm:$0xff] %vm480, %v2516
        %s2522 = sld [smem:[#allocation5 + $0xde]]
        %v2523 = vstv %s2522
        %s2524 = sld [smem:[#allocation5 + $0xa2]]
        %v2525 = vld [vmem:[#allocation2] sm:$0xff]
        %v2526 = vld [vmem:[#allocation2 + $0x8] sm:$0xff]
        %v2527 = vstv %s2524
        %v2528 = vmul.f32 %v2527, %v2525
        %v2529 = vmul.f32 %v2527, %v2526
        %v2530 = vadd.f32 %v2523, %v2528
        %v2531 = vadd.f32 %v2523, %v2529
        %s2532 = sld [smem:[#allocation5 + $0xa3]]
        %v2533 = vstv %s2532
        %v2534 = vmul.f32 %v2533, %v2525
        %v2535 = vmul.f32 %v2533, %v2526
        %2538 = vrot.lane.b32.xlu0 %v2534, 127
        %v2539 = vpop.permute.xlu0 %2538
        %2540 = vrot.lane.b32.xlu0 %v2535, 127
        %v2541 = vpop.permute.xlu0 %2540
        %v2544 = vadd.f32 %v2530, %v2539
        %v2545 = vadd.f32 %v2531, %v2541
        %s2546 = sld [smem:[#allocation5 + $0xa4]]
        %v2547 = vstv %s2546
        %v2548 = vmul.f32 %v2547, %v2525
        %v2549 = vmul.f32 %v2547, %v2526
        %2552 = vrot.lane.b32.xlu0 %v2548, 126
        %v2553 = vpop.permute.xlu0 %2552
        %2554 = vrot.lane.b32.xlu0 %v2549, 126
        %v2555 = vpop.permute.xlu0 %2554
        %v2558 = vadd.f32 %v2544, %v2553
        %v2559 = vadd.f32 %v2545, %v2555
        %s2560 = sld [smem:[#allocation5 + $0xa5]]
        %v2561 = vld [vmem:[#allocation2 + $0x1] sm:$0xff]
        %v2562 = vld [vmem:[#allocation2 + $0x9] sm:$0xff]
        %v2563 = vstv %s2560
        %v2564 = vmul.f32 %v2563, %v2561
        %v2565 = vmul.f32 %v2563, %v2562
        %v2566 = vadd.f32 %v2558, %v2564
        %v2567 = vadd.f32 %v2559, %v2565
        %s2568 = sld [smem:[#allocation5 + $0xa6]]
        %v2569 = vstv %s2568
        %v2570 = vmul.f32 %v2569, %v2561
        %v2571 = vmul.f32 %v2569, %v2562
        %2574 = vrot.lane.b32.xlu0 %v2570, 127
        %v2575 = vpop.permute.xlu0 %2574
        %2576 = vrot.lane.b32.xlu0 %v2571, 127
        %v2577 = vpop.permute.xlu0 %2576
        %v2580 = vadd.f32 %v2566, %v2575
        %v2581 = vadd.f32 %v2567, %v2577
        %s2582 = sld [smem:[#allocation5 + $0xa7]]
        %v2583 = vstv %s2582
        %v2584 = vmul.f32 %v2583, %v2561
        %v2585 = vmul.f32 %v2583, %v2562
        %2588 = vrot.lane.b32.xlu0 %v2584, 126
        %v2589 = vpop.permute.xlu0 %2588
        %2590 = vrot.lane.b32.xlu0 %v2585, 126
        %v2591 = vpop.permute.xlu0 %2590
        %v2594 = vadd.f32 %v2580, %v2589
        %v2595 = vadd.f32 %v2581, %v2591
        %s2596 = sld [smem:[#allocation5 + $0xa8]]
        %v2597 = vld [vmem:[#allocation2 + $0x2] sm:$0xff]
        %v2598 = vld [vmem:[#allocation2 + $0xa] sm:$0xff]
        %v2599 = vstv %s2596
        %v2600 = vmul.f32 %v2599, %v2597
        %v2601 = vmul.f32 %v2599, %v2598
        %v2602 = vadd.f32 %v2594, %v2600
        %v2603 = vadd.f32 %v2595, %v2601
        %s2604 = sld [smem:[#allocation5 + $0xa9]]
        %v2605 = vstv %s2604
        %v2606 = vmul.f32 %v2605, %v2597
        %v2607 = vmul.f32 %v2605, %v2598
        %2610 = vrot.lane.b32.xlu0 %v2606, 127
        %v2611 = vpop.permute.xlu0 %2610
        %2612 = vrot.lane.b32.xlu0 %v2607, 127
        %v2613 = vpop.permute.xlu0 %2612
        %v2616 = vadd.f32 %v2602, %v2611
        %v2617 = vadd.f32 %v2603, %v2613
        %s2618 = sld [smem:[#allocation5 + $0xaa]]
        %v2619 = vstv %s2618
        %v2620 = vmul.f32 %v2619, %v2597
        %v2621 = vmul.f32 %v2619, %v2598
        %2624 = vrot.lane.b32.xlu0 %v2620, 126
        %v2625 = vpop.permute.xlu0 %2624
        %2626 = vrot.lane.b32.xlu0 %v2621, 126
        %v2627 = vpop.permute.xlu0 %2626
        %v2630 = vadd.f32 %v2616, %v2625
        %v2631 = vadd.f32 %v2617, %v2627
        %s2632 = sld [smem:[#allocation5 + $0xab]]
        %v2633 = vld [vmem:[%s598] sm:$0xff]
        %v2634 = vld [vmem:[%s598 + $0x8] sm:$0xff]
        %v2635 = vstv %s2632
        %v2636 = vmul.f32 %v2635, %v2633
        %v2637 = vmul.f32 %v2635, %v2634
        %v2638 = vadd.f32 %v2630, %v2636
        %v2639 = vadd.f32 %v2631, %v2637
        %s2640 = sld [smem:[#allocation5 + $0xac]]
        %v2641 = vstv %s2640
        %v2642 = vmul.f32 %v2641, %v2633
        %v2643 = vmul.f32 %v2641, %v2634
        %2646 = vrot.lane.b32.xlu0 %v2642, 127
        %v2647 = vpop.permute.xlu0 %2646
        %2648 = vrot.lane.b32.xlu0 %v2643, 127
        %v2649 = vpop.permute.xlu0 %2648
        %v2652 = vadd.f32 %v2638, %v2647
        %v2653 = vadd.f32 %v2639, %v2649
        %s2654 = sld [smem:[#allocation5 + $0xad]]
        %v2655 = vstv %s2654
        %v2656 = vmul.f32 %v2655, %v2633
        %v2657 = vmul.f32 %v2655, %v2634
        %2660 = vrot.lane.b32.xlu0 %v2656, 126
        %v2661 = vpop.permute.xlu0 %2660
        %2662 = vrot.lane.b32.xlu0 %v2657, 126
        %v2663 = vpop.permute.xlu0 %2662
        %v2666 = vadd.f32 %v2652, %v2661
        %v2667 = vadd.f32 %v2653, %v2663
        %s2668 = sld [smem:[#allocation5 + $0xae]]
        %v2669 = vld [vmem:[%s598 + $0x1] sm:$0xff]
        %v2670 = vld [vmem:[%s598 + $0x9] sm:$0xff]
        %v2671 = vstv %s2668
        %v2672 = vmul.f32 %v2671, %v2669
        %v2673 = vmul.f32 %v2671, %v2670
        %v2674 = vadd.f32 %v2666, %v2672
        %v2675 = vadd.f32 %v2667, %v2673
        %s2676 = sld [smem:[#allocation5 + $0xaf]]
        %v2677 = vstv %s2676
        %v2678 = vmul.f32 %v2677, %v2669
        %v2679 = vmul.f32 %v2677, %v2670
        %2682 = vrot.lane.b32.xlu0 %v2678, 127
        %v2683 = vpop.permute.xlu0 %2682
        %2684 = vrot.lane.b32.xlu0 %v2679, 127
        %v2685 = vpop.permute.xlu0 %2684
        %v2688 = vadd.f32 %v2674, %v2683
        %v2689 = vadd.f32 %v2675, %v2685
        %s2690 = sld [smem:[#allocation5 + $0xb0]]
        %v2691 = vstv %s2690
        %v2692 = vmul.f32 %v2691, %v2669
        %v2693 = vmul.f32 %v2691, %v2670
        %2696 = vrot.lane.b32.xlu0 %v2692, 126
        %v2697 = vpop.permute.xlu0 %2696
        %2698 = vrot.lane.b32.xlu0 %v2693, 126
        %v2699 = vpop.permute.xlu0 %2698
        %v2702 = vadd.f32 %v2688, %v2697
        %v2703 = vadd.f32 %v2689, %v2699
        %s2704 = sld [smem:[#allocation5 + $0xb1]]
        %v2705 = vld [vmem:[%s598 + $0x2] sm:$0xff]
        %v2706 = vld [vmem:[%s598 + $0xa] sm:$0xff]
        %v2707 = vstv %s2704
        %v2708 = vmul.f32 %v2707, %v2705
        %v2709 = vmul.f32 %v2707, %v2706
        %v2710 = vadd.f32 %v2702, %v2708
        %v2711 = vadd.f32 %v2703, %v2709
        %s2712 = sld [smem:[#allocation5 + $0xb2]]
        %v2713 = vstv %s2712
        %v2714 = vmul.f32 %v2713, %v2705
        %v2715 = vmul.f32 %v2713, %v2706
        %2718 = vrot.lane.b32.xlu0 %v2714, 127
        %v2719 = vpop.permute.xlu0 %2718
        %2720 = vrot.lane.b32.xlu0 %v2715, 127
        %v2721 = vpop.permute.xlu0 %2720
        %v2724 = vadd.f32 %v2710, %v2719
        %v2725 = vadd.f32 %v2711, %v2721
        %s2726 = sld [smem:[#allocation5 + $0xb3]]
        %v2727 = vstv %s2726
        %v2728 = vmul.f32 %v2727, %v2705
        %v2729 = vmul.f32 %v2727, %v2706
        %2732 = vrot.lane.b32.xlu0 %v2728, 126
        %v2733 = vpop.permute.xlu0 %2732
        %2734 = vrot.lane.b32.xlu0 %v2729, 126
        %v2735 = vpop.permute.xlu0 %2734
        %v2738 = vadd.f32 %v2724, %v2733
        %v2739 = vadd.f32 %v2725, %v2735
        %s2740 = sld [smem:[#allocation5 + $0xb4]]
        %v2741 = vld [vmem:[%s707] sm:$0xff]
        %v2742 = vld [vmem:[%s707 + $0x8] sm:$0xff]
        %v2743 = vstv %s2740
        %v2744 = vmul.f32 %v2743, %v2741
        %v2745 = vmul.f32 %v2743, %v2742
        %v2746 = vadd.f32 %v2738, %v2744
        %v2747 = vadd.f32 %v2739, %v2745
        %s2748 = sld [smem:[#allocation5 + $0xb5]]
        %v2749 = vstv %s2748
        %v2750 = vmul.f32 %v2749, %v2741
        %v2751 = vmul.f32 %v2749, %v2742
        %2754 = vrot.lane.b32.xlu0 %v2750, 127
        %v2755 = vpop.permute.xlu0 %2754
        %2756 = vrot.lane.b32.xlu0 %v2751, 127
        %v2757 = vpop.permute.xlu0 %2756
        %v2760 = vadd.f32 %v2746, %v2755
        %v2761 = vadd.f32 %v2747, %v2757
        %s2762 = sld [smem:[#allocation5 + $0xb6]]
        %v2763 = vstv %s2762
        %v2764 = vmul.f32 %v2763, %v2741
        %v2765 = vmul.f32 %v2763, %v2742
        %2768 = vrot.lane.b32.xlu0 %v2764, 126
        %v2769 = vpop.permute.xlu0 %2768
        %2770 = vrot.lane.b32.xlu0 %v2765, 126
        %v2771 = vpop.permute.xlu0 %2770
        %v2774 = vadd.f32 %v2760, %v2769
        %v2775 = vadd.f32 %v2761, %v2771
        %s2776 = sld [smem:[#allocation5 + $0xb7]]
        %v2777 = vld [vmem:[%s707 + $0x1] sm:$0xff]
        %v2778 = vld [vmem:[%s707 + $0x9] sm:$0xff]
        %v2779 = vstv %s2776
        %v2780 = vmul.f32 %v2779, %v2777
        %v2781 = vmul.f32 %v2779, %v2778
        %v2782 = vadd.f32 %v2774, %v2780
        %v2783 = vadd.f32 %v2775, %v2781
        %s2784 = sld [smem:[#allocation5 + $0xb8]]
        %v2785 = vstv %s2784
        %v2786 = vmul.f32 %v2785, %v2777
        %v2787 = vmul.f32 %v2785, %v2778
        %2790 = vrot.lane.b32.xlu0 %v2786, 127
        %v2791 = vpop.permute.xlu0 %2790
        %2792 = vrot.lane.b32.xlu0 %v2787, 127
        %v2793 = vpop.permute.xlu0 %2792
        %v2796 = vadd.f32 %v2782, %v2791
        %v2797 = vadd.f32 %v2783, %v2793
        %s2798 = sld [smem:[#allocation5 + $0xb9]]
        %v2799 = vstv %s2798
        %v2800 = vmul.f32 %v2799, %v2777
        %v2801 = vmul.f32 %v2799, %v2778
        %2804 = vrot.lane.b32.xlu0 %v2800, 126
        %v2805 = vpop.permute.xlu0 %2804
        %2806 = vrot.lane.b32.xlu0 %v2801, 126
        %v2807 = vpop.permute.xlu0 %2806
        %v2810 = vadd.f32 %v2796, %v2805
        %v2811 = vadd.f32 %v2797, %v2807
        %s2812 = sld [smem:[#allocation5 + $0xba]]
        %v2813 = vld [vmem:[%s707 + $0x2] sm:$0xff]
        %v2814 = vld [vmem:[%s707 + $0xa] sm:$0xff]
        %v2815 = vstv %s2812
        %v2816 = vmul.f32 %v2815, %v2813
        %v2817 = vmul.f32 %v2815, %v2814
        %v2818 = vadd.f32 %v2810, %v2816
        %v2819 = vadd.f32 %v2811, %v2817
        %s2820 = sld [smem:[#allocation5 + $0xbb]]
        %v2821 = vstv %s2820
        %v2822 = vmul.f32 %v2821, %v2813
        %v2823 = vmul.f32 %v2821, %v2814
        %2826 = vrot.lane.b32.xlu0 %v2822, 127
        %v2827 = vpop.permute.xlu0 %2826
        %2828 = vrot.lane.b32.xlu0 %v2823, 127
        %v2829 = vpop.permute.xlu0 %2828
        %v2832 = vadd.f32 %v2818, %v2827
        %v2833 = vadd.f32 %v2819, %v2829
        %s2834 = sld [smem:[#allocation5 + $0xbc]]
        %v2835 = vstv %s2834
        %v2836 = vmul.f32 %v2835, %v2813
        %v2837 = vmul.f32 %v2835, %v2814
        %2840 = vrot.lane.b32.xlu0 %v2836, 126
        %v2841 = vpop.permute.xlu0 %2840
        %2842 = vrot.lane.b32.xlu0 %v2837, 126
        %v2843 = vpop.permute.xlu0 %2842
        %v2846 = vadd.f32 %v2832, %v2841
        %v2847 = vadd.f32 %v2833, %v2843
        %v2848 = vmax.f32 %v2846, 0.0
        %v2849 = vmax.f32 %v2847, 0.0
        %2852 = vrot.lane.b32.xlu0 %v2848, 1
        %v2853 = vpop.permute.xlu0 %2852
        %2854 = vrot.lane.b32.xlu0 %v2849, 1
        %v2855 = vpop.permute.xlu0 %2854
        %s2858 = scalar_lea.vmem [#allocation3], 144
        %2859 = vst.msk [vmem:[%s2858 + $0x1] sm:$0xff] %vm480, %v2853
        %2860 = vst.msk [vmem:[%s2858 + $0x9] sm:$0xff] %vm480, %v2855
        %s2861 = sld [smem:[#allocation5 + $0xdf]]
        %v2862 = vstv %s2861
        %s2863 = sld [smem:[#allocation5 + $0xbd]]
        %v2864 = vld [vmem:[#allocation2] sm:$0xff]
        %v2865 = vld [vmem:[#allocation2 + $0x8] sm:$0xff]
        %v2866 = vstv %s2863
        %v2867 = vmul.f32 %v2866, %v2864
        %v2868 = vmul.f32 %v2866, %v2865
        %v2869 = vadd.f32 %v2862, %v2867
        %v2870 = vadd.f32 %v2862, %v2868
        %s2871 = sld [smem:[#allocation5 + $0xbe]]
        %v2872 = vstv %s2871
        %v2873 = vmul.f32 %v2872, %v2864
        %v2874 = vmul.f32 %v2872, %v2865
        %2877 = vrot.lane.b32.xlu0 %v2873, 127
        %v2878 = vpop.permute.xlu0 %2877
        %2879 = vrot.lane.b32.xlu0 %v2874, 127
        %v2880 = vpop.permute.xlu0 %2879
        %v2883 = vadd.f32 %v2869, %v2878
        %v2884 = vadd.f32 %v2870, %v2880
        %s2885 = sld [smem:[#allocation5 + $0xbf]]
        %v2886 = vstv %s2885
        %v2887 = vmul.f32 %v2886, %v2864
        %v2888 = vmul.f32 %v2886, %v2865
        %2891 = vrot.lane.b32.xlu0 %v2887, 126
        %v2892 = vpop.permute.xlu0 %2891
        %2893 = vrot.lane.b32.xlu0 %v2888, 126
        %v2894 = vpop.permute.xlu0 %2893
        %v2897 = vadd.f32 %v2883, %v2892
        %v2898 = vadd.f32 %v2884, %v2894
        %s2899 = sld [smem:[#allocation5 + $0xc0]]
        %v2900 = vld [vmem:[#allocation2 + $0x1] sm:$0xff]
        %v2901 = vld [vmem:[#allocation2 + $0x9] sm:$0xff]
        %v2902 = vstv %s2899
        %v2903 = vmul.f32 %v2902, %v2900
        %v2904 = vmul.f32 %v2902, %v2901
        %v2905 = vadd.f32 %v2897, %v2903
        %v2906 = vadd.f32 %v2898, %v2904
        %s2907 = sld [smem:[#allocation5 + $0xc1]]
        %v2908 = vstv %s2907
        %v2909 = vmul.f32 %v2908, %v2900
        %v2910 = vmul.f32 %v2908, %v2901
        %2913 = vrot.lane.b32.xlu0 %v2909, 127
        %v2914 = vpop.permute.xlu0 %2913
        %2915 = vrot.lane.b32.xlu0 %v2910, 127
        %v2916 = vpop.permute.xlu0 %2915
        %v2919 = vadd.f32 %v2905, %v2914
        %v2920 = vadd.f32 %v2906, %v2916
        %s2921 = sld [smem:[#allocation5 + $0xc2]]
        %v2922 = vstv %s2921
        %v2923 = vmul.f32 %v2922, %v2900
        %v2924 = vmul.f32 %v2922, %v2901
        %2927 = vrot.lane.b32.xlu0 %v2923, 126
        %v2928 = vpop.permute.xlu0 %2927
        %2929 = vrot.lane.b32.xlu0 %v2924, 126
        %v2930 = vpop.permute.xlu0 %2929
        %v2933 = vadd.f32 %v2919, %v2928
        %v2934 = vadd.f32 %v2920, %v2930
        %s2935 = sld [smem:[#allocation5 + $0xc3]]
        %v2936 = vld [vmem:[#allocation2 + $0x2] sm:$0xff]
        %v2937 = vld [vmem:[#allocation2 + $0xa] sm:$0xff]
        %v2938 = vstv %s2935
        %v2939 = vmul.f32 %v2938, %v2936
        %v2940 = vmul.f32 %v2938, %v2937
        %v2941 = vadd.f32 %v2933, %v2939
        %v2942 = vadd.f32 %v2934, %v2940
        %s2943 = sld [smem:[#allocation5 + $0xc4]]
        %v2944 = vstv %s2943
        %v2945 = vmul.f32 %v2944, %v2936
        %v2946 = vmul.f32 %v2944, %v2937
        %2949 = vrot.lane.b32.xlu0 %v2945, 127
        %v2950 = vpop.permute.xlu0 %2949
        %2951 = vrot.lane.b32.xlu0 %v2946, 127
        %v2952 = vpop.permute.xlu0 %2951
        %v2955 = vadd.f32 %v2941, %v2950
        %v2956 = vadd.f32 %v2942, %v2952
        %s2957 = sld [smem:[#allocation5 + $0xc5]]
        %v2958 = vstv %s2957
        %v2959 = vmul.f32 %v2958, %v2936
        %v2960 = vmul.f32 %v2958, %v2937
        %2963 = vrot.lane.b32.xlu0 %v2959, 126
        %v2964 = vpop.permute.xlu0 %2963
        %2965 = vrot.lane.b32.xlu0 %v2960, 126
        %v2966 = vpop.permute.xlu0 %2965
        %v2969 = vadd.f32 %v2955, %v2964
        %v2970 = vadd.f32 %v2956, %v2966
        %s2971 = sld [smem:[#allocation5 + $0xc6]]
        %v2972 = vld [vmem:[%s598] sm:$0xff]
        %v2973 = vld [vmem:[%s598 + $0x8] sm:$0xff]
        %v2974 = vstv %s2971
        %v2975 = vmul.f32 %v2974, %v2972
        %v2976 = vmul.f32 %v2974, %v2973
        %v2977 = vadd.f32 %v2969, %v2975
        %v2978 = vadd.f32 %v2970, %v2976
        %s2979 = sld [smem:[#allocation5 + $0xc7]]
        %v2980 = vstv %s2979
        %v2981 = vmul.f32 %v2980, %v2972
        %v2982 = vmul.f32 %v2980, %v2973
        %2985 = vrot.lane.b32.xlu0 %v2981, 127
        %v2986 = vpop.permute.xlu0 %2985
        %2987 = vrot.lane.b32.xlu0 %v2982, 127
        %v2988 = vpop.permute.xlu0 %2987
        %v2991 = vadd.f32 %v2977, %v2986
        %v2992 = vadd.f32 %v2978, %v2988
        %s2993 = sld [smem:[#allocation5 + $0xc8]]
        %v2994 = vstv %s2993
        %v2995 = vmul.f32 %v2994, %v2972
        %v2996 = vmul.f32 %v2994, %v2973
        %2999 = vrot.lane.b32.xlu0 %v2995, 126
        %v3000 = vpop.permute.xlu0 %2999
        %3001 = vrot.lane.b32.xlu0 %v2996, 126
        %v3002 = vpop.permute.xlu0 %3001
        %v3005 = vadd.f32 %v2991, %v3000
        %v3006 = vadd.f32 %v2992, %v3002
        %s3007 = sld [smem:[#allocation5 + $0xc9]]
        %v3008 = vld [vmem:[%s598 + $0x1] sm:$0xff]
        %v3009 = vld [vmem:[%s598 + $0x9] sm:$0xff]
        %v3010 = vstv %s3007
        %v3011 = vmul.f32 %v3010, %v3008
        %v3012 = vmul.f32 %v3010, %v3009
        %v3013 = vadd.f32 %v3005, %v3011
        %v3014 = vadd.f32 %v3006, %v3012
        %s3015 = sld [smem:[#allocation5 + $0xca]]
        %v3016 = vstv %s3015
        %v3017 = vmul.f32 %v3016, %v3008
        %v3018 = vmul.f32 %v3016, %v3009
        %3021 = vrot.lane.b32.xlu0 %v3017, 127
        %v3022 = vpop.permute.xlu0 %3021
        %3023 = vrot.lane.b32.xlu0 %v3018, 127
        %v3024 = vpop.permute.xlu0 %3023
        %v3027 = vadd.f32 %v3013, %v3022
        %v3028 = vadd.f32 %v3014, %v3024
        %s3029 = sld [smem:[#allocation5 + $0xcb]]
        %v3030 = vstv %s3029
        %v3031 = vmul.f32 %v3030, %v3008
        %v3032 = vmul.f32 %v3030, %v3009
        %3035 = vrot.lane.b32.xlu0 %v3031, 126
        %v3036 = vpop.permute.xlu0 %3035
        %3037 = vrot.lane.b32.xlu0 %v3032, 126
        %v3038 = vpop.permute.xlu0 %3037
        %v3041 = vadd.f32 %v3027, %v3036
        %v3042 = vadd.f32 %v3028, %v3038
        %s3043 = sld [smem:[#allocation5 + $0xcc]]
        %v3044 = vld [vmem:[%s598 + $0x2] sm:$0xff]
        %v3045 = vld [vmem:[%s598 + $0xa] sm:$0xff]
        %v3046 = vstv %s3043
        %v3047 = vmul.f32 %v3046, %v3044
        %v3048 = vmul.f32 %v3046, %v3045
        %v3049 = vadd.f32 %v3041, %v3047
        %v3050 = vadd.f32 %v3042, %v3048
        %s3051 = sld [smem:[#allocation5 + $0xcd]]
        %v3052 = vstv %s3051
        %v3053 = vmul.f32 %v3052, %v3044
        %v3054 = vmul.f32 %v3052, %v3045
        %3057 = vrot.lane.b32.xlu0 %v3053, 127
        %v3058 = vpop.permute.xlu0 %3057
        %3059 = vrot.lane.b32.xlu0 %v3054, 127
        %v3060 = vpop.permute.xlu0 %3059
        %v3063 = vadd.f32 %v3049, %v3058
        %v3064 = vadd.f32 %v3050, %v3060
        %s3065 = sld [smem:[#allocation5 + $0xce]]
        %v3066 = vstv %s3065
        %v3067 = vmul.f32 %v3066, %v3044
        %v3068 = vmul.f32 %v3066, %v3045
        %3071 = vrot.lane.b32.xlu0 %v3067, 126
        %v3072 = vpop.permute.xlu0 %3071
        %3073 = vrot.lane.b32.xlu0 %v3068, 126
        %v3074 = vpop.permute.xlu0 %3073
        %v3077 = vadd.f32 %v3063, %v3072
        %v3078 = vadd.f32 %v3064, %v3074
        %s3079 = sld [smem:[#allocation5 + $0xcf]]
        %v3080 = vld [vmem:[%s707] sm:$0xff]
        %v3081 = vld [vmem:[%s707 + $0x8] sm:$0xff]
        %v3082 = vstv %s3079
        %v3083 = vmul.f32 %v3082, %v3080
        %v3084 = vmul.f32 %v3082, %v3081
        %v3085 = vadd.f32 %v3077, %v3083
        %v3086 = vadd.f32 %v3078, %v3084
        %s3087 = sld [smem:[#allocation5 + $0xd0]]
        %v3088 = vstv %s3087
        %v3089 = vmul.f32 %v3088, %v3080
        %v3090 = vmul.f32 %v3088, %v3081
        %3093 = vrot.lane.b32.xlu0 %v3089, 127
        %v3094 = vpop.permute.xlu0 %3093
        %3095 = vrot.lane.b32.xlu0 %v3090, 127
        %v3096 = vpop.permute.xlu0 %3095
        %v3099 = vadd.f32 %v3085, %v3094
        %v3100 = vadd.f32 %v3086, %v3096
        %s3101 = sld [smem:[#allocation5 + $0xd1]]
        %v3102 = vstv %s3101
        %v3103 = vmul.f32 %v3102, %v3080
        %v3104 = vmul.f32 %v3102, %v3081
        %3107 = vrot.lane.b32.xlu0 %v3103, 126
        %v3108 = vpop.permute.xlu0 %3107
        %3109 = vrot.lane.b32.xlu0 %v3104, 126
        %v3110 = vpop.permute.xlu0 %3109
        %v3113 = vadd.f32 %v3099, %v3108
        %v3114 = vadd.f32 %v3100, %v3110
        %s3115 = sld [smem:[#allocation5 + $0xd2]]
        %v3116 = vld [vmem:[%s707 + $0x1] sm:$0xff]
        %v3117 = vld [vmem:[%s707 + $0x9] sm:$0xff]
        %v3118 = vstv %s3115
        %v3119 = vmul.f32 %v3118, %v3116
        %v3120 = vmul.f32 %v3118, %v3117
        %v3121 = vadd.f32 %v3113, %v3119
        %v3122 = vadd.f32 %v3114, %v3120
        %s3123 = sld [smem:[#allocation5 + $0xd3]]
        %v3124 = vstv %s3123
        %v3125 = vmul.f32 %v3124, %v3116
        %v3126 = vmul.f32 %v3124, %v3117
        %3129 = vrot.lane.b32.xlu0 %v3125, 127
        %v3130 = vpop.permute.xlu0 %3129
        %3131 = vrot.lane.b32.xlu0 %v3126, 127
        %v3132 = vpop.permute.xlu0 %3131
        %v3135 = vadd.f32 %v3121, %v3130
        %v3136 = vadd.f32 %v3122, %v3132
        %s3137 = sld [smem:[#allocation5 + $0xd4]]
        %v3138 = vstv %s3137
        %v3139 = vmul.f32 %v3138, %v3116
        %v3140 = vmul.f32 %v3138, %v3117
        %3143 = vrot.lane.b32.xlu0 %v3139, 126
        %v3144 = vpop.permute.xlu0 %3143
        %3145 = vrot.lane.b32.xlu0 %v3140, 126
        %v3146 = vpop.permute.xlu0 %3145
        %v3149 = vadd.f32 %v3135, %v3144
        %v3150 = vadd.f32 %v3136, %v3146
        %s3151 = sld [smem:[#allocation5 + $0xd5]]
        %v3152 = vld [vmem:[%s707 + $0x2] sm:$0xff]
        %v3153 = vld [vmem:[%s707 + $0xa] sm:$0xff]
        %v3154 = vstv %s3151
        %v3155 = vmul.f32 %v3154, %v3152
        %v3156 = vmul.f32 %v3154, %v3153
        %v3157 = vadd.f32 %v3149, %v3155
        %v3158 = vadd.f32 %v3150, %v3156
        %s3159 = sld [smem:[#allocation5 + $0xd6]]
        %v3160 = vstv %s3159
        %v3161 = vmul.f32 %v3160, %v3152
        %v3162 = vmul.f32 %v3160, %v3153
        %3165 = vrot.lane.b32.xlu0 %v3161, 127
        %v3166 = vpop.permute.xlu0 %3165
        %3167 = vrot.lane.b32.xlu0 %v3162, 127
        %v3168 = vpop.permute.xlu0 %3167
        %v3171 = vadd.f32 %v3157, %v3166
        %v3172 = vadd.f32 %v3158, %v3168
        %s3173 = sld [smem:[#allocation5 + $0xd7]]
        %v3174 = vstv %s3173
        %v3175 = vmul.f32 %v3174, %v3152
        %v3176 = vmul.f32 %v3174, %v3153
        %3179 = vrot.lane.b32.xlu0 %v3175, 126
        %v3180 = vpop.permute.xlu0 %3179
        %3181 = vrot.lane.b32.xlu0 %v3176, 126
        %v3182 = vpop.permute.xlu0 %3181
        %v3185 = vadd.f32 %v3171, %v3180
        %v3186 = vadd.f32 %v3172, %v3182
        %v3187 = vmax.f32 %v3185, 0.0
        %v3188 = vmax.f32 %v3186, 0.0
        %3191 = vrot.lane.b32.xlu0 %v3187, 1
        %v3192 = vpop.permute.xlu0 %3191
        %3193 = vrot.lane.b32.xlu0 %v3188, 1
        %v3194 = vpop.permute.xlu0 %3193
        %s3197 = scalar_lea.vmem [#allocation3], 168
        %3198 = vst.msk [vmem:[%s3197 + $0x1] sm:$0xff] %vm480, %v3192
        %3199 = vst.msk [vmem:[%s3197 + $0x9] sm:$0xff] %vm480, %v3194
        %s3200 = sld [smem:[#allocation5 + $0x128]]
        %v3201 = vstv %s3200
        %s3202 = sld [smem:[#allocation5 + $0xe0]]
        %v3203 = vld [vmem:[#allocation3] sm:$0xff]
        %v3204 = vld [vmem:[#allocation3 + $0x8] sm:$0xff]
        %v3205 = vstv %s3202
        %v3206 = vmul.f32 %v3205, %v3203
        %v3207 = vmul.f32 %v3205, %v3204
        %v3208 = vadd.f32 %v3201, %v3206
        %v3209 = vadd.f32 %v3201, %v3207
        %s3210 = sld [smem:[#allocation5 + $0xe1]]
        %v3211 = vstv %s3210
        %v3212 = vmul.f32 %v3211, %v3203
        %v3213 = vmul.f32 %v3211, %v3204
        %3216 = vrot.lane.b32.xlu0 %v3212, 127
        %v3217 = vpop.permute.xlu0 %3216
        %3218 = vrot.lane.b32.xlu0 %v3213, 127
        %v3219 = vpop.permute.xlu0 %3218
        %v3222 = vadd.f32 %v3208, %v3217
        %v3223 = vadd.f32 %v3209, %v3219
        %s3224 = sld [smem:[#allocation5 + $0xe2]]
        %v3225 = vstv %s3224
        %v3226 = vmul.f32 %v3225, %v3203
        %v3227 = vmul.f32 %v3225, %v3204
        %3230 = vrot.lane.b32.xlu0 %v3226, 126
        %v3231 = vpop.permute.xlu0 %3230
        %3232 = vrot.lane.b32.xlu0 %v3227, 126
        %v3233 = vpop.permute.xlu0 %3232
        %v3236 = vadd.f32 %v3222, %v3231
        %v3237 = vadd.f32 %v3223, %v3233
        %s3238 = sld [smem:[#allocation5 + $0xe3]]
        %v3239 = vld [vmem:[#allocation3 + $0x1] sm:$0xff]
        %v3240 = vld [vmem:[#allocation3 + $0x9] sm:$0xff]
        %v3241 = vstv %s3238
        %v3242 = vmul.f32 %v3241, %v3239
        %v3243 = vmul.f32 %v3241, %v3240
        %v3244 = vadd.f32 %v3236, %v3242
        %v3245 = vadd.f32 %v3237, %v3243
        %s3246 = sld [smem:[#allocation5 + $0xe4]]
        %v3247 = vstv %s3246
        %v3248 = vmul.f32 %v3247, %v3239
        %v3249 = vmul.f32 %v3247, %v3240
        %3252 = vrot.lane.b32.xlu0 %v3248, 127
        %v3253 = vpop.permute.xlu0 %3252
        %3254 = vrot.lane.b32.xlu0 %v3249, 127
        %v3255 = vpop.permute.xlu0 %3254
        %v3258 = vadd.f32 %v3244, %v3253
        %v3259 = vadd.f32 %v3245, %v3255
        %s3260 = sld [smem:[#allocation5 + $0xe5]]
        %v3261 = vstv %s3260
        %v3262 = vmul.f32 %v3261, %v3239
        %v3263 = vmul.f32 %v3261, %v3240
        %3266 = vrot.lane.b32.xlu0 %v3262, 126
        %v3267 = vpop.permute.xlu0 %3266
        %3268 = vrot.lane.b32.xlu0 %v3263, 126
        %v3269 = vpop.permute.xlu0 %3268
        %v3272 = vadd.f32 %v3258, %v3267
        %v3273 = vadd.f32 %v3259, %v3269
        %s3274 = sld [smem:[#allocation5 + $0xe6]]
        %v3275 = vld [vmem:[#allocation3 + $0x2] sm:$0xff]
        %v3276 = vld [vmem:[#allocation3 + $0xa] sm:$0xff]
        %v3277 = vstv %s3274
        %v3278 = vmul.f32 %v3277, %v3275
        %v3279 = vmul.f32 %v3277, %v3276
        %v3280 = vadd.f32 %v3272, %v3278
        %v3281 = vadd.f32 %v3273, %v3279
        %s3282 = sld [smem:[#allocation5 + $0xe7]]
        %v3283 = vstv %s3282
        %v3284 = vmul.f32 %v3283, %v3275
        %v3285 = vmul.f32 %v3283, %v3276
        %3288 = vrot.lane.b32.xlu0 %v3284, 127
        %v3289 = vpop.permute.xlu0 %3288
        %3290 = vrot.lane.b32.xlu0 %v3285, 127
        %v3291 = vpop.permute.xlu0 %3290
        %v3294 = vadd.f32 %v3280, %v3289
        %v3295 = vadd.f32 %v3281, %v3291
        %s3296 = sld [smem:[#allocation5 + $0xe8]]
        %v3297 = vstv %s3296
        %v3298 = vmul.f32 %v3297, %v3275
        %v3299 = vmul.f32 %v3297, %v3276
        %3302 = vrot.lane.b32.xlu0 %v3298, 126
        %v3303 = vpop.permute.xlu0 %3302
        %3304 = vrot.lane.b32.xlu0 %v3299, 126
        %v3305 = vpop.permute.xlu0 %3304
        %v3308 = vadd.f32 %v3294, %v3303
        %v3309 = vadd.f32 %v3295, %v3305
        %s3310 = sld [smem:[#allocation5 + $0xe9]]
        %v3311 = vld [vmem:[%s1163] sm:$0xff]
        %v3312 = vld [vmem:[%s1163 + $0x8] sm:$0xff]
        %v3313 = vstv %s3310
        %v3314 = vmul.f32 %v3313, %v3311
        %v3315 = vmul.f32 %v3313, %v3312
        %v3316 = vadd.f32 %v3308, %v3314
        %v3317 = vadd.f32 %v3309, %v3315
        %s3318 = sld [smem:[#allocation5 + $0xea]]
        %v3319 = vstv %s3318
        %v3320 = vmul.f32 %v3319, %v3311
        %v3321 = vmul.f32 %v3319, %v3312
        %3324 = vrot.lane.b32.xlu0 %v3320, 127
        %v3325 = vpop.permute.xlu0 %3324
        %3326 = vrot.lane.b32.xlu0 %v3321, 127
        %v3327 = vpop.permute.xlu0 %3326
        %v3330 = vadd.f32 %v3316, %v3325
        %v3331 = vadd.f32 %v3317, %v3327
        %s3332 = sld [smem:[#allocation5 + $0xeb]]
        %v3333 = vstv %s3332
        %v3334 = vmul.f32 %v3333, %v3311
        %v3335 = vmul.f32 %v3333, %v3312
        %3338 = vrot.lane.b32.xlu0 %v3334, 126
        %v3339 = vpop.permute.xlu0 %3338
        %3340 = vrot.lane.b32.xlu0 %v3335, 126
        %v3341 = vpop.permute.xlu0 %3340
        %v3344 = vadd.f32 %v3330, %v3339
        %v3345 = vadd.f32 %v3331, %v3341
        %s3346 = sld [smem:[#allocation5 + $0xec]]
        %v3347 = vld [vmem:[%s1163 + $0x1] sm:$0xff]
        %v3348 = vld [vmem:[%s1163 + $0x9] sm:$0xff]
        %v3349 = vstv %s3346
        %v3350 = vmul.f32 %v3349, %v3347
        %v3351 = vmul.f32 %v3349, %v3348
        %v3352 = vadd.f32 %v3344, %v3350
        %v3353 = vadd.f32 %v3345, %v3351
        %s3354 = sld [smem:[#allocation5 + $0xed]]
        %v3355 = vstv %s3354
        %v3356 = vmul.f32 %v3355, %v3347
        %v3357 = vmul.f32 %v3355, %v3348
        %3360 = vrot.lane.b32.xlu0 %v3356, 127
        %v3361 = vpop.permute.xlu0 %3360
        %3362 = vrot.lane.b32.xlu0 %v3357, 127
        %v3363 = vpop.permute.xlu0 %3362
        %v3366 = vadd.f32 %v3352, %v3361
        %v3367 = vadd.f32 %v3353, %v3363
        %s3368 = sld [smem:[#allocation5 + $0xee]]
        %v3369 = vstv %s3368
        %v3370 = vmul.f32 %v3369, %v3347
        %v3371 = vmul.f32 %v3369, %v3348
        %3374 = vrot.lane.b32.xlu0 %v3370, 126
        %v3375 = vpop.permute.xlu0 %3374
        %3376 = vrot.lane.b32.xlu0 %v3371, 126
        %v3377 = vpop.permute.xlu0 %3376
        %v3380 = vadd.f32 %v3366, %v3375
        %v3381 = vadd.f32 %v3367, %v3377
        %s3382 = sld [smem:[#allocation5 + $0xef]]
        %v3383 = vld [vmem:[%s1163 + $0x2] sm:$0xff]
        %v3384 = vld [vmem:[%s1163 + $0xa] sm:$0xff]
        %v3385 = vstv %s3382
        %v3386 = vmul.f32 %v3385, %v3383
        %v3387 = vmul.f32 %v3385, %v3384
        %v3388 = vadd.f32 %v3380, %v3386
        %v3389 = vadd.f32 %v3381, %v3387
        %s3390 = sld [smem:[#allocation5 + $0xf0]]
        %v3391 = vstv %s3390
        %v3392 = vmul.f32 %v3391, %v3383
        %v3393 = vmul.f32 %v3391, %v3384
        %3396 = vrot.lane.b32.xlu0 %v3392, 127
        %v3397 = vpop.permute.xlu0 %3396
        %3398 = vrot.lane.b32.xlu0 %v3393, 127
        %v3399 = vpop.permute.xlu0 %3398
        %v3402 = vadd.f32 %v3388, %v3397
        %v3403 = vadd.f32 %v3389, %v3399
        %s3404 = sld [smem:[#allocation5 + $0xf1]]
        %v3405 = vstv %s3404
        %v3406 = vmul.f32 %v3405, %v3383
        %v3407 = vmul.f32 %v3405, %v3384
        %3410 = vrot.lane.b32.xlu0 %v3406, 126
        %v3411 = vpop.permute.xlu0 %3410
        %3412 = vrot.lane.b32.xlu0 %v3407, 126
        %v3413 = vpop.permute.xlu0 %3412
        %v3416 = vadd.f32 %v3402, %v3411
        %v3417 = vadd.f32 %v3403, %v3413
        %s3418 = sld [smem:[#allocation5 + $0xf2]]
        %v3419 = vld [vmem:[%s1502] sm:$0xff]
        %v3420 = vld [vmem:[%s1502 + $0x8] sm:$0xff]
        %v3421 = vstv %s3418
        %v3422 = vmul.f32 %v3421, %v3419
        %v3423 = vmul.f32 %v3421, %v3420
        %v3424 = vadd.f32 %v3416, %v3422
        %v3425 = vadd.f32 %v3417, %v3423
        %s3426 = sld [smem:[#allocation5 + $0xf3]]
        %v3427 = vstv %s3426
        %v3428 = vmul.f32 %v3427, %v3419
        %v3429 = vmul.f32 %v3427, %v3420
        %3432 = vrot.lane.b32.xlu0 %v3428, 127
        %v3433 = vpop.permute.xlu0 %3432
        %3434 = vrot.lane.b32.xlu0 %v3429, 127
        %v3435 = vpop.permute.xlu0 %3434
        %v3438 = vadd.f32 %v3424, %v3433
        %v3439 = vadd.f32 %v3425, %v3435
        %s3440 = sld [smem:[#allocation5 + $0xf4]]
        %v3441 = vstv %s3440
        %v3442 = vmul.f32 %v3441, %v3419
        %v3443 = vmul.f32 %v3441, %v3420
        %3446 = vrot.lane.b32.xlu0 %v3442, 126
        %v3447 = vpop.permute.xlu0 %3446
        %3448 = vrot.lane.b32.xlu0 %v3443, 126
        %v3449 = vpop.permute.xlu0 %3448
        %v3452 = vadd.f32 %v3438, %v3447
        %v3453 = vadd.f32 %v3439, %v3449
        %s3454 = sld [smem:[#allocation5 + $0xf5]]
        %v3455 = vld [vmem:[%s1502 + $0x1] sm:$0xff]
        %v3456 = vld [vmem:[%s1502 + $0x9] sm:$0xff]
        %v3457 = vstv %s3454
        %v3458 = vmul.f32 %v3457, %v3455
        %v3459 = vmul.f32 %v3457, %v3456
        %v3460 = vadd.f32 %v3452, %v3458
        %v3461 = vadd.f32 %v3453, %v3459
        %s3462 = sld [smem:[#allocation5 + $0xf6]]
        %v3463 = vstv %s3462
        %v3464 = vmul.f32 %v3463, %v3455
        %v3465 = vmul.f32 %v3463, %v3456
        %3468 = vrot.lane.b32.xlu0 %v3464, 127
        %v3469 = vpop.permute.xlu0 %3468
        %3470 = vrot.lane.b32.xlu0 %v3465, 127
        %v3471 = vpop.permute.xlu0 %3470
        %v3474 = vadd.f32 %v3460, %v3469
        %v3475 = vadd.f32 %v3461, %v3471
        %s3476 = sld [smem:[#allocation5 + $0xf7]]
        %v3477 = vstv %s3476
        %v3478 = vmul.f32 %v3477, %v3455
        %v3479 = vmul.f32 %v3477, %v3456
        %3482 = vrot.lane.b32.xlu0 %v3478, 126
        %v3483 = vpop.permute.xlu0 %3482
        %3484 = vrot.lane.b32.xlu0 %v3479, 126
        %v3485 = vpop.permute.xlu0 %3484
        %v3488 = vadd.f32 %v3474, %v3483
        %v3489 = vadd.f32 %v3475, %v3485
        %s3490 = sld [smem:[#allocation5 + $0xf8]]
        %v3491 = vld [vmem:[%s1502 + $0x2] sm:$0xff]
        %v3492 = vld [vmem:[%s1502 + $0xa] sm:$0xff]
        %v3493 = vstv %s3490
        %v3494 = vmul.f32 %v3493, %v3491
        %v3495 = vmul.f32 %v3493, %v3492
        %v3496 = vadd.f32 %v3488, %v3494
        %v3497 = vadd.f32 %v3489, %v3495
        %s3498 = sld [smem:[#allocation5 + $0xf9]]
        %v3499 = vstv %s3498
        %v3500 = vmul.f32 %v3499, %v3491
        %v3501 = vmul.f32 %v3499, %v3492
        %3504 = vrot.lane.b32.xlu0 %v3500, 127
        %v3505 = vpop.permute.xlu0 %3504
        %3506 = vrot.lane.b32.xlu0 %v3501, 127
        %v3507 = vpop.permute.xlu0 %3506
        %v3510 = vadd.f32 %v3496, %v3505
        %v3511 = vadd.f32 %v3497, %v3507
        %s3512 = sld [smem:[#allocation5 + $0xfa]]
        %v3513 = vstv %s3512
        %v3514 = vmul.f32 %v3513, %v3491
        %v3515 = vmul.f32 %v3513, %v3492
        %3518 = vrot.lane.b32.xlu0 %v3514, 126
        %v3519 = vpop.permute.xlu0 %3518
        %3520 = vrot.lane.b32.xlu0 %v3515, 126
        %v3521 = vpop.permute.xlu0 %3520
        %v3524 = vadd.f32 %v3510, %v3519
        %v3525 = vadd.f32 %v3511, %v3521
        %s3526 = sld [smem:[#allocation5 + $0xfb]]
        %v3527 = vld [vmem:[%s1841] sm:$0xff]
        %v3528 = vld [vmem:[%s1841 + $0x8] sm:$0xff]
        %v3529 = vstv %s3526
        %v3530 = vmul.f32 %v3529, %v3527
        %v3531 = vmul.f32 %v3529, %v3528
        %v3532 = vadd.f32 %v3524, %v3530
        %v3533 = vadd.f32 %v3525, %v3531
        %s3534 = sld [smem:[#allocation5 + $0xfc]]
        %v3535 = vstv %s3534
        %v3536 = vmul.f32 %v3535, %v3527
        %v3537 = vmul.f32 %v3535, %v3528
        %3540 = vrot.lane.b32.xlu0 %v3536, 127
        %v3541 = vpop.permute.xlu0 %3540
        %3542 = vrot.lane.b32.xlu0 %v3537, 127
        %v3543 = vpop.permute.xlu0 %3542
        %v3546 = vadd.f32 %v3532, %v3541
        %v3547 = vadd.f32 %v3533, %v3543
        %s3548 = sld [smem:[#allocation5 + $0xfd]]
        %v3549 = vstv %s3548
        %v3550 = vmul.f32 %v3549, %v3527
        %v3551 = vmul.f32 %v3549, %v3528
        %3554 = vrot.lane.b32.xlu0 %v3550, 126
        %v3555 = vpop.permute.xlu0 %3554
        %3556 = vrot.lane.b32.xlu0 %v3551, 126
        %v3557 = vpop.permute.xlu0 %3556
        %v3560 = vadd.f32 %v3546, %v3555
        %v3561 = vadd.f32 %v3547, %v3557
        %s3562 = sld [smem:[#allocation5 + $0xfe]]
        %v3563 = vld [vmem:[%s1841 + $0x1] sm:$0xff]
        %v3564 = vld [vmem:[%s1841 + $0x9] sm:$0xff]
        %v3565 = vstv %s3562
        %v3566 = vmul.f32 %v3565, %v3563
        %v3567 = vmul.f32 %v3565, %v3564
        %v3568 = vadd.f32 %v3560, %v3566
        %v3569 = vadd.f32 %v3561, %v3567
        %s3570 = sld [smem:[#allocation5 + $0xff]]
        %v3571 = vstv %s3570
        %v3572 = vmul.f32 %v3571, %v3563
        %v3573 = vmul.f32 %v3571, %v3564
        %3576 = vrot.lane.b32.xlu0 %v3572, 127
        %v3577 = vpop.permute.xlu0 %3576
        %3578 = vrot.lane.b32.xlu0 %v3573, 127
        %v3579 = vpop.permute.xlu0 %3578
        %v3582 = vadd.f32 %v3568, %v3577
        %v3583 = vadd.f32 %v3569, %v3579
        %s3584 = sld [smem:[#allocation5 + $0x100]]
        %v3585 = vstv %s3584
        %v3586 = vmul.f32 %v3585, %v3563
        %v3587 = vmul.f32 %v3585, %v3564
        %3590 = vrot.lane.b32.xlu0 %v3586, 126
        %v3591 = vpop.permute.xlu0 %3590
        %3592 = vrot.lane.b32.xlu0 %v3587, 126
        %v3593 = vpop.permute.xlu0 %3592
        %v3596 = vadd.f32 %v3582, %v3591
        %v3597 = vadd.f32 %v3583, %v3593
        %s3598 = sld [smem:[#allocation5 + $0x101]]
        %v3599 = vld [vmem:[%s1841 + $0x2] sm:$0xff]
        %v3600 = vld [vmem:[%s1841 + $0xa] sm:$0xff]
        %v3601 = vstv %s3598
        %v3602 = vmul.f32 %v3601, %v3599
        %v3603 = vmul.f32 %v3601, %v3600
        %v3604 = vadd.f32 %v3596, %v3602
        %v3605 = vadd.f32 %v3597, %v3603
        %s3606 = sld [smem:[#allocation5 + $0x102]]
        %v3607 = vstv %s3606
        %v3608 = vmul.f32 %v3607, %v3599
        %v3609 = vmul.f32 %v3607, %v3600
        %3612 = vrot.lane.b32.xlu0 %v3608, 127
        %v3613 = vpop.permute.xlu0 %3612
        %3614 = vrot.lane.b32.xlu0 %v3609, 127
        %v3615 = vpop.permute.xlu0 %3614
        %v3618 = vadd.f32 %v3604, %v3613
        %v3619 = vadd.f32 %v3605, %v3615
        %s3620 = sld [smem:[#allocation5 + $0x103]]
        %v3621 = vstv %s3620
        %v3622 = vmul.f32 %v3621, %v3599
        %v3623 = vmul.f32 %v3621, %v3600
        %3626 = vrot.lane.b32.xlu0 %v3622, 126
        %v3627 = vpop.permute.xlu0 %3626
        %3628 = vrot.lane.b32.xlu0 %v3623, 126
        %v3629 = vpop.permute.xlu0 %3628
        %v3632 = vadd.f32 %v3618, %v3627
        %v3633 = vadd.f32 %v3619, %v3629
        %s3634 = sld [smem:[#allocation5 + $0x104]]
        %v3635 = vld [vmem:[%s2180] sm:$0xff]
        %v3636 = vld [vmem:[%s2180 + $0x8] sm:$0xff]
        %v3637 = vstv %s3634
        %v3638 = vmul.f32 %v3637, %v3635
        %v3639 = vmul.f32 %v3637, %v3636
        %v3640 = vadd.f32 %v3632, %v3638
        %v3641 = vadd.f32 %v3633, %v3639
        %s3642 = sld [smem:[#allocation5 + $0x105]]
        %v3643 = vstv %s3642
        %v3644 = vmul.f32 %v3643, %v3635
        %v3645 = vmul.f32 %v3643, %v3636
        %3648 = vrot.lane.b32.xlu0 %v3644, 127
        %v3649 = vpop.permute.xlu0 %3648
        %3650 = vrot.lane.b32.xlu0 %v3645, 127
        %v3651 = vpop.permute.xlu0 %3650
        %v3654 = vadd.f32 %v3640, %v3649
        %v3655 = vadd.f32 %v3641, %v3651
        %s3656 = sld [smem:[#allocation5 + $0x106]]
        %v3657 = vstv %s3656
        %v3658 = vmul.f32 %v3657, %v3635
        %v3659 = vmul.f32 %v3657, %v3636
        %3662 = vrot.lane.b32.xlu0 %v3658, 126
        %v3663 = vpop.permute.xlu0 %3662
        %3664 = vrot.lane.b32.xlu0 %v3659, 126
        %v3665 = vpop.permute.xlu0 %3664
        %v3668 = vadd.f32 %v3654, %v3663
        %v3669 = vadd.f32 %v3655, %v3665
        %s3670 = sld [smem:[#allocation5 + $0x107]]
        %v3671 = vld [vmem:[%s2180 + $0x1] sm:$0xff]
        %v3672 = vld [vmem:[%s2180 + $0x9] sm:$0xff]
        %v3673 = vstv %s3670
        %v3674 = vmul.f32 %v3673, %v3671
        %v3675 = vmul.f32 %v3673, %v3672
        %v3676 = vadd.f32 %v3668, %v3674
        %v3677 = vadd.f32 %v3669, %v3675
        %s3678 = sld [smem:[#allocation5 + $0x108]]
        %v3679 = vstv %s3678
        %v3680 = vmul.f32 %v3679, %v3671
        %v3681 = vmul.f32 %v3679, %v3672
        %3684 = vrot.lane.b32.xlu0 %v3680, 127
        %v3685 = vpop.permute.xlu0 %3684
        %3686 = vrot.lane.b32.xlu0 %v3681, 127
        %v3687 = vpop.permute.xlu0 %3686
        %v3690 = vadd.f32 %v3676, %v3685
        %v3691 = vadd.f32 %v3677, %v3687
        %s3692 = sld [smem:[#allocation5 + $0x109]]
        %v3693 = vstv %s3692
        %v3694 = vmul.f32 %v3693, %v3671
        %v3695 = vmul.f32 %v3693, %v3672
        %3698 = vrot.lane.b32.xlu0 %v3694, 126
        %v3699 = vpop.permute.xlu0 %3698
        %3700 = vrot.lane.b32.xlu0 %v3695, 126
        %v3701 = vpop.permute.xlu0 %3700
        %v3704 = vadd.f32 %v3690, %v3699
        %v3705 = vadd.f32 %v3691, %v3701
        %s3706 = sld [smem:[#allocation5 + $0x10a]]
        %v3707 = vld [vmem:[%s2180 + $0x2] sm:$0xff]
        %v3708 = vld [vmem:[%s2180 + $0xa] sm:$0xff]
        %v3709 = vstv %s3706
        %v3710 = vmul.f32 %v3709, %v3707
        %v3711 = vmul.f32 %v3709, %v3708
        %v3712 = vadd.f32 %v3704, %v3710
        %v3713 = vadd.f32 %v3705, %v3711
        %s3714 = sld [smem:[#allocation5 + $0x10b]]
        %v3715 = vstv %s3714
        %v3716 = vmul.f32 %v3715, %v3707
        %v3717 = vmul.f32 %v3715, %v3708
        %3720 = vrot.lane.b32.xlu0 %v3716, 127
        %v3721 = vpop.permute.xlu0 %3720
        %3722 = vrot.lane.b32.xlu0 %v3717, 127
        %v3723 = vpop.permute.xlu0 %3722
        %v3726 = vadd.f32 %v3712, %v3721
        %v3727 = vadd.f32 %v3713, %v3723
        %s3728 = sld [smem:[#allocation5 + $0x10c]]
        %v3729 = vstv %s3728
        %v3730 = vmul.f32 %v3729, %v3707
        %v3731 = vmul.f32 %v3729, %v3708
        %3734 = vrot.lane.b32.xlu0 %v3730, 126
        %v3735 = vpop.permute.xlu0 %3734
        %3736 = vrot.lane.b32.xlu0 %v3731, 126
        %v3737 = vpop.permute.xlu0 %3736
        %v3740 = vadd.f32 %v3726, %v3735
        %v3741 = vadd.f32 %v3727, %v3737
        %s3742 = sld [smem:[#allocation5 + $0x10d]]
        %v3743 = vld [vmem:[%s2519] sm:$0xff]
        %v3744 = vld [vmem:[%s2519 + $0x8] sm:$0xff]
        %v3745 = vstv %s3742
        %v3746 = vmul.f32 %v3745, %v3743
        %v3747 = vmul.f32 %v3745, %v3744
        %v3748 = vadd.f32 %v3740, %v3746
        %v3749 = vadd.f32 %v3741, %v3747
        %s3750 = sld [smem:[#allocation5 + $0x10e]]
        %v3751 = vstv %s3750
        %v3752 = vmul.f32 %v3751, %v3743
        %v3753 = vmul.f32 %v3751, %v3744
        %3756 = vrot.lane.b32.xlu0 %v3752, 127
        %v3757 = vpop.permute.xlu0 %3756
        %3758 = vrot.lane.b32.xlu0 %v3753, 127
        %v3759 = vpop.permute.xlu0 %3758
        %v3762 = vadd.f32 %v3748, %v3757
        %v3763 = vadd.f32 %v3749, %v3759
        %s3764 = sld [smem:[#allocation5 + $0x10f]]
        %v3765 = vstv %s3764
        %v3766 = vmul.f32 %v3765, %v3743
        %v3767 = vmul.f32 %v3765, %v3744
        %3770 = vrot.lane.b32.xlu0 %v3766, 126
        %v3771 = vpop.permute.xlu0 %3770
        %3772 = vrot.lane.b32.xlu0 %v3767, 126
        %v3773 = vpop.permute.xlu0 %3772
        %v3776 = vadd.f32 %v3762, %v3771
        %v3777 = vadd.f32 %v3763, %v3773
        %s3778 = sld [smem:[#allocation5 + $0x110]]
        %v3779 = vld [vmem:[%s2519 + $0x1] sm:$0xff]
        %v3780 = vld [vmem:[%s2519 + $0x9] sm:$0xff]
        %v3781 = vstv %s3778
        %v3782 = vmul.f32 %v3781, %v3779
        %v3783 = vmul.f32 %v3781, %v3780
        %v3784 = vadd.f32 %v3776, %v3782
        %v3785 = vadd.f32 %v3777, %v3783
        %s3786 = sld [smem:[#allocation5 + $0x111]]
        %v3787 = vstv %s3786
        %v3788 = vmul.f32 %v3787, %v3779
        %v3789 = vmul.f32 %v3787, %v3780
        %3792 = vrot.lane.b32.xlu0 %v3788, 127
        %v3793 = vpop.permute.xlu0 %3792
        %3794 = vrot.lane.b32.xlu0 %v3789, 127
        %v3795 = vpop.permute.xlu0 %3794
        %v3798 = vadd.f32 %v3784, %v3793
        %v3799 = vadd.f32 %v3785, %v3795
        %s3800 = sld [smem:[#allocation5 + $0x112]]
        %v3801 = vstv %s3800
        %v3802 = vmul.f32 %v3801, %v3779
        %v3803 = vmul.f32 %v3801, %v3780
        %3806 = vrot.lane.b32.xlu0 %v3802, 126
        %v3807 = vpop.permute.xlu0 %3806
        %3808 = vrot.lane.b32.xlu0 %v3803, 126
        %v3809 = vpop.permute.xlu0 %3808
        %v3812 = vadd.f32 %v3798, %v3807
        %v3813 = vadd.f32 %v3799, %v3809
        %s3814 = sld [smem:[#allocation5 + $0x113]]
        %v3815 = vld [vmem:[%s2519 + $0x2] sm:$0xff]
        %v3816 = vld [vmem:[%s2519 + $0xa] sm:$0xff]
        %v3817 = vstv %s3814
        %v3818 = vmul.f32 %v3817, %v3815
        %v3819 = vmul.f32 %v3817, %v3816
        %v3820 = vadd.f32 %v3812, %v3818
        %v3821 = vadd.f32 %v3813, %v3819
        %s3822 = sld [smem:[#allocation5 + $0x114]]
        %v3823 = vstv %s3822
        %v3824 = vmul.f32 %v3823, %v3815
        %v3825 = vmul.f32 %v3823, %v3816
        %3828 = vrot.lane.b32.xlu0 %v3824, 127
        %v3829 = vpop.permute.xlu0 %3828
        %3830 = vrot.lane.b32.xlu0 %v3825, 127
        %v3831 = vpop.permute.xlu0 %3830
        %v3834 = vadd.f32 %v3820, %v3829
        %v3835 = vadd.f32 %v3821, %v3831
        %s3836 = sld [smem:[#allocation5 + $0x115]]
        %v3837 = vstv %s3836
        %v3838 = vmul.f32 %v3837, %v3815
        %v3839 = vmul.f32 %v3837, %v3816
        %3842 = vrot.lane.b32.xlu0 %v3838, 126
        %v3843 = vpop.permute.xlu0 %3842
        %3844 = vrot.lane.b32.xlu0 %v3839, 126
        %v3845 = vpop.permute.xlu0 %3844
        %v3848 = vadd.f32 %v3834, %v3843
        %v3849 = vadd.f32 %v3835, %v3845
        %s3850 = sld [smem:[#allocation5 + $0x116]]
        %v3851 = vld [vmem:[%s2858] sm:$0xff]
        %v3852 = vld [vmem:[%s2858 + $0x8] sm:$0xff]
        %v3853 = vstv %s3850
        %v3854 = vmul.f32 %v3853, %v3851
        %v3855 = vmul.f32 %v3853, %v3852
        %v3856 = vadd.f32 %v3848, %v3854
        %v3857 = vadd.f32 %v3849, %v3855
        %s3858 = sld [smem:[#allocation5 + $0x117]]
        %v3859 = vstv %s3858
        %v3860 = vmul.f32 %v3859, %v3851
        %v3861 = vmul.f32 %v3859, %v3852
        %3864 = vrot.lane.b32.xlu0 %v3860, 127
        %v3865 = vpop.permute.xlu0 %3864
        %3866 = vrot.lane.b32.xlu0 %v3861, 127
        %v3867 = vpop.permute.xlu0 %3866
        %v3870 = vadd.f32 %v3856, %v3865
        %v3871 = vadd.f32 %v3857, %v3867
        %s3872 = sld [smem:[#allocation5 + $0x118]]
        %v3873 = vstv %s3872
        %v3874 = vmul.f32 %v3873, %v3851
        %v3875 = vmul.f32 %v3873, %v3852
        %3878 = vrot.lane.b32.xlu0 %v3874, 126
        %v3879 = vpop.permute.xlu0 %3878
        %3880 = vrot.lane.b32.xlu0 %v3875, 126
        %v3881 = vpop.permute.xlu0 %3880
        %v3884 = vadd.f32 %v3870, %v3879
        %v3885 = vadd.f32 %v3871, %v3881
        %s3886 = sld [smem:[#allocation5 + $0x119]]
        %v3887 = vld [vmem:[%s2858 + $0x1] sm:$0xff]
        %v3888 = vld [vmem:[%s2858 + $0x9] sm:$0xff]
        %v3889 = vstv %s3886
        %v3890 = vmul.f32 %v3889, %v3887
        %v3891 = vmul.f32 %v3889, %v3888
        %v3892 = vadd.f32 %v3884, %v3890
        %v3893 = vadd.f32 %v3885, %v3891
        %s3894 = sld [smem:[#allocation5 + $0x11a]]
        %v3895 = vstv %s3894
        %v3896 = vmul.f32 %v3895, %v3887
        %v3897 = vmul.f32 %v3895, %v3888
        %3900 = vrot.lane.b32.xlu0 %v3896, 127
        %v3901 = vpop.permute.xlu0 %3900
        %3902 = vrot.lane.b32.xlu0 %v3897, 127
        %v3903 = vpop.permute.xlu0 %3902
        %v3906 = vadd.f32 %v3892, %v3901
        %v3907 = vadd.f32 %v3893, %v3903
        %s3908 = sld [smem:[#allocation5 + $0x11b]]
        %v3909 = vstv %s3908
        %v3910 = vmul.f32 %v3909, %v3887
        %v3911 = vmul.f32 %v3909, %v3888
        %3914 = vrot.lane.b32.xlu0 %v3910, 126
        %v3915 = vpop.permute.xlu0 %3914
        %3916 = vrot.lane.b32.xlu0 %v3911, 126
        %v3917 = vpop.permute.xlu0 %3916
        %v3920 = vadd.f32 %v3906, %v3915
        %v3921 = vadd.f32 %v3907, %v3917
        %s3922 = sld [smem:[#allocation5 + $0x11c]]
        %v3923 = vld [vmem:[%s2858 + $0x2] sm:$0xff]
        %v3924 = vld [vmem:[%s2858 + $0xa] sm:$0xff]
        %v3925 = vstv %s3922
        %v3926 = vmul.f32 %v3925, %v3923
        %v3927 = vmul.f32 %v3925, %v3924
        %v3928 = vadd.f32 %v3920, %v3926
        %v3929 = vadd.f32 %v3921, %v3927
        %s3930 = sld [smem:[#allocation5 + $0x11d]]
        %v3931 = vstv %s3930
        %v3932 = vmul.f32 %v3931, %v3923
        %v3933 = vmul.f32 %v3931, %v3924
        %3936 = vrot.lane.b32.xlu0 %v3932, 127
        %v3937 = vpop.permute.xlu0 %3936
        %3938 = vrot.lane.b32.xlu0 %v3933, 127
        %v3939 = vpop.permute.xlu0 %3938
        %v3942 = vadd.f32 %v3928, %v3937
        %v3943 = vadd.f32 %v3929, %v3939
        %s3944 = sld [smem:[#allocation5 + $0x11e]]
        %v3945 = vstv %s3944
        %v3946 = vmul.f32 %v3945, %v3923
        %v3947 = vmul.f32 %v3945, %v3924
        %3950 = vrot.lane.b32.xlu0 %v3946, 126
        %v3951 = vpop.permute.xlu0 %3950
        %3952 = vrot.lane.b32.xlu0 %v3947, 126
        %v3953 = vpop.permute.xlu0 %3952
        %v3956 = vadd.f32 %v3942, %v3951
        %v3957 = vadd.f32 %v3943, %v3953
        %s3958 = sld [smem:[#allocation5 + $0x11f]]
        %v3959 = vld [vmem:[%s3197] sm:$0xff]
        %v3960 = vld [vmem:[%s3197 + $0x8] sm:$0xff]
        %v3961 = vstv %s3958
        %v3962 = vmul.f32 %v3961, %v3959
        %v3963 = vmul.f32 %v3961, %v3960
        %v3964 = vadd.f32 %v3956, %v3962
        %v3965 = vadd.f32 %v3957, %v3963
        %s3966 = sld [smem:[#allocation5 + $0x120]]
        %v3967 = vstv %s3966
        %v3968 = vmul.f32 %v3967, %v3959
        %v3969 = vmul.f32 %v3967, %v3960
        %3972 = vrot.lane.b32.xlu0 %v3968, 127
        %v3973 = vpop.permute.xlu0 %3972
        %3974 = vrot.lane.b32.xlu0 %v3969, 127
        %v3975 = vpop.permute.xlu0 %3974
        %v3978 = vadd.f32 %v3964, %v3973
        %v3979 = vadd.f32 %v3965, %v3975
        %s3980 = sld [smem:[#allocation5 + $0x121]]
        %v3981 = vstv %s3980
        %v3982 = vmul.f32 %v3981, %v3959
        %v3983 = vmul.f32 %v3981, %v3960
        %3986 = vrot.lane.b32.xlu0 %v3982, 126
        %v3987 = vpop.permute.xlu0 %3986
        %3988 = vrot.lane.b32.xlu0 %v3983, 126
        %v3989 = vpop.permute.xlu0 %3988
        %v3992 = vadd.f32 %v3978, %v3987
        %v3993 = vadd.f32 %v3979, %v3989
        %s3994 = sld [smem:[#allocation5 + $0x122]]
        %v3995 = vld [vmem:[%s3197 + $0x1] sm:$0xff]
        %v3996 = vld [vmem:[%s3197 + $0x9] sm:$0xff]
        %v3997 = vstv %s3994
        %v3998 = vmul.f32 %v3997, %v3995
        %v3999 = vmul.f32 %v3997, %v3996
        %v4000 = vadd.f32 %v3992, %v3998
        %v4001 = vadd.f32 %v3993, %v3999
        %s4002 = sld [smem:[#allocation5 + $0x123]]
        %v4003 = vstv %s4002
        %v4004 = vmul.f32 %v4003, %v3995
        %v4005 = vmul.f32 %v4003, %v3996
        %4008 = vrot.lane.b32.xlu0 %v4004, 127
        %v4009 = vpop.permute.xlu0 %4008
        %4010 = vrot.lane.b32.xlu0 %v4005, 127
        %v4011 = vpop.permute.xlu0 %4010
        %v4014 = vadd.f32 %v4000, %v4009
        %v4015 = vadd.f32 %v4001, %v4011
        %s4016 = sld [smem:[#allocation5 + $0x124]]
        %v4017 = vstv %s4016
        %v4018 = vmul.f32 %v4017, %v3995
        %v4019 = vmul.f32 %v4017, %v3996
        %4022 = vrot.lane.b32.xlu0 %v4018, 126
        %v4023 = vpop.permute.xlu0 %4022
        %4024 = vrot.lane.b32.xlu0 %v4019, 126
        %v4025 = vpop.permute.xlu0 %4024
        %v4028 = vadd.f32 %v4014, %v4023
        %v4029 = vadd.f32 %v4015, %v4025
        %s4030 = sld [smem:[#allocation5 + $0x125]]
        %v4031 = vld [vmem:[%s3197 + $0x2] sm:$0xff]
        %v4032 = vld [vmem:[%s3197 + $0xa] sm:$0xff]
        %v4033 = vstv %s4030
        %v4034 = vmul.f32 %v4033, %v4031
        %v4035 = vmul.f32 %v4033, %v4032
        %v4036 = vadd.f32 %v4028, %v4034
        %v4037 = vadd.f32 %v4029, %v4035
        %s4038 = sld [smem:[#allocation5 + $0x126]]
        %v4039 = vstv %s4038
        %v4040 = vmul.f32 %v4039, %v4031
        %v4041 = vmul.f32 %v4039, %v4032
        %4044 = vrot.lane.b32.xlu0 %v4040, 127
        %v4045 = vpop.permute.xlu0 %4044
        %4046 = vrot.lane.b32.xlu0 %v4041, 127
        %v4047 = vpop.permute.xlu0 %4046
        %v4050 = vadd.f32 %v4036, %v4045
        %v4051 = vadd.f32 %v4037, %v4047
        %s4052 = sld [smem:[#allocation5 + $0x127]]
        %v4053 = vstv %s4052
        %v4054 = vmul.f32 %v4053, %v4031
        %v4055 = vmul.f32 %v4053, %v4032
        %4058 = vrot.lane.b32.xlu0 %v4054, 126
        %v4059 = vpop.permute.xlu0 %4058
        %4060 = vrot.lane.b32.xlu0 %v4055, 126
        %v4061 = vpop.permute.xlu0 %4060
        %v4064 = vadd.f32 %v4050, %v4059
        %v4065 = vadd.f32 %v4051, %v4061
        %v4066 = vld [vmem:[%s297] sm:$0xff]
        %v4067 = vld [vmem:[%s297 + $0x8] sm:$0xff]
        %s4068 = scalar_lea.vmem %s297, 16 [#allocation10]
        %v4069 = vld [vmem:[%s4068] sm:$0xff]
        %v4070 = vld [vmem:[%s4068 + $0x8] sm:$0xff]
        %v4071 = vadd.f32 %v4066, %v4069
        %v4072 = vadd.f32 %v4067, %v4070
        %s4073 = scalar_lea.vmem %s297, 32 [#allocation10]
        %v4074 = vld [vmem:[%s4073] sm:$0xff]
        %v4075 = vld [vmem:[%s4073 + $0x8] sm:$0xff]
        %v4076 = vadd.f32 %v4071, %v4074
        %v4077 = vadd.f32 %v4072, %v4075
        %s4078 = scalar_lea.vmem %s297, 48 [#allocation10]
        %v4079 = vld [vmem:[%s4078] sm:$0xff]
        %v4080 = vld [vmem:[%s4078 + $0x8] sm:$0xff]
        %v4081 = vadd.f32 %v4076, %v4079
        %v4082 = vadd.f32 %v4077, %v4080
        %v4083 = vmul.f32 %v4081, 0.25
        %v4084 = vmul.f32 %v4082, 0.25
        %v4085 = vmax.f32 %v4064, 0.0
        %v4086 = vmax.f32 %v4065, 0.0
        %v4087 = vmul.f32 %v4064, %v4083
        %v4088 = vmul.f32 %v4065, %v4084
        %v4089 = vsub.f32 %v4085, %v4087
        %v4090 = vsub.f32 %v4086, %v4088
        %v4091 = vand.u32 2147483647, %v4064
        %v4092 = vand.u32 2147483647, %v4065
        %v4093 = vsub.f32 0.0, %v4091
        %v4094 = vsub.f32 0.0, %v4092
        %v4095 = vmul.f32 %v4093, 1.442695
        %v4096 = vpow.pop %v4095
        %v4097 = vmul.f32 %v4094, 1.442695
        %v4098 = vpow.pop %v4097
        %v4099 = vadd.f32 %v4096, 1.0
        %v4100 = vadd.f32 %v4098, 1.0
        %v4101 = vlog2.pop %v4099
        %v4102 = vmul.f32 %v4101, 0.6931472
        %v4103 = vlog2.pop %v4100
        %v4104 = vmul.f32 %v4103, 0.6931472
        %v4105 = vadd.f32 %v4089, %v4102
        %v4106 = vadd.f32 %v4090, %v4104
        %vm4107 = vcmask 130048
        %v4108 = vsel %vm4107, %v4105, 0.0
        %v4109 = vsel %vm4107, %v4106, 0.0
        %v4110 = vadd.f32 %v4108, %v4109
        %4111 = vadd.xlane.f32.xlu0 %v4110
        %v4112 = vpop.xlane.xlu0 %4111
        %v4113 = vrot.slane %v4112, 4
        %v4114 = vadd.f32 %v4112, %v4113
        %v4115 = vrot.slane %v4114, 2
        %v4116 = vadd.f32 %v4114, %v4115
        %v4117 = vrot.slane %v4116, 1
        %v4118 = vadd.f32 %v4116, %v4117
        %s4119 = vtos %v4118
        %v4120 = vstv %s4119
        %vm4121 = vcmask 0
        %4122 = vst.msk [vmem:[%s345] sm:$0x1] %vm4121, %v4120
        %v4123 = vxor.u32 %v4064, 2147483648
        %v4124 = vxor.u32 %v4065, 2147483648
        %v4125 = vmul.f32 %v4123, 1.442695
        %v4126 = vpow.pop %v4125
        %v4127 = vmul.f32 %v4124, 1.442695
        %v4128 = vpow.pop %v4127
        %v4129 = vadd.f32 %v4126, 1.0
        %v4130 = vadd.f32 %v4128, 1.0
        %v4131 = vrcp.pop %v4129
        %v4132 = vmul.f32 1.0, %v4131
        %v4133 = vrcp.pop %v4130
        %v4134 = vmul.f32 1.0, %v4133
        %4135 = vst.msk [vmem:[%s325] sm:$0xff] %vm4107, %v4132
        %4136 = vst.msk [vmem:[%s325 + $0x8] sm:$0xff] %vm4107, %v4134
        %4139 = vrot.lane.b32.xlu0 %v4132, 1
        %v4140 = vpop.permute.xlu0 %4139
        %4141 = vrot.lane.b32.xlu0 %v4134, 1
        %v4142 = vpop.permute.xlu0 %4141
        %4145 = vst.msk [vmem:[#allocation4 + $0x1] sm:$0xff] %vm480, %v4140
        %4146 = vst.msk [vmem:[#allocation4 + $0x9] sm:$0xff] %vm480, %v4142
        %s4147 = sld [smem:[#allocation5 + $0x14d]]
        %v4148 = vstv %s4147
        %s4149 = sld [smem:[#allocation5 + $0x129]]
        %v4150 = vld [vmem:[#allocation4] sm:$0xff]
        %v4151 = vld [vmem:[#allocation4 + $0x8] sm:$0xff]
        %v4152 = vstv %s4149
        %v4153 = vmul.f32 %v4152, %v4150
        %v4154 = vmul.f32 %v4152, %v4151
        %v4155 = vadd.f32 %v4148, %v4153
        %v4156 = vadd.f32 %v4148, %v4154
        %s4157 = sld [smem:[#allocation5 + $0x12a]]
        %v4158 = vstv %s4157
        %v4159 = vmul.f32 %v4158, %v4150
        %v4160 = vmul.f32 %v4158, %v4151
        %4163 = vrot.lane.b32.xlu0 %v4159, 127
        %v4164 = vpop.permute.xlu0 %4163
        %4165 = vrot.lane.b32.xlu0 %v4160, 127
        %v4166 = vpop.permute.xlu0 %4165
        %v4169 = vadd.f32 %v4155, %v4164
        %v4170 = vadd.f32 %v4156, %v4166
        %s4171 = sld [smem:[#allocation5 + $0x12b]]
        %v4172 = vstv %s4171
        %v4173 = vmul.f32 %v4172, %v4150
        %v4174 = vmul.f32 %v4172, %v4151
        %4177 = vrot.lane.b32.xlu0 %v4173, 126
        %v4178 = vpop.permute.xlu0 %4177
        %4179 = vrot.lane.b32.xlu0 %v4174, 126
        %v4180 = vpop.permute.xlu0 %4179
        %v4183 = vadd.f32 %v4169, %v4178
        %v4184 = vadd.f32 %v4170, %v4180
        %s4185 = sld [smem:[#allocation5 + $0x12c]]
        %v4186 = vld [vmem:[#allocation4 + $0x1] sm:$0xff]
        %v4187 = vld [vmem:[#allocation4 + $0x9] sm:$0xff]
        %v4188 = vstv %s4185
        %v4189 = vmul.f32 %v4188, %v4186
        %v4190 = vmul.f32 %v4188, %v4187
        %v4191 = vadd.f32 %v4183, %v4189
        %v4192 = vadd.f32 %v4184, %v4190
        %s4193 = sld [smem:[#allocation5 + $0x12d]]
        %v4194 = vstv %s4193
        %v4195 = vmul.f32 %v4194, %v4186
        %v4196 = vmul.f32 %v4194, %v4187
        %4199 = vrot.lane.b32.xlu0 %v4195, 127
        %v4200 = vpop.permute.xlu0 %4199
        %4201 = vrot.lane.b32.xlu0 %v4196, 127
        %v4202 = vpop.permute.xlu0 %4201
        %v4205 = vadd.f32 %v4191, %v4200
        %v4206 = vadd.f32 %v4192, %v4202
        %s4207 = sld [smem:[#allocation5 + $0x12e]]
        %v4208 = vstv %s4207
        %v4209 = vmul.f32 %v4208, %v4186
        %v4210 = vmul.f32 %v4208, %v4187
        %4213 = vrot.lane.b32.xlu0 %v4209, 126
        %v4214 = vpop.permute.xlu0 %4213
        %4215 = vrot.lane.b32.xlu0 %v4210, 126
        %v4216 = vpop.permute.xlu0 %4215
        %v4219 = vadd.f32 %v4205, %v4214
        %v4220 = vadd.f32 %v4206, %v4216
        %s4221 = sld [smem:[#allocation5 + $0x12f]]
        %v4222 = vld [vmem:[#allocation4 + $0x2] sm:$0xff]
        %v4223 = vld [vmem:[#allocation4 + $0xa] sm:$0xff]
        %v4224 = vstv %s4221
        %v4225 = vmul.f32 %v4224, %v4222
        %v4226 = vmul.f32 %v4224, %v4223
        %v4227 = vadd.f32 %v4219, %v4225
        %v4228 = vadd.f32 %v4220, %v4226
        %s4229 = sld [smem:[#allocation5 + $0x130]]
        %v4230 = vstv %s4229
        %v4231 = vmul.f32 %v4230, %v4222
        %v4232 = vmul.f32 %v4230, %v4223
        %4235 = vrot.lane.b32.xlu0 %v4231, 127
        %v4236 = vpop.permute.xlu0 %4235
        %4237 = vrot.lane.b32.xlu0 %v4232, 127
        %v4238 = vpop.permute.xlu0 %4237
        %v4241 = vadd.f32 %v4227, %v4236
        %v4242 = vadd.f32 %v4228, %v4238
        %s4243 = sld [smem:[#allocation5 + $0x131]]
        %v4244 = vstv %s4243
        %v4245 = vmul.f32 %v4244, %v4222
        %v4246 = vmul.f32 %v4244, %v4223
        %4249 = vrot.lane.b32.xlu0 %v4245, 126
        %v4250 = vpop.permute.xlu0 %4249
        %4251 = vrot.lane.b32.xlu0 %v4246, 126
        %v4252 = vpop.permute.xlu0 %4251
        %v4255 = vadd.f32 %v4241, %v4250
        %v4256 = vadd.f32 %v4242, %v4252
        %4257 = vst.msk [vmem:[%s332] sm:$0xff] %vm4107, %v4255
        %4258 = vst.msk [vmem:[%s332 + $0x8] sm:$0xff] %vm4107, %v4256
        %v4259 = vld [vmem:[%s297] sm:$0xff]
        %v4260 = vld [vmem:[%s297 + $0x8] sm:$0xff]
        %v4261 = vsub.f32 %v4255, %v4259
        %v4262 = vsub.f32 %v4256, %v4260
        %v4263 = vand.u32 2147483647, %v4261
        %v4264 = vand.u32 2147483647, %v4262
        %v4265 = vsel %vm4107, %v4263, 0.0
        %v4266 = vsel %vm4107, %v4264, 0.0
        %v4267 = vadd.f32 %v4265, %v4266
        %4268 = vadd.xlane.f32.xlu0 %v4267
        %v4269 = vpop.xlane.xlu0 %4268
        %v4270 = vrot.slane %v4269, 4
        %v4271 = vadd.f32 %v4269, %v4270
        %v4272 = vrot.slane %v4271, 2
        %v4273 = vadd.f32 %v4271, %v4272
        %v4274 = vrot.slane %v4273, 1
        %v4275 = vadd.f32 %v4273, %v4274
        %s4276 = vtos %v4275
        %v4277 = vstv %s4276
        %v4278 = vadd.f32 %v4277, 0.0
        %s4279 = sld [smem:[#allocation5 + $0x14e]]
        %v4280 = vstv %s4279
        %s4281 = sld [smem:[#allocation5 + $0x132]]
        %v4282 = vld [vmem:[#allocation4] sm:$0xff]
        %v4283 = vld [vmem:[#allocation4 + $0x8] sm:$0xff]
        %v4284 = vstv %s4281
        %v4285 = vmul.f32 %v4284, %v4282
        %v4286 = vmul.f32 %v4284, %v4283
        %v4287 = vadd.f32 %v4280, %v4285
        %v4288 = vadd.f32 %v4280, %v4286
        %s4289 = sld [smem:[#allocation5 + $0x133]]
        %v4290 = vstv %s4289
        %v4291 = vmul.f32 %v4290, %v4282
        %v4292 = vmul.f32 %v4290, %v4283
        %4295 = vrot.lane.b32.xlu0 %v4291, 127
        %v4296 = vpop.permute.xlu0 %4295
        %4297 = vrot.lane.b32.xlu0 %v4292, 127
        %v4298 = vpop.permute.xlu0 %4297
        %v4301 = vadd.f32 %v4287, %v4296
        %v4302 = vadd.f32 %v4288, %v4298
        %s4303 = sld [smem:[#allocation5 + $0x134]]
        %v4304 = vstv %s4303
        %v4305 = vmul.f32 %v4304, %v4282
        %v4306 = vmul.f32 %v4304, %v4283
        %4309 = vrot.lane.b32.xlu0 %v4305, 126
        %v4310 = vpop.permute.xlu0 %4309
        %4311 = vrot.lane.b32.xlu0 %v4306, 126
        %v4312 = vpop.permute.xlu0 %4311
        %v4315 = vadd.f32 %v4301, %v4310
        %v4316 = vadd.f32 %v4302, %v4312
        %s4317 = sld [smem:[#allocation5 + $0x135]]
        %v4318 = vld [vmem:[#allocation4 + $0x1] sm:$0xff]
        %v4319 = vld [vmem:[#allocation4 + $0x9] sm:$0xff]
        %v4320 = vstv %s4317
        %v4321 = vmul.f32 %v4320, %v4318
        %v4322 = vmul.f32 %v4320, %v4319
        %v4323 = vadd.f32 %v4315, %v4321
        %v4324 = vadd.f32 %v4316, %v4322
        %s4325 = sld [smem:[#allocation5 + $0x136]]
        %v4326 = vstv %s4325
        %v4327 = vmul.f32 %v4326, %v4318
        %v4328 = vmul.f32 %v4326, %v4319
        %4331 = vrot.lane.b32.xlu0 %v4327, 127
        %v4332 = vpop.permute.xlu0 %4331
        %4333 = vrot.lane.b32.xlu0 %v4328, 127
        %v4334 = vpop.permute.xlu0 %4333
        %v4337 = vadd.f32 %v4323, %v4332
        %v4338 = vadd.f32 %v4324, %v4334
        %s4339 = sld [smem:[#allocation5 + $0x137]]
        %v4340 = vstv %s4339
        %v4341 = vmul.f32 %v4340, %v4318
        %v4342 = vmul.f32 %v4340, %v4319
        %4345 = vrot.lane.b32.xlu0 %v4341, 126
        %v4346 = vpop.permute.xlu0 %4345
        %4347 = vrot.lane.b32.xlu0 %v4342, 126
        %v4348 = vpop.permute.xlu0 %4347
        %v4351 = vadd.f32 %v4337, %v4346
        %v4352 = vadd.f32 %v4338, %v4348
        %s4353 = sld [smem:[#allocation5 + $0x138]]
        %v4354 = vld [vmem:[#allocation4 + $0x2] sm:$0xff]
        %v4355 = vld [vmem:[#allocation4 + $0xa] sm:$0xff]
        %v4356 = vstv %s4353
        %v4357 = vmul.f32 %v4356, %v4354
        %v4358 = vmul.f32 %v4356, %v4355
        %v4359 = vadd.f32 %v4351, %v4357
        %v4360 = vadd.f32 %v4352, %v4358
        %s4361 = sld [smem:[#allocation5 + $0x139]]
        %v4362 = vstv %s4361
        %v4363 = vmul.f32 %v4362, %v4354
        %v4364 = vmul.f32 %v4362, %v4355
        %4367 = vrot.lane.b32.xlu0 %v4363, 127
        %v4368 = vpop.permute.xlu0 %4367
        %4369 = vrot.lane.b32.xlu0 %v4364, 127
        %v4370 = vpop.permute.xlu0 %4369
        %v4373 = vadd.f32 %v4359, %v4368
        %v4374 = vadd.f32 %v4360, %v4370
        %s4375 = sld [smem:[#allocation5 + $0x13a]]
        %v4376 = vstv %s4375
        %v4377 = vmul.f32 %v4376, %v4354
        %v4378 = vmul.f32 %v4376, %v4355
        %4381 = vrot.lane.b32.xlu0 %v4377, 126
        %v4382 = vpop.permute.xlu0 %4381
        %4383 = vrot.lane.b32.xlu0 %v4378, 126
        %v4384 = vpop.permute.xlu0 %4383
        %v4387 = vadd.f32 %v4373, %v4382
        %v4388 = vadd.f32 %v4374, %v4384
        %s4389 = scalar_lea.vmem %s332, 16 [#allocation13]
        %4390 = vst.msk [vmem:[%s4389] sm:$0xff] %vm4107, %v4387
        %4391 = vst.msk [vmem:[%s4389 + $0x8] sm:$0xff] %vm4107, %v4388
        %v4392 = vld [vmem:[%s4068] sm:$0xff]
        %v4393 = vld [vmem:[%s4068 + $0x8] sm:$0xff]
        %v4394 = vsub.f32 %v4387, %v4392
        %v4395 = vsub.f32 %v4388, %v4393
        %v4396 = vand.u32 2147483647, %v4394
        %v4397 = vand.u32 2147483647, %v4395
        %v4398 = vsel %vm4107, %v4396, 0.0
        %v4399 = vsel %vm4107, %v4397, 0.0
        %v4400 = vadd.f32 %v4398, %v4399
        %4401 = vadd.xlane.f32.xlu0 %v4400
        %v4402 = vpop.xlane.xlu0 %4401
        %v4403 = vrot.slane %v4402, 4
        %v4404 = vadd.f32 %v4402, %v4403
        %v4405 = vrot.slane %v4404, 2
        %v4406 = vadd.f32 %v4404, %v4405
        %v4407 = vrot.slane %v4406, 1
        %v4408 = vadd.f32 %v4406, %v4407
        %s4409 = vtos %v4408
        %v4410 = vstv %s4409
        %v4411 = vadd.f32 %v4278, %v4410
        %s4412 = sld [smem:[#allocation5 + $0x14f]]
        %v4413 = vstv %s4412
        %s4414 = sld [smem:[#allocation5 + $0x13b]]
        %v4415 = vld [vmem:[#allocation4] sm:$0xff]
        %v4416 = vld [vmem:[#allocation4 + $0x8] sm:$0xff]
        %v4417 = vstv %s4414
        %v4418 = vmul.f32 %v4417, %v4415
        %v4419 = vmul.f32 %v4417, %v4416
        %v4420 = vadd.f32 %v4413, %v4418
        %v4421 = vadd.f32 %v4413, %v4419
        %s4422 = sld [smem:[#allocation5 + $0x13c]]
        %v4423 = vstv %s4422
        %v4424 = vmul.f32 %v4423, %v4415
        %v4425 = vmul.f32 %v4423, %v4416
        %4428 = vrot.lane.b32.xlu0 %v4424, 127
        %v4429 = vpop.permute.xlu0 %4428
        %4430 = vrot.lane.b32.xlu0 %v4425, 127
        %v4431 = vpop.permute.xlu0 %4430
        %v4434 = vadd.f32 %v4420, %v4429
        %v4435 = vadd.f32 %v4421, %v4431
        %s4436 = sld [smem:[#allocation5 + $0x13d]]
        %v4437 = vstv %s4436
        %v4438 = vmul.f32 %v4437, %v4415
        %v4439 = vmul.f32 %v4437, %v4416
        %4442 = vrot.lane.b32.xlu0 %v4438, 126
        %v4443 = vpop.permute.xlu0 %4442
        %4444 = vrot.lane.b32.xlu0 %v4439, 126
        %v4445 = vpop.permute.xlu0 %4444
        %v4448 = vadd.f32 %v4434, %v4443
        %v4449 = vadd.f32 %v4435, %v4445
        %s4450 = sld [smem:[#allocation5 + $0x13e]]
        %v4451 = vld [vmem:[#allocation4 + $0x1] sm:$0xff]
        %v4452 = vld [vmem:[#allocation4 + $0x9] sm:$0xff]
        %v4453 = vstv %s4450
        %v4454 = vmul.f32 %v4453, %v4451
        %v4455 = vmul.f32 %v4453, %v4452
        %v4456 = vadd.f32 %v4448, %v4454
        %v4457 = vadd.f32 %v4449, %v4455
        %s4458 = sld [smem:[#allocation5 + $0x13f]]
        %v4459 = vstv %s4458
        %v4460 = vmul.f32 %v4459, %v4451
        %v4461 = vmul.f32 %v4459, %v4452
        %4464 = vrot.lane.b32.xlu0 %v4460, 127
        %v4465 = vpop.permute.xlu0 %4464
        %4466 = vrot.lane.b32.xlu0 %v4461, 127
        %v4467 = vpop.permute.xlu0 %4466
        %v4470 = vadd.f32 %v4456, %v4465
        %v4471 = vadd.f32 %v4457, %v4467
        %s4472 = sld [smem:[#allocation5 + $0x140]]
        %v4473 = vstv %s4472
        %v4474 = vmul.f32 %v4473, %v4451
        %v4475 = vmul.f32 %v4473, %v4452
        %4478 = vrot.lane.b32.xlu0 %v4474, 126
        %v4479 = vpop.permute.xlu0 %4478
        %4480 = vrot.lane.b32.xlu0 %v4475, 126
        %v4481 = vpop.permute.xlu0 %4480
        %v4484 = vadd.f32 %v4470, %v4479
        %v4485 = vadd.f32 %v4471, %v4481
        %s4486 = sld [smem:[#allocation5 + $0x141]]
        %v4487 = vld [vmem:[#allocation4 + $0x2] sm:$0xff]
        %v4488 = vld [vmem:[#allocation4 + $0xa] sm:$0xff]
        %v4489 = vstv %s4486
        %v4490 = vmul.f32 %v4489, %v4487
        %v4491 = vmul.f32 %v4489, %v4488
        %v4492 = vadd.f32 %v4484, %v4490
        %v4493 = vadd.f32 %v4485, %v4491
        %s4494 = sld [smem:[#allocation5 + $0x142]]
        %v4495 = vstv %s4494
        %v4496 = vmul.f32 %v4495, %v4487
        %v4497 = vmul.f32 %v4495, %v4488
        %4500 = vrot.lane.b32.xlu0 %v4496, 127
        %v4501 = vpop.permute.xlu0 %4500
        %4502 = vrot.lane.b32.xlu0 %v4497, 127
        %v4503 = vpop.permute.xlu0 %4502
        %v4506 = vadd.f32 %v4492, %v4501
        %v4507 = vadd.f32 %v4493, %v4503
        %s4508 = sld [smem:[#allocation5 + $0x143]]
        %v4509 = vstv %s4508
        %v4510 = vmul.f32 %v4509, %v4487
        %v4511 = vmul.f32 %v4509, %v4488
        %4514 = vrot.lane.b32.xlu0 %v4510, 126
        %v4515 = vpop.permute.xlu0 %4514
        %4516 = vrot.lane.b32.xlu0 %v4511, 126
        %v4517 = vpop.permute.xlu0 %4516
        %v4520 = vadd.f32 %v4506, %v4515
        %v4521 = vadd.f32 %v4507, %v4517
        %s4522 = scalar_lea.vmem %s332, 32 [#allocation13]
        %4523 = vst.msk [vmem:[%s4522] sm:$0xff] %vm4107, %v4520
        %4524 = vst.msk [vmem:[%s4522 + $0x8] sm:$0xff] %vm4107, %v4521
        %v4525 = vld [vmem:[%s4073] sm:$0xff]
        %v4526 = vld [vmem:[%s4073 + $0x8] sm:$0xff]
        %v4527 = vsub.f32 %v4520, %v4525
        %v4528 = vsub.f32 %v4521, %v4526
        %v4529 = vand.u32 2147483647, %v4527
        %v4530 = vand.u32 2147483647, %v4528
        %v4531 = vsel %vm4107, %v4529, 0.0
        %v4532 = vsel %vm4107, %v4530, 0.0
        %v4533 = vadd.f32 %v4531, %v4532
        %4534 = vadd.xlane.f32.xlu0 %v4533
        %v4535 = vpop.xlane.xlu0 %4534
        %v4536 = vrot.slane %v4535, 4
        %v4537 = vadd.f32 %v4535, %v4536
        %v4538 = vrot.slane %v4537, 2
        %v4539 = vadd.f32 %v4537, %v4538
        %v4540 = vrot.slane %v4539, 1
        %v4541 = vadd.f32 %v4539, %v4540
        %s4542 = vtos %v4541
        %v4543 = vstv %s4542
        %v4544 = vadd.f32 %v4411, %v4543
        %s4545 = sld [smem:[#allocation5 + $0x150]]
        %v4546 = vstv %s4545
        %s4547 = sld [smem:[#allocation5 + $0x144]]
        %v4548 = vld [vmem:[#allocation4] sm:$0xff]
        %v4549 = vld [vmem:[#allocation4 + $0x8] sm:$0xff]
        %v4550 = vstv %s4547
        %v4551 = vmul.f32 %v4550, %v4548
        %v4552 = vmul.f32 %v4550, %v4549
        %v4553 = vadd.f32 %v4546, %v4551
        %v4554 = vadd.f32 %v4546, %v4552
        %s4555 = sld [smem:[#allocation5 + $0x145]]
        %v4556 = vstv %s4555
        %v4557 = vmul.f32 %v4556, %v4548
        %v4558 = vmul.f32 %v4556, %v4549
        %4561 = vrot.lane.b32.xlu0 %v4557, 127
        %v4562 = vpop.permute.xlu0 %4561
        %4563 = vrot.lane.b32.xlu0 %v4558, 127
        %v4564 = vpop.permute.xlu0 %4563
        %v4567 = vadd.f32 %v4553, %v4562
        %v4568 = vadd.f32 %v4554, %v4564
        %s4569 = sld [smem:[#allocation5 + $0x146]]
        %v4570 = vstv %s4569
        %v4571 = vmul.f32 %v4570, %v4548
        %v4572 = vmul.f32 %v4570, %v4549
        %4575 = vrot.lane.b32.xlu0 %v4571, 126
        %v4576 = vpop.permute.xlu0 %4575
        %4577 = vrot.lane.b32.xlu0 %v4572, 126
        %v4578 = vpop.permute.xlu0 %4577
        %v4581 = vadd.f32 %v4567, %v4576
        %v4582 = vadd.f32 %v4568, %v4578
        %s4583 = sld [smem:[#allocation5 + $0x147]]
        %v4584 = vld [vmem:[#allocation4 + $0x1] sm:$0xff]
        %v4585 = vld [vmem:[#allocation4 + $0x9] sm:$0xff]
        %v4586 = vstv %s4583
        %v4587 = vmul.f32 %v4586, %v4584
        %v4588 = vmul.f32 %v4586, %v4585
        %v4589 = vadd.f32 %v4581, %v4587
        %v4590 = vadd.f32 %v4582, %v4588
        %s4591 = sld [smem:[#allocation5 + $0x148]]
        %v4592 = vstv %s4591
        %v4593 = vmul.f32 %v4592, %v4584
        %v4594 = vmul.f32 %v4592, %v4585
        %4597 = vrot.lane.b32.xlu0 %v4593, 127
        %v4598 = vpop.permute.xlu0 %4597
        %4599 = vrot.lane.b32.xlu0 %v4594, 127
        %v4600 = vpop.permute.xlu0 %4599
        %v4603 = vadd.f32 %v4589, %v4598
        %v4604 = vadd.f32 %v4590, %v4600
        %s4605 = sld [smem:[#allocation5 + $0x149]]
        %v4606 = vstv %s4605
        %v4607 = vmul.f32 %v4606, %v4584
        %v4608 = vmul.f32 %v4606, %v4585
        %4611 = vrot.lane.b32.xlu0 %v4607, 126
        %v4612 = vpop.permute.xlu0 %4611
        %4613 = vrot.lane.b32.xlu0 %v4608, 126
        %v4614 = vpop.permute.xlu0 %4613
        %v4617 = vadd.f32 %v4603, %v4612
        %v4618 = vadd.f32 %v4604, %v4614
        %s4619 = sld [smem:[#allocation5 + $0x14a]]
        %v4620 = vld [vmem:[#allocation4 + $0x2] sm:$0xff]
        %v4621 = vld [vmem:[#allocation4 + $0xa] sm:$0xff]
        %v4622 = vstv %s4619
        %v4623 = vmul.f32 %v4622, %v4620
        %v4624 = vmul.f32 %v4622, %v4621
        %v4625 = vadd.f32 %v4617, %v4623
        %v4626 = vadd.f32 %v4618, %v4624
        %s4627 = sld [smem:[#allocation5 + $0x14b]]
        %v4628 = vstv %s4627
        %v4629 = vmul.f32 %v4628, %v4620
        %v4630 = vmul.f32 %v4628, %v4621
        %4633 = vrot.lane.b32.xlu0 %v4629, 127
        %v4634 = vpop.permute.xlu0 %4633
        %4635 = vrot.lane.b32.xlu0 %v4630, 127
        %v4636 = vpop.permute.xlu0 %4635
        %v4639 = vadd.f32 %v4625, %v4634
        %v4640 = vadd.f32 %v4626, %v4636
        %s4641 = sld [smem:[#allocation5 + $0x14c]]
        %v4642 = vstv %s4641
        %v4643 = vmul.f32 %v4642, %v4620
        %v4644 = vmul.f32 %v4642, %v4621
        %4647 = vrot.lane.b32.xlu0 %v4643, 126
        %v4648 = vpop.permute.xlu0 %4647
        %4649 = vrot.lane.b32.xlu0 %v4644, 126
        %v4650 = vpop.permute.xlu0 %4649
        %v4653 = vadd.f32 %v4639, %v4648
        %v4654 = vadd.f32 %v4640, %v4650
        %s4655 = scalar_lea.vmem %s332, 48 [#allocation13]
        %4656 = vst.msk [vmem:[%s4655] sm:$0xff] %vm4107, %v4653
        %4657 = vst.msk [vmem:[%s4655 + $0x8] sm:$0xff] %vm4107, %v4654
        %v4658 = vld [vmem:[%s4078] sm:$0xff]
        %v4659 = vld [vmem:[%s4078 + $0x8] sm:$0xff]
        %v4660 = vsub.f32 %v4653, %v4658
        %v4661 = vsub.f32 %v4654, %v4659
        %v4662 = vand.u32 2147483647, %v4660
        %v4663 = vand.u32 2147483647, %v4661
        %v4664 = vsel %vm4107, %v4662, 0.0
        %v4665 = vsel %vm4107, %v4663, 0.0
        %v4666 = vadd.f32 %v4664, %v4665
        %4667 = vadd.xlane.f32.xlu0 %v4666
        %v4668 = vpop.xlane.xlu0 %4667
        %v4669 = vrot.slane %v4668, 4
        %v4670 = vadd.f32 %v4668, %v4669
        %v4671 = vrot.slane %v4670, 2
        %v4672 = vadd.f32 %v4670, %v4671
        %v4673 = vrot.slane %v4672, 1
        %v4674 = vadd.f32 %v4672, %v4673
        %s4675 = vtos %v4674
        %v4676 = vstv %s4675
        %v4677 = vadd.f32 %v4544, %v4676
        %v4678 = vmul.f32 %v4677, 0.0009765625
        %4679 = vst.msk [vmem:[%s348] sm:$0x1] %vm4121, %v4678
        %s4680 = sand.u32 %s112, 1
        %s4681 = scalar_lea.sflag [#allocation7], %s4680
        %s4682 = sand.u32 %s112, 1
        %s4683 = smul.addr %s4682, 16
        %s4684 = scalar_lea.vmem [#allocation12], %s4683
        %s4685 = sand.u32 %s138, 1
        %s4686 = scalar_lea.sflag [#allocation14], %s4685
        %s4687 = sand.u32 %s138, 1
        %s4688 = smul.addr %s4687, 64
        %s4689 = scalar_lea.vmem [#allocation13], %s4688
        %p4690 = scmp.lt.s32.totalorder %s31, 1
        %s4691 = scalar_select %p4690, %s31, 1
        %s4692 = scalar_lea.vmem %s5, %s4691
        %p4693 = scmp.lt.s32.totalorder %s31, 1
        %s4694 = scalar_select %p4693, %s31, 1
        %s4695 = scalar_lea.vmem %s6, %s4694
        // Predicated region
        $region45: #{tpu_custom_call.1} parent=31 // pred_check
          %p4696 = pneg %p122
        $region46: #{tpu_custom_call.1} parent=31 // pred_check_branch
          %4698 = sbr.rel (%p4696) target = $region48
        $region47: #{tpu_custom_call.1} parent=31 // pred_region
          %s4700 = ssub.s32 256, 256
          %4701 = vsyncadd %s4681, %s4700
          %s4702 = smul.addr %s31, 2
          %s4703 = smul.addr %s4702, 128
          %s4704 = scalar_lea.hbm %s3, %s4703
          %s4705 = sshll.u32 %s4684, 4
          %s4706 = int_to_ptr.vmem [resolvable:$true] %s4705
          %4711 = dma.vmem_to_hbm [thread:$0]  %s4706, 256, %s4704, %s4681, 128, 128, 8
        $region48: #{tpu_custom_call.1} parent=31 // pred_fallthru
          _
        // Predicated region
        $region49: #{tpu_custom_call.1} parent=31 // pred_check
          %p4712 = pneg %p148
        $region50: #{tpu_custom_call.1} parent=31 // pred_check_branch
          %4714 = sbr.rel (%p4712) target = $region52
        $region51: #{tpu_custom_call.1} parent=31 // pred_region
          %s4716 = ssub.s32 1024, 1024
          %4717 = vsyncadd %s4686, %s4716
          %s4718 = smul.addr %s31, 8
          %s4719 = smul.addr %s4718, 128
          %s4720 = scalar_lea.hbm %s4, %s4719
          %s4721 = sshll.u32 %s4689, 4
          %s4722 = int_to_ptr.vmem [resolvable:$true] %s4721
          %4727 = dma.vmem_to_hbm [thread:$0]  %s4722, 1024, %s4720, %s4686, 128, 128, 8
        $region52: #{tpu_custom_call.1} parent=31 // pred_fallthru
          _
        // Predicated region
        $region53: #{tpu_custom_call.1} parent=31 // pred_check
          %p4728 = pneg %p174
        $region54: #{tpu_custom_call.1} parent=31 // pred_check_branch
          %4730 = sbr.rel (%p4728) target = $region56
        $region55: #{tpu_custom_call.1} parent=31 // pred_region
          _
        $region56: #{tpu_custom_call.1} parent=31 // pred_fallthru
          _
        // Predicated region
        $region57: #{tpu_custom_call.1} parent=31 // pred_check
          %p4731 = pneg %p200
        $region58: #{tpu_custom_call.1} parent=31 // pred_check_branch
          %4733 = sbr.rel (%p4731) target = $region60
        $region59: #{tpu_custom_call.1} parent=31 // pred_region
          _
        $region60: #{tpu_custom_call.1} parent=31 // pred_fallthru
          _
      $region32: #{tpu_custom_call.1} parent=5 // pred_fallthru
        _
      %p4734 = scmp.le.s32.totalorder 2, %s26
      // Predicated region
      $region61: #{tpu_custom_call.1} parent=5 // pred_check
        %p4735 = pneg %p4734
      $region62: #{tpu_custom_call.1} parent=5 // pred_check_branch
        %4737 = sbr.rel (%p4735) target = $region64
      $region63: #{tpu_custom_call.1} parent=5 // pred_region
        %s4738 = ssub.s32 %s26, 2
        // Predicated region
        $region65: #{tpu_custom_call.1} parent=63 // pred_check
          %p4739 = pneg %p128
        $region66: #{tpu_custom_call.1} parent=63 // pred_check_branch
          %4741 = sbr.rel (%p4739) target = $region68
        $region67: #{tpu_custom_call.1} parent=63 // pred_region
          %s4742 = sand.u32 %s113, 1
          %s4743 = scalar_lea.sflag [#allocation7], %s4742
          %s4744 = sand.u32 %s113, 1
          %s4745 = smul.addr %s4744, 16
          %s4746 = scalar_lea.vmem [#allocation12], %s4745
          %4747 = dma.done %s4743, 256
        $region68: #{tpu_custom_call.1} parent=63 // pred_fallthru
          _
        // Predicated region
        $region69: #{tpu_custom_call.1} parent=63 // pred_check
          %p4748 = pneg %p154
        $region70: #{tpu_custom_call.1} parent=63 // pred_check_branch
          %4750 = sbr.rel (%p4748) target = $region72
        $region71: #{tpu_custom_call.1} parent=63 // pred_region
          %s4751 = sand.u32 %s139, 1
          %s4752 = scalar_lea.sflag [#allocation14], %s4751
          %s4753 = sand.u32 %s139, 1
          %s4754 = smul.addr %s4753, 64
          %s4755 = scalar_lea.vmem [#allocation13], %s4754
          %4756 = dma.done %s4752, 1024
        $region72: #{tpu_custom_call.1} parent=63 // pred_fallthru
          _
        // Predicated region
        $region73: #{tpu_custom_call.1} parent=63 // pred_check
          %p4757 = pneg %p180
        $region74: #{tpu_custom_call.1} parent=63 // pred_check_branch
          %4759 = sbr.rel (%p4757) target = $region76
        $region75: #{tpu_custom_call.1} parent=63 // pred_region
          %p4760 = scmp.lt.s32.totalorder %s32, 1
          %s4761 = scalar_select %p4760, %s32, 1
          %s4762 = scalar_lea.vmem %s5, %s4761
        $region76: #{tpu_custom_call.1} parent=63 // pred_fallthru
          _
        // Predicated region
        $region77: #{tpu_custom_call.1} parent=63 // pred_check
          %p4763 = pneg %p206
        $region78: #{tpu_custom_call.1} parent=63 // pred_check_branch
          %4765 = sbr.rel (%p4763) target = $region80
        $region79: #{tpu_custom_call.1} parent=63 // pred_region
          %p4766 = scmp.lt.s32.totalorder %s32, 1
          %s4767 = scalar_select %p4766, %s32, 1
          %s4768 = scalar_lea.vmem %s6, %s4767
        $region80: #{tpu_custom_call.1} parent=63 // pred_fallthru
          _
      $region64: #{tpu_custom_call.1} parent=5 // pred_fallthru
        _
    $region6: #{tpu_custom_call.1} parent=1 // loop_footer
      %s30 = sadd.s32 1, %s26
    $region7: #{tpu_custom_call.1} parent=1 // loop_footer_branch
      %25 = sbr.rel target = $region3
    $region8: #{tpu_custom_call.1} parent=1 // loop_exit
      _
    %4769 = vsyncpa [#allocation6], 1
    %s4770 = scalar_lea.sflag [#allocation6], 1
    %4771 = vsyncpa %s4770, 1
    %4772 = vsyncpa [#allocation11], 1
    %s4773 = scalar_lea.sflag [#allocation11], 1
    %4774 = vsyncpa %s4773, 1
    %4775 = vsyncpa [#allocation7], 1
    %s4776 = scalar_lea.sflag [#allocation7], 1
    %4777 = vsyncpa %s4776, 1
    %4778 = vsyncpa [#allocation14], 1
    %s4779 = scalar_lea.sflag [#allocation14], 1
    %4780 = vsyncpa %s4779, 1
    %4781 = vsyncpa [#allocation8], 1
    %s4782 = scalar_lea.sflag [#allocation8], 1
    %4783 = vsyncpa %s4782, 1

</llo_original>
